<compile_context>
chip_gen: v6e
topology: v6e:2x2x1
jax: 0.10.0
libtpu: 0.0.40
codegen_flags: <defaults>
</compile_context>

<pallas_src>
import math
from functools import partial

import jax
import jax.numpy as jnp
from jax.experimental import pallas as pl
from jax.experimental.pallas import tpu as pltpu

jax.config.update("jax_default_matmul_precision", "float32")


def _sigmoid(v):
    return 1.0 / (1.0 + jnp.exp(-v))


def _lstm_ln_kernel(x_ref, wih_ref, whh_f_ref, whh_b_ref, b_ref,
                    ln_w_ref, ln_b_ref, out_ref,
                    gx_scr, hf_scr, hb_scr, *, T, B, H, eps):
    """Fused bidirectional LSTM (1 layer) + LayerNorm.

    x_ref:   (T*B, C)      time-major, rows are [t=0: b0..bB-1, t=1: ...]
    wih_ref: (C, 8H)       [W_ih_fwd | W_ih_bwd], pre-transposed
    whh_*:   (H, 4H)       per-direction recurrent weights, pre-transposed
    b_ref:   (1, 8H)       [b_ih_f + b_hh_f | b_ih_b + b_hh_b]
    ln_*:    (1, 2H)       LayerNorm affine params
    out_ref: (T*B, 2H)     LayerNorm(concat(h_fwd, h_bwd))
    """
    G = 4 * H

    # Input projection for ALL timesteps and BOTH directions in one MXU matmul,
    # bias folded in.  Result kept in VMEM scratch for the recurrence.
    gx_scr[...] = (
        jnp.dot(x_ref[...], wih_ref[...], preferred_element_type=jnp.float32)
        + b_ref[...]
    )

    def run_direction(whh_ref, col_off, h_out_scr, reverse):
        whh = whh_ref[...]                       # hoisted: (H, 4H)

        def step(t, carry):
            h, c = carry
            s = (T - 1 - t) if reverse else t    # original time index
            row = s * B
            gx_row = gx_scr[pl.ds(row, B), :][:, col_off:col_off + G]  # (B, 4H)
            g = gx_row + jnp.dot(h, whh, preferred_element_type=jnp.float32)
            i = _sigmoid(g[:, 0:H])
            f = _sigmoid(g[:, H:2 * H])
            gg = jnp.tanh(g[:, 2 * H:3 * H])
            o = _sigmoid(g[:, 3 * H:4 * H])
            c_new = f * c + i * gg
            h_new = o * jnp.tanh(c_new)
            h_out_scr[pl.ds(row, B), :] = h_new
            return (h_new, c_new)

        h0 = jnp.zeros((B, H), jnp.float32)
        c0 = jnp.zeros((B, H), jnp.float32)
        jax.lax.fori_loop(0, T, step, (h0, c0), unroll=True)

    run_direction(whh_f_ref, 0, hf_scr, reverse=False)
    run_direction(whh_b_ref, G, hb_scr, reverse=True)

    # Concatenate directions and apply LayerNorm over the 2H feature dim.
    hcat = jnp.concatenate([hf_scr[...], hb_scr[...]], axis=-1)  # (T*B, 2H)
    mean = jnp.mean(hcat, axis=-1, keepdims=True)
    centered = hcat - mean
    var = jnp.mean(centered * centered, axis=-1, keepdims=True)
    normed = centered * jax.lax.rsqrt(var + eps)
    out_ref[...] = (normed * ln_w_ref[...] + ln_b_ref[...]).astype(out_ref.dtype)


def layer_norm_lstm_forward(params, x, *, eps=1e-5):
    """x: (B, C, T) -> (x_norm (B, T, 2H), y (B, 2H, T))."""
    B, C, T = x.shape
    H = params["whh_f"].shape[0]

    # time-major, flattened rows: (B, C, T) -> (T, B, C) -> (T*B, C)
    x_tm = jnp.transpose(x, (2, 0, 1)).reshape(T * B, C)

    out2d = pl.pallas_call(
        partial(_lstm_ln_kernel, T=T, B=B, H=H, eps=eps),
        out_shape=jax.ShapeDtypeStruct((T * B, 2 * H), jnp.float32),
        # Small shapes: every operand fits in VMEM as one full-array block.
        in_specs=[pl.BlockSpec(memory_space=pltpu.VMEM)] * 7,
        out_specs=pl.BlockSpec(memory_space=pltpu.VMEM),
        scratch_shapes=[
            pltpu.VMEM((T * B, 8 * H), jnp.float32),  # input-gate projections
            pltpu.VMEM((T * B, H), jnp.float32),      # forward hidden trace
            pltpu.VMEM((T * B, H), jnp.float32),      # backward hidden trace
        ],
    )(x_tm, params["wih"], params["whh_f"], params["whh_b"],
      params["b"], params["ln_w"], params["ln_b"])

    out = out2d.reshape(T, B, 2 * H)
    x_out = jnp.transpose(out, (1, 0, 2))   # (B, T, 2H)
    y_out = jnp.transpose(out, (1, 2, 0))   # (B, 2H, T)
    return x_out, y_out


def init_layer_norm_lstm_params(key, input_size, hidden_size):
    """Mirror PyTorch nn.LSTM default init: uniform(-1/sqrt(H), 1/sqrt(H)).

    Weights are stored pre-transposed (in_features, 4H); the two directions'
    input weights / biases are concatenated along the gate axis for one fused
    input-projection matmul.  LayerNorm: weight=1, bias=0.
    """
    H = hidden_size
    bound = 1.0 / math.sqrt(H)
    keys = jax.random.split(key, 8)

    def u(k, shape):
        return jax.random.uniform(k, shape, jnp.float32, -bound, bound)

    wih_f = u(keys[0], (input_size, 4 * H))
    whh_f = u(keys[1], (H, 4 * H))
    b_f = u(keys[2], (1, 4 * H)) + u(keys[3], (1, 4 * H))   # b_ih + b_hh
    wih_b = u(keys[4], (input_size, 4 * H))
    whh_b = u(keys[5], (H, 4 * H))
    b_b = u(keys[6], (1, 4 * H)) + u(keys[7], (1, 4 * H))

    return {
        "wih": jnp.concatenate([wih_f, wih_b], axis=1),     # (C, 8H)
        "whh_f": whh_f,
        "whh_b": whh_b,
        "b": jnp.concatenate([b_f, b_b], axis=1),           # (1, 8H)
        "ln_w": jnp.ones((1, 2 * H), jnp.float32),
        "ln_b": jnp.zeros((1, 2 * H), jnp.float32),
    }


def layer_norm_lstm_reference(params, x, *, eps=1e-5):
    """Pure-JAX reference (same math, lax.scan recurrence) for validation."""
    B, C, T = x.shape
    H = params["whh_f"].shape[0]
    G = 4 * H
    xt = jnp.transpose(x, (2, 0, 1))  # (T, B, C), time-major

    def run(wih_d, whh_d, b_d, xseq):
        def step(carry, xrow):
            h, c = carry
            g = xrow @ wih_d + h @ whh_d + b_d
            i = _sigmoid(g[:, 0:H])
            f = _sigmoid(g[:, H:2 * H])
            gg = jnp.tanh(g[:, 2 * H:3 * H])
            o = _sigmoid(g[:, 3 * H:4 * H])
            c = f * c + i * gg
            h = o * jnp.tanh(c)
            return (h, c), h

        init = (jnp.zeros((B, H), jnp.float32), jnp.zeros((B, H), jnp.float32))
        _, hs = jax.lax.scan(step, init, xseq)
        return hs  # (T, B, H)

    wih, b = params["wih"], params["b"]
    hf = run(wih[:, :G], params["whh_f"], b[:, :G], xt)
    hb = run(wih[:, G:], params["whh_b"], b[:, G:], xt[::-1])[::-1]
    out = jnp.concatenate([hf, hb], axis=-1)       # (T, B, 2H)
    out = jnp.transpose(out, (1, 0, 2))            # (B, T, 2H)
    mean = jnp.mean(out, axis=-1, keepdims=True)
    var = jnp.mean((out - mean) ** 2, axis=-1, keepdims=True)
    out = (out - mean) * jax.lax.rsqrt(var + eps)
    out = out * params["ln_w"].reshape(2 * H) + params["ln_b"].reshape(2 * H)
    y = jnp.transpose(out, (0, 2, 1))              # (B, 2H, T)
    return out, y


if __name__ == "__main__":
    key = jax.random.PRNGKey(0)
    B, C, T, H = 2, 16, 8, 32           # batch, input_size, seq_len, hidden

    kx, kp = jax.random.split(key)
    x = jax.random.normal(kx, (B, C, T), jnp.float32)
    params = init_layer_norm_lstm_params(kp, C, H)

    x_out, y_out = layer_norm_lstm_forward(params, x)
    x_out = jax.block_until_ready(x_out)
    y_out = jax.block_until_ready(y_out)

    x_ref, y_ref = layer_norm_lstm_reference(params, x)

    assert x_out.shape == (B, T, 2 * H)
    assert y_out.shape == (B, 2 * H, T)
    assert jnp.allclose(x_out, x_ref, atol=1e-4, rtol=1e-4)
    assert jnp.allclose(y_out, y_ref, atol=1e-4, rtol=1e-4)

    print("KERNEL_OK")
</pallas_src>

<mosaic_0001>
module attributes {stable_mosaic.version = 11 : i64} {
  func.func @_lstm_ln_kernel(%arg0: memref<16x16xf32, #tpu.memory_space<vmem>>, %arg1: memref<16x256xf32, #tpu.memory_space<vmem>>, %arg2: memref<32x128xf32, #tpu.memory_space<vmem>>, %arg3: memref<32x128xf32, #tpu.memory_space<vmem>>, %arg4: memref<1x256xf32, #tpu.memory_space<vmem>>, %arg5: memref<1x64xf32, #tpu.memory_space<vmem>>, %arg6: memref<1x64xf32, #tpu.memory_space<vmem>>, %arg7: memref<16x64xf32, #tpu.memory_space<vmem>>, %arg8: memref<16x256xf32, #tpu.memory_space<vmem>>, %arg9: memref<16x32xf32, #tpu.memory_space<vmem>>, %arg10: memref<16x32xf32, #tpu.memory_space<vmem>>) attributes {dimension_semantics = [], scalar_prefetch = 0 : i64, scratch_operands = 3 : i64, tpu.core_type = #tpu.core_type<tc>} {
    %c0 = arith.constant 0 : index
    %c0_0 = arith.constant 0 : index
    %0 = vector.load %arg0[%c0, %c0_0] : memref<16x16xf32, #tpu.memory_space<vmem>>, vector<16x16xf32>
    %c0_1 = arith.constant 0 : index
    %c0_2 = arith.constant 0 : index
    %1 = vector.load %arg1[%c0_1, %c0_2] : memref<16x256xf32, #tpu.memory_space<vmem>>, vector<16x256xf32>
    %cst = arith.constant dense<0.000000e+00> : vector<16x256xf32>
    %2 = tpu.matmul %0, %1, %cst {dimension_numbers = #tpu.dot_dimension_numbers<[1], [0], [0], [1], [0, 0, 1, 1], [], []>, precision = #tpu.contract_precision<fp32>} : vector<16x16xf32>, vector<16x256xf32>, vector<16x256xf32> -> vector<16x256xf32>
    %c0_3 = arith.constant 0 : index
    %c0_4 = arith.constant 0 : index
    %3 = vector.load %arg4[%c0_3, %c0_4] : memref<1x256xf32, #tpu.memory_space<vmem>>, vector<1x256xf32>
    %4 = vector.broadcast %3 : vector<1x256xf32> to vector<16x256xf32>
    %5 = arith.addf %2, %4 : vector<16x256xf32>
    %c0_5 = arith.constant 0 : index
    %c0_6 = arith.constant 0 : index
    %6 = vector.load %arg8[%c0_5, %c0_6] : memref<16x256xf32, #tpu.memory_space<vmem>>, vector<16x256xf32>
    tpu.vector_store %arg8[%c0_5, %c0_6], %5 {strides = array<i32>} : memref<16x256xf32, #tpu.memory_space<vmem>>, vector<16x256xf32>,
    %c0_7 = arith.constant 0 : index
    %c0_8 = arith.constant 0 : index
    %7 = vector.load %arg2[%c0_7, %c0_8] : memref<32x128xf32, #tpu.memory_space<vmem>>, vector<32x128xf32>
    %cst_9 = arith.constant 0.000000e+00 : f32
    %8 = vector.broadcast %cst_9 : f32 to vector<2x32xf32>
    %cst_10 = arith.constant 0.000000e+00 : f32
    %9 = vector.broadcast %cst_10 : f32 to vector<2x32xf32>
    %c0_i32 = arith.constant 0 : i32
    %c2_i32 = arith.constant 2 : i32
    %10 = arith.muli %c0_i32, %c2_i32 : i32
    %11 = arith.index_cast %10 : i32 to index
    %c0_11 = arith.constant 0 : index
    %12 = vector.load %arg8[%11, %c0_11] : memref<16x256xf32, #tpu.memory_space<vmem>>, vector<2x256xf32>
    %13 = vector.extract_strided_slice %12 {offsets = [0, 0], sizes = [2, 128], strides = [1, 1]} : vector<2x256xf32> to vector<2x128xf32>
    %cst_12 = arith.constant dense<0.000000e+00> : vector<2x128xf32>
    %14 = tpu.matmul %8, %7, %cst_12 {dimension_numbers = #tpu.dot_dimension_numbers<[1], [0], [0], [1], [0, 0, 1, 1], [], []>, precision = #tpu.contract_precision<fp32>} : vector<2x32xf32>, vector<32x128xf32>, vector<2x128xf32> -> vector<2x128xf32>
    %15 = arith.addf %13, %14 : vector<2x128xf32>
    %16 = vector.extract_strided_slice %15 {offsets = [0, 0], sizes = [2, 32], strides = [1, 1]} : vector<2x128xf32> to vector<2x32xf32>
    %cst_13 = arith.constant 0.000000e+00 : f32
    %17 = vector.broadcast %cst_13 : f32 to vector<2x32xf32>
    %18 = arith.subf %17, %16 : vector<2x32xf32>
    %19 = math.exp %18 : vector<2x32xf32>
    %cst_14 = arith.constant 1.000000e+00 : f32
    %20 = vector.broadcast %cst_14 : f32 to vector<2x32xf32>
    %21 = arith.addf %20, %19 : vector<2x32xf32>
    %cst_15 = arith.constant 1.000000e+00 : f32
    %22 = vector.broadcast %cst_15 : f32 to vector<2x32xf32>
    %23 = arith.divf %22, %21 : vector<2x32xf32>
    %24 = vector.extract_strided_slice %15 {offsets = [0, 32], sizes = [2, 32], strides = [1, 1]} : vector<2x128xf32> to vector<2x32xf32>
    %cst_16 = arith.constant 0.000000e+00 : f32
    %25 = vector.broadcast %cst_16 : f32 to vector<2x32xf32>
    %26 = arith.subf %25, %24 : vector<2x32xf32>
    %27 = math.exp %26 : vector<2x32xf32>
    %cst_17 = arith.constant 1.000000e+00 : f32
    %28 = vector.broadcast %cst_17 : f32 to vector<2x32xf32>
    %29 = arith.addf %28, %27 : vector<2x32xf32>
    %cst_18 = arith.constant 1.000000e+00 : f32
    %30 = vector.broadcast %cst_18 : f32 to vector<2x32xf32>
    %31 = arith.divf %30, %29 : vector<2x32xf32>
    %32 = vector.extract_strided_slice %15 {offsets = [0, 64], sizes = [2, 32], strides = [1, 1]} : vector<2x128xf32> to vector<2x32xf32>
    %33 = math.tanh %32 : vector<2x32xf32>
    %34 = vector.extract_strided_slice %15 {offsets = [0, 96], sizes = [2, 32], strides = [1, 1]} : vector<2x128xf32> to vector<2x32xf32>
    %cst_19 = arith.constant 0.000000e+00 : f32
    %35 = vector.broadcast %cst_19 : f32 to vector<2x32xf32>
    %36 = arith.subf %35, %34 : vector<2x32xf32>
    %37 = math.exp %36 : vector<2x32xf32>
    %cst_20 = arith.constant 1.000000e+00 : f32
    %38 = vector.broadcast %cst_20 : f32 to vector<2x32xf32>
    %39 = arith.addf %38, %37 : vector<2x32xf32>
    %cst_21 = arith.constant 1.000000e+00 : f32
    %40 = vector.broadcast %cst_21 : f32 to vector<2x32xf32>
    %41 = arith.divf %40, %39 : vector<2x32xf32>
    %42 = arith.mulf %31, %9 : vector<2x32xf32>
    %43 = arith.mulf %23, %33 : vector<2x32xf32>
    %44 = arith.addf %42, %43 : vector<2x32xf32>
    %45 = math.tanh %44 : vector<2x32xf32>
    %46 = arith.mulf %41, %45 : vector<2x32xf32>
    %47 = arith.index_cast %10 : i32 to index
    %c0_22 = arith.constant 0 : index
    %48 = vector.load %arg9[%47, %c0_22] : memref<16x32xf32, #tpu.memory_space<vmem>>, vector<2x32xf32>
    tpu.vector_store %arg9[%47, %c0_22], %46 {strides = array<i32>} : memref<16x32xf32, #tpu.memory_space<vmem>>, vector<2x32xf32>,
    %c1_i32 = arith.constant 1 : i32
    %c2_i32_23 = arith.constant 2 : i32
    %49 = arith.muli %c1_i32, %c2_i32_23 : i32
    %50 = arith.index_cast %49 : i32 to index
    %c0_24 = arith.constant 0 : index
    %51 = vector.load %arg8[%50, %c0_24] : memref<16x256xf32, #tpu.memory_space<vmem>>, vector<2x256xf32>
    %52 = vector.extract_strided_slice %51 {offsets = [0, 0], sizes = [2, 128], strides = [1, 1]} : vector<2x256xf32> to vector<2x128xf32>
    %cst_25 = arith.constant dense<0.000000e+00> : vector<2x128xf32>
    %53 = tpu.matmul %46, %7, %cst_25 {dimension_numbers = #tpu.dot_dimension_numbers<[1], [0], [0], [1], [0, 0, 1, 1], [], []>, precision = #tpu.contract_precision<fp32>} : vector<2x32xf32>, vector<32x128xf32>, vector<2x128xf32> -> vector<2x128xf32>
    %54 = arith.addf %52, %53 : vector<2x128xf32>
    %55 = vector.extract_strided_slice %54 {offsets = [0, 0], sizes = [2, 32], strides = [1, 1]} : vector<2x128xf32> to vector<2x32xf32>
    %cst_26 = arith.constant 0.000000e+00 : f32
    %56 = vector.broadcast %cst_26 : f32 to vector<2x32xf32>
    %57 = arith.subf %56, %55 : vector<2x32xf32>
    %58 = math.exp %57 : vector<2x32xf32>
    %cst_27 = arith.constant 1.000000e+00 : f32
    %59 = vector.broadcast %cst_27 : f32 to vector<2x32xf32>
    %60 = arith.addf %59, %58 : vector<2x32xf32>
    %cst_28 = arith.constant 1.000000e+00 : f32
    %61 = vector.broadcast %cst_28 : f32 to vector<2x32xf32>
    %62 = arith.divf %61, %60 : vector<2x32xf32>
    %63 = vector.extract_strided_slice %54 {offsets = [0, 32], sizes = [2, 32], strides = [1, 1]} : vector<2x128xf32> to vector<2x32xf32>
    %cst_29 = arith.constant 0.000000e+00 : f32
    %64 = vector.broadcast %cst_29 : f32 to vector<2x32xf32>
    %65 = arith.subf %64, %63 : vector<2x32xf32>
    %66 = math.exp %65 : vector<2x32xf32>
    %cst_30 = arith.constant 1.000000e+00 : f32
    %67 = vector.broadcast %cst_30 : f32 to vector<2x32xf32>
    %68 = arith.addf %67, %66 : vector<2x32xf32>
    %cst_31 = arith.constant 1.000000e+00 : f32
    %69 = vector.broadcast %cst_31 : f32 to vector<2x32xf32>
    %70 = arith.divf %69, %68 : vector<2x32xf32>
    %71 = vector.extract_strided_slice %54 {offsets = [0, 64], sizes = [2, 32], strides = [1, 1]} : vector<2x128xf32> to vector<2x32xf32>
    %72 = math.tanh %71 : vector<2x32xf32>
    %73 = vector.extract_strided_slice %54 {offsets = [0, 96], sizes = [2, 32], strides = [1, 1]} : vector<2x128xf32> to vector<2x32xf32>
    %cst_32 = arith.constant 0.000000e+00 : f32
    %74 = vector.broadcast %cst_32 : f32 to vector<2x32xf32>
    %75 = arith.subf %74, %73 : vector<2x32xf32>
    %76 = math.exp %75 : vector<2x32xf32>
    %cst_33 = arith.constant 1.000000e+00 : f32
    %77 = vector.broadcast %cst_33 : f32 to vector<2x32xf32>
    %78 = arith.addf %77, %76 : vector<2x32xf32>
    %cst_34 = arith.constant 1.000000e+00 : f32
    %79 = vector.broadcast %cst_34 : f32 to vector<2x32xf32>
    %80 = arith.divf %79, %78 : vector<2x32xf32>
    %81 = arith.mulf %70, %44 : vector<2x32xf32>
    %82 = arith.mulf %62, %72 : vector<2x32xf32>
    %83 = arith.addf %81, %82 : vector<2x32xf32>
    %84 = math.tanh %83 : vector<2x32xf32>
    %85 = arith.mulf %80, %84 : vector<2x32xf32>
    %86 = arith.index_cast %49 : i32 to index
    %c0_35 = arith.constant 0 : index
    %87 = vector.load %arg9[%86, %c0_35] : memref<16x32xf32, #tpu.memory_space<vmem>>, vector<2x32xf32>
    tpu.vector_store %arg9[%86, %c0_35], %85 {strides = array<i32>} : memref<16x32xf32, #tpu.memory_space<vmem>>, vector<2x32xf32>,
    %c2_i32_36 = arith.constant 2 : i32
    %c2_i32_37 = arith.constant 2 : i32
    %88 = arith.muli %c2_i32_36, %c2_i32_37 : i32
    %89 = arith.index_cast %88 : i32 to index
    %c0_38 = arith.constant 0 : index
    %90 = vector.load %arg8[%89, %c0_38] : memref<16x256xf32, #tpu.memory_space<vmem>>, vector<2x256xf32>
    %91 = vector.extract_strided_slice %90 {offsets = [0, 0], sizes = [2, 128], strides = [1, 1]} : vector<2x256xf32> to vector<2x128xf32>
    %cst_39 = arith.constant dense<0.000000e+00> : vector<2x128xf32>
    %92 = tpu.matmul %85, %7, %cst_39 {dimension_numbers = #tpu.dot_dimension_numbers<[1], [0], [0], [1], [0, 0, 1, 1], [], []>, precision = #tpu.contract_precision<fp32>} : vector<2x32xf32>, vector<32x128xf32>, vector<2x128xf32> -> vector<2x128xf32>
    %93 = arith.addf %91, %92 : vector<2x128xf32>
    %94 = vector.extract_strided_slice %93 {offsets = [0, 0], sizes = [2, 32], strides = [1, 1]} : vector<2x128xf32> to vector<2x32xf32>
    %cst_40 = arith.constant 0.000000e+00 : f32
    %95 = vector.broadcast %cst_40 : f32 to vector<2x32xf32>
    %96 = arith.subf %95, %94 : vector<2x32xf32>
    %97 = math.exp %96 : vector<2x32xf32>
    %cst_41 = arith.constant 1.000000e+00 : f32
    %98 = vector.broadcast %cst_41 : f32 to vector<2x32xf32>
    %99 = arith.addf %98, %97 : vector<2x32xf32>
    %cst_42 = arith.constant 1.000000e+00 : f32
    %100 = vector.broadcast %cst_42 : f32 to vector<2x32xf32>
    %101 = arith.divf %100, %99 : vector<2x32xf32>
    %102 = vector.extract_strided_slice %93 {offsets = [0, 32], sizes = [2, 32], strides = [1, 1]} : vector<2x128xf32> to vector<2x32xf32>
    %cst_43 = arith.constant 0.000000e+00 : f32
    %103 = vector.broadcast %cst_43 : f32 to vector<2x32xf32>
    %104 = arith.subf %103, %102 : vector<2x32xf32>
    %105 = math.exp %104 : vector<2x32xf32>
    %cst_44 = arith.constant 1.000000e+00 : f32
    %106 = vector.broadcast %cst_44 : f32 to vector<2x32xf32>
    %107 = arith.addf %106, %105 : vector<2x32xf32>
    %cst_45 = arith.constant 1.000000e+00 : f32
    %108 = vector.broadcast %cst_45 : f32 to vector<2x32xf32>
    %109 = arith.divf %108, %107 : vector<2x32xf32>
    %110 = vector.extract_strided_slice %93 {offsets = [0, 64], sizes = [2, 32], strides = [1, 1]} : vector<2x128xf32> to vector<2x32xf32>
    %111 = math.tanh %110 : vector<2x32xf32>
    %112 = vector.extract_strided_slice %93 {offsets = [0, 96], sizes = [2, 32], strides = [1, 1]} : vector<2x128xf32> to vector<2x32xf32>
    %cst_46 = arith.constant 0.000000e+00 : f32
    %113 = vector.broadcast %cst_46 : f32 to vector<2x32xf32>
    %114 = arith.subf %113, %112 : vector<2x32xf32>
    %115 = math.exp %114 : vector<2x32xf32>
    %cst_47 = arith.constant 1.000000e+00 : f32
    %116 = vector.broadcast %cst_47 : f32 to vector<2x32xf32>
    %117 = arith.addf %116, %115 : vector<2x32xf32>
    %cst_48 = arith.constant 1.000000e+00 : f32
    %118 = vector.broadcast %cst_48 : f32 to vector<2x32xf32>
    %119 = arith.divf %118, %117 : vector<2x32xf32>
    %120 = arith.mulf %109, %83 : vector<2x32xf32>
    %121 = arith.mulf %101, %111 : vector<2x32xf32>
    %122 = arith.addf %120, %121 : vector<2x32xf32>
    %123 = math.tanh %122 : vector<2x32xf32>
    %124 = arith.mulf %119, %123 : vector<2x32xf32>
    %125 = arith.index_cast %88 : i32 to index
    %c0_49 = arith.constant 0 : index
    %126 = vector.load %arg9[%125, %c0_49] : memref<16x32xf32, #tpu.memory_space<vmem>>, vector<2x32xf32>
    tpu.vector_store %arg9[%125, %c0_49], %124 {strides = array<i32>} : memref<16x32xf32, #tpu.memory_space<vmem>>, vector<2x32xf32>,
    %c3_i32 = arith.constant 3 : i32
    %c2_i32_50 = arith.constant 2 : i32
    %127 = arith.muli %c3_i32, %c2_i32_50 : i32
    %128 = arith.index_cast %127 : i32 to index
    %c0_51 = arith.constant 0 : index
    %129 = vector.load %arg8[%128, %c0_51] : memref<16x256xf32, #tpu.memory_space<vmem>>, vector<2x256xf32>
    %130 = vector.extract_strided_slice %129 {offsets = [0, 0], sizes = [2, 128], strides = [1, 1]} : vector<2x256xf32> to vector<2x128xf32>
    %cst_52 = arith.constant dense<0.000000e+00> : vector<2x128xf32>
    %131 = tpu.matmul %124, %7, %cst_52 {dimension_numbers = #tpu.dot_dimension_numbers<[1], [0], [0], [1], [0, 0, 1, 1], [], []>, precision = #tpu.contract_precision<fp32>} : vector<2x32xf32>, vector<32x128xf32>, vector<2x128xf32> -> vector<2x128xf32>
    %132 = arith.addf %130, %131 : vector<2x128xf32>
    %133 = vector.extract_strided_slice %132 {offsets = [0, 0], sizes = [2, 32], strides = [1, 1]} : vector<2x128xf32> to vector<2x32xf32>
    %cst_53 = arith.constant 0.000000e+00 : f32
    %134 = vector.broadcast %cst_53 : f32 to vector<2x32xf32>
    %135 = arith.subf %134, %133 : vector<2x32xf32>
    %136 = math.exp %135 : vector<2x32xf32>
    %cst_54 = arith.constant 1.000000e+00 : f32
    %137 = vector.broadcast %cst_54 : f32 to vector<2x32xf32>
    %138 = arith.addf %137, %136 : vector<2x32xf32>
    %cst_55 = arith.constant 1.000000e+00 : f32
    %139 = vector.broadcast %cst_55 : f32 to vector<2x32xf32>
    %140 = arith.divf %139, %138 : vector<2x32xf32>
    %141 = vector.extract_strided_slice %132 {offsets = [0, 32], sizes = [2, 32], strides = [1, 1]} : vector<2x128xf32> to vector<2x32xf32>
    %cst_56 = arith.constant 0.000000e+00 : f32
    %142 = vector.broadcast %cst_56 : f32 to vector<2x32xf32>
    %143 = arith.subf %142, %141 : vector<2x32xf32>
    %144 = math.exp %143 : vector<2x32xf32>
    %cst_57 = arith.constant 1.000000e+00 : f32
    %145 = vector.broadcast %cst_57 : f32 to vector<2x32xf32>
    %146 = arith.addf %145, %144 : vector<2x32xf32>
    %cst_58 = arith.constant 1.000000e+00 : f32
    %147 = vector.broadcast %cst_58 : f32 to vector<2x32xf32>
    %148 = arith.divf %147, %146 : vector<2x32xf32>
    %149 = vector.extract_strided_slice %132 {offsets = [0, 64], sizes = [2, 32], strides = [1, 1]} : vector<2x128xf32> to vector<2x32xf32>
    %150 = math.tanh %149 : vector<2x32xf32>
    %151 = vector.extract_strided_slice %132 {offsets = [0, 96], sizes = [2, 32], strides = [1, 1]} : vector<2x128xf32> to vector<2x32xf32>
    %cst_59 = arith.constant 0.000000e+00 : f32
    %152 = vector.broadcast %cst_59 : f32 to vector<2x32xf32>
    %153 = arith.subf %152, %151 : vector<2x32xf32>
    %154 = math.exp %153 : vector<2x32xf32>
    %cst_60 = arith.constant 1.000000e+00 : f32
    %155 = vector.broadcast %cst_60 : f32 to vector<2x32xf32>
    %156 = arith.addf %155, %154 : vector<2x32xf32>
    %cst_61 = arith.constant 1.000000e+00 : f32
    %157 = vector.broadcast %cst_61 : f32 to vector<2x32xf32>
    %158 = arith.divf %157, %156 : vector<2x32xf32>
    %159 = arith.mulf %148, %122 : vector<2x32xf32>
    %160 = arith.mulf %140, %150 : vector<2x32xf32>
    %161 = arith.addf %159, %160 : vector<2x32xf32>
    %162 = math.tanh %161 : vector<2x32xf32>
    %163 = arith.mulf %158, %162 : vector<2x32xf32>
    %164 = arith.index_cast %127 : i32 to index
    %c0_62 = arith.constant 0 : index
    %165 = vector.load %arg9[%164, %c0_62] : memref<16x32xf32, #tpu.memory_space<vmem>>, vector<2x32xf32>
    tpu.vector_store %arg9[%164, %c0_62], %163 {strides = array<i32>} : memref<16x32xf32, #tpu.memory_space<vmem>>, vector<2x32xf32>,
    %c4_i32 = arith.constant 4 : i32
    %c2_i32_63 = arith.constant 2 : i32
    %166 = arith.muli %c4_i32, %c2_i32_63 : i32
    %167 = arith.index_cast %166 : i32 to index
    %c0_64 = arith.constant 0 : index
    %168 = vector.load %arg8[%167, %c0_64] : memref<16x256xf32, #tpu.memory_space<vmem>>, vector<2x256xf32>
    %169 = vector.extract_strided_slice %168 {offsets = [0, 0], sizes = [2, 128], strides = [1, 1]} : vector<2x256xf32> to vector<2x128xf32>
    %cst_65 = arith.constant dense<0.000000e+00> : vector<2x128xf32>
    %170 = tpu.matmul %163, %7, %cst_65 {dimension_numbers = #tpu.dot_dimension_numbers<[1], [0], [0], [1], [0, 0, 1, 1], [], []>, precision = #tpu.contract_precision<fp32>} : vector<2x32xf32>, vector<32x128xf32>, vector<2x128xf32> -> vector<2x128xf32>
    %171 = arith.addf %169, %170 : vector<2x128xf32>
    %172 = vector.extract_strided_slice %171 {offsets = [0, 0], sizes = [2, 32], strides = [1, 1]} : vector<2x128xf32> to vector<2x32xf32>
    %cst_66 = arith.constant 0.000000e+00 : f32
    %173 = vector.broadcast %cst_66 : f32 to vector<2x32xf32>
    %174 = arith.subf %173, %172 : vector<2x32xf32>
    %175 = math.exp %174 : vector<2x32xf32>
    %cst_67 = arith.constant 1.000000e+00 : f32
    %176 = vector.broadcast %cst_67 : f32 to vector<2x32xf32>
    %177 = arith.addf %176, %175 : vector<2x32xf32>
    %cst_68 = arith.constant 1.000000e+00 : f32
    %178 = vector.broadcast %cst_68 : f32 to vector<2x32xf32>
    %179 = arith.divf %178, %177 : vector<2x32xf32>
    %180 = vector.extract_strided_slice %171 {offsets = [0, 32], sizes = [2, 32], strides = [1, 1]} : vector<2x128xf32> to vector<2x32xf32>
    %cst_69 = arith.constant 0.000000e+00 : f32
    %181 = vector.broadcast %cst_69 : f32 to vector<2x32xf32>
    %182 = arith.subf %181, %180 : vector<2x32xf32>
    %183 = math.exp %182 : vector<2x32xf32>
    %cst_70 = arith.constant 1.000000e+00 : f32
    %184 = vector.broadcast %cst_70 : f32 to vector<2x32xf32>
    %185 = arith.addf %184, %183 : vector<2x32xf32>
    %cst_71 = arith.constant 1.000000e+00 : f32
    %186 = vector.broadcast %cst_71 : f32 to vector<2x32xf32>
    %187 = arith.divf %186, %185 : vector<2x32xf32>
    %188 = vector.extract_strided_slice %171 {offsets = [0, 64], sizes = [2, 32], strides = [1, 1]} : vector<2x128xf32> to vector<2x32xf32>
    %189 = math.tanh %188 : vector<2x32xf32>
    %190 = vector.extract_strided_slice %171 {offsets = [0, 96], sizes = [2, 32], strides = [1, 1]} : vector<2x128xf32> to vector<2x32xf32>
    %cst_72 = arith.constant 0.000000e+00 : f32
    %191 = vector.broadcast %cst_72 : f32 to vector<2x32xf32>
    %192 = arith.subf %191, %190 : vector<2x32xf32>
    %193 = math.exp %192 : vector<2x32xf32>
    %cst_73 = arith.constant 1.000000e+00 : f32
    %194 = vector.broadcast %cst_73 : f32 to vector<2x32xf32>
    %195 = arith.addf %194, %193 : vector<2x32xf32>
    %cst_74 = arith.constant 1.000000e+00 : f32
    %196 = vector.broadcast %cst_74 : f32 to vector<2x32xf32>
    %197 = arith.divf %196, %195 : vector<2x32xf32>
    %198 = arith.mulf %187, %161 : vector<2x32xf32>
    %199 = arith.mulf %179, %189 : vector<2x32xf32>
    %200 = arith.addf %198, %199 : vector<2x32xf32>
    %201 = math.tanh %200 : vector<2x32xf32>
    %202 = arith.mulf %197, %201 : vector<2x32xf32>
    %203 = arith.index_cast %166 : i32 to index
    %c0_75 = arith.constant 0 : index
    %204 = vector.load %arg9[%203, %c0_75] : memref<16x32xf32, #tpu.memory_space<vmem>>, vector<2x32xf32>
    tpu.vector_store %arg9[%203, %c0_75], %202 {strides = array<i32>} : memref<16x32xf32, #tpu.memory_space<vmem>>, vector<2x32xf32>,
    %c5_i32 = arith.constant 5 : i32
    %c2_i32_76 = arith.constant 2 : i32
    %205 = arith.muli %c5_i32, %c2_i32_76 : i32
    %206 = arith.index_cast %205 : i32 to index
    %c0_77 = arith.constant 0 : index
    %207 = vector.load %arg8[%206, %c0_77] : memref<16x256xf32, #tpu.memory_space<vmem>>, vector<2x256xf32>
    %208 = vector.extract_strided_slice %207 {offsets = [0, 0], sizes = [2, 128], strides = [1, 1]} : vector<2x256xf32> to vector<2x128xf32>
    %cst_78 = arith.constant dense<0.000000e+00> : vector<2x128xf32>
    %209 = tpu.matmul %202, %7, %cst_78 {dimension_numbers = #tpu.dot_dimension_numbers<[1], [0], [0], [1], [0, 0, 1, 1], [], []>, precision = #tpu.contract_precision<fp32>} : vector<2x32xf32>, vector<32x128xf32>, vector<2x128xf32> -> vector<2x128xf32>
    %210 = arith.addf %208, %209 : vector<2x128xf32>
    %211 = vector.extract_strided_slice %210 {offsets = [0, 0], sizes = [2, 32], strides = [1, 1]} : vector<2x128xf32> to vector<2x32xf32>
    %cst_79 = arith.constant 0.000000e+00 : f32
    %212 = vector.broadcast %cst_79 : f32 to vector<2x32xf32>
    %213 = arith.subf %212, %211 : vector<2x32xf32>
    %214 = math.exp %213 : vector<2x32xf32>
    %cst_80 = arith.constant 1.000000e+00 : f32
    %215 = vector.broadcast %cst_80 : f32 to vector<2x32xf32>
    %216 = arith.addf %215, %214 : vector<2x32xf32>
    %cst_81 = arith.constant 1.000000e+00 : f32
    %217 = vector.broadcast %cst_81 : f32 to vector<2x32xf32>
    %218 = arith.divf %217, %216 : vector<2x32xf32>
    %219 = vector.extract_strided_slice %210 {offsets = [0, 32], sizes = [2, 32], strides = [1, 1]} : vector<2x128xf32> to vector<2x32xf32>
    %cst_82 = arith.constant 0.000000e+00 : f32
    %220 = vector.broadcast %cst_82 : f32 to vector<2x32xf32>
    %221 = arith.subf %220, %219 : vector<2x32xf32>
    %222 = math.exp %221 : vector<2x32xf32>
    %cst_83 = arith.constant 1.000000e+00 : f32
    %223 = vector.broadcast %cst_83 : f32 to vector<2x32xf32>
    %224 = arith.addf %223, %222 : vector<2x32xf32>
    %cst_84 = arith.constant 1.000000e+00 : f32
    %225 = vector.broadcast %cst_84 : f32 to vector<2x32xf32>
    %226 = arith.divf %225, %224 : vector<2x32xf32>
    %227 = vector.extract_strided_slice %210 {offsets = [0, 64], sizes = [2, 32], strides = [1, 1]} : vector<2x128xf32> to vector<2x32xf32>
    %228 = math.tanh %227 : vector<2x32xf32>
    %229 = vector.extract_strided_slice %210 {offsets = [0, 96], sizes = [2, 32], strides = [1, 1]} : vector<2x128xf32> to vector<2x32xf32>
    %cst_85 = arith.constant 0.000000e+00 : f32
    %230 = vector.broadcast %cst_85 : f32 to vector<2x32xf32>
    %231 = arith.subf %230, %229 : vector<2x32xf32>
    %232 = math.exp %231 : vector<2x32xf32>
    %cst_86 = arith.constant 1.000000e+00 : f32
    %233 = vector.broadcast %cst_86 : f32 to vector<2x32xf32>
    %234 = arith.addf %233, %232 : vector<2x32xf32>
    %cst_87 = arith.constant 1.000000e+00 : f32
    %235 = vector.broadcast %cst_87 : f32 to vector<2x32xf32>
    %236 = arith.divf %235, %234 : vector<2x32xf32>
    %237 = arith.mulf %226, %200 : vector<2x32xf32>
    %238 = arith.mulf %218, %228 : vector<2x32xf32>
    %239 = arith.addf %237, %238 : vector<2x32xf32>
    %240 = math.tanh %239 : vector<2x32xf32>
    %241 = arith.mulf %236, %240 : vector<2x32xf32>
    %242 = arith.index_cast %205 : i32 to index
    %c0_88 = arith.constant 0 : index
    %243 = vector.load %arg9[%242, %c0_88] : memref<16x32xf32, #tpu.memory_space<vmem>>, vector<2x32xf32>
    tpu.vector_store %arg9[%242, %c0_88], %241 {strides = array<i32>} : memref<16x32xf32, #tpu.memory_space<vmem>>, vector<2x32xf32>,
    %c6_i32 = arith.constant 6 : i32
    %c2_i32_89 = arith.constant 2 : i32
    %244 = arith.muli %c6_i32, %c2_i32_89 : i32
    %245 = arith.index_cast %244 : i32 to index
    %c0_90 = arith.constant 0 : index
    %246 = vector.load %arg8[%245, %c0_90] : memref<16x256xf32, #tpu.memory_space<vmem>>, vector<2x256xf32>
    %247 = vector.extract_strided_slice %246 {offsets = [0, 0], sizes = [2, 128], strides = [1, 1]} : vector<2x256xf32> to vector<2x128xf32>
    %cst_91 = arith.constant dense<0.000000e+00> : vector<2x128xf32>
    %248 = tpu.matmul %241, %7, %cst_91 {dimension_numbers = #tpu.dot_dimension_numbers<[1], [0], [0], [1], [0, 0, 1, 1], [], []>, precision = #tpu.contract_precision<fp32>} : vector<2x32xf32>, vector<32x128xf32>, vector<2x128xf32> -> vector<2x128xf32>
    %249 = arith.addf %247, %248 : vector<2x128xf32>
    %250 = vector.extract_strided_slice %249 {offsets = [0, 0], sizes = [2, 32], strides = [1, 1]} : vector<2x128xf32> to vector<2x32xf32>
    %cst_92 = arith.constant 0.000000e+00 : f32
    %251 = vector.broadcast %cst_92 : f32 to vector<2x32xf32>
    %252 = arith.subf %251, %250 : vector<2x32xf32>
    %253 = math.exp %252 : vector<2x32xf32>
    %cst_93 = arith.constant 1.000000e+00 : f32
    %254 = vector.broadcast %cst_93 : f32 to vector<2x32xf32>
    %255 = arith.addf %254, %253 : vector<2x32xf32>
    %cst_94 = arith.constant 1.000000e+00 : f32
    %256 = vector.broadcast %cst_94 : f32 to vector<2x32xf32>
    %257 = arith.divf %256, %255 : vector<2x32xf32>
    %258 = vector.extract_strided_slice %249 {offsets = [0, 32], sizes = [2, 32], strides = [1, 1]} : vector<2x128xf32> to vector<2x32xf32>
    %cst_95 = arith.constant 0.000000e+00 : f32
    %259 = vector.broadcast %cst_95 : f32 to vector<2x32xf32>
    %260 = arith.subf %259, %258 : vector<2x32xf32>
    %261 = math.exp %260 : vector<2x32xf32>
    %cst_96 = arith.constant 1.000000e+00 : f32
    %262 = vector.broadcast %cst_96 : f32 to vector<2x32xf32>
    %263 = arith.addf %262, %261 : vector<2x32xf32>
    %cst_97 = arith.constant 1.000000e+00 : f32
    %264 = vector.broadcast %cst_97 : f32 to vector<2x32xf32>
    %265 = arith.divf %264, %263 : vector<2x32xf32>
    %266 = vector.extract_strided_slice %249 {offsets = [0, 64], sizes = [2, 32], strides = [1, 1]} : vector<2x128xf32> to vector<2x32xf32>
    %267 = math.tanh %266 : vector<2x32xf32>
    %268 = vector.extract_strided_slice %249 {offsets = [0, 96], sizes = [2, 32], strides = [1, 1]} : vector<2x128xf32> to vector<2x32xf32>
    %cst_98 = arith.constant 0.000000e+00 : f32
    %269 = vector.broadcast %cst_98 : f32 to vector<2x32xf32>
    %270 = arith.subf %269, %268 : vector<2x32xf32>
    %271 = math.exp %270 : vector<2x32xf32>
    %cst_99 = arith.constant 1.000000e+00 : f32
    %272 = vector.broadcast %cst_99 : f32 to vector<2x32xf32>
    %273 = arith.addf %272, %271 : vector<2x32xf32>
    %cst_100 = arith.constant 1.000000e+00 : f32
    %274 = vector.broadcast %cst_100 : f32 to vector<2x32xf32>
    %275 = arith.divf %274, %273 : vector<2x32xf32>
    %276 = arith.mulf %265, %239 : vector<2x32xf32>
    %277 = arith.mulf %257, %267 : vector<2x32xf32>
    %278 = arith.addf %276, %277 : vector<2x32xf32>
    %279 = math.tanh %278 : vector<2x32xf32>
    %280 = arith.mulf %275, %279 : vector<2x32xf32>
    %281 = arith.index_cast %244 : i32 to index
    %c0_101 = arith.constant 0 : index
    %282 = vector.load %arg9[%281, %c0_101] : memref<16x32xf32, #tpu.memory_space<vmem>>, vector<2x32xf32>
    tpu.vector_store %arg9[%281, %c0_101], %280 {strides = array<i32>} : memref<16x32xf32, #tpu.memory_space<vmem>>, vector<2x32xf32>,
    %c7_i32 = arith.constant 7 : i32
    %c2_i32_102 = arith.constant 2 : i32
    %283 = arith.muli %c7_i32, %c2_i32_102 : i32
    %284 = arith.index_cast %283 : i32 to index
    %c0_103 = arith.constant 0 : index
    %285 = vector.load %arg8[%284, %c0_103] : memref<16x256xf32, #tpu.memory_space<vmem>>, vector<2x256xf32>
    %286 = vector.extract_strided_slice %285 {offsets = [0, 0], sizes = [2, 128], strides = [1, 1]} : vector<2x256xf32> to vector<2x128xf32>
    %cst_104 = arith.constant dense<0.000000e+00> : vector<2x128xf32>
    %287 = tpu.matmul %280, %7, %cst_104 {dimension_numbers = #tpu.dot_dimension_numbers<[1], [0], [0], [1], [0, 0, 1, 1], [], []>, precision = #tpu.contract_precision<fp32>} : vector<2x32xf32>, vector<32x128xf32>, vector<2x128xf32> -> vector<2x128xf32>
    %288 = arith.addf %286, %287 : vector<2x128xf32>
    %289 = vector.extract_strided_slice %288 {offsets = [0, 0], sizes = [2, 32], strides = [1, 1]} : vector<2x128xf32> to vector<2x32xf32>
    %cst_105 = arith.constant 0.000000e+00 : f32
    %290 = vector.broadcast %cst_105 : f32 to vector<2x32xf32>
    %291 = arith.subf %290, %289 : vector<2x32xf32>
    %292 = math.exp %291 : vector<2x32xf32>
    %cst_106 = arith.constant 1.000000e+00 : f32
    %293 = vector.broadcast %cst_106 : f32 to vector<2x32xf32>
    %294 = arith.addf %293, %292 : vector<2x32xf32>
    %cst_107 = arith.constant 1.000000e+00 : f32
    %295 = vector.broadcast %cst_107 : f32 to vector<2x32xf32>
    %296 = arith.divf %295, %294 : vector<2x32xf32>
    %297 = vector.extract_strided_slice %288 {offsets = [0, 32], sizes = [2, 32], strides = [1, 1]} : vector<2x128xf32> to vector<2x32xf32>
    %cst_108 = arith.constant 0.000000e+00 : f32
    %298 = vector.broadcast %cst_108 : f32 to vector<2x32xf32>
    %299 = arith.subf %298, %297 : vector<2x32xf32>
    %300 = math.exp %299 : vector<2x32xf32>
    %cst_109 = arith.constant 1.000000e+00 : f32
    %301 = vector.broadcast %cst_109 : f32 to vector<2x32xf32>
    %302 = arith.addf %301, %300 : vector<2x32xf32>
    %cst_110 = arith.constant 1.000000e+00 : f32
    %303 = vector.broadcast %cst_110 : f32 to vector<2x32xf32>
    %304 = arith.divf %303, %302 : vector<2x32xf32>
    %305 = vector.extract_strided_slice %288 {offsets = [0, 64], sizes = [2, 32], strides = [1, 1]} : vector<2x128xf32> to vector<2x32xf32>
    %306 = math.tanh %305 : vector<2x32xf32>
    %307 = vector.extract_strided_slice %288 {offsets = [0, 96], sizes = [2, 32], strides = [1, 1]} : vector<2x128xf32> to vector<2x32xf32>
    %cst_111 = arith.constant 0.000000e+00 : f32
    %308 = vector.broadcast %cst_111 : f32 to vector<2x32xf32>
    %309 = arith.subf %308, %307 : vector<2x32xf32>
    %310 = math.exp %309 : vector<2x32xf32>
    %cst_112 = arith.constant 1.000000e+00 : f32
    %311 = vector.broadcast %cst_112 : f32 to vector<2x32xf32>
    %312 = arith.addf %311, %310 : vector<2x32xf32>
    %cst_113 = arith.constant 1.000000e+00 : f32
    %313 = vector.broadcast %cst_113 : f32 to vector<2x32xf32>
    %314 = arith.divf %313, %312 : vector<2x32xf32>
    %315 = arith.mulf %304, %278 : vector<2x32xf32>
    %316 = arith.mulf %296, %306 : vector<2x32xf32>
    %317 = arith.addf %315, %316 : vector<2x32xf32>
    %318 = math.tanh %317 : vector<2x32xf32>
    %319 = arith.mulf %314, %318 : vector<2x32xf32>
    %320 = arith.index_cast %283 : i32 to index
    %c0_114 = arith.constant 0 : index
    %321 = vector.load %arg9[%320, %c0_114] : memref<16x32xf32, #tpu.memory_space<vmem>>, vector<2x32xf32>
    tpu.vector_store %arg9[%320, %c0_114], %319 {strides = array<i32>} : memref<16x32xf32, #tpu.memory_space<vmem>>, vector<2x32xf32>,
    %c8_i32 = arith.constant 8 : i32
    %c0_115 = arith.constant 0 : index
    %c0_116 = arith.constant 0 : index
    %322 = vector.load %arg3[%c0_115, %c0_116] : memref<32x128xf32, #tpu.memory_space<vmem>>, vector<32x128xf32>
    %cst_117 = arith.constant 0.000000e+00 : f32
    %323 = vector.broadcast %cst_117 : f32 to vector<2x32xf32>
    %cst_118 = arith.constant 0.000000e+00 : f32
    %324 = vector.broadcast %cst_118 : f32 to vector<2x32xf32>
    %c0_i32_119 = arith.constant 0 : i32
    %c7_i32_120 = arith.constant 7 : i32
    %325 = arith.subi %c7_i32_120, %c0_i32_119 : i32
    %c2_i32_121 = arith.constant 2 : i32
    %326 = arith.muli %325, %c2_i32_121 : i32
    %327 = arith.index_cast %326 : i32 to index
    %c0_122 = arith.constant 0 : index
    %328 = vector.load %arg8[%327, %c0_122] : memref<16x256xf32, #tpu.memory_space<vmem>>, vector<2x256xf32>
    %329 = vector.extract_strided_slice %328 {offsets = [0, 128], sizes = [2, 128], strides = [1, 1]} : vector<2x256xf32> to vector<2x128xf32>
    %cst_123 = arith.constant dense<0.000000e+00> : vector<2x128xf32>
    %330 = tpu.matmul %323, %322, %cst_123 {dimension_numbers = #tpu.dot_dimension_numbers<[1], [0], [0], [1], [0, 0, 1, 1], [], []>, precision = #tpu.contract_precision<fp32>} : vector<2x32xf32>, vector<32x128xf32>, vector<2x128xf32> -> vector<2x128xf32>
    %331 = arith.addf %329, %330 : vector<2x128xf32>
    %332 = vector.extract_strided_slice %331 {offsets = [0, 0], sizes = [2, 32], strides = [1, 1]} : vector<2x128xf32> to vector<2x32xf32>
    %cst_124 = arith.constant 0.000000e+00 : f32
    %333 = vector.broadcast %cst_124 : f32 to vector<2x32xf32>
    %334 = arith.subf %333, %332 : vector<2x32xf32>
    %335 = math.exp %334 : vector<2x32xf32>
    %cst_125 = arith.constant 1.000000e+00 : f32
    %336 = vector.broadcast %cst_125 : f32 to vector<2x32xf32>
    %337 = arith.addf %336, %335 : vector<2x32xf32>
    %cst_126 = arith.constant 1.000000e+00 : f32
    %338 = vector.broadcast %cst_126 : f32 to vector<2x32xf32>
    %339 = arith.divf %338, %337 : vector<2x32xf32>
    %340 = vector.extract_strided_slice %331 {offsets = [0, 32], sizes = [2, 32], strides = [1, 1]} : vector<2x128xf32> to vector<2x32xf32>
    %cst_127 = arith.constant 0.000000e+00 : f32
    %341 = vector.broadcast %cst_127 : f32 to vector<2x32xf32>
    %342 = arith.subf %341, %340 : vector<2x32xf32>
    %343 = math.exp %342 : vector<2x32xf32>
    %cst_128 = arith.constant 1.000000e+00 : f32
    %344 = vector.broadcast %cst_128 : f32 to vector<2x32xf32>
    %345 = arith.addf %344, %343 : vector<2x32xf32>
    %cst_129 = arith.constant 1.000000e+00 : f32
    %346 = vector.broadcast %cst_129 : f32 to vector<2x32xf32>
    %347 = arith.divf %346, %345 : vector<2x32xf32>
    %348 = vector.extract_strided_slice %331 {offsets = [0, 64], sizes = [2, 32], strides = [1, 1]} : vector<2x128xf32> to vector<2x32xf32>
    %349 = math.tanh %348 : vector<2x32xf32>
    %350 = vector.extract_strided_slice %331 {offsets = [0, 96], sizes = [2, 32], strides = [1, 1]} : vector<2x128xf32> to vector<2x32xf32>
    %cst_130 = arith.constant 0.000000e+00 : f32
    %351 = vector.broadcast %cst_130 : f32 to vector<2x32xf32>
    %352 = arith.subf %351, %350 : vector<2x32xf32>
    %353 = math.exp %352 : vector<2x32xf32>
    %cst_131 = arith.constant 1.000000e+00 : f32
    %354 = vector.broadcast %cst_131 : f32 to vector<2x32xf32>
    %355 = arith.addf %354, %353 : vector<2x32xf32>
    %cst_132 = arith.constant 1.000000e+00 : f32
    %356 = vector.broadcast %cst_132 : f32 to vector<2x32xf32>
    %357 = arith.divf %356, %355 : vector<2x32xf32>
    %358 = arith.mulf %347, %324 : vector<2x32xf32>
    %359 = arith.mulf %339, %349 : vector<2x32xf32>
    %360 = arith.addf %358, %359 : vector<2x32xf32>
    %361 = math.tanh %360 : vector<2x32xf32>
    %362 = arith.mulf %357, %361 : vector<2x32xf32>
    %363 = arith.index_cast %326 : i32 to index
    %c0_133 = arith.constant 0 : index
    %364 = vector.load %arg10[%363, %c0_133] : memref<16x32xf32, #tpu.memory_space<vmem>>, vector<2x32xf32>
    tpu.vector_store %arg10[%363, %c0_133], %362 {strides = array<i32>} : memref<16x32xf32, #tpu.memory_space<vmem>>, vector<2x32xf32>,
    %c1_i32_134 = arith.constant 1 : i32
    %c7_i32_135 = arith.constant 7 : i32
    %365 = arith.subi %c7_i32_135, %c1_i32_134 : i32
    %c2_i32_136 = arith.constant 2 : i32
    %366 = arith.muli %365, %c2_i32_136 : i32
    %367 = arith.index_cast %366 : i32 to index
    %c0_137 = arith.constant 0 : index
    %368 = vector.load %arg8[%367, %c0_137] : memref<16x256xf32, #tpu.memory_space<vmem>>, vector<2x256xf32>
    %369 = vector.extract_strided_slice %368 {offsets = [0, 128], sizes = [2, 128], strides = [1, 1]} : vector<2x256xf32> to vector<2x128xf32>
    %cst_138 = arith.constant dense<0.000000e+00> : vector<2x128xf32>
    %370 = tpu.matmul %362, %322, %cst_138 {dimension_numbers = #tpu.dot_dimension_numbers<[1], [0], [0], [1], [0, 0, 1, 1], [], []>, precision = #tpu.contract_precision<fp32>} : vector<2x32xf32>, vector<32x128xf32>, vector<2x128xf32> -> vector<2x128xf32>
    %371 = arith.addf %369, %370 : vector<2x128xf32>
    %372 = vector.extract_strided_slice %371 {offsets = [0, 0], sizes = [2, 32], strides = [1, 1]} : vector<2x128xf32> to vector<2x32xf32>
    %cst_139 = arith.constant 0.000000e+00 : f32
    %373 = vector.broadcast %cst_139 : f32 to vector<2x32xf32>
    %374 = arith.subf %373, %372 : vector<2x32xf32>
    %375 = math.exp %374 : vector<2x32xf32>
    %cst_140 = arith.constant 1.000000e+00 : f32
    %376 = vector.broadcast %cst_140 : f32 to vector<2x32xf32>
    %377 = arith.addf %376, %375 : vector<2x32xf32>
    %cst_141 = arith.constant 1.000000e+00 : f32
    %378 = vector.broadcast %cst_141 : f32 to vector<2x32xf32>
    %379 = arith.divf %378, %377 : vector<2x32xf32>
    %380 = vector.extract_strided_slice %371 {offsets = [0, 32], sizes = [2, 32], strides = [1, 1]} : vector<2x128xf32> to vector<2x32xf32>
    %cst_142 = arith.constant 0.000000e+00 : f32
    %381 = vector.broadcast %cst_142 : f32 to vector<2x32xf32>
    %382 = arith.subf %381, %380 : vector<2x32xf32>
    %383 = math.exp %382 : vector<2x32xf32>
    %cst_143 = arith.constant 1.000000e+00 : f32
    %384 = vector.broadcast %cst_143 : f32 to vector<2x32xf32>
    %385 = arith.addf %384, %383 : vector<2x32xf32>
    %cst_144 = arith.constant 1.000000e+00 : f32
    %386 = vector.broadcast %cst_144 : f32 to vector<2x32xf32>
    %387 = arith.divf %386, %385 : vector<2x32xf32>
    %388 = vector.extract_strided_slice %371 {offsets = [0, 64], sizes = [2, 32], strides = [1, 1]} : vector<2x128xf32> to vector<2x32xf32>
    %389 = math.tanh %388 : vector<2x32xf32>
    %390 = vector.extract_strided_slice %371 {offsets = [0, 96], sizes = [2, 32], strides = [1, 1]} : vector<2x128xf32> to vector<2x32xf32>
    %cst_145 = arith.constant 0.000000e+00 : f32
    %391 = vector.broadcast %cst_145 : f32 to vector<2x32xf32>
    %392 = arith.subf %391, %390 : vector<2x32xf32>
    %393 = math.exp %392 : vector<2x32xf32>
    %cst_146 = arith.constant 1.000000e+00 : f32
    %394 = vector.broadcast %cst_146 : f32 to vector<2x32xf32>
    %395 = arith.addf %394, %393 : vector<2x32xf32>
    %cst_147 = arith.constant 1.000000e+00 : f32
    %396 = vector.broadcast %cst_147 : f32 to vector<2x32xf32>
    %397 = arith.divf %396, %395 : vector<2x32xf32>
    %398 = arith.mulf %387, %360 : vector<2x32xf32>
    %399 = arith.mulf %379, %389 : vector<2x32xf32>
    %400 = arith.addf %398, %399 : vector<2x32xf32>
    %401 = math.tanh %400 : vector<2x32xf32>
    %402 = arith.mulf %397, %401 : vector<2x32xf32>
    %403 = arith.index_cast %366 : i32 to index
    %c0_148 = arith.constant 0 : index
    %404 = vector.load %arg10[%403, %c0_148] : memref<16x32xf32, #tpu.memory_space<vmem>>, vector<2x32xf32>
    tpu.vector_store %arg10[%403, %c0_148], %402 {strides = array<i32>} : memref<16x32xf32, #tpu.memory_space<vmem>>, vector<2x32xf32>,
    %c2_i32_149 = arith.constant 2 : i32
    %c7_i32_150 = arith.constant 7 : i32
    %405 = arith.subi %c7_i32_150, %c2_i32_149 : i32
    %c2_i32_151 = arith.constant 2 : i32
    %406 = arith.muli %405, %c2_i32_151 : i32
    %407 = arith.index_cast %406 : i32 to index
    %c0_152 = arith.constant 0 : index
    %408 = vector.load %arg8[%407, %c0_152] : memref<16x256xf32, #tpu.memory_space<vmem>>, vector<2x256xf32>
    %409 = vector.extract_strided_slice %408 {offsets = [0, 128], sizes = [2, 128], strides = [1, 1]} : vector<2x256xf32> to vector<2x128xf32>
    %cst_153 = arith.constant dense<0.000000e+00> : vector<2x128xf32>
    %410 = tpu.matmul %402, %322, %cst_153 {dimension_numbers = #tpu.dot_dimension_numbers<[1], [0], [0], [1], [0, 0, 1, 1], [], []>, precision = #tpu.contract_precision<fp32>} : vector<2x32xf32>, vector<32x128xf32>, vector<2x128xf32> -> vector<2x128xf32>
    %411 = arith.addf %409, %410 : vector<2x128xf32>
    %412 = vector.extract_strided_slice %411 {offsets = [0, 0], sizes = [2, 32], strides = [1, 1]} : vector<2x128xf32> to vector<2x32xf32>
    %cst_154 = arith.constant 0.000000e+00 : f32
    %413 = vector.broadcast %cst_154 : f32 to vector<2x32xf32>
    %414 = arith.subf %413, %412 : vector<2x32xf32>
    %415 = math.exp %414 : vector<2x32xf32>
    %cst_155 = arith.constant 1.000000e+00 : f32
    %416 = vector.broadcast %cst_155 : f32 to vector<2x32xf32>
    %417 = arith.addf %416, %415 : vector<2x32xf32>
    %cst_156 = arith.constant 1.000000e+00 : f32
    %418 = vector.broadcast %cst_156 : f32 to vector<2x32xf32>
    %419 = arith.divf %418, %417 : vector<2x32xf32>
    %420 = vector.extract_strided_slice %411 {offsets = [0, 32], sizes = [2, 32], strides = [1, 1]} : vector<2x128xf32> to vector<2x32xf32>
    %cst_157 = arith.constant 0.000000e+00 : f32
    %421 = vector.broadcast %cst_157 : f32 to vector<2x32xf32>
    %422 = arith.subf %421, %420 : vector<2x32xf32>
    %423 = math.exp %422 : vector<2x32xf32>
    %cst_158 = arith.constant 1.000000e+00 : f32
    %424 = vector.broadcast %cst_158 : f32 to vector<2x32xf32>
    %425 = arith.addf %424, %423 : vector<2x32xf32>
    %cst_159 = arith.constant 1.000000e+00 : f32
    %426 = vector.broadcast %cst_159 : f32 to vector<2x32xf32>
    %427 = arith.divf %426, %425 : vector<2x32xf32>
    %428 = vector.extract_strided_slice %411 {offsets = [0, 64], sizes = [2, 32], strides = [1, 1]} : vector<2x128xf32> to vector<2x32xf32>
    %429 = math.tanh %428 : vector<2x32xf32>
    %430 = vector.extract_strided_slice %411 {offsets = [0, 96], sizes = [2, 32], strides = [1, 1]} : vector<2x128xf32> to vector<2x32xf32>
    %cst_160 = arith.constant 0.000000e+00 : f32
    %431 = vector.broadcast %cst_160 : f32 to vector<2x32xf32>
    %432 = arith.subf %431, %430 : vector<2x32xf32>
    %433 = math.exp %432 : vector<2x32xf32>
    %cst_161 = arith.constant 1.000000e+00 : f32
    %434 = vector.broadcast %cst_161 : f32 to vector<2x32xf32>
    %435 = arith.addf %434, %433 : vector<2x32xf32>
    %cst_162 = arith.constant 1.000000e+00 : f32
    %436 = vector.broadcast %cst_162 : f32 to vector<2x32xf32>
    %437 = arith.divf %436, %435 : vector<2x32xf32>
    %438 = arith.mulf %427, %400 : vector<2x32xf32>
    %439 = arith.mulf %419, %429 : vector<2x32xf32>
    %440 = arith.addf %438, %439 : vector<2x32xf32>
    %441 = math.tanh %440 : vector<2x32xf32>
    %442 = arith.mulf %437, %441 : vector<2x32xf32>
    %443 = arith.index_cast %406 : i32 to index
    %c0_163 = arith.constant 0 : index
    %444 = vector.load %arg10[%443, %c0_163] : memref<16x32xf32, #tpu.memory_space<vmem>>, vector<2x32xf32>
    tpu.vector_store %arg10[%443, %c0_163], %442 {strides = array<i32>} : memref<16x32xf32, #tpu.memory_space<vmem>>, vector<2x32xf32>,
    %c3_i32_164 = arith.constant 3 : i32
    %c7_i32_165 = arith.constant 7 : i32
    %445 = arith.subi %c7_i32_165, %c3_i32_164 : i32
    %c2_i32_166 = arith.constant 2 : i32
    %446 = arith.muli %445, %c2_i32_166 : i32
    %447 = arith.index_cast %446 : i32 to index
    %c0_167 = arith.constant 0 : index
    %448 = vector.load %arg8[%447, %c0_167] : memref<16x256xf32, #tpu.memory_space<vmem>>, vector<2x256xf32>
    %449 = vector.extract_strided_slice %448 {offsets = [0, 128], sizes = [2, 128], strides = [1, 1]} : vector<2x256xf32> to vector<2x128xf32>
    %cst_168 = arith.constant dense<0.000000e+00> : vector<2x128xf32>
    %450 = tpu.matmul %442, %322, %cst_168 {dimension_numbers = #tpu.dot_dimension_numbers<[1], [0], [0], [1], [0, 0, 1, 1], [], []>, precision = #tpu.contract_precision<fp32>} : vector<2x32xf32>, vector<32x128xf32>, vector<2x128xf32> -> vector<2x128xf32>
    %451 = arith.addf %449, %450 : vector<2x128xf32>
    %452 = vector.extract_strided_slice %451 {offsets = [0, 0], sizes = [2, 32], strides = [1, 1]} : vector<2x128xf32> to vector<2x32xf32>
    %cst_169 = arith.constant 0.000000e+00 : f32
    %453 = vector.broadcast %cst_169 : f32 to vector<2x32xf32>
    %454 = arith.subf %453, %452 : vector<2x32xf32>
    %455 = math.exp %454 : vector<2x32xf32>
    %cst_170 = arith.constant 1.000000e+00 : f32
    %456 = vector.broadcast %cst_170 : f32 to vector<2x32xf32>
    %457 = arith.addf %456, %455 : vector<2x32xf32>
    %cst_171 = arith.constant 1.000000e+00 : f32
    %458 = vector.broadcast %cst_171 : f32 to vector<2x32xf32>
    %459 = arith.divf %458, %457 : vector<2x32xf32>
    %460 = vector.extract_strided_slice %451 {offsets = [0, 32], sizes = [2, 32], strides = [1, 1]} : vector<2x128xf32> to vector<2x32xf32>
    %cst_172 = arith.constant 0.000000e+00 : f32
    %461 = vector.broadcast %cst_172 : f32 to vector<2x32xf32>
    %462 = arith.subf %461, %460 : vector<2x32xf32>
    %463 = math.exp %462 : vector<2x32xf32>
    %cst_173 = arith.constant 1.000000e+00 : f32
    %464 = vector.broadcast %cst_173 : f32 to vector<2x32xf32>
    %465 = arith.addf %464, %463 : vector<2x32xf32>
    %cst_174 = arith.constant 1.000000e+00 : f32
    %466 = vector.broadcast %cst_174 : f32 to vector<2x32xf32>
    %467 = arith.divf %466, %465 : vector<2x32xf32>
    %468 = vector.extract_strided_slice %451 {offsets = [0, 64], sizes = [2, 32], strides = [1, 1]} : vector<2x128xf32> to vector<2x32xf32>
    %469 = math.tanh %468 : vector<2x32xf32>
    %470 = vector.extract_strided_slice %451 {offsets = [0, 96], sizes = [2, 32], strides = [1, 1]} : vector<2x128xf32> to vector<2x32xf32>
    %cst_175 = arith.constant 0.000000e+00 : f32
    %471 = vector.broadcast %cst_175 : f32 to vector<2x32xf32>
    %472 = arith.subf %471, %470 : vector<2x32xf32>
    %473 = math.exp %472 : vector<2x32xf32>
    %cst_176 = arith.constant 1.000000e+00 : f32
    %474 = vector.broadcast %cst_176 : f32 to vector<2x32xf32>
    %475 = arith.addf %474, %473 : vector<2x32xf32>
    %cst_177 = arith.constant 1.000000e+00 : f32
    %476 = vector.broadcast %cst_177 : f32 to vector<2x32xf32>
    %477 = arith.divf %476, %475 : vector<2x32xf32>
    %478 = arith.mulf %467, %440 : vector<2x32xf32>
    %479 = arith.mulf %459, %469 : vector<2x32xf32>
    %480 = arith.addf %478, %479 : vector<2x32xf32>
    %481 = math.tanh %480 : vector<2x32xf32>
    %482 = arith.mulf %477, %481 : vector<2x32xf32>
    %483 = arith.index_cast %446 : i32 to index
    %c0_178 = arith.constant 0 : index
    %484 = vector.load %arg10[%483, %c0_178] : memref<16x32xf32, #tpu.memory_space<vmem>>, vector<2x32xf32>
    tpu.vector_store %arg10[%483, %c0_178], %482 {strides = array<i32>} : memref<16x32xf32, #tpu.memory_space<vmem>>, vector<2x32xf32>,
    %c4_i32_179 = arith.constant 4 : i32
    %c7_i32_180 = arith.constant 7 : i32
    %485 = arith.subi %c7_i32_180, %c4_i32_179 : i32
    %c2_i32_181 = arith.constant 2 : i32
    %486 = arith.muli %485, %c2_i32_181 : i32
    %487 = arith.index_cast %486 : i32 to index
    %c0_182 = arith.constant 0 : index
    %488 = vector.load %arg8[%487, %c0_182] : memref<16x256xf32, #tpu.memory_space<vmem>>, vector<2x256xf32>
    %489 = vector.extract_strided_slice %488 {offsets = [0, 128], sizes = [2, 128], strides = [1, 1]} : vector<2x256xf32> to vector<2x128xf32>
    %cst_183 = arith.constant dense<0.000000e+00> : vector<2x128xf32>
    %490 = tpu.matmul %482, %322, %cst_183 {dimension_numbers = #tpu.dot_dimension_numbers<[1], [0], [0], [1], [0, 0, 1, 1], [], []>, precision = #tpu.contract_precision<fp32>} : vector<2x32xf32>, vector<32x128xf32>, vector<2x128xf32> -> vector<2x128xf32>
    %491 = arith.addf %489, %490 : vector<2x128xf32>
    %492 = vector.extract_strided_slice %491 {offsets = [0, 0], sizes = [2, 32], strides = [1, 1]} : vector<2x128xf32> to vector<2x32xf32>
    %cst_184 = arith.constant 0.000000e+00 : f32
    %493 = vector.broadcast %cst_184 : f32 to vector<2x32xf32>
    %494 = arith.subf %493, %492 : vector<2x32xf32>
    %495 = math.exp %494 : vector<2x32xf32>
    %cst_185 = arith.constant 1.000000e+00 : f32
    %496 = vector.broadcast %cst_185 : f32 to vector<2x32xf32>
    %497 = arith.addf %496, %495 : vector<2x32xf32>
    %cst_186 = arith.constant 1.000000e+00 : f32
    %498 = vector.broadcast %cst_186 : f32 to vector<2x32xf32>
    %499 = arith.divf %498, %497 : vector<2x32xf32>
    %500 = vector.extract_strided_slice %491 {offsets = [0, 32], sizes = [2, 32], strides = [1, 1]} : vector<2x128xf32> to vector<2x32xf32>
    %cst_187 = arith.constant 0.000000e+00 : f32
    %501 = vector.broadcast %cst_187 : f32 to vector<2x32xf32>
    %502 = arith.subf %501, %500 : vector<2x32xf32>
    %503 = math.exp %502 : vector<2x32xf32>
    %cst_188 = arith.constant 1.000000e+00 : f32
    %504 = vector.broadcast %cst_188 : f32 to vector<2x32xf32>
    %505 = arith.addf %504, %503 : vector<2x32xf32>
    %cst_189 = arith.constant 1.000000e+00 : f32
    %506 = vector.broadcast %cst_189 : f32 to vector<2x32xf32>
    %507 = arith.divf %506, %505 : vector<2x32xf32>
    %508 = vector.extract_strided_slice %491 {offsets = [0, 64], sizes = [2, 32], strides = [1, 1]} : vector<2x128xf32> to vector<2x32xf32>
    %509 = math.tanh %508 : vector<2x32xf32>
    %510 = vector.extract_strided_slice %491 {offsets = [0, 96], sizes = [2, 32], strides = [1, 1]} : vector<2x128xf32> to vector<2x32xf32>
    %cst_190 = arith.constant 0.000000e+00 : f32
    %511 = vector.broadcast %cst_190 : f32 to vector<2x32xf32>
    %512 = arith.subf %511, %510 : vector<2x32xf32>
    %513 = math.exp %512 : vector<2x32xf32>
    %cst_191 = arith.constant 1.000000e+00 : f32
    %514 = vector.broadcast %cst_191 : f32 to vector<2x32xf32>
    %515 = arith.addf %514, %513 : vector<2x32xf32>
    %cst_192 = arith.constant 1.000000e+00 : f32
    %516 = vector.broadcast %cst_192 : f32 to vector<2x32xf32>
    %517 = arith.divf %516, %515 : vector<2x32xf32>
    %518 = arith.mulf %507, %480 : vector<2x32xf32>
    %519 = arith.mulf %499, %509 : vector<2x32xf32>
    %520 = arith.addf %518, %519 : vector<2x32xf32>
    %521 = math.tanh %520 : vector<2x32xf32>
    %522 = arith.mulf %517, %521 : vector<2x32xf32>
    %523 = arith.index_cast %486 : i32 to index
    %c0_193 = arith.constant 0 : index
    %524 = vector.load %arg10[%523, %c0_193] : memref<16x32xf32, #tpu.memory_space<vmem>>, vector<2x32xf32>
    tpu.vector_store %arg10[%523, %c0_193], %522 {strides = array<i32>} : memref<16x32xf32, #tpu.memory_space<vmem>>, vector<2x32xf32>,
    %c5_i32_194 = arith.constant 5 : i32
    %c7_i32_195 = arith.constant 7 : i32
    %525 = arith.subi %c7_i32_195, %c5_i32_194 : i32
    %c2_i32_196 = arith.constant 2 : i32
    %526 = arith.muli %525, %c2_i32_196 : i32
    %527 = arith.index_cast %526 : i32 to index
    %c0_197 = arith.constant 0 : index
    %528 = vector.load %arg8[%527, %c0_197] : memref<16x256xf32, #tpu.memory_space<vmem>>, vector<2x256xf32>
    %529 = vector.extract_strided_slice %528 {offsets = [0, 128], sizes = [2, 128], strides = [1, 1]} : vector<2x256xf32> to vector<2x128xf32>
    %cst_198 = arith.constant dense<0.000000e+00> : vector<2x128xf32>
    %530 = tpu.matmul %522, %322, %cst_198 {dimension_numbers = #tpu.dot_dimension_numbers<[1], [0], [0], [1], [0, 0, 1, 1], [], []>, precision = #tpu.contract_precision<fp32>} : vector<2x32xf32>, vector<32x128xf32>, vector<2x128xf32> -> vector<2x128xf32>
    %531 = arith.addf %529, %530 : vector<2x128xf32>
    %532 = vector.extract_strided_slice %531 {offsets = [0, 0], sizes = [2, 32], strides = [1, 1]} : vector<2x128xf32> to vector<2x32xf32>
    %cst_199 = arith.constant 0.000000e+00 : f32
    %533 = vector.broadcast %cst_199 : f32 to vector<2x32xf32>
    %534 = arith.subf %533, %532 : vector<2x32xf32>
    %535 = math.exp %534 : vector<2x32xf32>
    %cst_200 = arith.constant 1.000000e+00 : f32
    %536 = vector.broadcast %cst_200 : f32 to vector<2x32xf32>
    %537 = arith.addf %536, %535 : vector<2x32xf32>
    %cst_201 = arith.constant 1.000000e+00 : f32
    %538 = vector.broadcast %cst_201 : f32 to vector<2x32xf32>
    %539 = arith.divf %538, %537 : vector<2x32xf32>
    %540 = vector.extract_strided_slice %531 {offsets = [0, 32], sizes = [2, 32], strides = [1, 1]} : vector<2x128xf32> to vector<2x32xf32>
    %cst_202 = arith.constant 0.000000e+00 : f32
    %541 = vector.broadcast %cst_202 : f32 to vector<2x32xf32>
    %542 = arith.subf %541, %540 : vector<2x32xf32>
    %543 = math.exp %542 : vector<2x32xf32>
    %cst_203 = arith.constant 1.000000e+00 : f32
    %544 = vector.broadcast %cst_203 : f32 to vector<2x32xf32>
    %545 = arith.addf %544, %543 : vector<2x32xf32>
    %cst_204 = arith.constant 1.000000e+00 : f32
    %546 = vector.broadcast %cst_204 : f32 to vector<2x32xf32>
    %547 = arith.divf %546, %545 : vector<2x32xf32>
    %548 = vector.extract_strided_slice %531 {offsets = [0, 64], sizes = [2, 32], strides = [1, 1]} : vector<2x128xf32> to vector<2x32xf32>
    %549 = math.tanh %548 : vector<2x32xf32>
    %550 = vector.extract_strided_slice %531 {offsets = [0, 96], sizes = [2, 32], strides = [1, 1]} : vector<2x128xf32> to vector<2x32xf32>
    %cst_205 = arith.constant 0.000000e+00 : f32
    %551 = vector.broadcast %cst_205 : f32 to vector<2x32xf32>
    %552 = arith.subf %551, %550 : vector<2x32xf32>
    %553 = math.exp %552 : vector<2x32xf32>
    %cst_206 = arith.constant 1.000000e+00 : f32
    %554 = vector.broadcast %cst_206 : f32 to vector<2x32xf32>
    %555 = arith.addf %554, %553 : vector<2x32xf32>
    %cst_207 = arith.constant 1.000000e+00 : f32
    %556 = vector.broadcast %cst_207 : f32 to vector<2x32xf32>
    %557 = arith.divf %556, %555 : vector<2x32xf32>
    %558 = arith.mulf %547, %520 : vector<2x32xf32>
    %559 = arith.mulf %539, %549 : vector<2x32xf32>
    %560 = arith.addf %558, %559 : vector<2x32xf32>
    %561 = math.tanh %560 : vector<2x32xf32>
    %562 = arith.mulf %557, %561 : vector<2x32xf32>
    %563 = arith.index_cast %526 : i32 to index
    %c0_208 = arith.constant 0 : index
    %564 = vector.load %arg10[%563, %c0_208] : memref<16x32xf32, #tpu.memory_space<vmem>>, vector<2x32xf32>
    tpu.vector_store %arg10[%563, %c0_208], %562 {strides = array<i32>} : memref<16x32xf32, #tpu.memory_space<vmem>>, vector<2x32xf32>,
    %c6_i32_209 = arith.constant 6 : i32
    %c7_i32_210 = arith.constant 7 : i32
    %565 = arith.subi %c7_i32_210, %c6_i32_209 : i32
    %c2_i32_211 = arith.constant 2 : i32
    %566 = arith.muli %565, %c2_i32_211 : i32
    %567 = arith.index_cast %566 : i32 to index
    %c0_212 = arith.constant 0 : index
    %568 = vector.load %arg8[%567, %c0_212] : memref<16x256xf32, #tpu.memory_space<vmem>>, vector<2x256xf32>
    %569 = vector.extract_strided_slice %568 {offsets = [0, 128], sizes = [2, 128], strides = [1, 1]} : vector<2x256xf32> to vector<2x128xf32>
    %cst_213 = arith.constant dense<0.000000e+00> : vector<2x128xf32>
    %570 = tpu.matmul %562, %322, %cst_213 {dimension_numbers = #tpu.dot_dimension_numbers<[1], [0], [0], [1], [0, 0, 1, 1], [], []>, precision = #tpu.contract_precision<fp32>} : vector<2x32xf32>, vector<32x128xf32>, vector<2x128xf32> -> vector<2x128xf32>
    %571 = arith.addf %569, %570 : vector<2x128xf32>
    %572 = vector.extract_strided_slice %571 {offsets = [0, 0], sizes = [2, 32], strides = [1, 1]} : vector<2x128xf32> to vector<2x32xf32>
    %cst_214 = arith.constant 0.000000e+00 : f32
    %573 = vector.broadcast %cst_214 : f32 to vector<2x32xf32>
    %574 = arith.subf %573, %572 : vector<2x32xf32>
    %575 = math.exp %574 : vector<2x32xf32>
    %cst_215 = arith.constant 1.000000e+00 : f32
    %576 = vector.broadcast %cst_215 : f32 to vector<2x32xf32>
    %577 = arith.addf %576, %575 : vector<2x32xf32>
    %cst_216 = arith.constant 1.000000e+00 : f32
    %578 = vector.broadcast %cst_216 : f32 to vector<2x32xf32>
    %579 = arith.divf %578, %577 : vector<2x32xf32>
    %580 = vector.extract_strided_slice %571 {offsets = [0, 32], sizes = [2, 32], strides = [1, 1]} : vector<2x128xf32> to vector<2x32xf32>
    %cst_217 = arith.constant 0.000000e+00 : f32
    %581 = vector.broadcast %cst_217 : f32 to vector<2x32xf32>
    %582 = arith.subf %581, %580 : vector<2x32xf32>
    %583 = math.exp %582 : vector<2x32xf32>
    %cst_218 = arith.constant 1.000000e+00 : f32
    %584 = vector.broadcast %cst_218 : f32 to vector<2x32xf32>
    %585 = arith.addf %584, %583 : vector<2x32xf32>
    %cst_219 = arith.constant 1.000000e+00 : f32
    %586 = vector.broadcast %cst_219 : f32 to vector<2x32xf32>
    %587 = arith.divf %586, %585 : vector<2x32xf32>
    %588 = vector.extract_strided_slice %571 {offsets = [0, 64], sizes = [2, 32], strides = [1, 1]} : vector<2x128xf32> to vector<2x32xf32>
    %589 = math.tanh %588 : vector<2x32xf32>
    %590 = vector.extract_strided_slice %571 {offsets = [0, 96], sizes = [2, 32], strides = [1, 1]} : vector<2x128xf32> to vector<2x32xf32>
    %cst_220 = arith.constant 0.000000e+00 : f32
    %591 = vector.broadcast %cst_220 : f32 to vector<2x32xf32>
    %592 = arith.subf %591, %590 : vector<2x32xf32>
    %593 = math.exp %592 : vector<2x32xf32>
    %cst_221 = arith.constant 1.000000e+00 : f32
    %594 = vector.broadcast %cst_221 : f32 to vector<2x32xf32>
    %595 = arith.addf %594, %593 : vector<2x32xf32>
    %cst_222 = arith.constant 1.000000e+00 : f32
    %596 = vector.broadcast %cst_222 : f32 to vector<2x32xf32>
    %597 = arith.divf %596, %595 : vector<2x32xf32>
    %598 = arith.mulf %587, %560 : vector<2x32xf32>
    %599 = arith.mulf %579, %589 : vector<2x32xf32>
    %600 = arith.addf %598, %599 : vector<2x32xf32>
    %601 = math.tanh %600 : vector<2x32xf32>
    %602 = arith.mulf %597, %601 : vector<2x32xf32>
    %603 = arith.index_cast %566 : i32 to index
    %c0_223 = arith.constant 0 : index
    %604 = vector.load %arg10[%603, %c0_223] : memref<16x32xf32, #tpu.memory_space<vmem>>, vector<2x32xf32>
    tpu.vector_store %arg10[%603, %c0_223], %602 {strides = array<i32>} : memref<16x32xf32, #tpu.memory_space<vmem>>, vector<2x32xf32>,
    %c7_i32_224 = arith.constant 7 : i32
    %c7_i32_225 = arith.constant 7 : i32
    %605 = arith.subi %c7_i32_225, %c7_i32_224 : i32
    %c2_i32_226 = arith.constant 2 : i32
    %606 = arith.muli %605, %c2_i32_226 : i32
    %607 = arith.index_cast %606 : i32 to index
    %c0_227 = arith.constant 0 : index
    %608 = vector.load %arg8[%607, %c0_227] : memref<16x256xf32, #tpu.memory_space<vmem>>, vector<2x256xf32>
    %609 = vector.extract_strided_slice %608 {offsets = [0, 128], sizes = [2, 128], strides = [1, 1]} : vector<2x256xf32> to vector<2x128xf32>
    %cst_228 = arith.constant dense<0.000000e+00> : vector<2x128xf32>
    %610 = tpu.matmul %602, %322, %cst_228 {dimension_numbers = #tpu.dot_dimension_numbers<[1], [0], [0], [1], [0, 0, 1, 1], [], []>, precision = #tpu.contract_precision<fp32>} : vector<2x32xf32>, vector<32x128xf32>, vector<2x128xf32> -> vector<2x128xf32>
    %611 = arith.addf %609, %610 : vector<2x128xf32>
    %612 = vector.extract_strided_slice %611 {offsets = [0, 0], sizes = [2, 32], strides = [1, 1]} : vector<2x128xf32> to vector<2x32xf32>
    %cst_229 = arith.constant 0.000000e+00 : f32
    %613 = vector.broadcast %cst_229 : f32 to vector<2x32xf32>
    %614 = arith.subf %613, %612 : vector<2x32xf32>
    %615 = math.exp %614 : vector<2x32xf32>
    %cst_230 = arith.constant 1.000000e+00 : f32
    %616 = vector.broadcast %cst_230 : f32 to vector<2x32xf32>
    %617 = arith.addf %616, %615 : vector<2x32xf32>
    %cst_231 = arith.constant 1.000000e+00 : f32
    %618 = vector.broadcast %cst_231 : f32 to vector<2x32xf32>
    %619 = arith.divf %618, %617 : vector<2x32xf32>
    %620 = vector.extract_strided_slice %611 {offsets = [0, 32], sizes = [2, 32], strides = [1, 1]} : vector<2x128xf32> to vector<2x32xf32>
    %cst_232 = arith.constant 0.000000e+00 : f32
    %621 = vector.broadcast %cst_232 : f32 to vector<2x32xf32>
    %622 = arith.subf %621, %620 : vector<2x32xf32>
    %623 = math.exp %622 : vector<2x32xf32>
    %cst_233 = arith.constant 1.000000e+00 : f32
    %624 = vector.broadcast %cst_233 : f32 to vector<2x32xf32>
    %625 = arith.addf %624, %623 : vector<2x32xf32>
    %cst_234 = arith.constant 1.000000e+00 : f32
    %626 = vector.broadcast %cst_234 : f32 to vector<2x32xf32>
    %627 = arith.divf %626, %625 : vector<2x32xf32>
    %628 = vector.extract_strided_slice %611 {offsets = [0, 64], sizes = [2, 32], strides = [1, 1]} : vector<2x128xf32> to vector<2x32xf32>
    %629 = math.tanh %628 : vector<2x32xf32>
    %630 = vector.extract_strided_slice %611 {offsets = [0, 96], sizes = [2, 32], strides = [1, 1]} : vector<2x128xf32> to vector<2x32xf32>
    %cst_235 = arith.constant 0.000000e+00 : f32
    %631 = vector.broadcast %cst_235 : f32 to vector<2x32xf32>
    %632 = arith.subf %631, %630 : vector<2x32xf32>
    %633 = math.exp %632 : vector<2x32xf32>
    %cst_236 = arith.constant 1.000000e+00 : f32
    %634 = vector.broadcast %cst_236 : f32 to vector<2x32xf32>
    %635 = arith.addf %634, %633 : vector<2x32xf32>
    %cst_237 = arith.constant 1.000000e+00 : f32
    %636 = vector.broadcast %cst_237 : f32 to vector<2x32xf32>
    %637 = arith.divf %636, %635 : vector<2x32xf32>
    %638 = arith.mulf %627, %600 : vector<2x32xf32>
    %639 = arith.mulf %619, %629 : vector<2x32xf32>
    %640 = arith.addf %638, %639 : vector<2x32xf32>
    %641 = math.tanh %640 : vector<2x32xf32>
    %642 = arith.mulf %637, %641 : vector<2x32xf32>
    %643 = arith.index_cast %606 : i32 to index
    %c0_238 = arith.constant 0 : index
    %644 = vector.load %arg10[%643, %c0_238] : memref<16x32xf32, #tpu.memory_space<vmem>>, vector<2x32xf32>
    tpu.vector_store %arg10[%643, %c0_238], %642 {strides = array<i32>} : memref<16x32xf32, #tpu.memory_space<vmem>>, vector<2x32xf32>,
    %c8_i32_239 = arith.constant 8 : i32
    %c0_240 = arith.constant 0 : index
    %c0_241 = arith.constant 0 : index
    %645 = vector.load %arg9[%c0_240, %c0_241] : memref<16x32xf32, #tpu.memory_space<vmem>>, vector<16x32xf32>
    %c0_242 = arith.constant 0 : index
    %c0_243 = arith.constant 0 : index
    %646 = vector.load %arg10[%c0_242, %c0_243] : memref<16x32xf32, #tpu.memory_space<vmem>>, vector<16x32xf32>
    %647 = tpu.concatenate %645, %646 in 1 : vector<16x32xf32>, vector<16x32xf32> -> vector<16x64xf32>
    %cst_244 = arith.constant dense<0.000000e+00> : vector<16xf32>
    %648 = vector.multi_reduction <add>, %647, %cst_244 [1] : vector<16x64xf32> to vector<16xf32>
    %649 = vector.shape_cast %648 : vector<16xf32> to vector<16x1xf32>
    %cst_245 = arith.constant 6.400000e+01 : f32
    %650 = vector.broadcast %cst_245 : f32 to vector<16x1xf32>
    %651 = arith.divf %649, %650 : vector<16x1xf32>
    %652 = vector.broadcast %651 : vector<16x1xf32> to vector<16x64xf32>
    %653 = arith.subf %647, %652 : vector<16x64xf32>
    %654 = arith.mulf %653, %653 : vector<16x64xf32>
    %cst_246 = arith.constant dense<0.000000e+00> : vector<16xf32>
    %655 = vector.multi_reduction <add>, %654, %cst_246 [1] : vector<16x64xf32> to vector<16xf32>
    %656 = vector.shape_cast %655 : vector<16xf32> to vector<16x1xf32>
    %cst_247 = arith.constant 6.400000e+01 : f32
    %657 = vector.broadcast %cst_247 : f32 to vector<16x1xf32>
    %658 = arith.divf %656, %657 : vector<16x1xf32>
    %cst_248 = arith.constant 9.99999974E-6 : f32
    %659 = vector.broadcast %cst_248 : f32 to vector<16x1xf32>
    %660 = arith.addf %658, %659 : vector<16x1xf32>
    %661 = math.rsqrt %660 : vector<16x1xf32>
    %662 = vector.broadcast %661 : vector<16x1xf32> to vector<16x64xf32>
    %663 = arith.mulf %653, %662 : vector<16x64xf32>
    %c0_249 = arith.constant 0 : index
    %c0_250 = arith.constant 0 : index
    %664 = vector.load %arg5[%c0_249, %c0_250] : memref<1x64xf32, #tpu.memory_space<vmem>>, vector<1x64xf32>
    %665 = vector.broadcast %664 : vector<1x64xf32> to vector<16x64xf32>
    %666 = arith.mulf %663, %665 : vector<16x64xf32>
    %c0_251 = arith.constant 0 : index
    %c0_252 = arith.constant 0 : index
    %667 = vector.load %arg6[%c0_251, %c0_252] : memref<1x64xf32, #tpu.memory_space<vmem>>, vector<1x64xf32>
    %668 = vector.broadcast %667 : vector<1x64xf32> to vector<16x64xf32>
    %669 = arith.addf %666, %668 : vector<16x64xf32>
    %c0_253 = arith.constant 0 : index
    %c0_254 = arith.constant 0 : index
    %670 = vector.load %arg7[%c0_253, %c0_254] : memref<16x64xf32, #tpu.memory_space<vmem>>, vector<16x64xf32>
    tpu.vector_store %arg7[%c0_253, %c0_254], %669 {strides = array<i32>} : memref<16x64xf32, #tpu.memory_space<vmem>>, vector<16x64xf32>,
    return
  }
}

</mosaic_0001>

<llo_original>
// kernel: tpu_custom_call.1
$region0: #{tpu_custom_call.1}
  #allocation0 [shape = 'u32[]', space=smem, size = 0x4, offset = 0x4, fixed_abs, tag = 'smem constant byte address 0x4 - core index']
  #allocation1 [shape = 'u32[144,128]{1,0:T(1,128)}', space=vmem, size = 0x12000, scoped, tag = 'internal scratch']
  #allocation2 [shape = 'f32[16,256]{1,0:T(8,128)}', space=vmem, size = 0x4000, scoped, tag = 'scratch operand']
  #allocation3 [shape = 'f32[16,32]{1,0:T(8,128)}', space=vmem, size = 0x2000, scoped, tag = 'scratch operand']
  #allocation4 [shape = 'f32[16,32]{1,0:T(8,128)}', space=vmem, size = 0x2000, scoped, tag = 'scratch operand']
  %s0 = inlined_call_operand.hbm [shape: f32[16,16], index: 0, kind: input, shape index: {}]
  %s1 = inlined_call_operand.hbm [shape: f32[16,256], index: 1, kind: input, shape index: {}]
  %s2 = inlined_call_operand.hbm [shape: f32[32,128], index: 2, kind: input, shape index: {}]
  %s3 = inlined_call_operand.hbm [shape: f32[32,128], index: 3, kind: input, shape index: {}]
  %s4 = inlined_call_operand.vmem [shape: f32[1,256], index: 4, kind: input, shape index: {}]
  %s5 = inlined_call_operand.vmem [shape: f32[1,64], index: 5, kind: input, shape index: {}]
  %s6 = inlined_call_operand.vmem [shape: f32[1,64], index: 6, kind: input, shape index: {}]
  %s7 = inlined_call_operand.hbm [shape: f32[16,64], index: 7, kind: output, shape index: {}]
  %s8 = sld [smem:[#allocation0]]
  $region54: #{tpu_custom_call.1} parent=0
    _
  %s10 = ssub.s32 1, %s8
  %s11 = scalar_select 0, %s10, %s8
  $region1: #{tpu_custom_call.1} parent=0
    #allocation5 [shape = 'u8[8192]{0}', space=vmem, size = 0x2000, scoped, tag = 'input window, operand 0, single buffered']
    #allocation6 [shape = 's32[1]{0}', space=sflag, size = 0x4, scoped, tag = 'scoped memory for tpu_custom_call.1']
    #allocation7 [shape = 's32[1]{0}', space=sflag, size = 0x4, scoped, tag = 'scoped memory for tpu_custom_call.1']
    #allocation8 [shape = 'u8[16384]{0}', space=vmem, size = 0x4000, scoped, tag = 'input window, operand 1, single buffered']
    #allocation9 [shape = 's32[1]{0}', space=sflag, size = 0x4, scoped, tag = 'scoped memory for tpu_custom_call.1']
    #allocation10 [shape = 'u8[16384]{0}', space=vmem, size = 0x4000, scoped, tag = 'input window, operand 2, single buffered']
    #allocation11 [shape = 'u8[16384]{0}', space=vmem, size = 0x4000, scoped, tag = 'input window, operand 3, single buffered']
    #allocation12 [shape = 's32[1]{0}', space=sflag, size = 0x4, scoped, tag = 'scoped memory for tpu_custom_call.1']
    #allocation13 [shape = 'u8[8192]{0}', space=vmem, size = 0x2000, scoped, tag = 'output window, operand 0, single buffered']
    %12 = vsyncpa [#allocation6], 0
    %13 = vsyncpa [#allocation9], 0
    %14 = vsyncpa [#allocation12], 0
    %15 = vsyncpa [#allocation7], 0
    // Predicated region
    $region2: #{tpu_custom_call.1} parent=1 // pred_check
      _
    $region3: #{tpu_custom_call.1} parent=1 // pred_check_branch
      %17 = sbr.rel (0) target = $region5
    $region4: #{tpu_custom_call.1} parent=1 // pred_region
      %s19 = ssub.s32 256, 256
      %20 = vsyncadd [#allocation6], %s19
      %s21 = sshll.u32 [#allocation5], 4
      %s22 = int_to_ptr.vmem [resolvable:$true] %s21
      %27 = dma.hbm_to_vmem [thread:$0]  %s0, 256, %s22, [#allocation6], 128, 128, 8
    $region5: #{tpu_custom_call.1} parent=1 // pred_fallthru
      _
    // Predicated region
    $region6: #{tpu_custom_call.1} parent=1 // pred_check
      _
    $region7: #{tpu_custom_call.1} parent=1 // pred_check_branch
      %29 = sbr.rel (0) target = $region9
    $region8: #{tpu_custom_call.1} parent=1 // pred_region
      %s31 = ssub.s32 512, 512
      %32 = vsyncadd [#allocation9], %s31
      %s33 = sshll.u32 [#allocation8], 4
      %s34 = int_to_ptr.vmem [resolvable:$true] %s33
      %39 = dma.hbm_to_vmem [thread:$0]  %s1, 512, %s34, [#allocation9], 256, 256, 16
    $region9: #{tpu_custom_call.1} parent=1 // pred_fallthru
      _
    // Predicated region
    $region10: #{tpu_custom_call.1} parent=1 // pred_check
      _
    $region11: #{tpu_custom_call.1} parent=1 // pred_check_branch
      %41 = sbr.rel (0) target = $region13
    $region12: #{tpu_custom_call.1} parent=1 // pred_region
      %s43 = ssub.s32 512, 512
      %44 = vsyncadd [#allocation9], %s43
      %s45 = sshll.u32 [#allocation10], 4
      %s46 = int_to_ptr.vmem [resolvable:$true] %s45
      %51 = dma.hbm_to_vmem [thread:$0]  %s2, 512, %s46, [#allocation9], 128, 128, 8
    $region13: #{tpu_custom_call.1} parent=1 // pred_fallthru
      _
    // Predicated region
    $region14: #{tpu_custom_call.1} parent=1 // pred_check
      _
    $region15: #{tpu_custom_call.1} parent=1 // pred_check_branch
      %53 = sbr.rel (0) target = $region17
    $region16: #{tpu_custom_call.1} parent=1 // pred_region
      %s55 = ssub.s32 512, 512
      %56 = vsyncadd [#allocation12], %s55
      %s57 = sshll.u32 [#allocation11], 4
      %s58 = int_to_ptr.vmem [resolvable:$true] %s57
      %63 = dma.hbm_to_vmem [thread:$0]  %s3, 512, %s58, [#allocation12], 128, 128, 8
    $region17: #{tpu_custom_call.1} parent=1 // pred_fallthru
      _
    // Predicated region
    $region18: #{tpu_custom_call.1} parent=1 // pred_check
      _
    $region19: #{tpu_custom_call.1} parent=1 // pred_check_branch
      %65 = sbr.rel (0) target = $region21
    $region20: #{tpu_custom_call.1} parent=1 // pred_region
      _
    $region21: #{tpu_custom_call.1} parent=1 // pred_fallthru
      _
    // Predicated region
    $region22: #{tpu_custom_call.1} parent=1 // pred_check
      _
    $region23: #{tpu_custom_call.1} parent=1 // pred_check_branch
      %67 = sbr.rel (0) target = $region25
    $region24: #{tpu_custom_call.1} parent=1 // pred_region
      _
    $region25: #{tpu_custom_call.1} parent=1 // pred_fallthru
      _
    // Predicated region
    $region26: #{tpu_custom_call.1} parent=1 // pred_check
      _
    $region27: #{tpu_custom_call.1} parent=1 // pred_check_branch
      %69 = sbr.rel (0) target = $region29
    $region28: #{tpu_custom_call.1} parent=1 // pred_region
      _
    $region29: #{tpu_custom_call.1} parent=1 // pred_fallthru
      _
    // Predicated region
    $region30: #{tpu_custom_call.1} parent=1 // pred_check
      _
    $region31: #{tpu_custom_call.1} parent=1 // pred_check_branch
      %71 = sbr.rel (0) target = $region33
    $region32: #{tpu_custom_call.1} parent=1 // pred_region
      %72 = dma.done [#allocation6], 256
    $region33: #{tpu_custom_call.1} parent=1 // pred_fallthru
      _
    // Predicated region
    $region34: #{tpu_custom_call.1} parent=1 // pred_check
      _
    $region35: #{tpu_custom_call.1} parent=1 // pred_check_branch
      %74 = sbr.rel (0) target = $region37
    $region36: #{tpu_custom_call.1} parent=1 // pred_region
      %75 = dma.done [#allocation9], 512
    $region37: #{tpu_custom_call.1} parent=1 // pred_fallthru
      _
    // Predicated region
    $region38: #{tpu_custom_call.1} parent=1 // pred_check
      _
    $region39: #{tpu_custom_call.1} parent=1 // pred_check_branch
      %77 = sbr.rel (0) target = $region41
    $region40: #{tpu_custom_call.1} parent=1 // pred_region
      %78 = dma.done [#allocation9], 512
    $region41: #{tpu_custom_call.1} parent=1 // pred_fallthru
      _
    // Predicated region
    $region42: #{tpu_custom_call.1} parent=1 // pred_check
      _
    $region43: #{tpu_custom_call.1} parent=1 // pred_check_branch
      %80 = sbr.rel (0) target = $region45
    $region44: #{tpu_custom_call.1} parent=1 // pred_region
      %81 = dma.done [#allocation12], 512
    $region45: #{tpu_custom_call.1} parent=1 // pred_fallthru
      _
    %v82 = vld [vmem:[#allocation5] sm:$0xff]
    %v83 = vld [vmem:[#allocation5 + $0x8] sm:$0xff]
    %v84 = vld [vmem:[#allocation8] sm:$0xff]
    %v85 = vld [vmem:[#allocation8 + $0x8] sm:$0xff]
    %v86 = vld [vmem:[#allocation8 + $0x10] sm:$0xff]
    %v87 = vld [vmem:[#allocation8 + $0x18] sm:$0xff]
    %v88 = vld [vmem:[%s4] sm:$0x3]
    %v90 = vlaneseq
    %v91 = vshrl.u32 %v90, 7
    %v92 = vsub.s32 0, %v91
    %v93 = vrot.slane %v88, %v92
    %v94 = vlaneseq
    %v95 = vshrl.u32 %v94, 7
    %v96 = vsub.s32 1, %v95
    %v97 = vrot.slane %v88, %v96
    %vm100 = vcmask 130048
    %v102 = vsel %vm100, %v82, 0
    %v105 = vsel %vm100, %v83, 0
    %107 = vmatprep.subr.mxu0 0.0
    %108 = vmatpush1.msra.mxu0 0.0
    %109 = vmatprep.subr.mxu0 0.0
    %110 = vmatpush1.msra.mxu0 0.0
    %111 = vmatprep.subr.mxu0 0.0
    %112 = vmatpush1.msra.mxu0 0.0
    %113 = vmatprep.subr.mxu0 0.0
    %114 = vmatpush1.msra.mxu0 0.0
    %115 = vmatprep.subr.mxu0 0.0
    %116 = vmatpush1.msra.mxu0 0.0
    %117 = vmatprep.subr.mxu0 0.0
    %118 = vmatpush1.msra.mxu0 0.0
    %119 = vmatprep.subr.mxu0 0.0
    %120 = vmatpush1.msra.mxu0 0.0
    %121 = vmatprep.subr.mxu0 0.0
    %122 = vmatpush1.msra.mxu0 0.0
    %123 = vmatprep.subr.mxu0 0.0
    %124 = vmatpush1.msra.mxu0 0.0
    %125 = vmatprep.subr.mxu0 0.0
    %126 = vmatpush1.msra.mxu0 0.0
    %127 = vmatprep.subr.mxu0 0.0
    %128 = vmatpush1.msra.mxu0 0.0
    %129 = vmatprep.subr.mxu0 0.0
    %130 = vmatpush1.msra.mxu0 0.0
    %131 = vmatprep.subr.mxu0 0.0
    %132 = vmatpush1.msra.mxu0 0.0
    %133 = vmatprep.subr.mxu0 0.0
    %134 = vmatpush1.msra.mxu0 0.0
    %v135 = vand.u32 %v87, 4294901760
    %136 = vmatprep.subr.mxu0 %v135
    %v137 = vand.u32 %v86, 4294901760
    %138 = vmatpush1.msra.mxu0 %v137
    %v139 = vand.u32 %v85, 4294901760
    %140 = vmatprep.subr.mxu0 %v139
    %v141 = vand.u32 %v84, 4294901760
    %142 = vmatpush1.msra.mxu0 %v141
    %143 = vmatprep.subr.mxu0 0.0
    %144 = vmatpush2.msra.mxu0 0.0
    %145 = vmatprep.subr.mxu0 0.0
    %146 = vmatpush2.msra.mxu0 0.0
    %147 = vmatprep.subr.mxu0 0.0
    %148 = vmatpush2.msra.mxu0 0.0
    %149 = vmatprep.subr.mxu0 0.0
    %150 = vmatpush2.msra.mxu0 0.0
    %151 = vmatprep.subr.mxu0 0.0
    %152 = vmatpush2.msra.mxu0 0.0
    %153 = vmatprep.subr.mxu0 0.0
    %154 = vmatpush2.msra.mxu0 0.0
    %155 = vmatprep.subr.mxu0 0.0
    %156 = vmatpush2.msra.mxu0 0.0
    %157 = vmatprep.subr.mxu0 0.0
    %158 = vmatpush2.msra.mxu0 0.0
    %159 = vmatprep.subr.mxu0 0.0
    %160 = vmatpush2.msra.mxu0 0.0
    %161 = vmatprep.subr.mxu0 0.0
    %162 = vmatpush2.msra.mxu0 0.0
    %163 = vmatprep.subr.mxu0 0.0
    %164 = vmatpush2.msra.mxu0 0.0
    %165 = vmatprep.subr.mxu0 0.0
    %166 = vmatpush2.msra.mxu0 0.0
    %167 = vmatprep.subr.mxu0 0.0
    %168 = vmatpush2.msra.mxu0 0.0
    %169 = vmatprep.subr.mxu0 0.0
    %170 = vmatpush2.msra.mxu0 0.0
    %171 = vmatprep.subr.mxu0 0.0
    %172 = vmatpush2.msra.mxu0 0.0
    %173 = vmatprep.subr.mxu0 0.0
    %174 = vmatpush2.msra.mxu0 0.0
    %175 = vmatprep.mubr.f32.mxu0 0.0
    %v176 = vand.u32 %v102, 4294901760
    %v177 = vsub.f32 %v102, %v176
    %v178 = vand.u32 %v177, 4294901760
    %v179 = vsub.f32 %v177, %v178
    %v180 = vand.u32 %v179, 4294901760
    %181 = vmatmul.mubr.f32.gmra.mxu0 %v180
    %v182 = vpop.f32.mrf.mxu0
    %v183 = vadd.f32 %v93, %v182
    %v184 = vpop.f32.mrf.mxu0
    %v185 = vadd.f32 %v97, %v184
    %186 = vmatprep.mubr.f32.mxu0 0.0
    %v187 = vand.u32 %v105, 4294901760
    %v188 = vsub.f32 %v105, %v187
    %v189 = vand.u32 %v188, 4294901760
    %v190 = vsub.f32 %v188, %v189
    %v191 = vand.u32 %v190, 4294901760
    %192 = vmatmul.mubr.f32.gmra.mxu0 %v191
    %v193 = vpop.f32.mrf.mxu0
    %v194 = vadd.f32 %v93, %v193
    %v195 = vpop.f32.mrf.mxu0
    %v196 = vadd.f32 %v97, %v195
    %197 = vdwg.mxu0
    %198 = vmatprep.subr.mxu0 0.0
    %199 = vmatpush1.msra.mxu0 0.0
    %200 = vmatprep.subr.mxu0 0.0
    %201 = vmatpush1.msra.mxu0 0.0
    %202 = vmatprep.subr.mxu0 0.0
    %203 = vmatpush1.msra.mxu0 0.0
    %204 = vmatprep.subr.mxu0 0.0
    %205 = vmatpush1.msra.mxu0 0.0
    %206 = vmatprep.subr.mxu0 0.0
    %207 = vmatpush1.msra.mxu0 0.0
    %208 = vmatprep.subr.mxu0 0.0
    %209 = vmatpush1.msra.mxu0 0.0
    %210 = vmatprep.subr.mxu0 0.0
    %211 = vmatpush1.msra.mxu0 0.0
    %212 = vmatprep.subr.mxu0 0.0
    %213 = vmatpush1.msra.mxu0 0.0
    %214 = vmatprep.subr.mxu0 0.0
    %215 = vmatpush1.msra.mxu0 0.0
    %216 = vmatprep.subr.mxu0 0.0
    %217 = vmatpush1.msra.mxu0 0.0
    %218 = vmatprep.subr.mxu0 0.0
    %219 = vmatpush1.msra.mxu0 0.0
    %220 = vmatprep.subr.mxu0 0.0
    %221 = vmatpush1.msra.mxu0 0.0
    %222 = vmatprep.subr.mxu0 0.0
    %223 = vmatpush1.msra.mxu0 0.0
    %224 = vmatprep.subr.mxu0 0.0
    %225 = vmatpush1.msra.mxu0 0.0
    %v226 = vand.u32 %v87, 4294901760
    %v227 = vsub.f32 %v87, %v226
    %v228 = vand.u32 %v227, 4294901760
    %v229 = vsub.f32 %v227, %v228
    %v230 = vand.u32 %v229, 4294901760
    %231 = vmatprep.subr.mxu0 %v230
    %v232 = vand.u32 %v86, 4294901760
    %v233 = vsub.f32 %v86, %v232
    %v234 = vand.u32 %v233, 4294901760
    %v235 = vsub.f32 %v233, %v234
    %v236 = vand.u32 %v235, 4294901760
    %237 = vmatpush1.msra.mxu0 %v236
    %v238 = vand.u32 %v85, 4294901760
    %v239 = vsub.f32 %v85, %v238
    %v240 = vand.u32 %v239, 4294901760
    %v241 = vsub.f32 %v239, %v240
    %v242 = vand.u32 %v241, 4294901760
    %243 = vmatprep.subr.mxu0 %v242
    %v244 = vand.u32 %v84, 4294901760
    %v245 = vsub.f32 %v84, %v244
    %v246 = vand.u32 %v245, 4294901760
    %v247 = vsub.f32 %v245, %v246
    %v248 = vand.u32 %v247, 4294901760
    %249 = vmatpush1.msra.mxu0 %v248
    %250 = vmatprep.subr.mxu0 0.0
    %251 = vmatpush2.msra.mxu0 0.0
    %252 = vmatprep.subr.mxu0 0.0
    %253 = vmatpush2.msra.mxu0 0.0
    %254 = vmatprep.subr.mxu0 0.0
    %255 = vmatpush2.msra.mxu0 0.0
    %256 = vmatprep.subr.mxu0 0.0
    %257 = vmatpush2.msra.mxu0 0.0
    %258 = vmatprep.subr.mxu0 0.0
    %259 = vmatpush2.msra.mxu0 0.0
    %260 = vmatprep.subr.mxu0 0.0
    %261 = vmatpush2.msra.mxu0 0.0
    %262 = vmatprep.subr.mxu0 0.0
    %263 = vmatpush2.msra.mxu0 0.0
    %264 = vmatprep.subr.mxu0 0.0
    %265 = vmatpush2.msra.mxu0 0.0
    %266 = vmatprep.subr.mxu0 0.0
    %267 = vmatpush2.msra.mxu0 0.0
    %268 = vmatprep.subr.mxu0 0.0
    %269 = vmatpush2.msra.mxu0 0.0
    %270 = vmatprep.subr.mxu0 0.0
    %271 = vmatpush2.msra.mxu0 0.0
    %272 = vmatprep.subr.mxu0 0.0
    %273 = vmatpush2.msra.mxu0 0.0
    %274 = vmatprep.subr.mxu0 0.0
    %275 = vmatpush2.msra.mxu0 0.0
    %276 = vmatprep.subr.mxu0 0.0
    %277 = vmatpush2.msra.mxu0 0.0
    %278 = vmatprep.subr.mxu0 0.0
    %279 = vmatpush2.msra.mxu0 0.0
    %280 = vmatprep.subr.mxu0 0.0
    %281 = vmatpush2.msra.mxu0 0.0
    %282 = vmatprep.mubr.f32.mxu0 0.0
    %v283 = vand.u32 %v102, 4294901760
    %284 = vmatmul.mubr.f32.gmra.mxu0 %v283
    %v285 = vpop.f32.mrf.mxu0
    %v286 = vadd.f32 %v183, %v285
    %v287 = vpop.f32.mrf.mxu0
    %v288 = vadd.f32 %v185, %v287
    %289 = vmatprep.mubr.f32.mxu0 0.0
    %v290 = vand.u32 %v105, 4294901760
    %291 = vmatmul.mubr.f32.gmra.mxu0 %v290
    %v292 = vpop.f32.mrf.mxu0
    %v293 = vadd.f32 %v194, %v292
    %v294 = vpop.f32.mrf.mxu0
    %v295 = vadd.f32 %v196, %v294
    %296 = vdwg.mxu0
    %297 = vmatprep.subr.mxu0 0.0
    %298 = vmatpush1.msra.mxu0 0.0
    %299 = vmatprep.subr.mxu0 0.0
    %300 = vmatpush1.msra.mxu0 0.0
    %301 = vmatprep.subr.mxu0 0.0
    %302 = vmatpush1.msra.mxu0 0.0
    %303 = vmatprep.subr.mxu0 0.0
    %304 = vmatpush1.msra.mxu0 0.0
    %305 = vmatprep.subr.mxu0 0.0
    %306 = vmatpush1.msra.mxu0 0.0
    %307 = vmatprep.subr.mxu0 0.0
    %308 = vmatpush1.msra.mxu0 0.0
    %309 = vmatprep.subr.mxu0 0.0
    %310 = vmatpush1.msra.mxu0 0.0
    %311 = vmatprep.subr.mxu0 0.0
    %312 = vmatpush1.msra.mxu0 0.0
    %313 = vmatprep.subr.mxu0 0.0
    %314 = vmatpush1.msra.mxu0 0.0
    %315 = vmatprep.subr.mxu0 0.0
    %316 = vmatpush1.msra.mxu0 0.0
    %317 = vmatprep.subr.mxu0 0.0
    %318 = vmatpush1.msra.mxu0 0.0
    %319 = vmatprep.subr.mxu0 0.0
    %320 = vmatpush1.msra.mxu0 0.0
    %321 = vmatprep.subr.mxu0 0.0
    %322 = vmatpush1.msra.mxu0 0.0
    %323 = vmatprep.subr.mxu0 0.0
    %324 = vmatpush1.msra.mxu0 0.0
    %v325 = vand.u32 %v87, 4294901760
    %v326 = vsub.f32 %v87, %v325
    %327 = vmatprep.subr.mxu0 %v326
    %v328 = vand.u32 %v86, 4294901760
    %v329 = vsub.f32 %v86, %v328
    %330 = vmatpush1.msra.mxu0 %v329
    %v331 = vand.u32 %v85, 4294901760
    %v332 = vsub.f32 %v85, %v331
    %333 = vmatprep.subr.mxu0 %v332
    %v334 = vand.u32 %v84, 4294901760
    %v335 = vsub.f32 %v84, %v334
    %336 = vmatpush1.msra.mxu0 %v335
    %337 = vmatprep.subr.mxu0 0.0
    %338 = vmatpush2.msra.mxu0 0.0
    %339 = vmatprep.subr.mxu0 0.0
    %340 = vmatpush2.msra.mxu0 0.0
    %341 = vmatprep.subr.mxu0 0.0
    %342 = vmatpush2.msra.mxu0 0.0
    %343 = vmatprep.subr.mxu0 0.0
    %344 = vmatpush2.msra.mxu0 0.0
    %345 = vmatprep.subr.mxu0 0.0
    %346 = vmatpush2.msra.mxu0 0.0
    %347 = vmatprep.subr.mxu0 0.0
    %348 = vmatpush2.msra.mxu0 0.0
    %349 = vmatprep.subr.mxu0 0.0
    %350 = vmatpush2.msra.mxu0 0.0
    %351 = vmatprep.subr.mxu0 0.0
    %352 = vmatpush2.msra.mxu0 0.0
    %353 = vmatprep.subr.mxu0 0.0
    %354 = vmatpush2.msra.mxu0 0.0
    %355 = vmatprep.subr.mxu0 0.0
    %356 = vmatpush2.msra.mxu0 0.0
    %357 = vmatprep.subr.mxu0 0.0
    %358 = vmatpush2.msra.mxu0 0.0
    %359 = vmatprep.subr.mxu0 0.0
    %360 = vmatpush2.msra.mxu0 0.0
    %361 = vmatprep.subr.mxu0 0.0
    %362 = vmatpush2.msra.mxu0 0.0
    %363 = vmatprep.subr.mxu0 0.0
    %364 = vmatpush2.msra.mxu0 0.0
    %365 = vmatprep.subr.mxu0 0.0
    %366 = vmatpush2.msra.mxu0 0.0
    %367 = vmatprep.subr.mxu0 0.0
    %368 = vmatpush2.msra.mxu0 0.0
    %369 = vmatprep.mubr.f32.mxu0 0.0
    %v370 = vand.u32 %v102, 4294901760
    %v371 = vsub.f32 %v102, %v370
    %372 = vmatmul.mubr.f32.gmra.mxu0 %v371
    %v373 = vpop.f32.mrf.mxu0
    %v374 = vadd.f32 %v286, %v373
    %v375 = vpop.f32.mrf.mxu0
    %v376 = vadd.f32 %v288, %v375
    %377 = vmatprep.mubr.f32.mxu0 0.0
    %v378 = vand.u32 %v105, 4294901760
    %v379 = vsub.f32 %v105, %v378
    %380 = vmatmul.mubr.f32.gmra.mxu0 %v379
    %v381 = vpop.f32.mrf.mxu0
    %v382 = vadd.f32 %v293, %v381
    %v383 = vpop.f32.mrf.mxu0
    %v384 = vadd.f32 %v295, %v383
    %385 = vdwg.mxu0
    %386 = vmatprep.subr.mxu0 0.0
    %387 = vmatpush1.msra.mxu0 0.0
    %388 = vmatprep.subr.mxu0 0.0
    %389 = vmatpush1.msra.mxu0 0.0
    %390 = vmatprep.subr.mxu0 0.0
    %391 = vmatpush1.msra.mxu0 0.0
    %392 = vmatprep.subr.mxu0 0.0
    %393 = vmatpush1.msra.mxu0 0.0
    %394 = vmatprep.subr.mxu0 0.0
    %395 = vmatpush1.msra.mxu0 0.0
    %396 = vmatprep.subr.mxu0 0.0
    %397 = vmatpush1.msra.mxu0 0.0
    %398 = vmatprep.subr.mxu0 0.0
    %399 = vmatpush1.msra.mxu0 0.0
    %400 = vmatprep.subr.mxu0 0.0
    %401 = vmatpush1.msra.mxu0 0.0
    %402 = vmatprep.subr.mxu0 0.0
    %403 = vmatpush1.msra.mxu0 0.0
    %404 = vmatprep.subr.mxu0 0.0
    %405 = vmatpush1.msra.mxu0 0.0
    %406 = vmatprep.subr.mxu0 0.0
    %407 = vmatpush1.msra.mxu0 0.0
    %408 = vmatprep.subr.mxu0 0.0
    %409 = vmatpush1.msra.mxu0 0.0
    %410 = vmatprep.subr.mxu0 0.0
    %411 = vmatpush1.msra.mxu0 0.0
    %412 = vmatprep.subr.mxu0 0.0
    %413 = vmatpush1.msra.mxu0 0.0
    %v414 = vand.u32 %v87, 4294901760
    %415 = vmatprep.subr.mxu0 %v414
    %v416 = vand.u32 %v86, 4294901760
    %417 = vmatpush1.msra.mxu0 %v416
    %v418 = vand.u32 %v85, 4294901760
    %419 = vmatprep.subr.mxu0 %v418
    %v420 = vand.u32 %v84, 4294901760
    %421 = vmatpush1.msra.mxu0 %v420
    %422 = vmatprep.subr.mxu0 0.0
    %423 = vmatpush2.msra.mxu0 0.0
    %424 = vmatprep.subr.mxu0 0.0
    %425 = vmatpush2.msra.mxu0 0.0
    %426 = vmatprep.subr.mxu0 0.0
    %427 = vmatpush2.msra.mxu0 0.0
    %428 = vmatprep.subr.mxu0 0.0
    %429 = vmatpush2.msra.mxu0 0.0
    %430 = vmatprep.subr.mxu0 0.0
    %431 = vmatpush2.msra.mxu0 0.0
    %432 = vmatprep.subr.mxu0 0.0
    %433 = vmatpush2.msra.mxu0 0.0
    %434 = vmatprep.subr.mxu0 0.0
    %435 = vmatpush2.msra.mxu0 0.0
    %436 = vmatprep.subr.mxu0 0.0
    %437 = vmatpush2.msra.mxu0 0.0
    %438 = vmatprep.subr.mxu0 0.0
    %439 = vmatpush2.msra.mxu0 0.0
    %440 = vmatprep.subr.mxu0 0.0
    %441 = vmatpush2.msra.mxu0 0.0
    %442 = vmatprep.subr.mxu0 0.0
    %443 = vmatpush2.msra.mxu0 0.0
    %444 = vmatprep.subr.mxu0 0.0
    %445 = vmatpush2.msra.mxu0 0.0
    %446 = vmatprep.subr.mxu0 0.0
    %447 = vmatpush2.msra.mxu0 0.0
    %448 = vmatprep.subr.mxu0 0.0
    %449 = vmatpush2.msra.mxu0 0.0
    %450 = vmatprep.subr.mxu0 0.0
    %451 = vmatpush2.msra.mxu0 0.0
    %452 = vmatprep.subr.mxu0 0.0
    %453 = vmatpush2.msra.mxu0 0.0
    %454 = vmatprep.mubr.f32.mxu0 0.0
    %v455 = vand.u32 %v102, 4294901760
    %v456 = vsub.f32 %v102, %v455
    %v457 = vand.u32 %v456, 4294901760
    %458 = vmatmul.mubr.f32.gmra.mxu0 %v457
    %v459 = vpop.f32.mrf.mxu0
    %v460 = vadd.f32 %v374, %v459
    %v461 = vpop.f32.mrf.mxu0
    %v462 = vadd.f32 %v376, %v461
    %463 = vmatprep.mubr.f32.mxu0 0.0
    %v464 = vand.u32 %v105, 4294901760
    %v465 = vsub.f32 %v105, %v464
    %v466 = vand.u32 %v465, 4294901760
    %467 = vmatmul.mubr.f32.gmra.mxu0 %v466
    %v468 = vpop.f32.mrf.mxu0
    %v469 = vadd.f32 %v382, %v468
    %v470 = vpop.f32.mrf.mxu0
    %v471 = vadd.f32 %v384, %v470
    %472 = vdwg.mxu0
    %473 = vmatprep.subr.mxu0 0.0
    %474 = vmatpush1.msra.mxu0 0.0
    %475 = vmatprep.subr.mxu0 0.0
    %476 = vmatpush1.msra.mxu0 0.0
    %477 = vmatprep.subr.mxu0 0.0
    %478 = vmatpush1.msra.mxu0 0.0
    %479 = vmatprep.subr.mxu0 0.0
    %480 = vmatpush1.msra.mxu0 0.0
    %481 = vmatprep.subr.mxu0 0.0
    %482 = vmatpush1.msra.mxu0 0.0
    %483 = vmatprep.subr.mxu0 0.0
    %484 = vmatpush1.msra.mxu0 0.0
    %485 = vmatprep.subr.mxu0 0.0
    %486 = vmatpush1.msra.mxu0 0.0
    %487 = vmatprep.subr.mxu0 0.0
    %488 = vmatpush1.msra.mxu0 0.0
    %489 = vmatprep.subr.mxu0 0.0
    %490 = vmatpush1.msra.mxu0 0.0
    %491 = vmatprep.subr.mxu0 0.0
    %492 = vmatpush1.msra.mxu0 0.0
    %493 = vmatprep.subr.mxu0 0.0
    %494 = vmatpush1.msra.mxu0 0.0
    %495 = vmatprep.subr.mxu0 0.0
    %496 = vmatpush1.msra.mxu0 0.0
    %497 = vmatprep.subr.mxu0 0.0
    %498 = vmatpush1.msra.mxu0 0.0
    %499 = vmatprep.subr.mxu0 0.0
    %500 = vmatpush1.msra.mxu0 0.0
    %v501 = vand.u32 %v87, 4294901760
    %v502 = vsub.f32 %v87, %v501
    %v503 = vand.u32 %v502, 4294901760
    %504 = vmatprep.subr.mxu0 %v503
    %v505 = vand.u32 %v86, 4294901760
    %v506 = vsub.f32 %v86, %v505
    %v507 = vand.u32 %v506, 4294901760
    %508 = vmatpush1.msra.mxu0 %v507
    %v509 = vand.u32 %v85, 4294901760
    %v510 = vsub.f32 %v85, %v509
    %v511 = vand.u32 %v510, 4294901760
    %512 = vmatprep.subr.mxu0 %v511
    %v513 = vand.u32 %v84, 4294901760
    %v514 = vsub.f32 %v84, %v513
    %v515 = vand.u32 %v514, 4294901760
    %516 = vmatpush1.msra.mxu0 %v515
    %517 = vmatprep.subr.mxu0 0.0
    %518 = vmatpush2.msra.mxu0 0.0
    %519 = vmatprep.subr.mxu0 0.0
    %520 = vmatpush2.msra.mxu0 0.0
    %521 = vmatprep.subr.mxu0 0.0
    %522 = vmatpush2.msra.mxu0 0.0
    %523 = vmatprep.subr.mxu0 0.0
    %524 = vmatpush2.msra.mxu0 0.0
    %525 = vmatprep.subr.mxu0 0.0
    %526 = vmatpush2.msra.mxu0 0.0
    %527 = vmatprep.subr.mxu0 0.0
    %528 = vmatpush2.msra.mxu0 0.0
    %529 = vmatprep.subr.mxu0 0.0
    %530 = vmatpush2.msra.mxu0 0.0
    %531 = vmatprep.subr.mxu0 0.0
    %532 = vmatpush2.msra.mxu0 0.0
    %533 = vmatprep.subr.mxu0 0.0
    %534 = vmatpush2.msra.mxu0 0.0
    %535 = vmatprep.subr.mxu0 0.0
    %536 = vmatpush2.msra.mxu0 0.0
    %537 = vmatprep.subr.mxu0 0.0
    %538 = vmatpush2.msra.mxu0 0.0
    %539 = vmatprep.subr.mxu0 0.0
    %540 = vmatpush2.msra.mxu0 0.0
    %541 = vmatprep.subr.mxu0 0.0
    %542 = vmatpush2.msra.mxu0 0.0
    %543 = vmatprep.subr.mxu0 0.0
    %544 = vmatpush2.msra.mxu0 0.0
    %545 = vmatprep.subr.mxu0 0.0
    %546 = vmatpush2.msra.mxu0 0.0
    %547 = vmatprep.subr.mxu0 0.0
    %548 = vmatpush2.msra.mxu0 0.0
    %549 = vmatprep.mubr.f32.mxu0 0.0
    %v550 = vand.u32 %v102, 4294901760
    %551 = vmatmul.mubr.f32.gmra.mxu0 %v550
    %v552 = vpop.f32.mrf.mxu0
    %v553 = vadd.f32 %v460, %v552
    %v554 = vpop.f32.mrf.mxu0
    %v555 = vadd.f32 %v462, %v554
    %556 = vmatprep.mubr.f32.mxu0 0.0
    %v557 = vand.u32 %v105, 4294901760
    %558 = vmatmul.mubr.f32.gmra.mxu0 %v557
    %v559 = vpop.f32.mrf.mxu0
    %v560 = vadd.f32 %v469, %v559
    %v561 = vpop.f32.mrf.mxu0
    %v562 = vadd.f32 %v471, %v561
    %563 = vdwg.mxu0
    %564 = vmatprep.subr.mxu0 0.0
    %565 = vmatpush1.msra.mxu0 0.0
    %566 = vmatprep.subr.mxu0 0.0
    %567 = vmatpush1.msra.mxu0 0.0
    %568 = vmatprep.subr.mxu0 0.0
    %569 = vmatpush1.msra.mxu0 0.0
    %570 = vmatprep.subr.mxu0 0.0
    %571 = vmatpush1.msra.mxu0 0.0
    %572 = vmatprep.subr.mxu0 0.0
    %573 = vmatpush1.msra.mxu0 0.0
    %574 = vmatprep.subr.mxu0 0.0
    %575 = vmatpush1.msra.mxu0 0.0
    %576 = vmatprep.subr.mxu0 0.0
    %577 = vmatpush1.msra.mxu0 0.0
    %578 = vmatprep.subr.mxu0 0.0
    %579 = vmatpush1.msra.mxu0 0.0
    %580 = vmatprep.subr.mxu0 0.0
    %581 = vmatpush1.msra.mxu0 0.0
    %582 = vmatprep.subr.mxu0 0.0
    %583 = vmatpush1.msra.mxu0 0.0
    %584 = vmatprep.subr.mxu0 0.0
    %585 = vmatpush1.msra.mxu0 0.0
    %586 = vmatprep.subr.mxu0 0.0
    %587 = vmatpush1.msra.mxu0 0.0
    %588 = vmatprep.subr.mxu0 0.0
    %589 = vmatpush1.msra.mxu0 0.0
    %590 = vmatprep.subr.mxu0 0.0
    %591 = vmatpush1.msra.mxu0 0.0
    %v592 = vand.u32 %v87, 4294901760
    %593 = vmatprep.subr.mxu0 %v592
    %v594 = vand.u32 %v86, 4294901760
    %595 = vmatpush1.msra.mxu0 %v594
    %v596 = vand.u32 %v85, 4294901760
    %597 = vmatprep.subr.mxu0 %v596
    %v598 = vand.u32 %v84, 4294901760
    %599 = vmatpush1.msra.mxu0 %v598
    %600 = vmatprep.subr.mxu0 0.0
    %601 = vmatpush2.msra.mxu0 0.0
    %602 = vmatprep.subr.mxu0 0.0
    %603 = vmatpush2.msra.mxu0 0.0
    %604 = vmatprep.subr.mxu0 0.0
    %605 = vmatpush2.msra.mxu0 0.0
    %606 = vmatprep.subr.mxu0 0.0
    %607 = vmatpush2.msra.mxu0 0.0
    %608 = vmatprep.subr.mxu0 0.0
    %609 = vmatpush2.msra.mxu0 0.0
    %610 = vmatprep.subr.mxu0 0.0
    %611 = vmatpush2.msra.mxu0 0.0
    %612 = vmatprep.subr.mxu0 0.0
    %613 = vmatpush2.msra.mxu0 0.0
    %614 = vmatprep.subr.mxu0 0.0
    %615 = vmatpush2.msra.mxu0 0.0
    %616 = vmatprep.subr.mxu0 0.0
    %617 = vmatpush2.msra.mxu0 0.0
    %618 = vmatprep.subr.mxu0 0.0
    %619 = vmatpush2.msra.mxu0 0.0
    %620 = vmatprep.subr.mxu0 0.0
    %621 = vmatpush2.msra.mxu0 0.0
    %622 = vmatprep.subr.mxu0 0.0
    %623 = vmatpush2.msra.mxu0 0.0
    %624 = vmatprep.subr.mxu0 0.0
    %625 = vmatpush2.msra.mxu0 0.0
    %626 = vmatprep.subr.mxu0 0.0
    %627 = vmatpush2.msra.mxu0 0.0
    %628 = vmatprep.subr.mxu0 0.0
    %629 = vmatpush2.msra.mxu0 0.0
    %630 = vmatprep.subr.mxu0 0.0
    %631 = vmatpush2.msra.mxu0 0.0
    %632 = vmatprep.mubr.f32.mxu0 0.0
    %v633 = vand.u32 %v102, 4294901760
    %634 = vmatmul.mubr.f32.gmra.mxu0 %v633
    %v635 = vpop.f32.mrf.mxu0
    %v636 = vadd.f32 %v553, %v635
    %v637 = vpop.f32.mrf.mxu0
    %v638 = vadd.f32 %v555, %v637
    %639 = vmatprep.mubr.f32.mxu0 0.0
    %v640 = vand.u32 %v105, 4294901760
    %641 = vmatmul.mubr.f32.gmra.mxu0 %v640
    %v642 = vpop.f32.mrf.mxu0
    %v643 = vadd.f32 %v560, %v642
    %v644 = vpop.f32.mrf.mxu0
    %v645 = vadd.f32 %v562, %v644
    %646 = vdwg.mxu0
    %647 = vst [vmem:[#allocation2] sm:$0xff] %v636
    %648 = vst [vmem:[#allocation2 + $0x8] sm:$0xff] %v638
    %649 = vst [vmem:[#allocation2 + $0x10] sm:$0xff] %v643
    %650 = vst [vmem:[#allocation2 + $0x18] sm:$0xff] %v645
    %v651 = vld [vmem:[#allocation10] sm:$0xff]
    %v652 = vld [vmem:[#allocation10 + $0x8] sm:$0xff]
    %v653 = vld [vmem:[#allocation10 + $0x10] sm:$0xff]
    %v654 = vld [vmem:[#allocation10 + $0x18] sm:$0xff]
    %v655 = vld [vmem:[#allocation2] sm:$0x3]
    %vm656 = vcmask 261120
    %v658 = vsel %vm656, 0.0, 0
    %660 = vmatprep.subr.mxu0 0.0
    %661 = vmatpush1.msra.mxu0 0.0
    %662 = vmatprep.subr.mxu0 0.0
    %663 = vmatpush1.msra.mxu0 0.0
    %664 = vmatprep.subr.mxu0 0.0
    %665 = vmatpush1.msra.mxu0 0.0
    %666 = vmatprep.subr.mxu0 0.0
    %667 = vmatpush1.msra.mxu0 0.0
    %668 = vmatprep.subr.mxu0 0.0
    %669 = vmatpush1.msra.mxu0 0.0
    %670 = vmatprep.subr.mxu0 0.0
    %671 = vmatpush1.msra.mxu0 0.0
    %672 = vmatprep.subr.mxu0 0.0
    %673 = vmatpush1.msra.mxu0 0.0
    %674 = vmatprep.subr.mxu0 0.0
    %675 = vmatpush1.msra.mxu0 0.0
    %676 = vmatprep.subr.mxu0 0.0
    %677 = vmatpush1.msra.mxu0 0.0
    %678 = vmatprep.subr.mxu0 0.0
    %679 = vmatpush1.msra.mxu0 0.0
    %680 = vmatprep.subr.mxu0 0.0
    %681 = vmatpush1.msra.mxu0 0.0
    %682 = vmatprep.subr.mxu0 0.0
    %683 = vmatpush1.msra.mxu0 0.0
    %684 = vmatprep.subr.mxu0 0.0
    %v685 = vand.u32 %v654, 4294901760
    %686 = vmatpush1.msra.mxu0 %v685
    %687 = vmatprep.subr.mxu0 0.0
    %v688 = vand.u32 %v653, 4294901760
    %689 = vmatpush1.msra.mxu0 %v688
    %690 = vmatprep.subr.mxu0 0.0
    %v691 = vand.u32 %v652, 4294901760
    %692 = vmatpush1.msra.mxu0 %v691
    %693 = vmatprep.subr.mxu0 0.0
    %v694 = vand.u32 %v651, 4294901760
    %695 = vmatpush1.msra.mxu0 %v694
    %696 = vmatprep.subr.mxu0 0.0
    %697 = vmatpush2.msra.mxu0 0.0
    %698 = vmatprep.subr.mxu0 0.0
    %699 = vmatpush2.msra.mxu0 0.0
    %700 = vmatprep.subr.mxu0 0.0
    %701 = vmatpush2.msra.mxu0 0.0
    %702 = vmatprep.subr.mxu0 0.0
    %703 = vmatpush2.msra.mxu0 0.0
    %704 = vmatprep.subr.mxu0 0.0
    %705 = vmatpush2.msra.mxu0 0.0
    %706 = vmatprep.subr.mxu0 0.0
    %707 = vmatpush2.msra.mxu0 0.0
    %708 = vmatprep.subr.mxu0 0.0
    %709 = vmatpush2.msra.mxu0 0.0
    %710 = vmatprep.subr.mxu0 0.0
    %711 = vmatpush2.msra.mxu0 0.0
    %712 = vmatprep.subr.mxu0 0.0
    %713 = vmatpush2.msra.mxu0 0.0
    %714 = vmatprep.subr.mxu0 0.0
    %715 = vmatpush2.msra.mxu0 0.0
    %716 = vmatprep.subr.mxu0 0.0
    %717 = vmatpush2.msra.mxu0 0.0
    %718 = vmatprep.subr.mxu0 0.0
    %719 = vmatpush2.msra.mxu0 0.0
    %720 = vmatprep.subr.mxu0 0.0
    %721 = vmatpush2.msra.mxu0 0.0
    %722 = vmatprep.subr.mxu0 0.0
    %723 = vmatpush2.msra.mxu0 0.0
    %724 = vmatprep.subr.mxu0 0.0
    %725 = vmatpush2.msra.mxu0 0.0
    %726 = vmatprep.subr.mxu0 0.0
    %727 = vmatpush2.msra.mxu0 0.0
    %728 = vmatprep.mubr.f32.mxu0 0.0
    %v729 = vand.u32 %v658, 4294901760
    %v730 = vsub.f32 %v658, %v729
    %v731 = vand.u32 %v730, 4294901760
    %v732 = vsub.f32 %v730, %v731
    %v733 = vand.u32 %v732, 4294901760
    %734 = vmatmul.mubr.f32.gmra.mxu0 %v733
    %v735 = vpop.f32.mrf.mxu0
    %v736 = vadd.f32 0.0, %v735
    %v737 = vpop.f32.mrf.mxu0
    %738 = vdwg.mxu0
    %739 = vmatprep.subr.mxu0 0.0
    %740 = vmatpush1.msra.mxu0 0.0
    %741 = vmatprep.subr.mxu0 0.0
    %742 = vmatpush1.msra.mxu0 0.0
    %743 = vmatprep.subr.mxu0 0.0
    %744 = vmatpush1.msra.mxu0 0.0
    %745 = vmatprep.subr.mxu0 0.0
    %746 = vmatpush1.msra.mxu0 0.0
    %747 = vmatprep.subr.mxu0 0.0
    %748 = vmatpush1.msra.mxu0 0.0
    %749 = vmatprep.subr.mxu0 0.0
    %750 = vmatpush1.msra.mxu0 0.0
    %751 = vmatprep.subr.mxu0 0.0
    %752 = vmatpush1.msra.mxu0 0.0
    %753 = vmatprep.subr.mxu0 0.0
    %754 = vmatpush1.msra.mxu0 0.0
    %755 = vmatprep.subr.mxu0 0.0
    %756 = vmatpush1.msra.mxu0 0.0
    %757 = vmatprep.subr.mxu0 0.0
    %758 = vmatpush1.msra.mxu0 0.0
    %759 = vmatprep.subr.mxu0 0.0
    %760 = vmatpush1.msra.mxu0 0.0
    %761 = vmatprep.subr.mxu0 0.0
    %762 = vmatpush1.msra.mxu0 0.0
    %763 = vmatprep.subr.mxu0 0.0
    %v764 = vand.u32 %v654, 4294901760
    %v765 = vsub.f32 %v654, %v764
    %v766 = vand.u32 %v765, 4294901760
    %v767 = vsub.f32 %v765, %v766
    %v768 = vand.u32 %v767, 4294901760
    %769 = vmatpush1.msra.mxu0 %v768
    %770 = vmatprep.subr.mxu0 0.0
    %v771 = vand.u32 %v653, 4294901760
    %v772 = vsub.f32 %v653, %v771
    %v773 = vand.u32 %v772, 4294901760
    %v774 = vsub.f32 %v772, %v773
    %v775 = vand.u32 %v774, 4294901760
    %776 = vmatpush1.msra.mxu0 %v775
    %777 = vmatprep.subr.mxu0 0.0
    %v778 = vand.u32 %v652, 4294901760
    %v779 = vsub.f32 %v652, %v778
    %v780 = vand.u32 %v779, 4294901760
    %v781 = vsub.f32 %v779, %v780
    %v782 = vand.u32 %v781, 4294901760
    %783 = vmatpush1.msra.mxu0 %v782
    %784 = vmatprep.subr.mxu0 0.0
    %v785 = vand.u32 %v651, 4294901760
    %v786 = vsub.f32 %v651, %v785
    %v787 = vand.u32 %v786, 4294901760
    %v788 = vsub.f32 %v786, %v787
    %v789 = vand.u32 %v788, 4294901760
    %790 = vmatpush1.msra.mxu0 %v789
    %791 = vmatprep.subr.mxu0 0.0
    %792 = vmatpush2.msra.mxu0 0.0
    %793 = vmatprep.subr.mxu0 0.0
    %794 = vmatpush2.msra.mxu0 0.0
    %795 = vmatprep.subr.mxu0 0.0
    %796 = vmatpush2.msra.mxu0 0.0
    %797 = vmatprep.subr.mxu0 0.0
    %798 = vmatpush2.msra.mxu0 0.0
    %799 = vmatprep.subr.mxu0 0.0
    %800 = vmatpush2.msra.mxu0 0.0
    %801 = vmatprep.subr.mxu0 0.0
    %802 = vmatpush2.msra.mxu0 0.0
    %803 = vmatprep.subr.mxu0 0.0
    %804 = vmatpush2.msra.mxu0 0.0
    %805 = vmatprep.subr.mxu0 0.0
    %806 = vmatpush2.msra.mxu0 0.0
    %807 = vmatprep.subr.mxu0 0.0
    %808 = vmatpush2.msra.mxu0 0.0
    %809 = vmatprep.subr.mxu0 0.0
    %810 = vmatpush2.msra.mxu0 0.0
    %811 = vmatprep.subr.mxu0 0.0
    %812 = vmatpush2.msra.mxu0 0.0
    %813 = vmatprep.subr.mxu0 0.0
    %814 = vmatpush2.msra.mxu0 0.0
    %815 = vmatprep.subr.mxu0 0.0
    %816 = vmatpush2.msra.mxu0 0.0
    %817 = vmatprep.subr.mxu0 0.0
    %818 = vmatpush2.msra.mxu0 0.0
    %819 = vmatprep.subr.mxu0 0.0
    %820 = vmatpush2.msra.mxu0 0.0
    %821 = vmatprep.subr.mxu0 0.0
    %822 = vmatpush2.msra.mxu0 0.0
    %823 = vmatprep.mubr.f32.mxu0 0.0
    %v824 = vand.u32 %v658, 4294901760
    %825 = vmatmul.mubr.f32.gmra.mxu0 %v824
    %v826 = vpop.f32.mrf.mxu0
    %v827 = vadd.f32 %v736, %v826
    %v828 = vpop.f32.mrf.mxu0
    %829 = vdwg.mxu0
    %830 = vmatprep.subr.mxu0 0.0
    %831 = vmatpush1.msra.mxu0 0.0
    %832 = vmatprep.subr.mxu0 0.0
    %833 = vmatpush1.msra.mxu0 0.0
    %834 = vmatprep.subr.mxu0 0.0
    %835 = vmatpush1.msra.mxu0 0.0
    %836 = vmatprep.subr.mxu0 0.0
    %837 = vmatpush1.msra.mxu0 0.0
    %838 = vmatprep.subr.mxu0 0.0
    %839 = vmatpush1.msra.mxu0 0.0
    %840 = vmatprep.subr.mxu0 0.0
    %841 = vmatpush1.msra.mxu0 0.0
    %842 = vmatprep.subr.mxu0 0.0
    %843 = vmatpush1.msra.mxu0 0.0
    %844 = vmatprep.subr.mxu0 0.0
    %845 = vmatpush1.msra.mxu0 0.0
    %846 = vmatprep.subr.mxu0 0.0
    %847 = vmatpush1.msra.mxu0 0.0
    %848 = vmatprep.subr.mxu0 0.0
    %849 = vmatpush1.msra.mxu0 0.0
    %850 = vmatprep.subr.mxu0 0.0
    %851 = vmatpush1.msra.mxu0 0.0
    %852 = vmatprep.subr.mxu0 0.0
    %853 = vmatpush1.msra.mxu0 0.0
    %854 = vmatprep.subr.mxu0 0.0
    %v855 = vand.u32 %v654, 4294901760
    %v856 = vsub.f32 %v654, %v855
    %857 = vmatpush1.msra.mxu0 %v856
    %858 = vmatprep.subr.mxu0 0.0
    %v859 = vand.u32 %v653, 4294901760
    %v860 = vsub.f32 %v653, %v859
    %861 = vmatpush1.msra.mxu0 %v860
    %862 = vmatprep.subr.mxu0 0.0
    %v863 = vand.u32 %v652, 4294901760
    %v864 = vsub.f32 %v652, %v863
    %865 = vmatpush1.msra.mxu0 %v864
    %866 = vmatprep.subr.mxu0 0.0
    %v867 = vand.u32 %v651, 4294901760
    %v868 = vsub.f32 %v651, %v867
    %869 = vmatpush1.msra.mxu0 %v868
    %870 = vmatprep.subr.mxu0 0.0
    %871 = vmatpush2.msra.mxu0 0.0
    %872 = vmatprep.subr.mxu0 0.0
    %873 = vmatpush2.msra.mxu0 0.0
    %874 = vmatprep.subr.mxu0 0.0
    %875 = vmatpush2.msra.mxu0 0.0
    %876 = vmatprep.subr.mxu0 0.0
    %877 = vmatpush2.msra.mxu0 0.0
    %878 = vmatprep.subr.mxu0 0.0
    %879 = vmatpush2.msra.mxu0 0.0
    %880 = vmatprep.subr.mxu0 0.0
    %881 = vmatpush2.msra.mxu0 0.0
    %882 = vmatprep.subr.mxu0 0.0
    %883 = vmatpush2.msra.mxu0 0.0
    %884 = vmatprep.subr.mxu0 0.0
    %885 = vmatpush2.msra.mxu0 0.0
    %886 = vmatprep.subr.mxu0 0.0
    %887 = vmatpush2.msra.mxu0 0.0
    %888 = vmatprep.subr.mxu0 0.0
    %889 = vmatpush2.msra.mxu0 0.0
    %890 = vmatprep.subr.mxu0 0.0
    %891 = vmatpush2.msra.mxu0 0.0
    %892 = vmatprep.subr.mxu0 0.0
    %893 = vmatpush2.msra.mxu0 0.0
    %894 = vmatprep.subr.mxu0 0.0
    %895 = vmatpush2.msra.mxu0 0.0
    %896 = vmatprep.subr.mxu0 0.0
    %897 = vmatpush2.msra.mxu0 0.0
    %898 = vmatprep.subr.mxu0 0.0
    %899 = vmatpush2.msra.mxu0 0.0
    %900 = vmatprep.subr.mxu0 0.0
    %901 = vmatpush2.msra.mxu0 0.0
    %902 = vmatprep.mubr.f32.mxu0 0.0
    %v903 = vand.u32 %v658, 4294901760
    %v904 = vsub.f32 %v658, %v903
    %905 = vmatmul.mubr.f32.gmra.mxu0 %v904
    %v906 = vpop.f32.mrf.mxu0
    %v907 = vadd.f32 %v827, %v906
    %v908 = vpop.f32.mrf.mxu0
    %909 = vdwg.mxu0
    %910 = vmatprep.subr.mxu0 0.0
    %911 = vmatpush1.msra.mxu0 0.0
    %912 = vmatprep.subr.mxu0 0.0
    %913 = vmatpush1.msra.mxu0 0.0
    %914 = vmatprep.subr.mxu0 0.0
    %915 = vmatpush1.msra.mxu0 0.0
    %916 = vmatprep.subr.mxu0 0.0
    %917 = vmatpush1.msra.mxu0 0.0
    %918 = vmatprep.subr.mxu0 0.0
    %919 = vmatpush1.msra.mxu0 0.0
    %920 = vmatprep.subr.mxu0 0.0
    %921 = vmatpush1.msra.mxu0 0.0
    %922 = vmatprep.subr.mxu0 0.0
    %923 = vmatpush1.msra.mxu0 0.0
    %924 = vmatprep.subr.mxu0 0.0
    %925 = vmatpush1.msra.mxu0 0.0
    %926 = vmatprep.subr.mxu0 0.0
    %927 = vmatpush1.msra.mxu0 0.0
    %928 = vmatprep.subr.mxu0 0.0
    %929 = vmatpush1.msra.mxu0 0.0
    %930 = vmatprep.subr.mxu0 0.0
    %931 = vmatpush1.msra.mxu0 0.0
    %932 = vmatprep.subr.mxu0 0.0
    %933 = vmatpush1.msra.mxu0 0.0
    %934 = vmatprep.subr.mxu0 0.0
    %v935 = vand.u32 %v654, 4294901760
    %936 = vmatpush1.msra.mxu0 %v935
    %937 = vmatprep.subr.mxu0 0.0
    %v938 = vand.u32 %v653, 4294901760
    %939 = vmatpush1.msra.mxu0 %v938
    %940 = vmatprep.subr.mxu0 0.0
    %v941 = vand.u32 %v652, 4294901760
    %942 = vmatpush1.msra.mxu0 %v941
    %943 = vmatprep.subr.mxu0 0.0
    %v944 = vand.u32 %v651, 4294901760
    %945 = vmatpush1.msra.mxu0 %v944
    %946 = vmatprep.subr.mxu0 0.0
    %947 = vmatpush2.msra.mxu0 0.0
    %948 = vmatprep.subr.mxu0 0.0
    %949 = vmatpush2.msra.mxu0 0.0
    %950 = vmatprep.subr.mxu0 0.0
    %951 = vmatpush2.msra.mxu0 0.0
    %952 = vmatprep.subr.mxu0 0.0
    %953 = vmatpush2.msra.mxu0 0.0
    %954 = vmatprep.subr.mxu0 0.0
    %955 = vmatpush2.msra.mxu0 0.0
    %956 = vmatprep.subr.mxu0 0.0
    %957 = vmatpush2.msra.mxu0 0.0
    %958 = vmatprep.subr.mxu0 0.0
    %959 = vmatpush2.msra.mxu0 0.0
    %960 = vmatprep.subr.mxu0 0.0
    %961 = vmatpush2.msra.mxu0 0.0
    %962 = vmatprep.subr.mxu0 0.0
    %963 = vmatpush2.msra.mxu0 0.0
    %964 = vmatprep.subr.mxu0 0.0
    %965 = vmatpush2.msra.mxu0 0.0
    %966 = vmatprep.subr.mxu0 0.0
    %967 = vmatpush2.msra.mxu0 0.0
    %968 = vmatprep.subr.mxu0 0.0
    %969 = vmatpush2.msra.mxu0 0.0
    %970 = vmatprep.subr.mxu0 0.0
    %971 = vmatpush2.msra.mxu0 0.0
    %972 = vmatprep.subr.mxu0 0.0
    %973 = vmatpush2.msra.mxu0 0.0
    %974 = vmatprep.subr.mxu0 0.0
    %975 = vmatpush2.msra.mxu0 0.0
    %976 = vmatprep.subr.mxu0 0.0
    %977 = vmatpush2.msra.mxu0 0.0
    %978 = vmatprep.mubr.f32.mxu0 0.0
    %v979 = vand.u32 %v658, 4294901760
    %v980 = vsub.f32 %v658, %v979
    %v981 = vand.u32 %v980, 4294901760
    %982 = vmatmul.mubr.f32.gmra.mxu0 %v981
    %v983 = vpop.f32.mrf.mxu0
    %v984 = vadd.f32 %v907, %v983
    %v985 = vpop.f32.mrf.mxu0
    %986 = vdwg.mxu0
    %987 = vmatprep.subr.mxu0 0.0
    %988 = vmatpush1.msra.mxu0 0.0
    %989 = vmatprep.subr.mxu0 0.0
    %990 = vmatpush1.msra.mxu0 0.0
    %991 = vmatprep.subr.mxu0 0.0
    %992 = vmatpush1.msra.mxu0 0.0
    %993 = vmatprep.subr.mxu0 0.0
    %994 = vmatpush1.msra.mxu0 0.0
    %995 = vmatprep.subr.mxu0 0.0
    %996 = vmatpush1.msra.mxu0 0.0
    %997 = vmatprep.subr.mxu0 0.0
    %998 = vmatpush1.msra.mxu0 0.0
    %999 = vmatprep.subr.mxu0 0.0
    %1000 = vmatpush1.msra.mxu0 0.0
    %1001 = vmatprep.subr.mxu0 0.0
    %1002 = vmatpush1.msra.mxu0 0.0
    %1003 = vmatprep.subr.mxu0 0.0
    %1004 = vmatpush1.msra.mxu0 0.0
    %1005 = vmatprep.subr.mxu0 0.0
    %1006 = vmatpush1.msra.mxu0 0.0
    %1007 = vmatprep.subr.mxu0 0.0
    %1008 = vmatpush1.msra.mxu0 0.0
    %1009 = vmatprep.subr.mxu0 0.0
    %1010 = vmatpush1.msra.mxu0 0.0
    %1011 = vmatprep.subr.mxu0 0.0
    %v1012 = vand.u32 %v654, 4294901760
    %v1013 = vsub.f32 %v654, %v1012
    %v1014 = vand.u32 %v1013, 4294901760
    %1015 = vmatpush1.msra.mxu0 %v1014
    %1016 = vmatprep.subr.mxu0 0.0
    %v1017 = vand.u32 %v653, 4294901760
    %v1018 = vsub.f32 %v653, %v1017
    %v1019 = vand.u32 %v1018, 4294901760
    %1020 = vmatpush1.msra.mxu0 %v1019
    %1021 = vmatprep.subr.mxu0 0.0
    %v1022 = vand.u32 %v652, 4294901760
    %v1023 = vsub.f32 %v652, %v1022
    %v1024 = vand.u32 %v1023, 4294901760
    %1025 = vmatpush1.msra.mxu0 %v1024
    %1026 = vmatprep.subr.mxu0 0.0
    %v1027 = vand.u32 %v651, 4294901760
    %v1028 = vsub.f32 %v651, %v1027
    %v1029 = vand.u32 %v1028, 4294901760
    %1030 = vmatpush1.msra.mxu0 %v1029
    %1031 = vmatprep.subr.mxu0 0.0
    %1032 = vmatpush2.msra.mxu0 0.0
    %1033 = vmatprep.subr.mxu0 0.0
    %1034 = vmatpush2.msra.mxu0 0.0
    %1035 = vmatprep.subr.mxu0 0.0
    %1036 = vmatpush2.msra.mxu0 0.0
    %1037 = vmatprep.subr.mxu0 0.0
    %1038 = vmatpush2.msra.mxu0 0.0
    %1039 = vmatprep.subr.mxu0 0.0
    %1040 = vmatpush2.msra.mxu0 0.0
    %1041 = vmatprep.subr.mxu0 0.0
    %1042 = vmatpush2.msra.mxu0 0.0
    %1043 = vmatprep.subr.mxu0 0.0
    %1044 = vmatpush2.msra.mxu0 0.0
    %1045 = vmatprep.subr.mxu0 0.0
    %1046 = vmatpush2.msra.mxu0 0.0
    %1047 = vmatprep.subr.mxu0 0.0
    %1048 = vmatpush2.msra.mxu0 0.0
    %1049 = vmatprep.subr.mxu0 0.0
    %1050 = vmatpush2.msra.mxu0 0.0
    %1051 = vmatprep.subr.mxu0 0.0
    %1052 = vmatpush2.msra.mxu0 0.0
    %1053 = vmatprep.subr.mxu0 0.0
    %1054 = vmatpush2.msra.mxu0 0.0
    %1055 = vmatprep.subr.mxu0 0.0
    %1056 = vmatpush2.msra.mxu0 0.0
    %1057 = vmatprep.subr.mxu0 0.0
    %1058 = vmatpush2.msra.mxu0 0.0
    %1059 = vmatprep.subr.mxu0 0.0
    %1060 = vmatpush2.msra.mxu0 0.0
    %1061 = vmatprep.subr.mxu0 0.0
    %1062 = vmatpush2.msra.mxu0 0.0
    %1063 = vmatprep.mubr.f32.mxu0 0.0
    %v1064 = vand.u32 %v658, 4294901760
    %1065 = vmatmul.mubr.f32.gmra.mxu0 %v1064
    %v1066 = vpop.f32.mrf.mxu0
    %v1067 = vadd.f32 %v984, %v1066
    %v1068 = vpop.f32.mrf.mxu0
    %1069 = vdwg.mxu0
    %1070 = vmatprep.subr.mxu0 0.0
    %1071 = vmatpush1.msra.mxu0 0.0
    %1072 = vmatprep.subr.mxu0 0.0
    %1073 = vmatpush1.msra.mxu0 0.0
    %1074 = vmatprep.subr.mxu0 0.0
    %1075 = vmatpush1.msra.mxu0 0.0
    %1076 = vmatprep.subr.mxu0 0.0
    %1077 = vmatpush1.msra.mxu0 0.0
    %1078 = vmatprep.subr.mxu0 0.0
    %1079 = vmatpush1.msra.mxu0 0.0
    %1080 = vmatprep.subr.mxu0 0.0
    %1081 = vmatpush1.msra.mxu0 0.0
    %1082 = vmatprep.subr.mxu0 0.0
    %1083 = vmatpush1.msra.mxu0 0.0
    %1084 = vmatprep.subr.mxu0 0.0
    %1085 = vmatpush1.msra.mxu0 0.0
    %1086 = vmatprep.subr.mxu0 0.0
    %1087 = vmatpush1.msra.mxu0 0.0
    %1088 = vmatprep.subr.mxu0 0.0
    %1089 = vmatpush1.msra.mxu0 0.0
    %1090 = vmatprep.subr.mxu0 0.0
    %1091 = vmatpush1.msra.mxu0 0.0
    %1092 = vmatprep.subr.mxu0 0.0
    %1093 = vmatpush1.msra.mxu0 0.0
    %1094 = vmatprep.subr.mxu0 0.0
    %v1095 = vand.u32 %v654, 4294901760
    %1096 = vmatpush1.msra.mxu0 %v1095
    %1097 = vmatprep.subr.mxu0 0.0
    %v1098 = vand.u32 %v653, 4294901760
    %1099 = vmatpush1.msra.mxu0 %v1098
    %1100 = vmatprep.subr.mxu0 0.0
    %v1101 = vand.u32 %v652, 4294901760
    %1102 = vmatpush1.msra.mxu0 %v1101
    %1103 = vmatprep.subr.mxu0 0.0
    %v1104 = vand.u32 %v651, 4294901760
    %1105 = vmatpush1.msra.mxu0 %v1104
    %1106 = vmatprep.subr.mxu0 0.0
    %1107 = vmatpush2.msra.mxu0 0.0
    %1108 = vmatprep.subr.mxu0 0.0
    %1109 = vmatpush2.msra.mxu0 0.0
    %1110 = vmatprep.subr.mxu0 0.0
    %1111 = vmatpush2.msra.mxu0 0.0
    %1112 = vmatprep.subr.mxu0 0.0
    %1113 = vmatpush2.msra.mxu0 0.0
    %1114 = vmatprep.subr.mxu0 0.0
    %1115 = vmatpush2.msra.mxu0 0.0
    %1116 = vmatprep.subr.mxu0 0.0
    %1117 = vmatpush2.msra.mxu0 0.0
    %1118 = vmatprep.subr.mxu0 0.0
    %1119 = vmatpush2.msra.mxu0 0.0
    %1120 = vmatprep.subr.mxu0 0.0
    %1121 = vmatpush2.msra.mxu0 0.0
    %1122 = vmatprep.subr.mxu0 0.0
    %1123 = vmatpush2.msra.mxu0 0.0
    %1124 = vmatprep.subr.mxu0 0.0
    %1125 = vmatpush2.msra.mxu0 0.0
    %1126 = vmatprep.subr.mxu0 0.0
    %1127 = vmatpush2.msra.mxu0 0.0
    %1128 = vmatprep.subr.mxu0 0.0
    %1129 = vmatpush2.msra.mxu0 0.0
    %1130 = vmatprep.subr.mxu0 0.0
    %1131 = vmatpush2.msra.mxu0 0.0
    %1132 = vmatprep.subr.mxu0 0.0
    %1133 = vmatpush2.msra.mxu0 0.0
    %1134 = vmatprep.subr.mxu0 0.0
    %1135 = vmatpush2.msra.mxu0 0.0
    %1136 = vmatprep.subr.mxu0 0.0
    %1137 = vmatpush2.msra.mxu0 0.0
    %1138 = vmatprep.mubr.f32.mxu0 0.0
    %v1139 = vand.u32 %v658, 4294901760
    %1140 = vmatmul.mubr.f32.gmra.mxu0 %v1139
    %v1141 = vpop.f32.mrf.mxu0
    %v1142 = vadd.f32 %v1067, %v1141
    %v1143 = vpop.f32.mrf.mxu0
    %1144 = vdwg.mxu0
    %v1145 = vadd.f32 %v655, %v1142
    %v1146 = vsub.f32 0.0, %v1145
    %v1147 = vmul.f32 %v1146, 1.442695
    %v1148 = vpow.pop %v1147
    %v1149 = vadd.f32 %v1148, 1.0
    %v1150 = vrcp.pop %v1149
    %v1151 = vmul.f32 1.0, %v1150
    %v1152 = vtanh.pop %v1145
    %v1153 = vmul.f32 %v1151, 0.0
    %1155 = vrot.lane.b32.xlu0 %v1152, 64
    %v1156 = vpop.permute.xlu0 %1155
    %v1158 = vmul.f32 %v1151, %v1156
    %1160 = vrot.lane.b32.xlu0 %v1158, 32
    %v1161 = vpop.permute.xlu0 %1160
    %v1163 = vadd.f32 %v1153, %v1161
    %v1164 = vtanh.pop %v1163
    %1166 = vrot.lane.b32.xlu0 %v1164, 64
    %v1167 = vpop.permute.xlu0 %1166
    %v1169 = vmul.f32 %v1151, %v1167
    %1171 = vrot.lane.b32.xlu0 %v1169, 32
    %v1172 = vpop.permute.xlu0 %1171
    %vm1174 = vcmask 254976
    %1175 = vst.msk [vmem:[#allocation3] sm:$0x3] %vm1174, %v1172
    %v1176 = vld [vmem:[#allocation2] sm:$0xc]
    %v1177 = vsel %vm656, %v1172, 0
    %1179 = vmatprep.subr.mxu0 0.0
    %1180 = vmatpush1.msra.mxu0 0.0
    %1181 = vmatprep.subr.mxu0 0.0
    %1182 = vmatpush1.msra.mxu0 0.0
    %1183 = vmatprep.subr.mxu0 0.0
    %1184 = vmatpush1.msra.mxu0 0.0
    %1185 = vmatprep.subr.mxu0 0.0
    %1186 = vmatpush1.msra.mxu0 0.0
    %1187 = vmatprep.subr.mxu0 0.0
    %1188 = vmatpush1.msra.mxu0 0.0
    %1189 = vmatprep.subr.mxu0 0.0
    %1190 = vmatpush1.msra.mxu0 0.0
    %1191 = vmatprep.subr.mxu0 0.0
    %1192 = vmatpush1.msra.mxu0 0.0
    %1193 = vmatprep.subr.mxu0 0.0
    %1194 = vmatpush1.msra.mxu0 0.0
    %1195 = vmatprep.subr.mxu0 0.0
    %1196 = vmatpush1.msra.mxu0 0.0
    %1197 = vmatprep.subr.mxu0 0.0
    %1198 = vmatpush1.msra.mxu0 0.0
    %1199 = vmatprep.subr.mxu0 0.0
    %1200 = vmatpush1.msra.mxu0 0.0
    %1201 = vmatprep.subr.mxu0 0.0
    %1202 = vmatpush1.msra.mxu0 0.0
    %1203 = vmatprep.subr.mxu0 0.0
    %v1204 = vand.u32 %v654, 4294901760
    %1205 = vmatpush1.msra.mxu0 %v1204
    %1206 = vmatprep.subr.mxu0 0.0
    %v1207 = vand.u32 %v653, 4294901760
    %1208 = vmatpush1.msra.mxu0 %v1207
    %1209 = vmatprep.subr.mxu0 0.0
    %v1210 = vand.u32 %v652, 4294901760
    %1211 = vmatpush1.msra.mxu0 %v1210
    %1212 = vmatprep.subr.mxu0 0.0
    %v1213 = vand.u32 %v651, 4294901760
    %1214 = vmatpush1.msra.mxu0 %v1213
    %1215 = vmatprep.subr.mxu0 0.0
    %1216 = vmatpush2.msra.mxu0 0.0
    %1217 = vmatprep.subr.mxu0 0.0
    %1218 = vmatpush2.msra.mxu0 0.0
    %1219 = vmatprep.subr.mxu0 0.0
    %1220 = vmatpush2.msra.mxu0 0.0
    %1221 = vmatprep.subr.mxu0 0.0
    %1222 = vmatpush2.msra.mxu0 0.0
    %1223 = vmatprep.subr.mxu0 0.0
    %1224 = vmatpush2.msra.mxu0 0.0
    %1225 = vmatprep.subr.mxu0 0.0
    %1226 = vmatpush2.msra.mxu0 0.0
    %1227 = vmatprep.subr.mxu0 0.0
    %1228 = vmatpush2.msra.mxu0 0.0
    %1229 = vmatprep.subr.mxu0 0.0
    %1230 = vmatpush2.msra.mxu0 0.0
    %1231 = vmatprep.subr.mxu0 0.0
    %1232 = vmatpush2.msra.mxu0 0.0
    %1233 = vmatprep.subr.mxu0 0.0
    %1234 = vmatpush2.msra.mxu0 0.0
    %1235 = vmatprep.subr.mxu0 0.0
    %1236 = vmatpush2.msra.mxu0 0.0
    %1237 = vmatprep.subr.mxu0 0.0
    %1238 = vmatpush2.msra.mxu0 0.0
    %1239 = vmatprep.subr.mxu0 0.0
    %1240 = vmatpush2.msra.mxu0 0.0
    %1241 = vmatprep.subr.mxu0 0.0
    %1242 = vmatpush2.msra.mxu0 0.0
    %1243 = vmatprep.subr.mxu0 0.0
    %1244 = vmatpush2.msra.mxu0 0.0
    %1245 = vmatprep.subr.mxu0 0.0
    %1246 = vmatpush2.msra.mxu0 0.0
    %1247 = vmatprep.mubr.f32.mxu0 0.0
    %v1248 = vand.u32 %v1177, 4294901760
    %v1249 = vsub.f32 %v1177, %v1248
    %v1250 = vand.u32 %v1249, 4294901760
    %v1251 = vsub.f32 %v1249, %v1250
    %v1252 = vand.u32 %v1251, 4294901760
    %1253 = vmatmul.mubr.f32.gmra.mxu0 %v1252
    %v1254 = vpop.f32.mrf.mxu0
    %v1255 = vadd.f32 0.0, %v1254
    %v1256 = vpop.f32.mrf.mxu0
    %1257 = vdwg.mxu0
    %1258 = vmatprep.subr.mxu0 0.0
    %1259 = vmatpush1.msra.mxu0 0.0
    %1260 = vmatprep.subr.mxu0 0.0
    %1261 = vmatpush1.msra.mxu0 0.0
    %1262 = vmatprep.subr.mxu0 0.0
    %1263 = vmatpush1.msra.mxu0 0.0
    %1264 = vmatprep.subr.mxu0 0.0
    %1265 = vmatpush1.msra.mxu0 0.0
    %1266 = vmatprep.subr.mxu0 0.0
    %1267 = vmatpush1.msra.mxu0 0.0
    %1268 = vmatprep.subr.mxu0 0.0
    %1269 = vmatpush1.msra.mxu0 0.0
    %1270 = vmatprep.subr.mxu0 0.0
    %1271 = vmatpush1.msra.mxu0 0.0
    %1272 = vmatprep.subr.mxu0 0.0
    %1273 = vmatpush1.msra.mxu0 0.0
    %1274 = vmatprep.subr.mxu0 0.0
    %1275 = vmatpush1.msra.mxu0 0.0
    %1276 = vmatprep.subr.mxu0 0.0
    %1277 = vmatpush1.msra.mxu0 0.0
    %1278 = vmatprep.subr.mxu0 0.0
    %1279 = vmatpush1.msra.mxu0 0.0
    %1280 = vmatprep.subr.mxu0 0.0
    %1281 = vmatpush1.msra.mxu0 0.0
    %1282 = vmatprep.subr.mxu0 0.0
    %v1283 = vand.u32 %v654, 4294901760
    %v1284 = vsub.f32 %v654, %v1283
    %v1285 = vand.u32 %v1284, 4294901760
    %v1286 = vsub.f32 %v1284, %v1285
    %v1287 = vand.u32 %v1286, 4294901760
    %1288 = vmatpush1.msra.mxu0 %v1287
    %1289 = vmatprep.subr.mxu0 0.0
    %v1290 = vand.u32 %v653, 4294901760
    %v1291 = vsub.f32 %v653, %v1290
    %v1292 = vand.u32 %v1291, 4294901760
    %v1293 = vsub.f32 %v1291, %v1292
    %v1294 = vand.u32 %v1293, 4294901760
    %1295 = vmatpush1.msra.mxu0 %v1294
    %1296 = vmatprep.subr.mxu0 0.0
    %v1297 = vand.u32 %v652, 4294901760
    %v1298 = vsub.f32 %v652, %v1297
    %v1299 = vand.u32 %v1298, 4294901760
    %v1300 = vsub.f32 %v1298, %v1299
    %v1301 = vand.u32 %v1300, 4294901760
    %1302 = vmatpush1.msra.mxu0 %v1301
    %1303 = vmatprep.subr.mxu0 0.0
    %v1304 = vand.u32 %v651, 4294901760
    %v1305 = vsub.f32 %v651, %v1304
    %v1306 = vand.u32 %v1305, 4294901760
    %v1307 = vsub.f32 %v1305, %v1306
    %v1308 = vand.u32 %v1307, 4294901760
    %1309 = vmatpush1.msra.mxu0 %v1308
    %1310 = vmatprep.subr.mxu0 0.0
    %1311 = vmatpush2.msra.mxu0 0.0
    %1312 = vmatprep.subr.mxu0 0.0
    %1313 = vmatpush2.msra.mxu0 0.0
    %1314 = vmatprep.subr.mxu0 0.0
    %1315 = vmatpush2.msra.mxu0 0.0
    %1316 = vmatprep.subr.mxu0 0.0
    %1317 = vmatpush2.msra.mxu0 0.0
    %1318 = vmatprep.subr.mxu0 0.0
    %1319 = vmatpush2.msra.mxu0 0.0
    %1320 = vmatprep.subr.mxu0 0.0
    %1321 = vmatpush2.msra.mxu0 0.0
    %1322 = vmatprep.subr.mxu0 0.0
    %1323 = vmatpush2.msra.mxu0 0.0
    %1324 = vmatprep.subr.mxu0 0.0
    %1325 = vmatpush2.msra.mxu0 0.0
    %1326 = vmatprep.subr.mxu0 0.0
    %1327 = vmatpush2.msra.mxu0 0.0
    %1328 = vmatprep.subr.mxu0 0.0
    %1329 = vmatpush2.msra.mxu0 0.0
    %1330 = vmatprep.subr.mxu0 0.0
    %1331 = vmatpush2.msra.mxu0 0.0
    %1332 = vmatprep.subr.mxu0 0.0
    %1333 = vmatpush2.msra.mxu0 0.0
    %1334 = vmatprep.subr.mxu0 0.0
    %1335 = vmatpush2.msra.mxu0 0.0
    %1336 = vmatprep.subr.mxu0 0.0
    %1337 = vmatpush2.msra.mxu0 0.0
    %1338 = vmatprep.subr.mxu0 0.0
    %1339 = vmatpush2.msra.mxu0 0.0
    %1340 = vmatprep.subr.mxu0 0.0
    %1341 = vmatpush2.msra.mxu0 0.0
    %1342 = vmatprep.mubr.f32.mxu0 0.0
    %v1343 = vand.u32 %v1177, 4294901760
    %1344 = vmatmul.mubr.f32.gmra.mxu0 %v1343
    %v1345 = vpop.f32.mrf.mxu0
    %v1346 = vadd.f32 %v1255, %v1345
    %v1347 = vpop.f32.mrf.mxu0
    %1348 = vdwg.mxu0
    %1349 = vmatprep.subr.mxu0 0.0
    %1350 = vmatpush1.msra.mxu0 0.0
    %1351 = vmatprep.subr.mxu0 0.0
    %1352 = vmatpush1.msra.mxu0 0.0
    %1353 = vmatprep.subr.mxu0 0.0
    %1354 = vmatpush1.msra.mxu0 0.0
    %1355 = vmatprep.subr.mxu0 0.0
    %1356 = vmatpush1.msra.mxu0 0.0
    %1357 = vmatprep.subr.mxu0 0.0
    %1358 = vmatpush1.msra.mxu0 0.0
    %1359 = vmatprep.subr.mxu0 0.0
    %1360 = vmatpush1.msra.mxu0 0.0
    %1361 = vmatprep.subr.mxu0 0.0
    %1362 = vmatpush1.msra.mxu0 0.0
    %1363 = vmatprep.subr.mxu0 0.0
    %1364 = vmatpush1.msra.mxu0 0.0
    %1365 = vmatprep.subr.mxu0 0.0
    %1366 = vmatpush1.msra.mxu0 0.0
    %1367 = vmatprep.subr.mxu0 0.0
    %1368 = vmatpush1.msra.mxu0 0.0
    %1369 = vmatprep.subr.mxu0 0.0
    %1370 = vmatpush1.msra.mxu0 0.0
    %1371 = vmatprep.subr.mxu0 0.0
    %1372 = vmatpush1.msra.mxu0 0.0
    %1373 = vmatprep.subr.mxu0 0.0
    %v1374 = vand.u32 %v654, 4294901760
    %v1375 = vsub.f32 %v654, %v1374
    %1376 = vmatpush1.msra.mxu0 %v1375
    %1377 = vmatprep.subr.mxu0 0.0
    %v1378 = vand.u32 %v653, 4294901760
    %v1379 = vsub.f32 %v653, %v1378
    %1380 = vmatpush1.msra.mxu0 %v1379
    %1381 = vmatprep.subr.mxu0 0.0
    %v1382 = vand.u32 %v652, 4294901760
    %v1383 = vsub.f32 %v652, %v1382
    %1384 = vmatpush1.msra.mxu0 %v1383
    %1385 = vmatprep.subr.mxu0 0.0
    %v1386 = vand.u32 %v651, 4294901760
    %v1387 = vsub.f32 %v651, %v1386
    %1388 = vmatpush1.msra.mxu0 %v1387
    %1389 = vmatprep.subr.mxu0 0.0
    %1390 = vmatpush2.msra.mxu0 0.0
    %1391 = vmatprep.subr.mxu0 0.0
    %1392 = vmatpush2.msra.mxu0 0.0
    %1393 = vmatprep.subr.mxu0 0.0
    %1394 = vmatpush2.msra.mxu0 0.0
    %1395 = vmatprep.subr.mxu0 0.0
    %1396 = vmatpush2.msra.mxu0 0.0
    %1397 = vmatprep.subr.mxu0 0.0
    %1398 = vmatpush2.msra.mxu0 0.0
    %1399 = vmatprep.subr.mxu0 0.0
    %1400 = vmatpush2.msra.mxu0 0.0
    %1401 = vmatprep.subr.mxu0 0.0
    %1402 = vmatpush2.msra.mxu0 0.0
    %1403 = vmatprep.subr.mxu0 0.0
    %1404 = vmatpush2.msra.mxu0 0.0
    %1405 = vmatprep.subr.mxu0 0.0
    %1406 = vmatpush2.msra.mxu0 0.0
    %1407 = vmatprep.subr.mxu0 0.0
    %1408 = vmatpush2.msra.mxu0 0.0
    %1409 = vmatprep.subr.mxu0 0.0
    %1410 = vmatpush2.msra.mxu0 0.0
    %1411 = vmatprep.subr.mxu0 0.0
    %1412 = vmatpush2.msra.mxu0 0.0
    %1413 = vmatprep.subr.mxu0 0.0
    %1414 = vmatpush2.msra.mxu0 0.0
    %1415 = vmatprep.subr.mxu0 0.0
    %1416 = vmatpush2.msra.mxu0 0.0
    %1417 = vmatprep.subr.mxu0 0.0
    %1418 = vmatpush2.msra.mxu0 0.0
    %1419 = vmatprep.subr.mxu0 0.0
    %1420 = vmatpush2.msra.mxu0 0.0
    %1421 = vmatprep.mubr.f32.mxu0 0.0
    %v1422 = vand.u32 %v1177, 4294901760
    %v1423 = vsub.f32 %v1177, %v1422
    %1424 = vmatmul.mubr.f32.gmra.mxu0 %v1423
    %v1425 = vpop.f32.mrf.mxu0
    %v1426 = vadd.f32 %v1346, %v1425
    %v1427 = vpop.f32.mrf.mxu0
    %1428 = vdwg.mxu0
    %1429 = vmatprep.subr.mxu0 0.0
    %1430 = vmatpush1.msra.mxu0 0.0
    %1431 = vmatprep.subr.mxu0 0.0
    %1432 = vmatpush1.msra.mxu0 0.0
    %1433 = vmatprep.subr.mxu0 0.0
    %1434 = vmatpush1.msra.mxu0 0.0
    %1435 = vmatprep.subr.mxu0 0.0
    %1436 = vmatpush1.msra.mxu0 0.0
    %1437 = vmatprep.subr.mxu0 0.0
    %1438 = vmatpush1.msra.mxu0 0.0
    %1439 = vmatprep.subr.mxu0 0.0
    %1440 = vmatpush1.msra.mxu0 0.0
    %1441 = vmatprep.subr.mxu0 0.0
    %1442 = vmatpush1.msra.mxu0 0.0
    %1443 = vmatprep.subr.mxu0 0.0
    %1444 = vmatpush1.msra.mxu0 0.0
    %1445 = vmatprep.subr.mxu0 0.0
    %1446 = vmatpush1.msra.mxu0 0.0
    %1447 = vmatprep.subr.mxu0 0.0
    %1448 = vmatpush1.msra.mxu0 0.0
    %1449 = vmatprep.subr.mxu0 0.0
    %1450 = vmatpush1.msra.mxu0 0.0
    %1451 = vmatprep.subr.mxu0 0.0
    %1452 = vmatpush1.msra.mxu0 0.0
    %1453 = vmatprep.subr.mxu0 0.0
    %v1454 = vand.u32 %v654, 4294901760
    %1455 = vmatpush1.msra.mxu0 %v1454
    %1456 = vmatprep.subr.mxu0 0.0
    %v1457 = vand.u32 %v653, 4294901760
    %1458 = vmatpush1.msra.mxu0 %v1457
    %1459 = vmatprep.subr.mxu0 0.0
    %v1460 = vand.u32 %v652, 4294901760
    %1461 = vmatpush1.msra.mxu0 %v1460
    %1462 = vmatprep.subr.mxu0 0.0
    %v1463 = vand.u32 %v651, 4294901760
    %1464 = vmatpush1.msra.mxu0 %v1463
    %1465 = vmatprep.subr.mxu0 0.0
    %1466 = vmatpush2.msra.mxu0 0.0
    %1467 = vmatprep.subr.mxu0 0.0
    %1468 = vmatpush2.msra.mxu0 0.0
    %1469 = vmatprep.subr.mxu0 0.0
    %1470 = vmatpush2.msra.mxu0 0.0
    %1471 = vmatprep.subr.mxu0 0.0
    %1472 = vmatpush2.msra.mxu0 0.0
    %1473 = vmatprep.subr.mxu0 0.0
    %1474 = vmatpush2.msra.mxu0 0.0
    %1475 = vmatprep.subr.mxu0 0.0
    %1476 = vmatpush2.msra.mxu0 0.0
    %1477 = vmatprep.subr.mxu0 0.0
    %1478 = vmatpush2.msra.mxu0 0.0
    %1479 = vmatprep.subr.mxu0 0.0
    %1480 = vmatpush2.msra.mxu0 0.0
    %1481 = vmatprep.subr.mxu0 0.0
    %1482 = vmatpush2.msra.mxu0 0.0
    %1483 = vmatprep.subr.mxu0 0.0
    %1484 = vmatpush2.msra.mxu0 0.0
    %1485 = vmatprep.subr.mxu0 0.0
    %1486 = vmatpush2.msra.mxu0 0.0
    %1487 = vmatprep.subr.mxu0 0.0
    %1488 = vmatpush2.msra.mxu0 0.0
    %1489 = vmatprep.subr.mxu0 0.0
    %1490 = vmatpush2.msra.mxu0 0.0
    %1491 = vmatprep.subr.mxu0 0.0
    %1492 = vmatpush2.msra.mxu0 0.0
    %1493 = vmatprep.subr.mxu0 0.0
    %1494 = vmatpush2.msra.mxu0 0.0
    %1495 = vmatprep.subr.mxu0 0.0
    %1496 = vmatpush2.msra.mxu0 0.0
    %1497 = vmatprep.mubr.f32.mxu0 0.0
    %v1498 = vand.u32 %v1177, 4294901760
    %v1499 = vsub.f32 %v1177, %v1498
    %v1500 = vand.u32 %v1499, 4294901760
    %1501 = vmatmul.mubr.f32.gmra.mxu0 %v1500
    %v1502 = vpop.f32.mrf.mxu0
    %v1503 = vadd.f32 %v1426, %v1502
    %v1504 = vpop.f32.mrf.mxu0
    %1505 = vdwg.mxu0
    %1506 = vmatprep.subr.mxu0 0.0
    %1507 = vmatpush1.msra.mxu0 0.0
    %1508 = vmatprep.subr.mxu0 0.0
    %1509 = vmatpush1.msra.mxu0 0.0
    %1510 = vmatprep.subr.mxu0 0.0
    %1511 = vmatpush1.msra.mxu0 0.0
    %1512 = vmatprep.subr.mxu0 0.0
    %1513 = vmatpush1.msra.mxu0 0.0
    %1514 = vmatprep.subr.mxu0 0.0
    %1515 = vmatpush1.msra.mxu0 0.0
    %1516 = vmatprep.subr.mxu0 0.0
    %1517 = vmatpush1.msra.mxu0 0.0
    %1518 = vmatprep.subr.mxu0 0.0
    %1519 = vmatpush1.msra.mxu0 0.0
    %1520 = vmatprep.subr.mxu0 0.0
    %1521 = vmatpush1.msra.mxu0 0.0
    %1522 = vmatprep.subr.mxu0 0.0
    %1523 = vmatpush1.msra.mxu0 0.0
    %1524 = vmatprep.subr.mxu0 0.0
    %1525 = vmatpush1.msra.mxu0 0.0
    %1526 = vmatprep.subr.mxu0 0.0
    %1527 = vmatpush1.msra.mxu0 0.0
    %1528 = vmatprep.subr.mxu0 0.0
    %1529 = vmatpush1.msra.mxu0 0.0
    %1530 = vmatprep.subr.mxu0 0.0
    %v1531 = vand.u32 %v654, 4294901760
    %v1532 = vsub.f32 %v654, %v1531
    %v1533 = vand.u32 %v1532, 4294901760
    %1534 = vmatpush1.msra.mxu0 %v1533
    %1535 = vmatprep.subr.mxu0 0.0
    %v1536 = vand.u32 %v653, 4294901760
    %v1537 = vsub.f32 %v653, %v1536
    %v1538 = vand.u32 %v1537, 4294901760
    %1539 = vmatpush1.msra.mxu0 %v1538
    %1540 = vmatprep.subr.mxu0 0.0
    %v1541 = vand.u32 %v652, 4294901760
    %v1542 = vsub.f32 %v652, %v1541
    %v1543 = vand.u32 %v1542, 4294901760
    %1544 = vmatpush1.msra.mxu0 %v1543
    %1545 = vmatprep.subr.mxu0 0.0
    %v1546 = vand.u32 %v651, 4294901760
    %v1547 = vsub.f32 %v651, %v1546
    %v1548 = vand.u32 %v1547, 4294901760
    %1549 = vmatpush1.msra.mxu0 %v1548
    %1550 = vmatprep.subr.mxu0 0.0
    %1551 = vmatpush2.msra.mxu0 0.0
    %1552 = vmatprep.subr.mxu0 0.0
    %1553 = vmatpush2.msra.mxu0 0.0
    %1554 = vmatprep.subr.mxu0 0.0
    %1555 = vmatpush2.msra.mxu0 0.0
    %1556 = vmatprep.subr.mxu0 0.0
    %1557 = vmatpush2.msra.mxu0 0.0
    %1558 = vmatprep.subr.mxu0 0.0
    %1559 = vmatpush2.msra.mxu0 0.0
    %1560 = vmatprep.subr.mxu0 0.0
    %1561 = vmatpush2.msra.mxu0 0.0
    %1562 = vmatprep.subr.mxu0 0.0
    %1563 = vmatpush2.msra.mxu0 0.0
    %1564 = vmatprep.subr.mxu0 0.0
    %1565 = vmatpush2.msra.mxu0 0.0
    %1566 = vmatprep.subr.mxu0 0.0
    %1567 = vmatpush2.msra.mxu0 0.0
    %1568 = vmatprep.subr.mxu0 0.0
    %1569 = vmatpush2.msra.mxu0 0.0
    %1570 = vmatprep.subr.mxu0 0.0
    %1571 = vmatpush2.msra.mxu0 0.0
    %1572 = vmatprep.subr.mxu0 0.0
    %1573 = vmatpush2.msra.mxu0 0.0
    %1574 = vmatprep.subr.mxu0 0.0
    %1575 = vmatpush2.msra.mxu0 0.0
    %1576 = vmatprep.subr.mxu0 0.0
    %1577 = vmatpush2.msra.mxu0 0.0
    %1578 = vmatprep.subr.mxu0 0.0
    %1579 = vmatpush2.msra.mxu0 0.0
    %1580 = vmatprep.subr.mxu0 0.0
    %1581 = vmatpush2.msra.mxu0 0.0
    %1582 = vmatprep.mubr.f32.mxu0 0.0
    %v1583 = vand.u32 %v1177, 4294901760
    %1584 = vmatmul.mubr.f32.gmra.mxu0 %v1583
    %v1585 = vpop.f32.mrf.mxu0
    %v1586 = vadd.f32 %v1503, %v1585
    %v1587 = vpop.f32.mrf.mxu0
    %1588 = vdwg.mxu0
    %1589 = vmatprep.subr.mxu0 0.0
    %1590 = vmatpush1.msra.mxu0 0.0
    %1591 = vmatprep.subr.mxu0 0.0
    %1592 = vmatpush1.msra.mxu0 0.0
    %1593 = vmatprep.subr.mxu0 0.0
    %1594 = vmatpush1.msra.mxu0 0.0
    %1595 = vmatprep.subr.mxu0 0.0
    %1596 = vmatpush1.msra.mxu0 0.0
    %1597 = vmatprep.subr.mxu0 0.0
    %1598 = vmatpush1.msra.mxu0 0.0
    %1599 = vmatprep.subr.mxu0 0.0
    %1600 = vmatpush1.msra.mxu0 0.0
    %1601 = vmatprep.subr.mxu0 0.0
    %1602 = vmatpush1.msra.mxu0 0.0
    %1603 = vmatprep.subr.mxu0 0.0
    %1604 = vmatpush1.msra.mxu0 0.0
    %1605 = vmatprep.subr.mxu0 0.0
    %1606 = vmatpush1.msra.mxu0 0.0
    %1607 = vmatprep.subr.mxu0 0.0
    %1608 = vmatpush1.msra.mxu0 0.0
    %1609 = vmatprep.subr.mxu0 0.0
    %1610 = vmatpush1.msra.mxu0 0.0
    %1611 = vmatprep.subr.mxu0 0.0
    %1612 = vmatpush1.msra.mxu0 0.0
    %1613 = vmatprep.subr.mxu0 0.0
    %v1614 = vand.u32 %v654, 4294901760
    %1615 = vmatpush1.msra.mxu0 %v1614
    %1616 = vmatprep.subr.mxu0 0.0
    %v1617 = vand.u32 %v653, 4294901760
    %1618 = vmatpush1.msra.mxu0 %v1617
    %1619 = vmatprep.subr.mxu0 0.0
    %v1620 = vand.u32 %v652, 4294901760
    %1621 = vmatpush1.msra.mxu0 %v1620
    %1622 = vmatprep.subr.mxu0 0.0
    %v1623 = vand.u32 %v651, 4294901760
    %1624 = vmatpush1.msra.mxu0 %v1623
    %1625 = vmatprep.subr.mxu0 0.0
    %1626 = vmatpush2.msra.mxu0 0.0
    %1627 = vmatprep.subr.mxu0 0.0
    %1628 = vmatpush2.msra.mxu0 0.0
    %1629 = vmatprep.subr.mxu0 0.0
    %1630 = vmatpush2.msra.mxu0 0.0
    %1631 = vmatprep.subr.mxu0 0.0
    %1632 = vmatpush2.msra.mxu0 0.0
    %1633 = vmatprep.subr.mxu0 0.0
    %1634 = vmatpush2.msra.mxu0 0.0
    %1635 = vmatprep.subr.mxu0 0.0
    %1636 = vmatpush2.msra.mxu0 0.0
    %1637 = vmatprep.subr.mxu0 0.0
    %1638 = vmatpush2.msra.mxu0 0.0
    %1639 = vmatprep.subr.mxu0 0.0
    %1640 = vmatpush2.msra.mxu0 0.0
    %1641 = vmatprep.subr.mxu0 0.0
    %1642 = vmatpush2.msra.mxu0 0.0
    %1643 = vmatprep.subr.mxu0 0.0
    %1644 = vmatpush2.msra.mxu0 0.0
    %1645 = vmatprep.subr.mxu0 0.0
    %1646 = vmatpush2.msra.mxu0 0.0
    %1647 = vmatprep.subr.mxu0 0.0
    %1648 = vmatpush2.msra.mxu0 0.0
    %1649 = vmatprep.subr.mxu0 0.0
    %1650 = vmatpush2.msra.mxu0 0.0
    %1651 = vmatprep.subr.mxu0 0.0
    %1652 = vmatpush2.msra.mxu0 0.0
    %1653 = vmatprep.subr.mxu0 0.0
    %1654 = vmatpush2.msra.mxu0 0.0
    %1655 = vmatprep.subr.mxu0 0.0
    %1656 = vmatpush2.msra.mxu0 0.0
    %1657 = vmatprep.mubr.f32.mxu0 0.0
    %v1658 = vand.u32 %v1177, 4294901760
    %1659 = vmatmul.mubr.f32.gmra.mxu0 %v1658
    %v1660 = vpop.f32.mrf.mxu0
    %v1661 = vadd.f32 %v1586, %v1660
    %v1662 = vpop.f32.mrf.mxu0
    %1663 = vdwg.mxu0
    %v1665 = vrot.slane %v1661, 6
    %v1667 = vadd.f32 %v1176, %v1665
    %v1668 = vsub.f32 0.0, %v1667
    %v1669 = vmul.f32 %v1668, 1.442695
    %v1670 = vpow.pop %v1669
    %v1671 = vadd.f32 %v1670, 1.0
    %v1672 = vrcp.pop %v1671
    %v1673 = vmul.f32 1.0, %v1672
    %v1674 = vtanh.pop %v1667
    %v1676 = vrot.slane %v1163, 6
    %v1678 = vmul.f32 %v1673, %v1676
    %1680 = vrot.lane.b32.xlu0 %v1674, 64
    %v1681 = vpop.permute.xlu0 %1680
    %v1683 = vmul.f32 %v1673, %v1681
    %1685 = vrot.lane.b32.xlu0 %v1683, 32
    %v1686 = vpop.permute.xlu0 %1685
    %v1688 = vadd.f32 %v1678, %v1686
    %v1689 = vtanh.pop %v1688
    %1691 = vrot.lane.b32.xlu0 %v1689, 64
    %v1692 = vpop.permute.xlu0 %1691
    %v1694 = vmul.f32 %v1673, %v1692
    %1696 = vrot.lane.b32.xlu0 %v1694, 32
    %v1697 = vpop.permute.xlu0 %1696
    %vm1699 = vcmask 257026
    %1700 = vst.msk [vmem:[#allocation3] sm:$0xc] %vm1699, %v1697
    %v1701 = vld [vmem:[#allocation2] sm:$0x30]
    %v1702 = vrot.slane %v1694, 2
    %1703 = vrot.lane.b32.xlu0 %v1702, 32
    %v1704 = vpop.permute.xlu0 %1703
    %v1705 = vsel %vm656, %v1704, 0
    %1707 = vmatprep.subr.mxu0 0.0
    %1708 = vmatpush1.msra.mxu0 0.0
    %1709 = vmatprep.subr.mxu0 0.0
    %1710 = vmatpush1.msra.mxu0 0.0
    %1711 = vmatprep.subr.mxu0 0.0
    %1712 = vmatpush1.msra.mxu0 0.0
    %1713 = vmatprep.subr.mxu0 0.0
    %1714 = vmatpush1.msra.mxu0 0.0
    %1715 = vmatprep.subr.mxu0 0.0
    %1716 = vmatpush1.msra.mxu0 0.0
    %1717 = vmatprep.subr.mxu0 0.0
    %1718 = vmatpush1.msra.mxu0 0.0
    %1719 = vmatprep.subr.mxu0 0.0
    %1720 = vmatpush1.msra.mxu0 0.0
    %1721 = vmatprep.subr.mxu0 0.0
    %1722 = vmatpush1.msra.mxu0 0.0
    %1723 = vmatprep.subr.mxu0 0.0
    %1724 = vmatpush1.msra.mxu0 0.0
    %1725 = vmatprep.subr.mxu0 0.0
    %1726 = vmatpush1.msra.mxu0 0.0
    %1727 = vmatprep.subr.mxu0 0.0
    %1728 = vmatpush1.msra.mxu0 0.0
    %1729 = vmatprep.subr.mxu0 0.0
    %1730 = vmatpush1.msra.mxu0 0.0
    %1731 = vmatprep.subr.mxu0 0.0
    %v1732 = vand.u32 %v654, 4294901760
    %1733 = vmatpush1.msra.mxu0 %v1732
    %1734 = vmatprep.subr.mxu0 0.0
    %v1735 = vand.u32 %v653, 4294901760
    %1736 = vmatpush1.msra.mxu0 %v1735
    %1737 = vmatprep.subr.mxu0 0.0
    %v1738 = vand.u32 %v652, 4294901760
    %1739 = vmatpush1.msra.mxu0 %v1738
    %1740 = vmatprep.subr.mxu0 0.0
    %v1741 = vand.u32 %v651, 4294901760
    %1742 = vmatpush1.msra.mxu0 %v1741
    %1743 = vmatprep.subr.mxu0 0.0
    %1744 = vmatpush2.msra.mxu0 0.0
    %1745 = vmatprep.subr.mxu0 0.0
    %1746 = vmatpush2.msra.mxu0 0.0
    %1747 = vmatprep.subr.mxu0 0.0
    %1748 = vmatpush2.msra.mxu0 0.0
    %1749 = vmatprep.subr.mxu0 0.0
    %1750 = vmatpush2.msra.mxu0 0.0
    %1751 = vmatprep.subr.mxu0 0.0
    %1752 = vmatpush2.msra.mxu0 0.0
    %1753 = vmatprep.subr.mxu0 0.0
    %1754 = vmatpush2.msra.mxu0 0.0
    %1755 = vmatprep.subr.mxu0 0.0
    %1756 = vmatpush2.msra.mxu0 0.0
    %1757 = vmatprep.subr.mxu0 0.0
    %1758 = vmatpush2.msra.mxu0 0.0
    %1759 = vmatprep.subr.mxu0 0.0
    %1760 = vmatpush2.msra.mxu0 0.0
    %1761 = vmatprep.subr.mxu0 0.0
    %1762 = vmatpush2.msra.mxu0 0.0
    %1763 = vmatprep.subr.mxu0 0.0
    %1764 = vmatpush2.msra.mxu0 0.0
    %1765 = vmatprep.subr.mxu0 0.0
    %1766 = vmatpush2.msra.mxu0 0.0
    %1767 = vmatprep.subr.mxu0 0.0
    %1768 = vmatpush2.msra.mxu0 0.0
    %1769 = vmatprep.subr.mxu0 0.0
    %1770 = vmatpush2.msra.mxu0 0.0
    %1771 = vmatprep.subr.mxu0 0.0
    %1772 = vmatpush2.msra.mxu0 0.0
    %1773 = vmatprep.subr.mxu0 0.0
    %1774 = vmatpush2.msra.mxu0 0.0
    %1775 = vmatprep.mubr.f32.mxu0 0.0
    %v1776 = vand.u32 %v1705, 4294901760
    %v1777 = vsub.f32 %v1705, %v1776
    %v1778 = vand.u32 %v1777, 4294901760
    %v1779 = vsub.f32 %v1777, %v1778
    %v1780 = vand.u32 %v1779, 4294901760
    %1781 = vmatmul.mubr.f32.gmra.mxu0 %v1780
    %v1782 = vpop.f32.mrf.mxu0
    %v1783 = vadd.f32 0.0, %v1782
    %v1784 = vpop.f32.mrf.mxu0
    %1785 = vdwg.mxu0
    %1786 = vmatprep.subr.mxu0 0.0
    %1787 = vmatpush1.msra.mxu0 0.0
    %1788 = vmatprep.subr.mxu0 0.0
    %1789 = vmatpush1.msra.mxu0 0.0
    %1790 = vmatprep.subr.mxu0 0.0
    %1791 = vmatpush1.msra.mxu0 0.0
    %1792 = vmatprep.subr.mxu0 0.0
    %1793 = vmatpush1.msra.mxu0 0.0
    %1794 = vmatprep.subr.mxu0 0.0
    %1795 = vmatpush1.msra.mxu0 0.0
    %1796 = vmatprep.subr.mxu0 0.0
    %1797 = vmatpush1.msra.mxu0 0.0
    %1798 = vmatprep.subr.mxu0 0.0
    %1799 = vmatpush1.msra.mxu0 0.0
    %1800 = vmatprep.subr.mxu0 0.0
    %1801 = vmatpush1.msra.mxu0 0.0
    %1802 = vmatprep.subr.mxu0 0.0
    %1803 = vmatpush1.msra.mxu0 0.0
    %1804 = vmatprep.subr.mxu0 0.0
    %1805 = vmatpush1.msra.mxu0 0.0
    %1806 = vmatprep.subr.mxu0 0.0
    %1807 = vmatpush1.msra.mxu0 0.0
    %1808 = vmatprep.subr.mxu0 0.0
    %1809 = vmatpush1.msra.mxu0 0.0
    %1810 = vmatprep.subr.mxu0 0.0
    %v1811 = vand.u32 %v654, 4294901760
    %v1812 = vsub.f32 %v654, %v1811
    %v1813 = vand.u32 %v1812, 4294901760
    %v1814 = vsub.f32 %v1812, %v1813
    %v1815 = vand.u32 %v1814, 4294901760
    %1816 = vmatpush1.msra.mxu0 %v1815
    %1817 = vmatprep.subr.mxu0 0.0
    %v1818 = vand.u32 %v653, 4294901760
    %v1819 = vsub.f32 %v653, %v1818
    %v1820 = vand.u32 %v1819, 4294901760
    %v1821 = vsub.f32 %v1819, %v1820
    %v1822 = vand.u32 %v1821, 4294901760
    %1823 = vmatpush1.msra.mxu0 %v1822
    %1824 = vmatprep.subr.mxu0 0.0
    %v1825 = vand.u32 %v652, 4294901760
    %v1826 = vsub.f32 %v652, %v1825
    %v1827 = vand.u32 %v1826, 4294901760
    %v1828 = vsub.f32 %v1826, %v1827
    %v1829 = vand.u32 %v1828, 4294901760
    %1830 = vmatpush1.msra.mxu0 %v1829
    %1831 = vmatprep.subr.mxu0 0.0
    %v1832 = vand.u32 %v651, 4294901760
    %v1833 = vsub.f32 %v651, %v1832
    %v1834 = vand.u32 %v1833, 4294901760
    %v1835 = vsub.f32 %v1833, %v1834
    %v1836 = vand.u32 %v1835, 4294901760
    %1837 = vmatpush1.msra.mxu0 %v1836
    %1838 = vmatprep.subr.mxu0 0.0
    %1839 = vmatpush2.msra.mxu0 0.0
    %1840 = vmatprep.subr.mxu0 0.0
    %1841 = vmatpush2.msra.mxu0 0.0
    %1842 = vmatprep.subr.mxu0 0.0
    %1843 = vmatpush2.msra.mxu0 0.0
    %1844 = vmatprep.subr.mxu0 0.0
    %1845 = vmatpush2.msra.mxu0 0.0
    %1846 = vmatprep.subr.mxu0 0.0
    %1847 = vmatpush2.msra.mxu0 0.0
    %1848 = vmatprep.subr.mxu0 0.0
    %1849 = vmatpush2.msra.mxu0 0.0
    %1850 = vmatprep.subr.mxu0 0.0
    %1851 = vmatpush2.msra.mxu0 0.0
    %1852 = vmatprep.subr.mxu0 0.0
    %1853 = vmatpush2.msra.mxu0 0.0
    %1854 = vmatprep.subr.mxu0 0.0
    %1855 = vmatpush2.msra.mxu0 0.0
    %1856 = vmatprep.subr.mxu0 0.0
    %1857 = vmatpush2.msra.mxu0 0.0
    %1858 = vmatprep.subr.mxu0 0.0
    %1859 = vmatpush2.msra.mxu0 0.0
    %1860 = vmatprep.subr.mxu0 0.0
    %1861 = vmatpush2.msra.mxu0 0.0
    %1862 = vmatprep.subr.mxu0 0.0
    %1863 = vmatpush2.msra.mxu0 0.0
    %1864 = vmatprep.subr.mxu0 0.0
    %1865 = vmatpush2.msra.mxu0 0.0
    %1866 = vmatprep.subr.mxu0 0.0
    %1867 = vmatpush2.msra.mxu0 0.0
    %1868 = vmatprep.subr.mxu0 0.0
    %1869 = vmatpush2.msra.mxu0 0.0
    %1870 = vmatprep.mubr.f32.mxu0 0.0
    %v1871 = vand.u32 %v1705, 4294901760
    %1872 = vmatmul.mubr.f32.gmra.mxu0 %v1871
    %v1873 = vpop.f32.mrf.mxu0
    %v1874 = vadd.f32 %v1783, %v1873
    %v1875 = vpop.f32.mrf.mxu0
    %1876 = vdwg.mxu0
    %1877 = vmatprep.subr.mxu0 0.0
    %1878 = vmatpush1.msra.mxu0 0.0
    %1879 = vmatprep.subr.mxu0 0.0
    %1880 = vmatpush1.msra.mxu0 0.0
    %1881 = vmatprep.subr.mxu0 0.0
    %1882 = vmatpush1.msra.mxu0 0.0
    %1883 = vmatprep.subr.mxu0 0.0
    %1884 = vmatpush1.msra.mxu0 0.0
    %1885 = vmatprep.subr.mxu0 0.0
    %1886 = vmatpush1.msra.mxu0 0.0
    %1887 = vmatprep.subr.mxu0 0.0
    %1888 = vmatpush1.msra.mxu0 0.0
    %1889 = vmatprep.subr.mxu0 0.0
    %1890 = vmatpush1.msra.mxu0 0.0
    %1891 = vmatprep.subr.mxu0 0.0
    %1892 = vmatpush1.msra.mxu0 0.0
    %1893 = vmatprep.subr.mxu0 0.0
    %1894 = vmatpush1.msra.mxu0 0.0
    %1895 = vmatprep.subr.mxu0 0.0
    %1896 = vmatpush1.msra.mxu0 0.0
    %1897 = vmatprep.subr.mxu0 0.0
    %1898 = vmatpush1.msra.mxu0 0.0
    %1899 = vmatprep.subr.mxu0 0.0
    %1900 = vmatpush1.msra.mxu0 0.0
    %1901 = vmatprep.subr.mxu0 0.0
    %v1902 = vand.u32 %v654, 4294901760
    %v1903 = vsub.f32 %v654, %v1902
    %1904 = vmatpush1.msra.mxu0 %v1903
    %1905 = vmatprep.subr.mxu0 0.0
    %v1906 = vand.u32 %v653, 4294901760
    %v1907 = vsub.f32 %v653, %v1906
    %1908 = vmatpush1.msra.mxu0 %v1907
    %1909 = vmatprep.subr.mxu0 0.0
    %v1910 = vand.u32 %v652, 4294901760
    %v1911 = vsub.f32 %v652, %v1910
    %1912 = vmatpush1.msra.mxu0 %v1911
    %1913 = vmatprep.subr.mxu0 0.0
    %v1914 = vand.u32 %v651, 4294901760
    %v1915 = vsub.f32 %v651, %v1914
    %1916 = vmatpush1.msra.mxu0 %v1915
    %1917 = vmatprep.subr.mxu0 0.0
    %1918 = vmatpush2.msra.mxu0 0.0
    %1919 = vmatprep.subr.mxu0 0.0
    %1920 = vmatpush2.msra.mxu0 0.0
    %1921 = vmatprep.subr.mxu0 0.0
    %1922 = vmatpush2.msra.mxu0 0.0
    %1923 = vmatprep.subr.mxu0 0.0
    %1924 = vmatpush2.msra.mxu0 0.0
    %1925 = vmatprep.subr.mxu0 0.0
    %1926 = vmatpush2.msra.mxu0 0.0
    %1927 = vmatprep.subr.mxu0 0.0
    %1928 = vmatpush2.msra.mxu0 0.0
    %1929 = vmatprep.subr.mxu0 0.0
    %1930 = vmatpush2.msra.mxu0 0.0
    %1931 = vmatprep.subr.mxu0 0.0
    %1932 = vmatpush2.msra.mxu0 0.0
    %1933 = vmatprep.subr.mxu0 0.0
    %1934 = vmatpush2.msra.mxu0 0.0
    %1935 = vmatprep.subr.mxu0 0.0
    %1936 = vmatpush2.msra.mxu0 0.0
    %1937 = vmatprep.subr.mxu0 0.0
    %1938 = vmatpush2.msra.mxu0 0.0
    %1939 = vmatprep.subr.mxu0 0.0
    %1940 = vmatpush2.msra.mxu0 0.0
    %1941 = vmatprep.subr.mxu0 0.0
    %1942 = vmatpush2.msra.mxu0 0.0
    %1943 = vmatprep.subr.mxu0 0.0
    %1944 = vmatpush2.msra.mxu0 0.0
    %1945 = vmatprep.subr.mxu0 0.0
    %1946 = vmatpush2.msra.mxu0 0.0
    %1947 = vmatprep.subr.mxu0 0.0
    %1948 = vmatpush2.msra.mxu0 0.0
    %1949 = vmatprep.mubr.f32.mxu0 0.0
    %v1950 = vand.u32 %v1705, 4294901760
    %v1951 = vsub.f32 %v1705, %v1950
    %1952 = vmatmul.mubr.f32.gmra.mxu0 %v1951
    %v1953 = vpop.f32.mrf.mxu0
    %v1954 = vadd.f32 %v1874, %v1953
    %v1955 = vpop.f32.mrf.mxu0
    %1956 = vdwg.mxu0
    %1957 = vmatprep.subr.mxu0 0.0
    %1958 = vmatpush1.msra.mxu0 0.0
    %1959 = vmatprep.subr.mxu0 0.0
    %1960 = vmatpush1.msra.mxu0 0.0
    %1961 = vmatprep.subr.mxu0 0.0
    %1962 = vmatpush1.msra.mxu0 0.0
    %1963 = vmatprep.subr.mxu0 0.0
    %1964 = vmatpush1.msra.mxu0 0.0
    %1965 = vmatprep.subr.mxu0 0.0
    %1966 = vmatpush1.msra.mxu0 0.0
    %1967 = vmatprep.subr.mxu0 0.0
    %1968 = vmatpush1.msra.mxu0 0.0
    %1969 = vmatprep.subr.mxu0 0.0
    %1970 = vmatpush1.msra.mxu0 0.0
    %1971 = vmatprep.subr.mxu0 0.0
    %1972 = vmatpush1.msra.mxu0 0.0
    %1973 = vmatprep.subr.mxu0 0.0
    %1974 = vmatpush1.msra.mxu0 0.0
    %1975 = vmatprep.subr.mxu0 0.0
    %1976 = vmatpush1.msra.mxu0 0.0
    %1977 = vmatprep.subr.mxu0 0.0
    %1978 = vmatpush1.msra.mxu0 0.0
    %1979 = vmatprep.subr.mxu0 0.0
    %1980 = vmatpush1.msra.mxu0 0.0
    %1981 = vmatprep.subr.mxu0 0.0
    %v1982 = vand.u32 %v654, 4294901760
    %1983 = vmatpush1.msra.mxu0 %v1982
    %1984 = vmatprep.subr.mxu0 0.0
    %v1985 = vand.u32 %v653, 4294901760
    %1986 = vmatpush1.msra.mxu0 %v1985
    %1987 = vmatprep.subr.mxu0 0.0
    %v1988 = vand.u32 %v652, 4294901760
    %1989 = vmatpush1.msra.mxu0 %v1988
    %1990 = vmatprep.subr.mxu0 0.0
    %v1991 = vand.u32 %v651, 4294901760
    %1992 = vmatpush1.msra.mxu0 %v1991
    %1993 = vmatprep.subr.mxu0 0.0
    %1994 = vmatpush2.msra.mxu0 0.0
    %1995 = vmatprep.subr.mxu0 0.0
    %1996 = vmatpush2.msra.mxu0 0.0
    %1997 = vmatprep.subr.mxu0 0.0
    %1998 = vmatpush2.msra.mxu0 0.0
    %1999 = vmatprep.subr.mxu0 0.0
    %2000 = vmatpush2.msra.mxu0 0.0
    %2001 = vmatprep.subr.mxu0 0.0
    %2002 = vmatpush2.msra.mxu0 0.0
    %2003 = vmatprep.subr.mxu0 0.0
    %2004 = vmatpush2.msra.mxu0 0.0
    %2005 = vmatprep.subr.mxu0 0.0
    %2006 = vmatpush2.msra.mxu0 0.0
    %2007 = vmatprep.subr.mxu0 0.0
    %2008 = vmatpush2.msra.mxu0 0.0
    %2009 = vmatprep.subr.mxu0 0.0
    %2010 = vmatpush2.msra.mxu0 0.0
    %2011 = vmatprep.subr.mxu0 0.0
    %2012 = vmatpush2.msra.mxu0 0.0
    %2013 = vmatprep.subr.mxu0 0.0
    %2014 = vmatpush2.msra.mxu0 0.0
    %2015 = vmatprep.subr.mxu0 0.0
    %2016 = vmatpush2.msra.mxu0 0.0
    %2017 = vmatprep.subr.mxu0 0.0
    %2018 = vmatpush2.msra.mxu0 0.0
    %2019 = vmatprep.subr.mxu0 0.0
    %2020 = vmatpush2.msra.mxu0 0.0
    %2021 = vmatprep.subr.mxu0 0.0
    %2022 = vmatpush2.msra.mxu0 0.0
    %2023 = vmatprep.subr.mxu0 0.0
    %2024 = vmatpush2.msra.mxu0 0.0
    %2025 = vmatprep.mubr.f32.mxu0 0.0
    %v2026 = vand.u32 %v1705, 4294901760
    %v2027 = vsub.f32 %v1705, %v2026
    %v2028 = vand.u32 %v2027, 4294901760
    %2029 = vmatmul.mubr.f32.gmra.mxu0 %v2028
    %v2030 = vpop.f32.mrf.mxu0
    %v2031 = vadd.f32 %v1954, %v2030
    %v2032 = vpop.f32.mrf.mxu0
    %2033 = vdwg.mxu0
    %2034 = vmatprep.subr.mxu0 0.0
    %2035 = vmatpush1.msra.mxu0 0.0
    %2036 = vmatprep.subr.mxu0 0.0
    %2037 = vmatpush1.msra.mxu0 0.0
    %2038 = vmatprep.subr.mxu0 0.0
    %2039 = vmatpush1.msra.mxu0 0.0
    %2040 = vmatprep.subr.mxu0 0.0
    %2041 = vmatpush1.msra.mxu0 0.0
    %2042 = vmatprep.subr.mxu0 0.0
    %2043 = vmatpush1.msra.mxu0 0.0
    %2044 = vmatprep.subr.mxu0 0.0
    %2045 = vmatpush1.msra.mxu0 0.0
    %2046 = vmatprep.subr.mxu0 0.0
    %2047 = vmatpush1.msra.mxu0 0.0
    %2048 = vmatprep.subr.mxu0 0.0
    %2049 = vmatpush1.msra.mxu0 0.0
    %2050 = vmatprep.subr.mxu0 0.0
    %2051 = vmatpush1.msra.mxu0 0.0
    %2052 = vmatprep.subr.mxu0 0.0
    %2053 = vmatpush1.msra.mxu0 0.0
    %2054 = vmatprep.subr.mxu0 0.0
    %2055 = vmatpush1.msra.mxu0 0.0
    %2056 = vmatprep.subr.mxu0 0.0
    %2057 = vmatpush1.msra.mxu0 0.0
    %2058 = vmatprep.subr.mxu0 0.0
    %v2059 = vand.u32 %v654, 4294901760
    %v2060 = vsub.f32 %v654, %v2059
    %v2061 = vand.u32 %v2060, 4294901760
    %2062 = vmatpush1.msra.mxu0 %v2061
    %2063 = vmatprep.subr.mxu0 0.0
    %v2064 = vand.u32 %v653, 4294901760
    %v2065 = vsub.f32 %v653, %v2064
    %v2066 = vand.u32 %v2065, 4294901760
    %2067 = vmatpush1.msra.mxu0 %v2066
    %2068 = vmatprep.subr.mxu0 0.0
    %v2069 = vand.u32 %v652, 4294901760
    %v2070 = vsub.f32 %v652, %v2069
    %v2071 = vand.u32 %v2070, 4294901760
    %2072 = vmatpush1.msra.mxu0 %v2071
    %2073 = vmatprep.subr.mxu0 0.0
    %v2074 = vand.u32 %v651, 4294901760
    %v2075 = vsub.f32 %v651, %v2074
    %v2076 = vand.u32 %v2075, 4294901760
    %2077 = vmatpush1.msra.mxu0 %v2076
    %2078 = vmatprep.subr.mxu0 0.0
    %2079 = vmatpush2.msra.mxu0 0.0
    %2080 = vmatprep.subr.mxu0 0.0
    %2081 = vmatpush2.msra.mxu0 0.0
    %2082 = vmatprep.subr.mxu0 0.0
    %2083 = vmatpush2.msra.mxu0 0.0
    %2084 = vmatprep.subr.mxu0 0.0
    %2085 = vmatpush2.msra.mxu0 0.0
    %2086 = vmatprep.subr.mxu0 0.0
    %2087 = vmatpush2.msra.mxu0 0.0
    %2088 = vmatprep.subr.mxu0 0.0
    %2089 = vmatpush2.msra.mxu0 0.0
    %2090 = vmatprep.subr.mxu0 0.0
    %2091 = vmatpush2.msra.mxu0 0.0
    %2092 = vmatprep.subr.mxu0 0.0
    %2093 = vmatpush2.msra.mxu0 0.0
    %2094 = vmatprep.subr.mxu0 0.0
    %2095 = vmatpush2.msra.mxu0 0.0
    %2096 = vmatprep.subr.mxu0 0.0
    %2097 = vmatpush2.msra.mxu0 0.0
    %2098 = vmatprep.subr.mxu0 0.0
    %2099 = vmatpush2.msra.mxu0 0.0
    %2100 = vmatprep.subr.mxu0 0.0
    %2101 = vmatpush2.msra.mxu0 0.0
    %2102 = vmatprep.subr.mxu0 0.0
    %2103 = vmatpush2.msra.mxu0 0.0
    %2104 = vmatprep.subr.mxu0 0.0
    %2105 = vmatpush2.msra.mxu0 0.0
    %2106 = vmatprep.subr.mxu0 0.0
    %2107 = vmatpush2.msra.mxu0 0.0
    %2108 = vmatprep.subr.mxu0 0.0
    %2109 = vmatpush2.msra.mxu0 0.0
    %2110 = vmatprep.mubr.f32.mxu0 0.0
    %v2111 = vand.u32 %v1705, 4294901760
    %2112 = vmatmul.mubr.f32.gmra.mxu0 %v2111
    %v2113 = vpop.f32.mrf.mxu0
    %v2114 = vadd.f32 %v2031, %v2113
    %v2115 = vpop.f32.mrf.mxu0
    %2116 = vdwg.mxu0
    %2117 = vmatprep.subr.mxu0 0.0
    %2118 = vmatpush1.msra.mxu0 0.0
    %2119 = vmatprep.subr.mxu0 0.0
    %2120 = vmatpush1.msra.mxu0 0.0
    %2121 = vmatprep.subr.mxu0 0.0
    %2122 = vmatpush1.msra.mxu0 0.0
    %2123 = vmatprep.subr.mxu0 0.0
    %2124 = vmatpush1.msra.mxu0 0.0
    %2125 = vmatprep.subr.mxu0 0.0
    %2126 = vmatpush1.msra.mxu0 0.0
    %2127 = vmatprep.subr.mxu0 0.0
    %2128 = vmatpush1.msra.mxu0 0.0
    %2129 = vmatprep.subr.mxu0 0.0
    %2130 = vmatpush1.msra.mxu0 0.0
    %2131 = vmatprep.subr.mxu0 0.0
    %2132 = vmatpush1.msra.mxu0 0.0
    %2133 = vmatprep.subr.mxu0 0.0
    %2134 = vmatpush1.msra.mxu0 0.0
    %2135 = vmatprep.subr.mxu0 0.0
    %2136 = vmatpush1.msra.mxu0 0.0
    %2137 = vmatprep.subr.mxu0 0.0
    %2138 = vmatpush1.msra.mxu0 0.0
    %2139 = vmatprep.subr.mxu0 0.0
    %2140 = vmatpush1.msra.mxu0 0.0
    %2141 = vmatprep.subr.mxu0 0.0
    %v2142 = vand.u32 %v654, 4294901760
    %2143 = vmatpush1.msra.mxu0 %v2142
    %2144 = vmatprep.subr.mxu0 0.0
    %v2145 = vand.u32 %v653, 4294901760
    %2146 = vmatpush1.msra.mxu0 %v2145
    %2147 = vmatprep.subr.mxu0 0.0
    %v2148 = vand.u32 %v652, 4294901760
    %2149 = vmatpush1.msra.mxu0 %v2148
    %2150 = vmatprep.subr.mxu0 0.0
    %v2151 = vand.u32 %v651, 4294901760
    %2152 = vmatpush1.msra.mxu0 %v2151
    %2153 = vmatprep.subr.mxu0 0.0
    %2154 = vmatpush2.msra.mxu0 0.0
    %2155 = vmatprep.subr.mxu0 0.0
    %2156 = vmatpush2.msra.mxu0 0.0
    %2157 = vmatprep.subr.mxu0 0.0
    %2158 = vmatpush2.msra.mxu0 0.0
    %2159 = vmatprep.subr.mxu0 0.0
    %2160 = vmatpush2.msra.mxu0 0.0
    %2161 = vmatprep.subr.mxu0 0.0
    %2162 = vmatpush2.msra.mxu0 0.0
    %2163 = vmatprep.subr.mxu0 0.0
    %2164 = vmatpush2.msra.mxu0 0.0
    %2165 = vmatprep.subr.mxu0 0.0
    %2166 = vmatpush2.msra.mxu0 0.0
    %2167 = vmatprep.subr.mxu0 0.0
    %2168 = vmatpush2.msra.mxu0 0.0
    %2169 = vmatprep.subr.mxu0 0.0
    %2170 = vmatpush2.msra.mxu0 0.0
    %2171 = vmatprep.subr.mxu0 0.0
    %2172 = vmatpush2.msra.mxu0 0.0
    %2173 = vmatprep.subr.mxu0 0.0
    %2174 = vmatpush2.msra.mxu0 0.0
    %2175 = vmatprep.subr.mxu0 0.0
    %2176 = vmatpush2.msra.mxu0 0.0
    %2177 = vmatprep.subr.mxu0 0.0
    %2178 = vmatpush2.msra.mxu0 0.0
    %2179 = vmatprep.subr.mxu0 0.0
    %2180 = vmatpush2.msra.mxu0 0.0
    %2181 = vmatprep.subr.mxu0 0.0
    %2182 = vmatpush2.msra.mxu0 0.0
    %2183 = vmatprep.subr.mxu0 0.0
    %2184 = vmatpush2.msra.mxu0 0.0
    %2185 = vmatprep.mubr.f32.mxu0 0.0
    %v2186 = vand.u32 %v1705, 4294901760
    %2187 = vmatmul.mubr.f32.gmra.mxu0 %v2186
    %v2188 = vpop.f32.mrf.mxu0
    %v2189 = vadd.f32 %v2114, %v2188
    %v2190 = vpop.f32.mrf.mxu0
    %2191 = vdwg.mxu0
    %v2193 = vrot.slane %v2189, 4
    %v2195 = vadd.f32 %v1701, %v2193
    %v2196 = vsub.f32 0.0, %v2195
    %v2197 = vmul.f32 %v2196, 1.442695
    %v2198 = vpow.pop %v2197
    %v2199 = vadd.f32 %v2198, 1.0
    %v2200 = vrcp.pop %v2199
    %v2201 = vmul.f32 1.0, %v2200
    %v2202 = vtanh.pop %v2195
    %v2204 = vrot.slane %v1688, 6
    %v2206 = vmul.f32 %v2201, %v2204
    %2208 = vrot.lane.b32.xlu0 %v2202, 64
    %v2209 = vpop.permute.xlu0 %2208
    %v2211 = vmul.f32 %v2201, %v2209
    %2213 = vrot.lane.b32.xlu0 %v2211, 32
    %v2214 = vpop.permute.xlu0 %2213
    %v2216 = vadd.f32 %v2206, %v2214
    %v2217 = vtanh.pop %v2216
    %2219 = vrot.lane.b32.xlu0 %v2217, 64
    %v2220 = vpop.permute.xlu0 %2219
    %v2222 = vmul.f32 %v2201, %v2220
    %2224 = vrot.lane.b32.xlu0 %v2222, 32
    %v2225 = vpop.permute.xlu0 %2224
    %vm2227 = vcmask 259076
    %2228 = vst.msk [vmem:[#allocation3] sm:$0x30] %vm2227, %v2225
    %v2229 = vld [vmem:[#allocation2] sm:$0xc0]
    %v2230 = vrot.slane %v2222, 4
    %2231 = vrot.lane.b32.xlu0 %v2230, 32
    %v2232 = vpop.permute.xlu0 %2231
    %v2233 = vsel %vm656, %v2232, 0
    %2235 = vmatprep.subr.mxu0 0.0
    %2236 = vmatpush1.msra.mxu0 0.0
    %2237 = vmatprep.subr.mxu0 0.0
    %2238 = vmatpush1.msra.mxu0 0.0
    %2239 = vmatprep.subr.mxu0 0.0
    %2240 = vmatpush1.msra.mxu0 0.0
    %2241 = vmatprep.subr.mxu0 0.0
    %2242 = vmatpush1.msra.mxu0 0.0
    %2243 = vmatprep.subr.mxu0 0.0
    %2244 = vmatpush1.msra.mxu0 0.0
    %2245 = vmatprep.subr.mxu0 0.0
    %2246 = vmatpush1.msra.mxu0 0.0
    %2247 = vmatprep.subr.mxu0 0.0
    %2248 = vmatpush1.msra.mxu0 0.0
    %2249 = vmatprep.subr.mxu0 0.0
    %2250 = vmatpush1.msra.mxu0 0.0
    %2251 = vmatprep.subr.mxu0 0.0
    %2252 = vmatpush1.msra.mxu0 0.0
    %2253 = vmatprep.subr.mxu0 0.0
    %2254 = vmatpush1.msra.mxu0 0.0
    %2255 = vmatprep.subr.mxu0 0.0
    %2256 = vmatpush1.msra.mxu0 0.0
    %2257 = vmatprep.subr.mxu0 0.0
    %2258 = vmatpush1.msra.mxu0 0.0
    %2259 = vmatprep.subr.mxu0 0.0
    %v2260 = vand.u32 %v654, 4294901760
    %2261 = vmatpush1.msra.mxu0 %v2260
    %2262 = vmatprep.subr.mxu0 0.0
    %v2263 = vand.u32 %v653, 4294901760
    %2264 = vmatpush1.msra.mxu0 %v2263
    %2265 = vmatprep.subr.mxu0 0.0
    %v2266 = vand.u32 %v652, 4294901760
    %2267 = vmatpush1.msra.mxu0 %v2266
    %2268 = vmatprep.subr.mxu0 0.0
    %v2269 = vand.u32 %v651, 4294901760
    %2270 = vmatpush1.msra.mxu0 %v2269
    %2271 = vmatprep.subr.mxu0 0.0
    %2272 = vmatpush2.msra.mxu0 0.0
    %2273 = vmatprep.subr.mxu0 0.0
    %2274 = vmatpush2.msra.mxu0 0.0
    %2275 = vmatprep.subr.mxu0 0.0
    %2276 = vmatpush2.msra.mxu0 0.0
    %2277 = vmatprep.subr.mxu0 0.0
    %2278 = vmatpush2.msra.mxu0 0.0
    %2279 = vmatprep.subr.mxu0 0.0
    %2280 = vmatpush2.msra.mxu0 0.0
    %2281 = vmatprep.subr.mxu0 0.0
    %2282 = vmatpush2.msra.mxu0 0.0
    %2283 = vmatprep.subr.mxu0 0.0
    %2284 = vmatpush2.msra.mxu0 0.0
    %2285 = vmatprep.subr.mxu0 0.0
    %2286 = vmatpush2.msra.mxu0 0.0
    %2287 = vmatprep.subr.mxu0 0.0
    %2288 = vmatpush2.msra.mxu0 0.0
    %2289 = vmatprep.subr.mxu0 0.0
    %2290 = vmatpush2.msra.mxu0 0.0
    %2291 = vmatprep.subr.mxu0 0.0
    %2292 = vmatpush2.msra.mxu0 0.0
    %2293 = vmatprep.subr.mxu0 0.0
    %2294 = vmatpush2.msra.mxu0 0.0
    %2295 = vmatprep.subr.mxu0 0.0
    %2296 = vmatpush2.msra.mxu0 0.0
    %2297 = vmatprep.subr.mxu0 0.0
    %2298 = vmatpush2.msra.mxu0 0.0
    %2299 = vmatprep.subr.mxu0 0.0
    %2300 = vmatpush2.msra.mxu0 0.0
    %2301 = vmatprep.subr.mxu0 0.0
    %2302 = vmatpush2.msra.mxu0 0.0
    %2303 = vmatprep.mubr.f32.mxu0 0.0
    %v2304 = vand.u32 %v2233, 4294901760
    %v2305 = vsub.f32 %v2233, %v2304
    %v2306 = vand.u32 %v2305, 4294901760
    %v2307 = vsub.f32 %v2305, %v2306
    %v2308 = vand.u32 %v2307, 4294901760
    %2309 = vmatmul.mubr.f32.gmra.mxu0 %v2308
    %v2310 = vpop.f32.mrf.mxu0
    %v2311 = vadd.f32 0.0, %v2310
    %v2312 = vpop.f32.mrf.mxu0
    %2313 = vdwg.mxu0
    %2314 = vmatprep.subr.mxu0 0.0
    %2315 = vmatpush1.msra.mxu0 0.0
    %2316 = vmatprep.subr.mxu0 0.0
    %2317 = vmatpush1.msra.mxu0 0.0
    %2318 = vmatprep.subr.mxu0 0.0
    %2319 = vmatpush1.msra.mxu0 0.0
    %2320 = vmatprep.subr.mxu0 0.0
    %2321 = vmatpush1.msra.mxu0 0.0
    %2322 = vmatprep.subr.mxu0 0.0
    %2323 = vmatpush1.msra.mxu0 0.0
    %2324 = vmatprep.subr.mxu0 0.0
    %2325 = vmatpush1.msra.mxu0 0.0
    %2326 = vmatprep.subr.mxu0 0.0
    %2327 = vmatpush1.msra.mxu0 0.0
    %2328 = vmatprep.subr.mxu0 0.0
    %2329 = vmatpush1.msra.mxu0 0.0
    %2330 = vmatprep.subr.mxu0 0.0
    %2331 = vmatpush1.msra.mxu0 0.0
    %2332 = vmatprep.subr.mxu0 0.0
    %2333 = vmatpush1.msra.mxu0 0.0
    %2334 = vmatprep.subr.mxu0 0.0
    %2335 = vmatpush1.msra.mxu0 0.0
    %2336 = vmatprep.subr.mxu0 0.0
    %2337 = vmatpush1.msra.mxu0 0.0
    %2338 = vmatprep.subr.mxu0 0.0
    %v2339 = vand.u32 %v654, 4294901760
    %v2340 = vsub.f32 %v654, %v2339
    %v2341 = vand.u32 %v2340, 4294901760
    %v2342 = vsub.f32 %v2340, %v2341
    %v2343 = vand.u32 %v2342, 4294901760
    %2344 = vmatpush1.msra.mxu0 %v2343
    %2345 = vmatprep.subr.mxu0 0.0
    %v2346 = vand.u32 %v653, 4294901760
    %v2347 = vsub.f32 %v653, %v2346
    %v2348 = vand.u32 %v2347, 4294901760
    %v2349 = vsub.f32 %v2347, %v2348
    %v2350 = vand.u32 %v2349, 4294901760
    %2351 = vmatpush1.msra.mxu0 %v2350
    %2352 = vmatprep.subr.mxu0 0.0
    %v2353 = vand.u32 %v652, 4294901760
    %v2354 = vsub.f32 %v652, %v2353
    %v2355 = vand.u32 %v2354, 4294901760
    %v2356 = vsub.f32 %v2354, %v2355
    %v2357 = vand.u32 %v2356, 4294901760
    %2358 = vmatpush1.msra.mxu0 %v2357
    %2359 = vmatprep.subr.mxu0 0.0
    %v2360 = vand.u32 %v651, 4294901760
    %v2361 = vsub.f32 %v651, %v2360
    %v2362 = vand.u32 %v2361, 4294901760
    %v2363 = vsub.f32 %v2361, %v2362
    %v2364 = vand.u32 %v2363, 4294901760
    %2365 = vmatpush1.msra.mxu0 %v2364
    %2366 = vmatprep.subr.mxu0 0.0
    %2367 = vmatpush2.msra.mxu0 0.0
    %2368 = vmatprep.subr.mxu0 0.0
    %2369 = vmatpush2.msra.mxu0 0.0
    %2370 = vmatprep.subr.mxu0 0.0
    %2371 = vmatpush2.msra.mxu0 0.0
    %2372 = vmatprep.subr.mxu0 0.0
    %2373 = vmatpush2.msra.mxu0 0.0
    %2374 = vmatprep.subr.mxu0 0.0
    %2375 = vmatpush2.msra.mxu0 0.0
    %2376 = vmatprep.subr.mxu0 0.0
    %2377 = vmatpush2.msra.mxu0 0.0
    %2378 = vmatprep.subr.mxu0 0.0
    %2379 = vmatpush2.msra.mxu0 0.0
    %2380 = vmatprep.subr.mxu0 0.0
    %2381 = vmatpush2.msra.mxu0 0.0
    %2382 = vmatprep.subr.mxu0 0.0
    %2383 = vmatpush2.msra.mxu0 0.0
    %2384 = vmatprep.subr.mxu0 0.0
    %2385 = vmatpush2.msra.mxu0 0.0
    %2386 = vmatprep.subr.mxu0 0.0
    %2387 = vmatpush2.msra.mxu0 0.0
    %2388 = vmatprep.subr.mxu0 0.0
    %2389 = vmatpush2.msra.mxu0 0.0
    %2390 = vmatprep.subr.mxu0 0.0
    %2391 = vmatpush2.msra.mxu0 0.0
    %2392 = vmatprep.subr.mxu0 0.0
    %2393 = vmatpush2.msra.mxu0 0.0
    %2394 = vmatprep.subr.mxu0 0.0
    %2395 = vmatpush2.msra.mxu0 0.0
    %2396 = vmatprep.subr.mxu0 0.0
    %2397 = vmatpush2.msra.mxu0 0.0
    %2398 = vmatprep.mubr.f32.mxu0 0.0
    %v2399 = vand.u32 %v2233, 4294901760
    %2400 = vmatmul.mubr.f32.gmra.mxu0 %v2399
    %v2401 = vpop.f32.mrf.mxu0
    %v2402 = vadd.f32 %v2311, %v2401
    %v2403 = vpop.f32.mrf.mxu0
    %2404 = vdwg.mxu0
    %2405 = vmatprep.subr.mxu0 0.0
    %2406 = vmatpush1.msra.mxu0 0.0
    %2407 = vmatprep.subr.mxu0 0.0
    %2408 = vmatpush1.msra.mxu0 0.0
    %2409 = vmatprep.subr.mxu0 0.0
    %2410 = vmatpush1.msra.mxu0 0.0
    %2411 = vmatprep.subr.mxu0 0.0
    %2412 = vmatpush1.msra.mxu0 0.0
    %2413 = vmatprep.subr.mxu0 0.0
    %2414 = vmatpush1.msra.mxu0 0.0
    %2415 = vmatprep.subr.mxu0 0.0
    %2416 = vmatpush1.msra.mxu0 0.0
    %2417 = vmatprep.subr.mxu0 0.0
    %2418 = vmatpush1.msra.mxu0 0.0
    %2419 = vmatprep.subr.mxu0 0.0
    %2420 = vmatpush1.msra.mxu0 0.0
    %2421 = vmatprep.subr.mxu0 0.0
    %2422 = vmatpush1.msra.mxu0 0.0
    %2423 = vmatprep.subr.mxu0 0.0
    %2424 = vmatpush1.msra.mxu0 0.0
    %2425 = vmatprep.subr.mxu0 0.0
    %2426 = vmatpush1.msra.mxu0 0.0
    %2427 = vmatprep.subr.mxu0 0.0
    %2428 = vmatpush1.msra.mxu0 0.0
    %2429 = vmatprep.subr.mxu0 0.0
    %v2430 = vand.u32 %v654, 4294901760
    %v2431 = vsub.f32 %v654, %v2430
    %2432 = vmatpush1.msra.mxu0 %v2431
    %2433 = vmatprep.subr.mxu0 0.0
    %v2434 = vand.u32 %v653, 4294901760
    %v2435 = vsub.f32 %v653, %v2434
    %2436 = vmatpush1.msra.mxu0 %v2435
    %2437 = vmatprep.subr.mxu0 0.0
    %v2438 = vand.u32 %v652, 4294901760
    %v2439 = vsub.f32 %v652, %v2438
    %2440 = vmatpush1.msra.mxu0 %v2439
    %2441 = vmatprep.subr.mxu0 0.0
    %v2442 = vand.u32 %v651, 4294901760
    %v2443 = vsub.f32 %v651, %v2442
    %2444 = vmatpush1.msra.mxu0 %v2443
    %2445 = vmatprep.subr.mxu0 0.0
    %2446 = vmatpush2.msra.mxu0 0.0
    %2447 = vmatprep.subr.mxu0 0.0
    %2448 = vmatpush2.msra.mxu0 0.0
    %2449 = vmatprep.subr.mxu0 0.0
    %2450 = vmatpush2.msra.mxu0 0.0
    %2451 = vmatprep.subr.mxu0 0.0
    %2452 = vmatpush2.msra.mxu0 0.0
    %2453 = vmatprep.subr.mxu0 0.0
    %2454 = vmatpush2.msra.mxu0 0.0
    %2455 = vmatprep.subr.mxu0 0.0
    %2456 = vmatpush2.msra.mxu0 0.0
    %2457 = vmatprep.subr.mxu0 0.0
    %2458 = vmatpush2.msra.mxu0 0.0
    %2459 = vmatprep.subr.mxu0 0.0
    %2460 = vmatpush2.msra.mxu0 0.0
    %2461 = vmatprep.subr.mxu0 0.0
    %2462 = vmatpush2.msra.mxu0 0.0
    %2463 = vmatprep.subr.mxu0 0.0
    %2464 = vmatpush2.msra.mxu0 0.0
    %2465 = vmatprep.subr.mxu0 0.0
    %2466 = vmatpush2.msra.mxu0 0.0
    %2467 = vmatprep.subr.mxu0 0.0
    %2468 = vmatpush2.msra.mxu0 0.0
    %2469 = vmatprep.subr.mxu0 0.0
    %2470 = vmatpush2.msra.mxu0 0.0
    %2471 = vmatprep.subr.mxu0 0.0
    %2472 = vmatpush2.msra.mxu0 0.0
    %2473 = vmatprep.subr.mxu0 0.0
    %2474 = vmatpush2.msra.mxu0 0.0
    %2475 = vmatprep.subr.mxu0 0.0
    %2476 = vmatpush2.msra.mxu0 0.0
    %2477 = vmatprep.mubr.f32.mxu0 0.0
    %v2478 = vand.u32 %v2233, 4294901760
    %v2479 = vsub.f32 %v2233, %v2478
    %2480 = vmatmul.mubr.f32.gmra.mxu0 %v2479
    %v2481 = vpop.f32.mrf.mxu0
    %v2482 = vadd.f32 %v2402, %v2481
    %v2483 = vpop.f32.mrf.mxu0
    %2484 = vdwg.mxu0
    %2485 = vmatprep.subr.mxu0 0.0
    %2486 = vmatpush1.msra.mxu0 0.0
    %2487 = vmatprep.subr.mxu0 0.0
    %2488 = vmatpush1.msra.mxu0 0.0
    %2489 = vmatprep.subr.mxu0 0.0
    %2490 = vmatpush1.msra.mxu0 0.0
    %2491 = vmatprep.subr.mxu0 0.0
    %2492 = vmatpush1.msra.mxu0 0.0
    %2493 = vmatprep.subr.mxu0 0.0
    %2494 = vmatpush1.msra.mxu0 0.0
    %2495 = vmatprep.subr.mxu0 0.0
    %2496 = vmatpush1.msra.mxu0 0.0
    %2497 = vmatprep.subr.mxu0 0.0
    %2498 = vmatpush1.msra.mxu0 0.0
    %2499 = vmatprep.subr.mxu0 0.0
    %2500 = vmatpush1.msra.mxu0 0.0
    %2501 = vmatprep.subr.mxu0 0.0
    %2502 = vmatpush1.msra.mxu0 0.0
    %2503 = vmatprep.subr.mxu0 0.0
    %2504 = vmatpush1.msra.mxu0 0.0
    %2505 = vmatprep.subr.mxu0 0.0
    %2506 = vmatpush1.msra.mxu0 0.0
    %2507 = vmatprep.subr.mxu0 0.0
    %2508 = vmatpush1.msra.mxu0 0.0
    %2509 = vmatprep.subr.mxu0 0.0
    %v2510 = vand.u32 %v654, 4294901760
    %2511 = vmatpush1.msra.mxu0 %v2510
    %2512 = vmatprep.subr.mxu0 0.0
    %v2513 = vand.u32 %v653, 4294901760
    %2514 = vmatpush1.msra.mxu0 %v2513
    %2515 = vmatprep.subr.mxu0 0.0
    %v2516 = vand.u32 %v652, 4294901760
    %2517 = vmatpush1.msra.mxu0 %v2516
    %2518 = vmatprep.subr.mxu0 0.0
    %v2519 = vand.u32 %v651, 4294901760
    %2520 = vmatpush1.msra.mxu0 %v2519
    %2521 = vmatprep.subr.mxu0 0.0
    %2522 = vmatpush2.msra.mxu0 0.0
    %2523 = vmatprep.subr.mxu0 0.0
    %2524 = vmatpush2.msra.mxu0 0.0
    %2525 = vmatprep.subr.mxu0 0.0
    %2526 = vmatpush2.msra.mxu0 0.0
    %2527 = vmatprep.subr.mxu0 0.0
    %2528 = vmatpush2.msra.mxu0 0.0
    %2529 = vmatprep.subr.mxu0 0.0
    %2530 = vmatpush2.msra.mxu0 0.0
    %2531 = vmatprep.subr.mxu0 0.0
    %2532 = vmatpush2.msra.mxu0 0.0
    %2533 = vmatprep.subr.mxu0 0.0
    %2534 = vmatpush2.msra.mxu0 0.0
    %2535 = vmatprep.subr.mxu0 0.0
    %2536 = vmatpush2.msra.mxu0 0.0
    %2537 = vmatprep.subr.mxu0 0.0
    %2538 = vmatpush2.msra.mxu0 0.0
    %2539 = vmatprep.subr.mxu0 0.0
    %2540 = vmatpush2.msra.mxu0 0.0
    %2541 = vmatprep.subr.mxu0 0.0
    %2542 = vmatpush2.msra.mxu0 0.0
    %2543 = vmatprep.subr.mxu0 0.0
    %2544 = vmatpush2.msra.mxu0 0.0
    %2545 = vmatprep.subr.mxu0 0.0
    %2546 = vmatpush2.msra.mxu0 0.0
    %2547 = vmatprep.subr.mxu0 0.0
    %2548 = vmatpush2.msra.mxu0 0.0
    %2549 = vmatprep.subr.mxu0 0.0
    %2550 = vmatpush2.msra.mxu0 0.0
    %2551 = vmatprep.subr.mxu0 0.0
    %2552 = vmatpush2.msra.mxu0 0.0
    %2553 = vmatprep.mubr.f32.mxu0 0.0
    %v2554 = vand.u32 %v2233, 4294901760
    %v2555 = vsub.f32 %v2233, %v2554
    %v2556 = vand.u32 %v2555, 4294901760
    %2557 = vmatmul.mubr.f32.gmra.mxu0 %v2556
    %v2558 = vpop.f32.mrf.mxu0
    %v2559 = vadd.f32 %v2482, %v2558
    %v2560 = vpop.f32.mrf.mxu0
    %2561 = vdwg.mxu0
    %2562 = vmatprep.subr.mxu0 0.0
    %2563 = vmatpush1.msra.mxu0 0.0
    %2564 = vmatprep.subr.mxu0 0.0
    %2565 = vmatpush1.msra.mxu0 0.0
    %2566 = vmatprep.subr.mxu0 0.0
    %2567 = vmatpush1.msra.mxu0 0.0
    %2568 = vmatprep.subr.mxu0 0.0
    %2569 = vmatpush1.msra.mxu0 0.0
    %2570 = vmatprep.subr.mxu0 0.0
    %2571 = vmatpush1.msra.mxu0 0.0
    %2572 = vmatprep.subr.mxu0 0.0
    %2573 = vmatpush1.msra.mxu0 0.0
    %2574 = vmatprep.subr.mxu0 0.0
    %2575 = vmatpush1.msra.mxu0 0.0
    %2576 = vmatprep.subr.mxu0 0.0
    %2577 = vmatpush1.msra.mxu0 0.0
    %2578 = vmatprep.subr.mxu0 0.0
    %2579 = vmatpush1.msra.mxu0 0.0
    %2580 = vmatprep.subr.mxu0 0.0
    %2581 = vmatpush1.msra.mxu0 0.0
    %2582 = vmatprep.subr.mxu0 0.0
    %2583 = vmatpush1.msra.mxu0 0.0
    %2584 = vmatprep.subr.mxu0 0.0
    %2585 = vmatpush1.msra.mxu0 0.0
    %2586 = vmatprep.subr.mxu0 0.0
    %v2587 = vand.u32 %v654, 4294901760
    %v2588 = vsub.f32 %v654, %v2587
    %v2589 = vand.u32 %v2588, 4294901760
    %2590 = vmatpush1.msra.mxu0 %v2589
    %2591 = vmatprep.subr.mxu0 0.0
    %v2592 = vand.u32 %v653, 4294901760
    %v2593 = vsub.f32 %v653, %v2592
    %v2594 = vand.u32 %v2593, 4294901760
    %2595 = vmatpush1.msra.mxu0 %v2594
    %2596 = vmatprep.subr.mxu0 0.0
    %v2597 = vand.u32 %v652, 4294901760
    %v2598 = vsub.f32 %v652, %v2597
    %v2599 = vand.u32 %v2598, 4294901760
    %2600 = vmatpush1.msra.mxu0 %v2599
    %2601 = vmatprep.subr.mxu0 0.0
    %v2602 = vand.u32 %v651, 4294901760
    %v2603 = vsub.f32 %v651, %v2602
    %v2604 = vand.u32 %v2603, 4294901760
    %2605 = vmatpush1.msra.mxu0 %v2604
    %2606 = vmatprep.subr.mxu0 0.0
    %2607 = vmatpush2.msra.mxu0 0.0
    %2608 = vmatprep.subr.mxu0 0.0
    %2609 = vmatpush2.msra.mxu0 0.0
    %2610 = vmatprep.subr.mxu0 0.0
    %2611 = vmatpush2.msra.mxu0 0.0
    %2612 = vmatprep.subr.mxu0 0.0
    %2613 = vmatpush2.msra.mxu0 0.0
    %2614 = vmatprep.subr.mxu0 0.0
    %2615 = vmatpush2.msra.mxu0 0.0
    %2616 = vmatprep.subr.mxu0 0.0
    %2617 = vmatpush2.msra.mxu0 0.0
    %2618 = vmatprep.subr.mxu0 0.0
    %2619 = vmatpush2.msra.mxu0 0.0
    %2620 = vmatprep.subr.mxu0 0.0
    %2621 = vmatpush2.msra.mxu0 0.0
    %2622 = vmatprep.subr.mxu0 0.0
    %2623 = vmatpush2.msra.mxu0 0.0
    %2624 = vmatprep.subr.mxu0 0.0
    %2625 = vmatpush2.msra.mxu0 0.0
    %2626 = vmatprep.subr.mxu0 0.0
    %2627 = vmatpush2.msra.mxu0 0.0
    %2628 = vmatprep.subr.mxu0 0.0
    %2629 = vmatpush2.msra.mxu0 0.0
    %2630 = vmatprep.subr.mxu0 0.0
    %2631 = vmatpush2.msra.mxu0 0.0
    %2632 = vmatprep.subr.mxu0 0.0
    %2633 = vmatpush2.msra.mxu0 0.0
    %2634 = vmatprep.subr.mxu0 0.0
    %2635 = vmatpush2.msra.mxu0 0.0
    %2636 = vmatprep.subr.mxu0 0.0
    %2637 = vmatpush2.msra.mxu0 0.0
    %2638 = vmatprep.mubr.f32.mxu0 0.0
    %v2639 = vand.u32 %v2233, 4294901760
    %2640 = vmatmul.mubr.f32.gmra.mxu0 %v2639
    %v2641 = vpop.f32.mrf.mxu0
    %v2642 = vadd.f32 %v2559, %v2641
    %v2643 = vpop.f32.mrf.mxu0
    %2644 = vdwg.mxu0
    %2645 = vmatprep.subr.mxu0 0.0
    %2646 = vmatpush1.msra.mxu0 0.0
    %2647 = vmatprep.subr.mxu0 0.0
    %2648 = vmatpush1.msra.mxu0 0.0
    %2649 = vmatprep.subr.mxu0 0.0
    %2650 = vmatpush1.msra.mxu0 0.0
    %2651 = vmatprep.subr.mxu0 0.0
    %2652 = vmatpush1.msra.mxu0 0.0
    %2653 = vmatprep.subr.mxu0 0.0
    %2654 = vmatpush1.msra.mxu0 0.0
    %2655 = vmatprep.subr.mxu0 0.0
    %2656 = vmatpush1.msra.mxu0 0.0
    %2657 = vmatprep.subr.mxu0 0.0
    %2658 = vmatpush1.msra.mxu0 0.0
    %2659 = vmatprep.subr.mxu0 0.0
    %2660 = vmatpush1.msra.mxu0 0.0
    %2661 = vmatprep.subr.mxu0 0.0
    %2662 = vmatpush1.msra.mxu0 0.0
    %2663 = vmatprep.subr.mxu0 0.0
    %2664 = vmatpush1.msra.mxu0 0.0
    %2665 = vmatprep.subr.mxu0 0.0
    %2666 = vmatpush1.msra.mxu0 0.0
    %2667 = vmatprep.subr.mxu0 0.0
    %2668 = vmatpush1.msra.mxu0 0.0
    %2669 = vmatprep.subr.mxu0 0.0
    %v2670 = vand.u32 %v654, 4294901760
    %2671 = vmatpush1.msra.mxu0 %v2670
    %2672 = vmatprep.subr.mxu0 0.0
    %v2673 = vand.u32 %v653, 4294901760
    %2674 = vmatpush1.msra.mxu0 %v2673
    %2675 = vmatprep.subr.mxu0 0.0
    %v2676 = vand.u32 %v652, 4294901760
    %2677 = vmatpush1.msra.mxu0 %v2676
    %2678 = vmatprep.subr.mxu0 0.0
    %v2679 = vand.u32 %v651, 4294901760
    %2680 = vmatpush1.msra.mxu0 %v2679
    %2681 = vmatprep.subr.mxu0 0.0
    %2682 = vmatpush2.msra.mxu0 0.0
    %2683 = vmatprep.subr.mxu0 0.0
    %2684 = vmatpush2.msra.mxu0 0.0
    %2685 = vmatprep.subr.mxu0 0.0
    %2686 = vmatpush2.msra.mxu0 0.0
    %2687 = vmatprep.subr.mxu0 0.0
    %2688 = vmatpush2.msra.mxu0 0.0
    %2689 = vmatprep.subr.mxu0 0.0
    %2690 = vmatpush2.msra.mxu0 0.0
    %2691 = vmatprep.subr.mxu0 0.0
    %2692 = vmatpush2.msra.mxu0 0.0
    %2693 = vmatprep.subr.mxu0 0.0
    %2694 = vmatpush2.msra.mxu0 0.0
    %2695 = vmatprep.subr.mxu0 0.0
    %2696 = vmatpush2.msra.mxu0 0.0
    %2697 = vmatprep.subr.mxu0 0.0
    %2698 = vmatpush2.msra.mxu0 0.0
    %2699 = vmatprep.subr.mxu0 0.0
    %2700 = vmatpush2.msra.mxu0 0.0
    %2701 = vmatprep.subr.mxu0 0.0
    %2702 = vmatpush2.msra.mxu0 0.0
    %2703 = vmatprep.subr.mxu0 0.0
    %2704 = vmatpush2.msra.mxu0 0.0
    %2705 = vmatprep.subr.mxu0 0.0
    %2706 = vmatpush2.msra.mxu0 0.0
    %2707 = vmatprep.subr.mxu0 0.0
    %2708 = vmatpush2.msra.mxu0 0.0
    %2709 = vmatprep.subr.mxu0 0.0
    %2710 = vmatpush2.msra.mxu0 0.0
    %2711 = vmatprep.subr.mxu0 0.0
    %2712 = vmatpush2.msra.mxu0 0.0
    %2713 = vmatprep.mubr.f32.mxu0 0.0
    %v2714 = vand.u32 %v2233, 4294901760
    %2715 = vmatmul.mubr.f32.gmra.mxu0 %v2714
    %v2716 = vpop.f32.mrf.mxu0
    %v2717 = vadd.f32 %v2642, %v2716
    %v2718 = vpop.f32.mrf.mxu0
    %2719 = vdwg.mxu0
    %v2721 = vrot.slane %v2717, 2
    %v2723 = vadd.f32 %v2229, %v2721
    %v2724 = vsub.f32 0.0, %v2723
    %v2725 = vmul.f32 %v2724, 1.442695
    %v2726 = vpow.pop %v2725
    %v2727 = vadd.f32 %v2726, 1.0
    %v2728 = vrcp.pop %v2727
    %v2729 = vmul.f32 1.0, %v2728
    %v2730 = vtanh.pop %v2723
    %v2732 = vrot.slane %v2216, 6
    %v2734 = vmul.f32 %v2729, %v2732
    %2736 = vrot.lane.b32.xlu0 %v2730, 64
    %v2737 = vpop.permute.xlu0 %2736
    %v2739 = vmul.f32 %v2729, %v2737
    %2741 = vrot.lane.b32.xlu0 %v2739, 32
    %v2742 = vpop.permute.xlu0 %2741
    %v2744 = vadd.f32 %v2734, %v2742
    %v2745 = vtanh.pop %v2744
    %2747 = vrot.lane.b32.xlu0 %v2745, 64
    %v2748 = vpop.permute.xlu0 %2747
    %v2750 = vmul.f32 %v2729, %v2748
    %2752 = vrot.lane.b32.xlu0 %v2750, 32
    %v2753 = vpop.permute.xlu0 %2752
    %vm2755 = vcmask 261126
    %2756 = vst.msk [vmem:[#allocation3] sm:$0xc0] %vm2755, %v2753
    %v2757 = vld [vmem:[#allocation2 + $0x10] sm:$0x3]
    %v2758 = vrot.slane %v2750, 6
    %2759 = vrot.lane.b32.xlu0 %v2758, 32
    %v2760 = vpop.permute.xlu0 %2759
    %v2761 = vsel %vm656, %v2760, 0
    %2763 = vmatprep.subr.mxu0 0.0
    %2764 = vmatpush1.msra.mxu0 0.0
    %2765 = vmatprep.subr.mxu0 0.0
    %2766 = vmatpush1.msra.mxu0 0.0
    %2767 = vmatprep.subr.mxu0 0.0
    %2768 = vmatpush1.msra.mxu0 0.0
    %2769 = vmatprep.subr.mxu0 0.0
    %2770 = vmatpush1.msra.mxu0 0.0
    %2771 = vmatprep.subr.mxu0 0.0
    %2772 = vmatpush1.msra.mxu0 0.0
    %2773 = vmatprep.subr.mxu0 0.0
    %2774 = vmatpush1.msra.mxu0 0.0
    %2775 = vmatprep.subr.mxu0 0.0
    %2776 = vmatpush1.msra.mxu0 0.0
    %2777 = vmatprep.subr.mxu0 0.0
    %2778 = vmatpush1.msra.mxu0 0.0
    %2779 = vmatprep.subr.mxu0 0.0
    %2780 = vmatpush1.msra.mxu0 0.0
    %2781 = vmatprep.subr.mxu0 0.0
    %2782 = vmatpush1.msra.mxu0 0.0
    %2783 = vmatprep.subr.mxu0 0.0
    %2784 = vmatpush1.msra.mxu0 0.0
    %2785 = vmatprep.subr.mxu0 0.0
    %2786 = vmatpush1.msra.mxu0 0.0
    %2787 = vmatprep.subr.mxu0 0.0
    %v2788 = vand.u32 %v654, 4294901760
    %2789 = vmatpush1.msra.mxu0 %v2788
    %2790 = vmatprep.subr.mxu0 0.0
    %v2791 = vand.u32 %v653, 4294901760
    %2792 = vmatpush1.msra.mxu0 %v2791
    %2793 = vmatprep.subr.mxu0 0.0
    %v2794 = vand.u32 %v652, 4294901760
    %2795 = vmatpush1.msra.mxu0 %v2794
    %2796 = vmatprep.subr.mxu0 0.0
    %v2797 = vand.u32 %v651, 4294901760
    %2798 = vmatpush1.msra.mxu0 %v2797
    %2799 = vmatprep.subr.mxu0 0.0
    %2800 = vmatpush2.msra.mxu0 0.0
    %2801 = vmatprep.subr.mxu0 0.0
    %2802 = vmatpush2.msra.mxu0 0.0
    %2803 = vmatprep.subr.mxu0 0.0
    %2804 = vmatpush2.msra.mxu0 0.0
    %2805 = vmatprep.subr.mxu0 0.0
    %2806 = vmatpush2.msra.mxu0 0.0
    %2807 = vmatprep.subr.mxu0 0.0
    %2808 = vmatpush2.msra.mxu0 0.0
    %2809 = vmatprep.subr.mxu0 0.0
    %2810 = vmatpush2.msra.mxu0 0.0
    %2811 = vmatprep.subr.mxu0 0.0
    %2812 = vmatpush2.msra.mxu0 0.0
    %2813 = vmatprep.subr.mxu0 0.0
    %2814 = vmatpush2.msra.mxu0 0.0
    %2815 = vmatprep.subr.mxu0 0.0
    %2816 = vmatpush2.msra.mxu0 0.0
    %2817 = vmatprep.subr.mxu0 0.0
    %2818 = vmatpush2.msra.mxu0 0.0
    %2819 = vmatprep.subr.mxu0 0.0
    %2820 = vmatpush2.msra.mxu0 0.0
    %2821 = vmatprep.subr.mxu0 0.0
    %2822 = vmatpush2.msra.mxu0 0.0
    %2823 = vmatprep.subr.mxu0 0.0
    %2824 = vmatpush2.msra.mxu0 0.0
    %2825 = vmatprep.subr.mxu0 0.0
    %2826 = vmatpush2.msra.mxu0 0.0
    %2827 = vmatprep.subr.mxu0 0.0
    %2828 = vmatpush2.msra.mxu0 0.0
    %2829 = vmatprep.subr.mxu0 0.0
    %2830 = vmatpush2.msra.mxu0 0.0
    %2831 = vmatprep.mubr.f32.mxu0 0.0
    %v2832 = vand.u32 %v2761, 4294901760
    %v2833 = vsub.f32 %v2761, %v2832
    %v2834 = vand.u32 %v2833, 4294901760
    %v2835 = vsub.f32 %v2833, %v2834
    %v2836 = vand.u32 %v2835, 4294901760
    %2837 = vmatmul.mubr.f32.gmra.mxu0 %v2836
    %v2838 = vpop.f32.mrf.mxu0
    %v2839 = vadd.f32 0.0, %v2838
    %v2840 = vpop.f32.mrf.mxu0
    %2841 = vdwg.mxu0
    %2842 = vmatprep.subr.mxu0 0.0
    %2843 = vmatpush1.msra.mxu0 0.0
    %2844 = vmatprep.subr.mxu0 0.0
    %2845 = vmatpush1.msra.mxu0 0.0
    %2846 = vmatprep.subr.mxu0 0.0
    %2847 = vmatpush1.msra.mxu0 0.0
    %2848 = vmatprep.subr.mxu0 0.0
    %2849 = vmatpush1.msra.mxu0 0.0
    %2850 = vmatprep.subr.mxu0 0.0
    %2851 = vmatpush1.msra.mxu0 0.0
    %2852 = vmatprep.subr.mxu0 0.0
    %2853 = vmatpush1.msra.mxu0 0.0
    %2854 = vmatprep.subr.mxu0 0.0
    %2855 = vmatpush1.msra.mxu0 0.0
    %2856 = vmatprep.subr.mxu0 0.0
    %2857 = vmatpush1.msra.mxu0 0.0
    %2858 = vmatprep.subr.mxu0 0.0
    %2859 = vmatpush1.msra.mxu0 0.0
    %2860 = vmatprep.subr.mxu0 0.0
    %2861 = vmatpush1.msra.mxu0 0.0
    %2862 = vmatprep.subr.mxu0 0.0
    %2863 = vmatpush1.msra.mxu0 0.0
    %2864 = vmatprep.subr.mxu0 0.0
    %2865 = vmatpush1.msra.mxu0 0.0
    %2866 = vmatprep.subr.mxu0 0.0
    %v2867 = vand.u32 %v654, 4294901760
    %v2868 = vsub.f32 %v654, %v2867
    %v2869 = vand.u32 %v2868, 4294901760
    %v2870 = vsub.f32 %v2868, %v2869
    %v2871 = vand.u32 %v2870, 4294901760
    %2872 = vmatpush1.msra.mxu0 %v2871
    %2873 = vmatprep.subr.mxu0 0.0
    %v2874 = vand.u32 %v653, 4294901760
    %v2875 = vsub.f32 %v653, %v2874
    %v2876 = vand.u32 %v2875, 4294901760
    %v2877 = vsub.f32 %v2875, %v2876
    %v2878 = vand.u32 %v2877, 4294901760
    %2879 = vmatpush1.msra.mxu0 %v2878
    %2880 = vmatprep.subr.mxu0 0.0
    %v2881 = vand.u32 %v652, 4294901760
    %v2882 = vsub.f32 %v652, %v2881
    %v2883 = vand.u32 %v2882, 4294901760
    %v2884 = vsub.f32 %v2882, %v2883
    %v2885 = vand.u32 %v2884, 4294901760
    %2886 = vmatpush1.msra.mxu0 %v2885
    %2887 = vmatprep.subr.mxu0 0.0
    %v2888 = vand.u32 %v651, 4294901760
    %v2889 = vsub.f32 %v651, %v2888
    %v2890 = vand.u32 %v2889, 4294901760
    %v2891 = vsub.f32 %v2889, %v2890
    %v2892 = vand.u32 %v2891, 4294901760
    %2893 = vmatpush1.msra.mxu0 %v2892
    %2894 = vmatprep.subr.mxu0 0.0
    %2895 = vmatpush2.msra.mxu0 0.0
    %2896 = vmatprep.subr.mxu0 0.0
    %2897 = vmatpush2.msra.mxu0 0.0
    %2898 = vmatprep.subr.mxu0 0.0
    %2899 = vmatpush2.msra.mxu0 0.0
    %2900 = vmatprep.subr.mxu0 0.0
    %2901 = vmatpush2.msra.mxu0 0.0
    %2902 = vmatprep.subr.mxu0 0.0
    %2903 = vmatpush2.msra.mxu0 0.0
    %2904 = vmatprep.subr.mxu0 0.0
    %2905 = vmatpush2.msra.mxu0 0.0
    %2906 = vmatprep.subr.mxu0 0.0
    %2907 = vmatpush2.msra.mxu0 0.0
    %2908 = vmatprep.subr.mxu0 0.0
    %2909 = vmatpush2.msra.mxu0 0.0
    %2910 = vmatprep.subr.mxu0 0.0
    %2911 = vmatpush2.msra.mxu0 0.0
    %2912 = vmatprep.subr.mxu0 0.0
    %2913 = vmatpush2.msra.mxu0 0.0
    %2914 = vmatprep.subr.mxu0 0.0
    %2915 = vmatpush2.msra.mxu0 0.0
    %2916 = vmatprep.subr.mxu0 0.0
    %2917 = vmatpush2.msra.mxu0 0.0
    %2918 = vmatprep.subr.mxu0 0.0
    %2919 = vmatpush2.msra.mxu0 0.0
    %2920 = vmatprep.subr.mxu0 0.0
    %2921 = vmatpush2.msra.mxu0 0.0
    %2922 = vmatprep.subr.mxu0 0.0
    %2923 = vmatpush2.msra.mxu0 0.0
    %2924 = vmatprep.subr.mxu0 0.0
    %2925 = vmatpush2.msra.mxu0 0.0
    %2926 = vmatprep.mubr.f32.mxu0 0.0
    %v2927 = vand.u32 %v2761, 4294901760
    %2928 = vmatmul.mubr.f32.gmra.mxu0 %v2927
    %v2929 = vpop.f32.mrf.mxu0
    %v2930 = vadd.f32 %v2839, %v2929
    %v2931 = vpop.f32.mrf.mxu0
    %2932 = vdwg.mxu0
    %2933 = vmatprep.subr.mxu0 0.0
    %2934 = vmatpush1.msra.mxu0 0.0
    %2935 = vmatprep.subr.mxu0 0.0
    %2936 = vmatpush1.msra.mxu0 0.0
    %2937 = vmatprep.subr.mxu0 0.0
    %2938 = vmatpush1.msra.mxu0 0.0
    %2939 = vmatprep.subr.mxu0 0.0
    %2940 = vmatpush1.msra.mxu0 0.0
    %2941 = vmatprep.subr.mxu0 0.0
    %2942 = vmatpush1.msra.mxu0 0.0
    %2943 = vmatprep.subr.mxu0 0.0
    %2944 = vmatpush1.msra.mxu0 0.0
    %2945 = vmatprep.subr.mxu0 0.0
    %2946 = vmatpush1.msra.mxu0 0.0
    %2947 = vmatprep.subr.mxu0 0.0
    %2948 = vmatpush1.msra.mxu0 0.0
    %2949 = vmatprep.subr.mxu0 0.0
    %2950 = vmatpush1.msra.mxu0 0.0
    %2951 = vmatprep.subr.mxu0 0.0
    %2952 = vmatpush1.msra.mxu0 0.0
    %2953 = vmatprep.subr.mxu0 0.0
    %2954 = vmatpush1.msra.mxu0 0.0
    %2955 = vmatprep.subr.mxu0 0.0
    %2956 = vmatpush1.msra.mxu0 0.0
    %2957 = vmatprep.subr.mxu0 0.0
    %v2958 = vand.u32 %v654, 4294901760
    %v2959 = vsub.f32 %v654, %v2958
    %2960 = vmatpush1.msra.mxu0 %v2959
    %2961 = vmatprep.subr.mxu0 0.0
    %v2962 = vand.u32 %v653, 4294901760
    %v2963 = vsub.f32 %v653, %v2962
    %2964 = vmatpush1.msra.mxu0 %v2963
    %2965 = vmatprep.subr.mxu0 0.0
    %v2966 = vand.u32 %v652, 4294901760
    %v2967 = vsub.f32 %v652, %v2966
    %2968 = vmatpush1.msra.mxu0 %v2967
    %2969 = vmatprep.subr.mxu0 0.0
    %v2970 = vand.u32 %v651, 4294901760
    %v2971 = vsub.f32 %v651, %v2970
    %2972 = vmatpush1.msra.mxu0 %v2971
    %2973 = vmatprep.subr.mxu0 0.0
    %2974 = vmatpush2.msra.mxu0 0.0
    %2975 = vmatprep.subr.mxu0 0.0
    %2976 = vmatpush2.msra.mxu0 0.0
    %2977 = vmatprep.subr.mxu0 0.0
    %2978 = vmatpush2.msra.mxu0 0.0
    %2979 = vmatprep.subr.mxu0 0.0
    %2980 = vmatpush2.msra.mxu0 0.0
    %2981 = vmatprep.subr.mxu0 0.0
    %2982 = vmatpush2.msra.mxu0 0.0
    %2983 = vmatprep.subr.mxu0 0.0
    %2984 = vmatpush2.msra.mxu0 0.0
    %2985 = vmatprep.subr.mxu0 0.0
    %2986 = vmatpush2.msra.mxu0 0.0
    %2987 = vmatprep.subr.mxu0 0.0
    %2988 = vmatpush2.msra.mxu0 0.0
    %2989 = vmatprep.subr.mxu0 0.0
    %2990 = vmatpush2.msra.mxu0 0.0
    %2991 = vmatprep.subr.mxu0 0.0
    %2992 = vmatpush2.msra.mxu0 0.0
    %2993 = vmatprep.subr.mxu0 0.0
    %2994 = vmatpush2.msra.mxu0 0.0
    %2995 = vmatprep.subr.mxu0 0.0
    %2996 = vmatpush2.msra.mxu0 0.0
    %2997 = vmatprep.subr.mxu0 0.0
    %2998 = vmatpush2.msra.mxu0 0.0
    %2999 = vmatprep.subr.mxu0 0.0
    %3000 = vmatpush2.msra.mxu0 0.0
    %3001 = vmatprep.subr.mxu0 0.0
    %3002 = vmatpush2.msra.mxu0 0.0
    %3003 = vmatprep.subr.mxu0 0.0
    %3004 = vmatpush2.msra.mxu0 0.0
    %3005 = vmatprep.mubr.f32.mxu0 0.0
    %v3006 = vand.u32 %v2761, 4294901760
    %v3007 = vsub.f32 %v2761, %v3006
    %3008 = vmatmul.mubr.f32.gmra.mxu0 %v3007
    %v3009 = vpop.f32.mrf.mxu0
    %v3010 = vadd.f32 %v2930, %v3009
    %v3011 = vpop.f32.mrf.mxu0
    %3012 = vdwg.mxu0
    %3013 = vmatprep.subr.mxu0 0.0
    %3014 = vmatpush1.msra.mxu0 0.0
    %3015 = vmatprep.subr.mxu0 0.0
    %3016 = vmatpush1.msra.mxu0 0.0
    %3017 = vmatprep.subr.mxu0 0.0
    %3018 = vmatpush1.msra.mxu0 0.0
    %3019 = vmatprep.subr.mxu0 0.0
    %3020 = vmatpush1.msra.mxu0 0.0
    %3021 = vmatprep.subr.mxu0 0.0
    %3022 = vmatpush1.msra.mxu0 0.0
    %3023 = vmatprep.subr.mxu0 0.0
    %3024 = vmatpush1.msra.mxu0 0.0
    %3025 = vmatprep.subr.mxu0 0.0
    %3026 = vmatpush1.msra.mxu0 0.0
    %3027 = vmatprep.subr.mxu0 0.0
    %3028 = vmatpush1.msra.mxu0 0.0
    %3029 = vmatprep.subr.mxu0 0.0
    %3030 = vmatpush1.msra.mxu0 0.0
    %3031 = vmatprep.subr.mxu0 0.0
    %3032 = vmatpush1.msra.mxu0 0.0
    %3033 = vmatprep.subr.mxu0 0.0
    %3034 = vmatpush1.msra.mxu0 0.0
    %3035 = vmatprep.subr.mxu0 0.0
    %3036 = vmatpush1.msra.mxu0 0.0
    %3037 = vmatprep.subr.mxu0 0.0
    %v3038 = vand.u32 %v654, 4294901760
    %3039 = vmatpush1.msra.mxu0 %v3038
    %3040 = vmatprep.subr.mxu0 0.0
    %v3041 = vand.u32 %v653, 4294901760
    %3042 = vmatpush1.msra.mxu0 %v3041
    %3043 = vmatprep.subr.mxu0 0.0
    %v3044 = vand.u32 %v652, 4294901760
    %3045 = vmatpush1.msra.mxu0 %v3044
    %3046 = vmatprep.subr.mxu0 0.0
    %v3047 = vand.u32 %v651, 4294901760
    %3048 = vmatpush1.msra.mxu0 %v3047
    %3049 = vmatprep.subr.mxu0 0.0
    %3050 = vmatpush2.msra.mxu0 0.0
    %3051 = vmatprep.subr.mxu0 0.0
    %3052 = vmatpush2.msra.mxu0 0.0
    %3053 = vmatprep.subr.mxu0 0.0
    %3054 = vmatpush2.msra.mxu0 0.0
    %3055 = vmatprep.subr.mxu0 0.0
    %3056 = vmatpush2.msra.mxu0 0.0
    %3057 = vmatprep.subr.mxu0 0.0
    %3058 = vmatpush2.msra.mxu0 0.0
    %3059 = vmatprep.subr.mxu0 0.0
    %3060 = vmatpush2.msra.mxu0 0.0
    %3061 = vmatprep.subr.mxu0 0.0
    %3062 = vmatpush2.msra.mxu0 0.0
    %3063 = vmatprep.subr.mxu0 0.0
    %3064 = vmatpush2.msra.mxu0 0.0
    %3065 = vmatprep.subr.mxu0 0.0
    %3066 = vmatpush2.msra.mxu0 0.0
    %3067 = vmatprep.subr.mxu0 0.0
    %3068 = vmatpush2.msra.mxu0 0.0
    %3069 = vmatprep.subr.mxu0 0.0
    %3070 = vmatpush2.msra.mxu0 0.0
    %3071 = vmatprep.subr.mxu0 0.0
    %3072 = vmatpush2.msra.mxu0 0.0
    %3073 = vmatprep.subr.mxu0 0.0
    %3074 = vmatpush2.msra.mxu0 0.0
    %3075 = vmatprep.subr.mxu0 0.0
    %3076 = vmatpush2.msra.mxu0 0.0
    %3077 = vmatprep.subr.mxu0 0.0
    %3078 = vmatpush2.msra.mxu0 0.0
    %3079 = vmatprep.subr.mxu0 0.0
    %3080 = vmatpush2.msra.mxu0 0.0
    %3081 = vmatprep.mubr.f32.mxu0 0.0
    %v3082 = vand.u32 %v2761, 4294901760
    %v3083 = vsub.f32 %v2761, %v3082
    %v3084 = vand.u32 %v3083, 4294901760
    %3085 = vmatmul.mubr.f32.gmra.mxu0 %v3084
    %v3086 = vpop.f32.mrf.mxu0
    %v3087 = vadd.f32 %v3010, %v3086
    %v3088 = vpop.f32.mrf.mxu0
    %3089 = vdwg.mxu0
    %3090 = vmatprep.subr.mxu0 0.0
    %3091 = vmatpush1.msra.mxu0 0.0
    %3092 = vmatprep.subr.mxu0 0.0
    %3093 = vmatpush1.msra.mxu0 0.0
    %3094 = vmatprep.subr.mxu0 0.0
    %3095 = vmatpush1.msra.mxu0 0.0
    %3096 = vmatprep.subr.mxu0 0.0
    %3097 = vmatpush1.msra.mxu0 0.0
    %3098 = vmatprep.subr.mxu0 0.0
    %3099 = vmatpush1.msra.mxu0 0.0
    %3100 = vmatprep.subr.mxu0 0.0
    %3101 = vmatpush1.msra.mxu0 0.0
    %3102 = vmatprep.subr.mxu0 0.0
    %3103 = vmatpush1.msra.mxu0 0.0
    %3104 = vmatprep.subr.mxu0 0.0
    %3105 = vmatpush1.msra.mxu0 0.0
    %3106 = vmatprep.subr.mxu0 0.0
    %3107 = vmatpush1.msra.mxu0 0.0
    %3108 = vmatprep.subr.mxu0 0.0
    %3109 = vmatpush1.msra.mxu0 0.0
    %3110 = vmatprep.subr.mxu0 0.0
    %3111 = vmatpush1.msra.mxu0 0.0
    %3112 = vmatprep.subr.mxu0 0.0
    %3113 = vmatpush1.msra.mxu0 0.0
    %3114 = vmatprep.subr.mxu0 0.0
    %v3115 = vand.u32 %v654, 4294901760
    %v3116 = vsub.f32 %v654, %v3115
    %v3117 = vand.u32 %v3116, 4294901760
    %3118 = vmatpush1.msra.mxu0 %v3117
    %3119 = vmatprep.subr.mxu0 0.0
    %v3120 = vand.u32 %v653, 4294901760
    %v3121 = vsub.f32 %v653, %v3120
    %v3122 = vand.u32 %v3121, 4294901760
    %3123 = vmatpush1.msra.mxu0 %v3122
    %3124 = vmatprep.subr.mxu0 0.0
    %v3125 = vand.u32 %v652, 4294901760
    %v3126 = vsub.f32 %v652, %v3125
    %v3127 = vand.u32 %v3126, 4294901760
    %3128 = vmatpush1.msra.mxu0 %v3127
    %3129 = vmatprep.subr.mxu0 0.0
    %v3130 = vand.u32 %v651, 4294901760
    %v3131 = vsub.f32 %v651, %v3130
    %v3132 = vand.u32 %v3131, 4294901760
    %3133 = vmatpush1.msra.mxu0 %v3132
    %3134 = vmatprep.subr.mxu0 0.0
    %3135 = vmatpush2.msra.mxu0 0.0
    %3136 = vmatprep.subr.mxu0 0.0
    %3137 = vmatpush2.msra.mxu0 0.0
    %3138 = vmatprep.subr.mxu0 0.0
    %3139 = vmatpush2.msra.mxu0 0.0
    %3140 = vmatprep.subr.mxu0 0.0
    %3141 = vmatpush2.msra.mxu0 0.0
    %3142 = vmatprep.subr.mxu0 0.0
    %3143 = vmatpush2.msra.mxu0 0.0
    %3144 = vmatprep.subr.mxu0 0.0
    %3145 = vmatpush2.msra.mxu0 0.0
    %3146 = vmatprep.subr.mxu0 0.0
    %3147 = vmatpush2.msra.mxu0 0.0
    %3148 = vmatprep.subr.mxu0 0.0
    %3149 = vmatpush2.msra.mxu0 0.0
    %3150 = vmatprep.subr.mxu0 0.0
    %3151 = vmatpush2.msra.mxu0 0.0
    %3152 = vmatprep.subr.mxu0 0.0
    %3153 = vmatpush2.msra.mxu0 0.0
    %3154 = vmatprep.subr.mxu0 0.0
    %3155 = vmatpush2.msra.mxu0 0.0
    %3156 = vmatprep.subr.mxu0 0.0
    %3157 = vmatpush2.msra.mxu0 0.0
    %3158 = vmatprep.subr.mxu0 0.0
    %3159 = vmatpush2.msra.mxu0 0.0
    %3160 = vmatprep.subr.mxu0 0.0
    %3161 = vmatpush2.msra.mxu0 0.0
    %3162 = vmatprep.subr.mxu0 0.0
    %3163 = vmatpush2.msra.mxu0 0.0
    %3164 = vmatprep.subr.mxu0 0.0
    %3165 = vmatpush2.msra.mxu0 0.0
    %3166 = vmatprep.mubr.f32.mxu0 0.0
    %v3167 = vand.u32 %v2761, 4294901760
    %3168 = vmatmul.mubr.f32.gmra.mxu0 %v3167
    %v3169 = vpop.f32.mrf.mxu0
    %v3170 = vadd.f32 %v3087, %v3169
    %v3171 = vpop.f32.mrf.mxu0
    %3172 = vdwg.mxu0
    %3173 = vmatprep.subr.mxu0 0.0
    %3174 = vmatpush1.msra.mxu0 0.0
    %3175 = vmatprep.subr.mxu0 0.0
    %3176 = vmatpush1.msra.mxu0 0.0
    %3177 = vmatprep.subr.mxu0 0.0
    %3178 = vmatpush1.msra.mxu0 0.0
    %3179 = vmatprep.subr.mxu0 0.0
    %3180 = vmatpush1.msra.mxu0 0.0
    %3181 = vmatprep.subr.mxu0 0.0
    %3182 = vmatpush1.msra.mxu0 0.0
    %3183 = vmatprep.subr.mxu0 0.0
    %3184 = vmatpush1.msra.mxu0 0.0
    %3185 = vmatprep.subr.mxu0 0.0
    %3186 = vmatpush1.msra.mxu0 0.0
    %3187 = vmatprep.subr.mxu0 0.0
    %3188 = vmatpush1.msra.mxu0 0.0
    %3189 = vmatprep.subr.mxu0 0.0
    %3190 = vmatpush1.msra.mxu0 0.0
    %3191 = vmatprep.subr.mxu0 0.0
    %3192 = vmatpush1.msra.mxu0 0.0
    %3193 = vmatprep.subr.mxu0 0.0
    %3194 = vmatpush1.msra.mxu0 0.0
    %3195 = vmatprep.subr.mxu0 0.0
    %3196 = vmatpush1.msra.mxu0 0.0
    %3197 = vmatprep.subr.mxu0 0.0
    %v3198 = vand.u32 %v654, 4294901760
    %3199 = vmatpush1.msra.mxu0 %v3198
    %3200 = vmatprep.subr.mxu0 0.0
    %v3201 = vand.u32 %v653, 4294901760
    %3202 = vmatpush1.msra.mxu0 %v3201
    %3203 = vmatprep.subr.mxu0 0.0
    %v3204 = vand.u32 %v652, 4294901760
    %3205 = vmatpush1.msra.mxu0 %v3204
    %3206 = vmatprep.subr.mxu0 0.0
    %v3207 = vand.u32 %v651, 4294901760
    %3208 = vmatpush1.msra.mxu0 %v3207
    %3209 = vmatprep.subr.mxu0 0.0
    %3210 = vmatpush2.msra.mxu0 0.0
    %3211 = vmatprep.subr.mxu0 0.0
    %3212 = vmatpush2.msra.mxu0 0.0
    %3213 = vmatprep.subr.mxu0 0.0
    %3214 = vmatpush2.msra.mxu0 0.0
    %3215 = vmatprep.subr.mxu0 0.0
    %3216 = vmatpush2.msra.mxu0 0.0
    %3217 = vmatprep.subr.mxu0 0.0
    %3218 = vmatpush2.msra.mxu0 0.0
    %3219 = vmatprep.subr.mxu0 0.0
    %3220 = vmatpush2.msra.mxu0 0.0
    %3221 = vmatprep.subr.mxu0 0.0
    %3222 = vmatpush2.msra.mxu0 0.0
    %3223 = vmatprep.subr.mxu0 0.0
    %3224 = vmatpush2.msra.mxu0 0.0
    %3225 = vmatprep.subr.mxu0 0.0
    %3226 = vmatpush2.msra.mxu0 0.0
    %3227 = vmatprep.subr.mxu0 0.0
    %3228 = vmatpush2.msra.mxu0 0.0
    %3229 = vmatprep.subr.mxu0 0.0
    %3230 = vmatpush2.msra.mxu0 0.0
    %3231 = vmatprep.subr.mxu0 0.0
    %3232 = vmatpush2.msra.mxu0 0.0
    %3233 = vmatprep.subr.mxu0 0.0
    %3234 = vmatpush2.msra.mxu0 0.0
    %3235 = vmatprep.subr.mxu0 0.0
    %3236 = vmatpush2.msra.mxu0 0.0
    %3237 = vmatprep.subr.mxu0 0.0
    %3238 = vmatpush2.msra.mxu0 0.0
    %3239 = vmatprep.subr.mxu0 0.0
    %3240 = vmatpush2.msra.mxu0 0.0
    %3241 = vmatprep.mubr.f32.mxu0 0.0
    %v3242 = vand.u32 %v2761, 4294901760
    %3243 = vmatmul.mubr.f32.gmra.mxu0 %v3242
    %v3244 = vpop.f32.mrf.mxu0
    %v3245 = vadd.f32 %v3170, %v3244
    %v3246 = vpop.f32.mrf.mxu0
    %3247 = vdwg.mxu0
    %v3248 = vadd.f32 %v2757, %v3245
    %v3249 = vsub.f32 0.0, %v3248
    %v3250 = vmul.f32 %v3249, 1.442695
    %v3251 = vpow.pop %v3250
    %v3252 = vadd.f32 %v3251, 1.0
    %v3253 = vrcp.pop %v3252
    %v3254 = vmul.f32 1.0, %v3253
    %v3255 = vtanh.pop %v3248
    %v3257 = vrot.slane %v2744, 6
    %v3259 = vmul.f32 %v3254, %v3257
    %3261 = vrot.lane.b32.xlu0 %v3255, 64
    %v3262 = vpop.permute.xlu0 %3261
    %v3264 = vmul.f32 %v3254, %v3262
    %3266 = vrot.lane.b32.xlu0 %v3264, 32
    %v3267 = vpop.permute.xlu0 %3266
    %v3269 = vadd.f32 %v3259, %v3267
    %v3270 = vtanh.pop %v3269
    %3272 = vrot.lane.b32.xlu0 %v3270, 64
    %v3273 = vpop.permute.xlu0 %3272
    %v3275 = vmul.f32 %v3254, %v3273
    %3277 = vrot.lane.b32.xlu0 %v3275, 32
    %v3278 = vpop.permute.xlu0 %3277
    %3280 = vst.msk [vmem:[#allocation3 + $0x8] sm:$0x3] %vm1174, %v3278
    %v3281 = vld [vmem:[#allocation2 + $0x10] sm:$0xc]
    %v3282 = vsel %vm656, %v3278, 0
    %3284 = vmatprep.subr.mxu0 0.0
    %3285 = vmatpush1.msra.mxu0 0.0
    %3286 = vmatprep.subr.mxu0 0.0
    %3287 = vmatpush1.msra.mxu0 0.0
    %3288 = vmatprep.subr.mxu0 0.0
    %3289 = vmatpush1.msra.mxu0 0.0
    %3290 = vmatprep.subr.mxu0 0.0
    %3291 = vmatpush1.msra.mxu0 0.0
    %3292 = vmatprep.subr.mxu0 0.0
    %3293 = vmatpush1.msra.mxu0 0.0
    %3294 = vmatprep.subr.mxu0 0.0
    %3295 = vmatpush1.msra.mxu0 0.0
    %3296 = vmatprep.subr.mxu0 0.0
    %3297 = vmatpush1.msra.mxu0 0.0
    %3298 = vmatprep.subr.mxu0 0.0
    %3299 = vmatpush1.msra.mxu0 0.0
    %3300 = vmatprep.subr.mxu0 0.0
    %3301 = vmatpush1.msra.mxu0 0.0
    %3302 = vmatprep.subr.mxu0 0.0
    %3303 = vmatpush1.msra.mxu0 0.0
    %3304 = vmatprep.subr.mxu0 0.0
    %3305 = vmatpush1.msra.mxu0 0.0
    %3306 = vmatprep.subr.mxu0 0.0
    %3307 = vmatpush1.msra.mxu0 0.0
    %3308 = vmatprep.subr.mxu0 0.0
    %v3309 = vand.u32 %v654, 4294901760
    %3310 = vmatpush1.msra.mxu0 %v3309
    %3311 = vmatprep.subr.mxu0 0.0
    %v3312 = vand.u32 %v653, 4294901760
    %3313 = vmatpush1.msra.mxu0 %v3312
    %3314 = vmatprep.subr.mxu0 0.0
    %v3315 = vand.u32 %v652, 4294901760
    %3316 = vmatpush1.msra.mxu0 %v3315
    %3317 = vmatprep.subr.mxu0 0.0
    %v3318 = vand.u32 %v651, 4294901760
    %3319 = vmatpush1.msra.mxu0 %v3318
    %3320 = vmatprep.subr.mxu0 0.0
    %3321 = vmatpush2.msra.mxu0 0.0
    %3322 = vmatprep.subr.mxu0 0.0
    %3323 = vmatpush2.msra.mxu0 0.0
    %3324 = vmatprep.subr.mxu0 0.0
    %3325 = vmatpush2.msra.mxu0 0.0
    %3326 = vmatprep.subr.mxu0 0.0
    %3327 = vmatpush2.msra.mxu0 0.0
    %3328 = vmatprep.subr.mxu0 0.0
    %3329 = vmatpush2.msra.mxu0 0.0
    %3330 = vmatprep.subr.mxu0 0.0
    %3331 = vmatpush2.msra.mxu0 0.0
    %3332 = vmatprep.subr.mxu0 0.0
    %3333 = vmatpush2.msra.mxu0 0.0
    %3334 = vmatprep.subr.mxu0 0.0
    %3335 = vmatpush2.msra.mxu0 0.0
    %3336 = vmatprep.subr.mxu0 0.0
    %3337 = vmatpush2.msra.mxu0 0.0
    %3338 = vmatprep.subr.mxu0 0.0
    %3339 = vmatpush2.msra.mxu0 0.0
    %3340 = vmatprep.subr.mxu0 0.0
    %3341 = vmatpush2.msra.mxu0 0.0
    %3342 = vmatprep.subr.mxu0 0.0
    %3343 = vmatpush2.msra.mxu0 0.0
    %3344 = vmatprep.subr.mxu0 0.0
    %3345 = vmatpush2.msra.mxu0 0.0
    %3346 = vmatprep.subr.mxu0 0.0
    %3347 = vmatpush2.msra.mxu0 0.0
    %3348 = vmatprep.subr.mxu0 0.0
    %3349 = vmatpush2.msra.mxu0 0.0
    %3350 = vmatprep.subr.mxu0 0.0
    %3351 = vmatpush2.msra.mxu0 0.0
    %3352 = vmatprep.mubr.f32.mxu0 0.0
    %v3353 = vand.u32 %v3282, 4294901760
    %v3354 = vsub.f32 %v3282, %v3353
    %v3355 = vand.u32 %v3354, 4294901760
    %v3356 = vsub.f32 %v3354, %v3355
    %v3357 = vand.u32 %v3356, 4294901760
    %3358 = vmatmul.mubr.f32.gmra.mxu0 %v3357
    %v3359 = vpop.f32.mrf.mxu0
    %v3360 = vadd.f32 0.0, %v3359
    %v3361 = vpop.f32.mrf.mxu0
    %3362 = vdwg.mxu0
    %3363 = vmatprep.subr.mxu0 0.0
    %3364 = vmatpush1.msra.mxu0 0.0
    %3365 = vmatprep.subr.mxu0 0.0
    %3366 = vmatpush1.msra.mxu0 0.0
    %3367 = vmatprep.subr.mxu0 0.0
    %3368 = vmatpush1.msra.mxu0 0.0
    %3369 = vmatprep.subr.mxu0 0.0
    %3370 = vmatpush1.msra.mxu0 0.0
    %3371 = vmatprep.subr.mxu0 0.0
    %3372 = vmatpush1.msra.mxu0 0.0
    %3373 = vmatprep.subr.mxu0 0.0
    %3374 = vmatpush1.msra.mxu0 0.0
    %3375 = vmatprep.subr.mxu0 0.0
    %3376 = vmatpush1.msra.mxu0 0.0
    %3377 = vmatprep.subr.mxu0 0.0
    %3378 = vmatpush1.msra.mxu0 0.0
    %3379 = vmatprep.subr.mxu0 0.0
    %3380 = vmatpush1.msra.mxu0 0.0
    %3381 = vmatprep.subr.mxu0 0.0
    %3382 = vmatpush1.msra.mxu0 0.0
    %3383 = vmatprep.subr.mxu0 0.0
    %3384 = vmatpush1.msra.mxu0 0.0
    %3385 = vmatprep.subr.mxu0 0.0
    %3386 = vmatpush1.msra.mxu0 0.0
    %3387 = vmatprep.subr.mxu0 0.0
    %v3388 = vand.u32 %v654, 4294901760
    %v3389 = vsub.f32 %v654, %v3388
    %v3390 = vand.u32 %v3389, 4294901760
    %v3391 = vsub.f32 %v3389, %v3390
    %v3392 = vand.u32 %v3391, 4294901760
    %3393 = vmatpush1.msra.mxu0 %v3392
    %3394 = vmatprep.subr.mxu0 0.0
    %v3395 = vand.u32 %v653, 4294901760
    %v3396 = vsub.f32 %v653, %v3395
    %v3397 = vand.u32 %v3396, 4294901760
    %v3398 = vsub.f32 %v3396, %v3397
    %v3399 = vand.u32 %v3398, 4294901760
    %3400 = vmatpush1.msra.mxu0 %v3399
    %3401 = vmatprep.subr.mxu0 0.0
    %v3402 = vand.u32 %v652, 4294901760
    %v3403 = vsub.f32 %v652, %v3402
    %v3404 = vand.u32 %v3403, 4294901760
    %v3405 = vsub.f32 %v3403, %v3404
    %v3406 = vand.u32 %v3405, 4294901760
    %3407 = vmatpush1.msra.mxu0 %v3406
    %3408 = vmatprep.subr.mxu0 0.0
    %v3409 = vand.u32 %v651, 4294901760
    %v3410 = vsub.f32 %v651, %v3409
    %v3411 = vand.u32 %v3410, 4294901760
    %v3412 = vsub.f32 %v3410, %v3411
    %v3413 = vand.u32 %v3412, 4294901760
    %3414 = vmatpush1.msra.mxu0 %v3413
    %3415 = vmatprep.subr.mxu0 0.0
    %3416 = vmatpush2.msra.mxu0 0.0
    %3417 = vmatprep.subr.mxu0 0.0
    %3418 = vmatpush2.msra.mxu0 0.0
    %3419 = vmatprep.subr.mxu0 0.0
    %3420 = vmatpush2.msra.mxu0 0.0
    %3421 = vmatprep.subr.mxu0 0.0
    %3422 = vmatpush2.msra.mxu0 0.0
    %3423 = vmatprep.subr.mxu0 0.0
    %3424 = vmatpush2.msra.mxu0 0.0
    %3425 = vmatprep.subr.mxu0 0.0
    %3426 = vmatpush2.msra.mxu0 0.0
    %3427 = vmatprep.subr.mxu0 0.0
    %3428 = vmatpush2.msra.mxu0 0.0
    %3429 = vmatprep.subr.mxu0 0.0
    %3430 = vmatpush2.msra.mxu0 0.0
    %3431 = vmatprep.subr.mxu0 0.0
    %3432 = vmatpush2.msra.mxu0 0.0
    %3433 = vmatprep.subr.mxu0 0.0
    %3434 = vmatpush2.msra.mxu0 0.0
    %3435 = vmatprep.subr.mxu0 0.0
    %3436 = vmatpush2.msra.mxu0 0.0
    %3437 = vmatprep.subr.mxu0 0.0
    %3438 = vmatpush2.msra.mxu0 0.0
    %3439 = vmatprep.subr.mxu0 0.0
    %3440 = vmatpush2.msra.mxu0 0.0
    %3441 = vmatprep.subr.mxu0 0.0
    %3442 = vmatpush2.msra.mxu0 0.0
    %3443 = vmatprep.subr.mxu0 0.0
    %3444 = vmatpush2.msra.mxu0 0.0
    %3445 = vmatprep.subr.mxu0 0.0
    %3446 = vmatpush2.msra.mxu0 0.0
    %3447 = vmatprep.mubr.f32.mxu0 0.0
    %v3448 = vand.u32 %v3282, 4294901760
    %3449 = vmatmul.mubr.f32.gmra.mxu0 %v3448
    %v3450 = vpop.f32.mrf.mxu0
    %v3451 = vadd.f32 %v3360, %v3450
    %v3452 = vpop.f32.mrf.mxu0
    %3453 = vdwg.mxu0
    %3454 = vmatprep.subr.mxu0 0.0
    %3455 = vmatpush1.msra.mxu0 0.0
    %3456 = vmatprep.subr.mxu0 0.0
    %3457 = vmatpush1.msra.mxu0 0.0
    %3458 = vmatprep.subr.mxu0 0.0
    %3459 = vmatpush1.msra.mxu0 0.0
    %3460 = vmatprep.subr.mxu0 0.0
    %3461 = vmatpush1.msra.mxu0 0.0
    %3462 = vmatprep.subr.mxu0 0.0
    %3463 = vmatpush1.msra.mxu0 0.0
    %3464 = vmatprep.subr.mxu0 0.0
    %3465 = vmatpush1.msra.mxu0 0.0
    %3466 = vmatprep.subr.mxu0 0.0
    %3467 = vmatpush1.msra.mxu0 0.0
    %3468 = vmatprep.subr.mxu0 0.0
    %3469 = vmatpush1.msra.mxu0 0.0
    %3470 = vmatprep.subr.mxu0 0.0
    %3471 = vmatpush1.msra.mxu0 0.0
    %3472 = vmatprep.subr.mxu0 0.0
    %3473 = vmatpush1.msra.mxu0 0.0
    %3474 = vmatprep.subr.mxu0 0.0
    %3475 = vmatpush1.msra.mxu0 0.0
    %3476 = vmatprep.subr.mxu0 0.0
    %3477 = vmatpush1.msra.mxu0 0.0
    %3478 = vmatprep.subr.mxu0 0.0
    %v3479 = vand.u32 %v654, 4294901760
    %v3480 = vsub.f32 %v654, %v3479
    %3481 = vmatpush1.msra.mxu0 %v3480
    %3482 = vmatprep.subr.mxu0 0.0
    %v3483 = vand.u32 %v653, 4294901760
    %v3484 = vsub.f32 %v653, %v3483
    %3485 = vmatpush1.msra.mxu0 %v3484
    %3486 = vmatprep.subr.mxu0 0.0
    %v3487 = vand.u32 %v652, 4294901760
    %v3488 = vsub.f32 %v652, %v3487
    %3489 = vmatpush1.msra.mxu0 %v3488
    %3490 = vmatprep.subr.mxu0 0.0
    %v3491 = vand.u32 %v651, 4294901760
    %v3492 = vsub.f32 %v651, %v3491
    %3493 = vmatpush1.msra.mxu0 %v3492
    %3494 = vmatprep.subr.mxu0 0.0
    %3495 = vmatpush2.msra.mxu0 0.0
    %3496 = vmatprep.subr.mxu0 0.0
    %3497 = vmatpush2.msra.mxu0 0.0
    %3498 = vmatprep.subr.mxu0 0.0
    %3499 = vmatpush2.msra.mxu0 0.0
    %3500 = vmatprep.subr.mxu0 0.0
    %3501 = vmatpush2.msra.mxu0 0.0
    %3502 = vmatprep.subr.mxu0 0.0
    %3503 = vmatpush2.msra.mxu0 0.0
    %3504 = vmatprep.subr.mxu0 0.0
    %3505 = vmatpush2.msra.mxu0 0.0
    %3506 = vmatprep.subr.mxu0 0.0
    %3507 = vmatpush2.msra.mxu0 0.0
    %3508 = vmatprep.subr.mxu0 0.0
    %3509 = vmatpush2.msra.mxu0 0.0
    %3510 = vmatprep.subr.mxu0 0.0
    %3511 = vmatpush2.msra.mxu0 0.0
    %3512 = vmatprep.subr.mxu0 0.0
    %3513 = vmatpush2.msra.mxu0 0.0
    %3514 = vmatprep.subr.mxu0 0.0
    %3515 = vmatpush2.msra.mxu0 0.0
    %3516 = vmatprep.subr.mxu0 0.0
    %3517 = vmatpush2.msra.mxu0 0.0
    %3518 = vmatprep.subr.mxu0 0.0
    %3519 = vmatpush2.msra.mxu0 0.0
    %3520 = vmatprep.subr.mxu0 0.0
    %3521 = vmatpush2.msra.mxu0 0.0
    %3522 = vmatprep.subr.mxu0 0.0
    %3523 = vmatpush2.msra.mxu0 0.0
    %3524 = vmatprep.subr.mxu0 0.0
    %3525 = vmatpush2.msra.mxu0 0.0
    %3526 = vmatprep.mubr.f32.mxu0 0.0
    %v3527 = vand.u32 %v3282, 4294901760
    %v3528 = vsub.f32 %v3282, %v3527
    %3529 = vmatmul.mubr.f32.gmra.mxu0 %v3528
    %v3530 = vpop.f32.mrf.mxu0
    %v3531 = vadd.f32 %v3451, %v3530
    %v3532 = vpop.f32.mrf.mxu0
    %3533 = vdwg.mxu0
    %3534 = vmatprep.subr.mxu0 0.0
    %3535 = vmatpush1.msra.mxu0 0.0
    %3536 = vmatprep.subr.mxu0 0.0
    %3537 = vmatpush1.msra.mxu0 0.0
    %3538 = vmatprep.subr.mxu0 0.0
    %3539 = vmatpush1.msra.mxu0 0.0
    %3540 = vmatprep.subr.mxu0 0.0
    %3541 = vmatpush1.msra.mxu0 0.0
    %3542 = vmatprep.subr.mxu0 0.0
    %3543 = vmatpush1.msra.mxu0 0.0
    %3544 = vmatprep.subr.mxu0 0.0
    %3545 = vmatpush1.msra.mxu0 0.0
    %3546 = vmatprep.subr.mxu0 0.0
    %3547 = vmatpush1.msra.mxu0 0.0
    %3548 = vmatprep.subr.mxu0 0.0
    %3549 = vmatpush1.msra.mxu0 0.0
    %3550 = vmatprep.subr.mxu0 0.0
    %3551 = vmatpush1.msra.mxu0 0.0
    %3552 = vmatprep.subr.mxu0 0.0
    %3553 = vmatpush1.msra.mxu0 0.0
    %3554 = vmatprep.subr.mxu0 0.0
    %3555 = vmatpush1.msra.mxu0 0.0
    %3556 = vmatprep.subr.mxu0 0.0
    %3557 = vmatpush1.msra.mxu0 0.0
    %3558 = vmatprep.subr.mxu0 0.0
    %v3559 = vand.u32 %v654, 4294901760
    %3560 = vmatpush1.msra.mxu0 %v3559
    %3561 = vmatprep.subr.mxu0 0.0
    %v3562 = vand.u32 %v653, 4294901760
    %3563 = vmatpush1.msra.mxu0 %v3562
    %3564 = vmatprep.subr.mxu0 0.0
    %v3565 = vand.u32 %v652, 4294901760
    %3566 = vmatpush1.msra.mxu0 %v3565
    %3567 = vmatprep.subr.mxu0 0.0
    %v3568 = vand.u32 %v651, 4294901760
    %3569 = vmatpush1.msra.mxu0 %v3568
    %3570 = vmatprep.subr.mxu0 0.0
    %3571 = vmatpush2.msra.mxu0 0.0
    %3572 = vmatprep.subr.mxu0 0.0
    %3573 = vmatpush2.msra.mxu0 0.0
    %3574 = vmatprep.subr.mxu0 0.0
    %3575 = vmatpush2.msra.mxu0 0.0
    %3576 = vmatprep.subr.mxu0 0.0
    %3577 = vmatpush2.msra.mxu0 0.0
    %3578 = vmatprep.subr.mxu0 0.0
    %3579 = vmatpush2.msra.mxu0 0.0
    %3580 = vmatprep.subr.mxu0 0.0
    %3581 = vmatpush2.msra.mxu0 0.0
    %3582 = vmatprep.subr.mxu0 0.0
    %3583 = vmatpush2.msra.mxu0 0.0
    %3584 = vmatprep.subr.mxu0 0.0
    %3585 = vmatpush2.msra.mxu0 0.0
    %3586 = vmatprep.subr.mxu0 0.0
    %3587 = vmatpush2.msra.mxu0 0.0
    %3588 = vmatprep.subr.mxu0 0.0
    %3589 = vmatpush2.msra.mxu0 0.0
    %3590 = vmatprep.subr.mxu0 0.0
    %3591 = vmatpush2.msra.mxu0 0.0
    %3592 = vmatprep.subr.mxu0 0.0
    %3593 = vmatpush2.msra.mxu0 0.0
    %3594 = vmatprep.subr.mxu0 0.0
    %3595 = vmatpush2.msra.mxu0 0.0
    %3596 = vmatprep.subr.mxu0 0.0
    %3597 = vmatpush2.msra.mxu0 0.0
    %3598 = vmatprep.subr.mxu0 0.0
    %3599 = vmatpush2.msra.mxu0 0.0
    %3600 = vmatprep.subr.mxu0 0.0
    %3601 = vmatpush2.msra.mxu0 0.0
    %3602 = vmatprep.mubr.f32.mxu0 0.0
    %v3603 = vand.u32 %v3282, 4294901760
    %v3604 = vsub.f32 %v3282, %v3603
    %v3605 = vand.u32 %v3604, 4294901760
    %3606 = vmatmul.mubr.f32.gmra.mxu0 %v3605
    %v3607 = vpop.f32.mrf.mxu0
    %v3608 = vadd.f32 %v3531, %v3607
    %v3609 = vpop.f32.mrf.mxu0
    %3610 = vdwg.mxu0
    %3611 = vmatprep.subr.mxu0 0.0
    %3612 = vmatpush1.msra.mxu0 0.0
    %3613 = vmatprep.subr.mxu0 0.0
    %3614 = vmatpush1.msra.mxu0 0.0
    %3615 = vmatprep.subr.mxu0 0.0
    %3616 = vmatpush1.msra.mxu0 0.0
    %3617 = vmatprep.subr.mxu0 0.0
    %3618 = vmatpush1.msra.mxu0 0.0
    %3619 = vmatprep.subr.mxu0 0.0
    %3620 = vmatpush1.msra.mxu0 0.0
    %3621 = vmatprep.subr.mxu0 0.0
    %3622 = vmatpush1.msra.mxu0 0.0
    %3623 = vmatprep.subr.mxu0 0.0
    %3624 = vmatpush1.msra.mxu0 0.0
    %3625 = vmatprep.subr.mxu0 0.0
    %3626 = vmatpush1.msra.mxu0 0.0
    %3627 = vmatprep.subr.mxu0 0.0
    %3628 = vmatpush1.msra.mxu0 0.0
    %3629 = vmatprep.subr.mxu0 0.0
    %3630 = vmatpush1.msra.mxu0 0.0
    %3631 = vmatprep.subr.mxu0 0.0
    %3632 = vmatpush1.msra.mxu0 0.0
    %3633 = vmatprep.subr.mxu0 0.0
    %3634 = vmatpush1.msra.mxu0 0.0
    %3635 = vmatprep.subr.mxu0 0.0
    %v3636 = vand.u32 %v654, 4294901760
    %v3637 = vsub.f32 %v654, %v3636
    %v3638 = vand.u32 %v3637, 4294901760
    %3639 = vmatpush1.msra.mxu0 %v3638
    %3640 = vmatprep.subr.mxu0 0.0
    %v3641 = vand.u32 %v653, 4294901760
    %v3642 = vsub.f32 %v653, %v3641
    %v3643 = vand.u32 %v3642, 4294901760
    %3644 = vmatpush1.msra.mxu0 %v3643
    %3645 = vmatprep.subr.mxu0 0.0
    %v3646 = vand.u32 %v652, 4294901760
    %v3647 = vsub.f32 %v652, %v3646
    %v3648 = vand.u32 %v3647, 4294901760
    %3649 = vmatpush1.msra.mxu0 %v3648
    %3650 = vmatprep.subr.mxu0 0.0
    %v3651 = vand.u32 %v651, 4294901760
    %v3652 = vsub.f32 %v651, %v3651
    %v3653 = vand.u32 %v3652, 4294901760
    %3654 = vmatpush1.msra.mxu0 %v3653
    %3655 = vmatprep.subr.mxu0 0.0
    %3656 = vmatpush2.msra.mxu0 0.0
    %3657 = vmatprep.subr.mxu0 0.0
    %3658 = vmatpush2.msra.mxu0 0.0
    %3659 = vmatprep.subr.mxu0 0.0
    %3660 = vmatpush2.msra.mxu0 0.0
    %3661 = vmatprep.subr.mxu0 0.0
    %3662 = vmatpush2.msra.mxu0 0.0
    %3663 = vmatprep.subr.mxu0 0.0
    %3664 = vmatpush2.msra.mxu0 0.0
    %3665 = vmatprep.subr.mxu0 0.0
    %3666 = vmatpush2.msra.mxu0 0.0
    %3667 = vmatprep.subr.mxu0 0.0
    %3668 = vmatpush2.msra.mxu0 0.0
    %3669 = vmatprep.subr.mxu0 0.0
    %3670 = vmatpush2.msra.mxu0 0.0
    %3671 = vmatprep.subr.mxu0 0.0
    %3672 = vmatpush2.msra.mxu0 0.0
    %3673 = vmatprep.subr.mxu0 0.0
    %3674 = vmatpush2.msra.mxu0 0.0
    %3675 = vmatprep.subr.mxu0 0.0
    %3676 = vmatpush2.msra.mxu0 0.0
    %3677 = vmatprep.subr.mxu0 0.0
    %3678 = vmatpush2.msra.mxu0 0.0
    %3679 = vmatprep.subr.mxu0 0.0
    %3680 = vmatpush2.msra.mxu0 0.0
    %3681 = vmatprep.subr.mxu0 0.0
    %3682 = vmatpush2.msra.mxu0 0.0
    %3683 = vmatprep.subr.mxu0 0.0
    %3684 = vmatpush2.msra.mxu0 0.0
    %3685 = vmatprep.subr.mxu0 0.0
    %3686 = vmatpush2.msra.mxu0 0.0
    %3687 = vmatprep.mubr.f32.mxu0 0.0
    %v3688 = vand.u32 %v3282, 4294901760
    %3689 = vmatmul.mubr.f32.gmra.mxu0 %v3688
    %v3690 = vpop.f32.mrf.mxu0
    %v3691 = vadd.f32 %v3608, %v3690
    %v3692 = vpop.f32.mrf.mxu0
    %3693 = vdwg.mxu0
    %3694 = vmatprep.subr.mxu0 0.0
    %3695 = vmatpush1.msra.mxu0 0.0
    %3696 = vmatprep.subr.mxu0 0.0
    %3697 = vmatpush1.msra.mxu0 0.0
    %3698 = vmatprep.subr.mxu0 0.0
    %3699 = vmatpush1.msra.mxu0 0.0
    %3700 = vmatprep.subr.mxu0 0.0
    %3701 = vmatpush1.msra.mxu0 0.0
    %3702 = vmatprep.subr.mxu0 0.0
    %3703 = vmatpush1.msra.mxu0 0.0
    %3704 = vmatprep.subr.mxu0 0.0
    %3705 = vmatpush1.msra.mxu0 0.0
    %3706 = vmatprep.subr.mxu0 0.0
    %3707 = vmatpush1.msra.mxu0 0.0
    %3708 = vmatprep.subr.mxu0 0.0
    %3709 = vmatpush1.msra.mxu0 0.0
    %3710 = vmatprep.subr.mxu0 0.0
    %3711 = vmatpush1.msra.mxu0 0.0
    %3712 = vmatprep.subr.mxu0 0.0
    %3713 = vmatpush1.msra.mxu0 0.0
    %3714 = vmatprep.subr.mxu0 0.0
    %3715 = vmatpush1.msra.mxu0 0.0
    %3716 = vmatprep.subr.mxu0 0.0
    %3717 = vmatpush1.msra.mxu0 0.0
    %3718 = vmatprep.subr.mxu0 0.0
    %v3719 = vand.u32 %v654, 4294901760
    %3720 = vmatpush1.msra.mxu0 %v3719
    %3721 = vmatprep.subr.mxu0 0.0
    %v3722 = vand.u32 %v653, 4294901760
    %3723 = vmatpush1.msra.mxu0 %v3722
    %3724 = vmatprep.subr.mxu0 0.0
    %v3725 = vand.u32 %v652, 4294901760
    %3726 = vmatpush1.msra.mxu0 %v3725
    %3727 = vmatprep.subr.mxu0 0.0
    %v3728 = vand.u32 %v651, 4294901760
    %3729 = vmatpush1.msra.mxu0 %v3728
    %3730 = vmatprep.subr.mxu0 0.0
    %3731 = vmatpush2.msra.mxu0 0.0
    %3732 = vmatprep.subr.mxu0 0.0
    %3733 = vmatpush2.msra.mxu0 0.0
    %3734 = vmatprep.subr.mxu0 0.0
    %3735 = vmatpush2.msra.mxu0 0.0
    %3736 = vmatprep.subr.mxu0 0.0
    %3737 = vmatpush2.msra.mxu0 0.0
    %3738 = vmatprep.subr.mxu0 0.0
    %3739 = vmatpush2.msra.mxu0 0.0
    %3740 = vmatprep.subr.mxu0 0.0
    %3741 = vmatpush2.msra.mxu0 0.0
    %3742 = vmatprep.subr.mxu0 0.0
    %3743 = vmatpush2.msra.mxu0 0.0
    %3744 = vmatprep.subr.mxu0 0.0
    %3745 = vmatpush2.msra.mxu0 0.0
    %3746 = vmatprep.subr.mxu0 0.0
    %3747 = vmatpush2.msra.mxu0 0.0
    %3748 = vmatprep.subr.mxu0 0.0
    %3749 = vmatpush2.msra.mxu0 0.0
    %3750 = vmatprep.subr.mxu0 0.0
    %3751 = vmatpush2.msra.mxu0 0.0
    %3752 = vmatprep.subr.mxu0 0.0
    %3753 = vmatpush2.msra.mxu0 0.0
    %3754 = vmatprep.subr.mxu0 0.0
    %3755 = vmatpush2.msra.mxu0 0.0
    %3756 = vmatprep.subr.mxu0 0.0
    %3757 = vmatpush2.msra.mxu0 0.0
    %3758 = vmatprep.subr.mxu0 0.0
    %3759 = vmatpush2.msra.mxu0 0.0
    %3760 = vmatprep.subr.mxu0 0.0
    %3761 = vmatpush2.msra.mxu0 0.0
    %3762 = vmatprep.mubr.f32.mxu0 0.0
    %v3763 = vand.u32 %v3282, 4294901760
    %3764 = vmatmul.mubr.f32.gmra.mxu0 %v3763
    %v3765 = vpop.f32.mrf.mxu0
    %v3766 = vadd.f32 %v3691, %v3765
    %v3767 = vpop.f32.mrf.mxu0
    %3768 = vdwg.mxu0
    %v3770 = vrot.slane %v3766, 6
    %v3772 = vadd.f32 %v3281, %v3770
    %v3773 = vsub.f32 0.0, %v3772
    %v3774 = vmul.f32 %v3773, 1.442695
    %v3775 = vpow.pop %v3774
    %v3776 = vadd.f32 %v3775, 1.0
    %v3777 = vrcp.pop %v3776
    %v3778 = vmul.f32 1.0, %v3777
    %v3779 = vtanh.pop %v3772
    %v3781 = vrot.slane %v3269, 6
    %v3783 = vmul.f32 %v3778, %v3781
    %3785 = vrot.lane.b32.xlu0 %v3779, 64
    %v3786 = vpop.permute.xlu0 %3785
    %v3788 = vmul.f32 %v3778, %v3786
    %3790 = vrot.lane.b32.xlu0 %v3788, 32
    %v3791 = vpop.permute.xlu0 %3790
    %v3793 = vadd.f32 %v3783, %v3791
    %v3794 = vtanh.pop %v3793
    %3796 = vrot.lane.b32.xlu0 %v3794, 64
    %v3797 = vpop.permute.xlu0 %3796
    %v3799 = vmul.f32 %v3778, %v3797
    %3801 = vrot.lane.b32.xlu0 %v3799, 32
    %v3802 = vpop.permute.xlu0 %3801
    %3804 = vst.msk [vmem:[#allocation3 + $0x8] sm:$0xc] %vm1699, %v3802
    %v3805 = vld [vmem:[#allocation2 + $0x10] sm:$0x30]
    %v3806 = vrot.slane %v3799, 2
    %3807 = vrot.lane.b32.xlu0 %v3806, 32
    %v3808 = vpop.permute.xlu0 %3807
    %v3809 = vsel %vm656, %v3808, 0
    %3811 = vmatprep.subr.mxu0 0.0
    %3812 = vmatpush1.msra.mxu0 0.0
    %3813 = vmatprep.subr.mxu0 0.0
    %3814 = vmatpush1.msra.mxu0 0.0
    %3815 = vmatprep.subr.mxu0 0.0
    %3816 = vmatpush1.msra.mxu0 0.0
    %3817 = vmatprep.subr.mxu0 0.0
    %3818 = vmatpush1.msra.mxu0 0.0
    %3819 = vmatprep.subr.mxu0 0.0
    %3820 = vmatpush1.msra.mxu0 0.0
    %3821 = vmatprep.subr.mxu0 0.0
    %3822 = vmatpush1.msra.mxu0 0.0
    %3823 = vmatprep.subr.mxu0 0.0
    %3824 = vmatpush1.msra.mxu0 0.0
    %3825 = vmatprep.subr.mxu0 0.0
    %3826 = vmatpush1.msra.mxu0 0.0
    %3827 = vmatprep.subr.mxu0 0.0
    %3828 = vmatpush1.msra.mxu0 0.0
    %3829 = vmatprep.subr.mxu0 0.0
    %3830 = vmatpush1.msra.mxu0 0.0
    %3831 = vmatprep.subr.mxu0 0.0
    %3832 = vmatpush1.msra.mxu0 0.0
    %3833 = vmatprep.subr.mxu0 0.0
    %3834 = vmatpush1.msra.mxu0 0.0
    %3835 = vmatprep.subr.mxu0 0.0
    %v3836 = vand.u32 %v654, 4294901760
    %3837 = vmatpush1.msra.mxu0 %v3836
    %3838 = vmatprep.subr.mxu0 0.0
    %v3839 = vand.u32 %v653, 4294901760
    %3840 = vmatpush1.msra.mxu0 %v3839
    %3841 = vmatprep.subr.mxu0 0.0
    %v3842 = vand.u32 %v652, 4294901760
    %3843 = vmatpush1.msra.mxu0 %v3842
    %3844 = vmatprep.subr.mxu0 0.0
    %v3845 = vand.u32 %v651, 4294901760
    %3846 = vmatpush1.msra.mxu0 %v3845
    %3847 = vmatprep.subr.mxu0 0.0
    %3848 = vmatpush2.msra.mxu0 0.0
    %3849 = vmatprep.subr.mxu0 0.0
    %3850 = vmatpush2.msra.mxu0 0.0
    %3851 = vmatprep.subr.mxu0 0.0
    %3852 = vmatpush2.msra.mxu0 0.0
    %3853 = vmatprep.subr.mxu0 0.0
    %3854 = vmatpush2.msra.mxu0 0.0
    %3855 = vmatprep.subr.mxu0 0.0
    %3856 = vmatpush2.msra.mxu0 0.0
    %3857 = vmatprep.subr.mxu0 0.0
    %3858 = vmatpush2.msra.mxu0 0.0
    %3859 = vmatprep.subr.mxu0 0.0
    %3860 = vmatpush2.msra.mxu0 0.0
    %3861 = vmatprep.subr.mxu0 0.0
    %3862 = vmatpush2.msra.mxu0 0.0
    %3863 = vmatprep.subr.mxu0 0.0
    %3864 = vmatpush2.msra.mxu0 0.0
    %3865 = vmatprep.subr.mxu0 0.0
    %3866 = vmatpush2.msra.mxu0 0.0
    %3867 = vmatprep.subr.mxu0 0.0
    %3868 = vmatpush2.msra.mxu0 0.0
    %3869 = vmatprep.subr.mxu0 0.0
    %3870 = vmatpush2.msra.mxu0 0.0
    %3871 = vmatprep.subr.mxu0 0.0
    %3872 = vmatpush2.msra.mxu0 0.0
    %3873 = vmatprep.subr.mxu0 0.0
    %3874 = vmatpush2.msra.mxu0 0.0
    %3875 = vmatprep.subr.mxu0 0.0
    %3876 = vmatpush2.msra.mxu0 0.0
    %3877 = vmatprep.subr.mxu0 0.0
    %3878 = vmatpush2.msra.mxu0 0.0
    %3879 = vmatprep.mubr.f32.mxu0 0.0
    %v3880 = vand.u32 %v3809, 4294901760
    %v3881 = vsub.f32 %v3809, %v3880
    %v3882 = vand.u32 %v3881, 4294901760
    %v3883 = vsub.f32 %v3881, %v3882
    %v3884 = vand.u32 %v3883, 4294901760
    %3885 = vmatmul.mubr.f32.gmra.mxu0 %v3884
    %v3886 = vpop.f32.mrf.mxu0
    %v3887 = vadd.f32 0.0, %v3886
    %v3888 = vpop.f32.mrf.mxu0
    %3889 = vdwg.mxu0
    %3890 = vmatprep.subr.mxu0 0.0
    %3891 = vmatpush1.msra.mxu0 0.0
    %3892 = vmatprep.subr.mxu0 0.0
    %3893 = vmatpush1.msra.mxu0 0.0
    %3894 = vmatprep.subr.mxu0 0.0
    %3895 = vmatpush1.msra.mxu0 0.0
    %3896 = vmatprep.subr.mxu0 0.0
    %3897 = vmatpush1.msra.mxu0 0.0
    %3898 = vmatprep.subr.mxu0 0.0
    %3899 = vmatpush1.msra.mxu0 0.0
    %3900 = vmatprep.subr.mxu0 0.0
    %3901 = vmatpush1.msra.mxu0 0.0
    %3902 = vmatprep.subr.mxu0 0.0
    %3903 = vmatpush1.msra.mxu0 0.0
    %3904 = vmatprep.subr.mxu0 0.0
    %3905 = vmatpush1.msra.mxu0 0.0
    %3906 = vmatprep.subr.mxu0 0.0
    %3907 = vmatpush1.msra.mxu0 0.0
    %3908 = vmatprep.subr.mxu0 0.0
    %3909 = vmatpush1.msra.mxu0 0.0
    %3910 = vmatprep.subr.mxu0 0.0
    %3911 = vmatpush1.msra.mxu0 0.0
    %3912 = vmatprep.subr.mxu0 0.0
    %3913 = vmatpush1.msra.mxu0 0.0
    %3914 = vmatprep.subr.mxu0 0.0
    %v3915 = vand.u32 %v654, 4294901760
    %v3916 = vsub.f32 %v654, %v3915
    %v3917 = vand.u32 %v3916, 4294901760
    %v3918 = vsub.f32 %v3916, %v3917
    %v3919 = vand.u32 %v3918, 4294901760
    %3920 = vmatpush1.msra.mxu0 %v3919
    %3921 = vmatprep.subr.mxu0 0.0
    %v3922 = vand.u32 %v653, 4294901760
    %v3923 = vsub.f32 %v653, %v3922
    %v3924 = vand.u32 %v3923, 4294901760
    %v3925 = vsub.f32 %v3923, %v3924
    %v3926 = vand.u32 %v3925, 4294901760
    %3927 = vmatpush1.msra.mxu0 %v3926
    %3928 = vmatprep.subr.mxu0 0.0
    %v3929 = vand.u32 %v652, 4294901760
    %v3930 = vsub.f32 %v652, %v3929
    %v3931 = vand.u32 %v3930, 4294901760
    %v3932 = vsub.f32 %v3930, %v3931
    %v3933 = vand.u32 %v3932, 4294901760
    %3934 = vmatpush1.msra.mxu0 %v3933
    %3935 = vmatprep.subr.mxu0 0.0
    %v3936 = vand.u32 %v651, 4294901760
    %v3937 = vsub.f32 %v651, %v3936
    %v3938 = vand.u32 %v3937, 4294901760
    %v3939 = vsub.f32 %v3937, %v3938
    %v3940 = vand.u32 %v3939, 4294901760
    %3941 = vmatpush1.msra.mxu0 %v3940
    %3942 = vmatprep.subr.mxu0 0.0
    %3943 = vmatpush2.msra.mxu0 0.0
    %3944 = vmatprep.subr.mxu0 0.0
    %3945 = vmatpush2.msra.mxu0 0.0
    %3946 = vmatprep.subr.mxu0 0.0
    %3947 = vmatpush2.msra.mxu0 0.0
    %3948 = vmatprep.subr.mxu0 0.0
    %3949 = vmatpush2.msra.mxu0 0.0
    %3950 = vmatprep.subr.mxu0 0.0
    %3951 = vmatpush2.msra.mxu0 0.0
    %3952 = vmatprep.subr.mxu0 0.0
    %3953 = vmatpush2.msra.mxu0 0.0
    %3954 = vmatprep.subr.mxu0 0.0
    %3955 = vmatpush2.msra.mxu0 0.0
    %3956 = vmatprep.subr.mxu0 0.0
    %3957 = vmatpush2.msra.mxu0 0.0
    %3958 = vmatprep.subr.mxu0 0.0
    %3959 = vmatpush2.msra.mxu0 0.0
    %3960 = vmatprep.subr.mxu0 0.0
    %3961 = vmatpush2.msra.mxu0 0.0
    %3962 = vmatprep.subr.mxu0 0.0
    %3963 = vmatpush2.msra.mxu0 0.0
    %3964 = vmatprep.subr.mxu0 0.0
    %3965 = vmatpush2.msra.mxu0 0.0
    %3966 = vmatprep.subr.mxu0 0.0
    %3967 = vmatpush2.msra.mxu0 0.0
    %3968 = vmatprep.subr.mxu0 0.0
    %3969 = vmatpush2.msra.mxu0 0.0
    %3970 = vmatprep.subr.mxu0 0.0
    %3971 = vmatpush2.msra.mxu0 0.0
    %3972 = vmatprep.subr.mxu0 0.0
    %3973 = vmatpush2.msra.mxu0 0.0
    %3974 = vmatprep.mubr.f32.mxu0 0.0
    %v3975 = vand.u32 %v3809, 4294901760
    %3976 = vmatmul.mubr.f32.gmra.mxu0 %v3975
    %v3977 = vpop.f32.mrf.mxu0
    %v3978 = vadd.f32 %v3887, %v3977
    %v3979 = vpop.f32.mrf.mxu0
    %3980 = vdwg.mxu0
    %3981 = vmatprep.subr.mxu0 0.0
    %3982 = vmatpush1.msra.mxu0 0.0
    %3983 = vmatprep.subr.mxu0 0.0
    %3984 = vmatpush1.msra.mxu0 0.0
    %3985 = vmatprep.subr.mxu0 0.0
    %3986 = vmatpush1.msra.mxu0 0.0
    %3987 = vmatprep.subr.mxu0 0.0
    %3988 = vmatpush1.msra.mxu0 0.0
    %3989 = vmatprep.subr.mxu0 0.0
    %3990 = vmatpush1.msra.mxu0 0.0
    %3991 = vmatprep.subr.mxu0 0.0
    %3992 = vmatpush1.msra.mxu0 0.0
    %3993 = vmatprep.subr.mxu0 0.0
    %3994 = vmatpush1.msra.mxu0 0.0
    %3995 = vmatprep.subr.mxu0 0.0
    %3996 = vmatpush1.msra.mxu0 0.0
    %3997 = vmatprep.subr.mxu0 0.0
    %3998 = vmatpush1.msra.mxu0 0.0
    %3999 = vmatprep.subr.mxu0 0.0
    %4000 = vmatpush1.msra.mxu0 0.0
    %4001 = vmatprep.subr.mxu0 0.0
    %4002 = vmatpush1.msra.mxu0 0.0
    %4003 = vmatprep.subr.mxu0 0.0
    %4004 = vmatpush1.msra.mxu0 0.0
    %4005 = vmatprep.subr.mxu0 0.0
    %v4006 = vand.u32 %v654, 4294901760
    %v4007 = vsub.f32 %v654, %v4006
    %4008 = vmatpush1.msra.mxu0 %v4007
    %4009 = vmatprep.subr.mxu0 0.0
    %v4010 = vand.u32 %v653, 4294901760
    %v4011 = vsub.f32 %v653, %v4010
    %4012 = vmatpush1.msra.mxu0 %v4011
    %4013 = vmatprep.subr.mxu0 0.0
    %v4014 = vand.u32 %v652, 4294901760
    %v4015 = vsub.f32 %v652, %v4014
    %4016 = vmatpush1.msra.mxu0 %v4015
    %4017 = vmatprep.subr.mxu0 0.0
    %v4018 = vand.u32 %v651, 4294901760
    %v4019 = vsub.f32 %v651, %v4018
    %4020 = vmatpush1.msra.mxu0 %v4019
    %4021 = vmatprep.subr.mxu0 0.0
    %4022 = vmatpush2.msra.mxu0 0.0
    %4023 = vmatprep.subr.mxu0 0.0
    %4024 = vmatpush2.msra.mxu0 0.0
    %4025 = vmatprep.subr.mxu0 0.0
    %4026 = vmatpush2.msra.mxu0 0.0
    %4027 = vmatprep.subr.mxu0 0.0
    %4028 = vmatpush2.msra.mxu0 0.0
    %4029 = vmatprep.subr.mxu0 0.0
    %4030 = vmatpush2.msra.mxu0 0.0
    %4031 = vmatprep.subr.mxu0 0.0
    %4032 = vmatpush2.msra.mxu0 0.0
    %4033 = vmatprep.subr.mxu0 0.0
    %4034 = vmatpush2.msra.mxu0 0.0
    %4035 = vmatprep.subr.mxu0 0.0
    %4036 = vmatpush2.msra.mxu0 0.0
    %4037 = vmatprep.subr.mxu0 0.0
    %4038 = vmatpush2.msra.mxu0 0.0
    %4039 = vmatprep.subr.mxu0 0.0
    %4040 = vmatpush2.msra.mxu0 0.0
    %4041 = vmatprep.subr.mxu0 0.0
    %4042 = vmatpush2.msra.mxu0 0.0
    %4043 = vmatprep.subr.mxu0 0.0
    %4044 = vmatpush2.msra.mxu0 0.0
    %4045 = vmatprep.subr.mxu0 0.0
    %4046 = vmatpush2.msra.mxu0 0.0
    %4047 = vmatprep.subr.mxu0 0.0
    %4048 = vmatpush2.msra.mxu0 0.0
    %4049 = vmatprep.subr.mxu0 0.0
    %4050 = vmatpush2.msra.mxu0 0.0
    %4051 = vmatprep.subr.mxu0 0.0
    %4052 = vmatpush2.msra.mxu0 0.0
    %4053 = vmatprep.mubr.f32.mxu0 0.0
    %v4054 = vand.u32 %v3809, 4294901760
    %v4055 = vsub.f32 %v3809, %v4054
    %4056 = vmatmul.mubr.f32.gmra.mxu0 %v4055
    %v4057 = vpop.f32.mrf.mxu0
    %v4058 = vadd.f32 %v3978, %v4057
    %v4059 = vpop.f32.mrf.mxu0
    %4060 = vdwg.mxu0
    %4061 = vmatprep.subr.mxu0 0.0
    %4062 = vmatpush1.msra.mxu0 0.0
    %4063 = vmatprep.subr.mxu0 0.0
    %4064 = vmatpush1.msra.mxu0 0.0
    %4065 = vmatprep.subr.mxu0 0.0
    %4066 = vmatpush1.msra.mxu0 0.0
    %4067 = vmatprep.subr.mxu0 0.0
    %4068 = vmatpush1.msra.mxu0 0.0
    %4069 = vmatprep.subr.mxu0 0.0
    %4070 = vmatpush1.msra.mxu0 0.0
    %4071 = vmatprep.subr.mxu0 0.0
    %4072 = vmatpush1.msra.mxu0 0.0
    %4073 = vmatprep.subr.mxu0 0.0
    %4074 = vmatpush1.msra.mxu0 0.0
    %4075 = vmatprep.subr.mxu0 0.0
    %4076 = vmatpush1.msra.mxu0 0.0
    %4077 = vmatprep.subr.mxu0 0.0
    %4078 = vmatpush1.msra.mxu0 0.0
    %4079 = vmatprep.subr.mxu0 0.0
    %4080 = vmatpush1.msra.mxu0 0.0
    %4081 = vmatprep.subr.mxu0 0.0
    %4082 = vmatpush1.msra.mxu0 0.0
    %4083 = vmatprep.subr.mxu0 0.0
    %4084 = vmatpush1.msra.mxu0 0.0
    %4085 = vmatprep.subr.mxu0 0.0
    %v4086 = vand.u32 %v654, 4294901760
    %4087 = vmatpush1.msra.mxu0 %v4086
    %4088 = vmatprep.subr.mxu0 0.0
    %v4089 = vand.u32 %v653, 4294901760
    %4090 = vmatpush1.msra.mxu0 %v4089
    %4091 = vmatprep.subr.mxu0 0.0
    %v4092 = vand.u32 %v652, 4294901760
    %4093 = vmatpush1.msra.mxu0 %v4092
    %4094 = vmatprep.subr.mxu0 0.0
    %v4095 = vand.u32 %v651, 4294901760
    %4096 = vmatpush1.msra.mxu0 %v4095
    %4097 = vmatprep.subr.mxu0 0.0
    %4098 = vmatpush2.msra.mxu0 0.0
    %4099 = vmatprep.subr.mxu0 0.0
    %4100 = vmatpush2.msra.mxu0 0.0
    %4101 = vmatprep.subr.mxu0 0.0
    %4102 = vmatpush2.msra.mxu0 0.0
    %4103 = vmatprep.subr.mxu0 0.0
    %4104 = vmatpush2.msra.mxu0 0.0
    %4105 = vmatprep.subr.mxu0 0.0
    %4106 = vmatpush2.msra.mxu0 0.0
    %4107 = vmatprep.subr.mxu0 0.0
    %4108 = vmatpush2.msra.mxu0 0.0
    %4109 = vmatprep.subr.mxu0 0.0
    %4110 = vmatpush2.msra.mxu0 0.0
    %4111 = vmatprep.subr.mxu0 0.0
    %4112 = vmatpush2.msra.mxu0 0.0
    %4113 = vmatprep.subr.mxu0 0.0
    %4114 = vmatpush2.msra.mxu0 0.0
    %4115 = vmatprep.subr.mxu0 0.0
    %4116 = vmatpush2.msra.mxu0 0.0
    %4117 = vmatprep.subr.mxu0 0.0
    %4118 = vmatpush2.msra.mxu0 0.0
    %4119 = vmatprep.subr.mxu0 0.0
    %4120 = vmatpush2.msra.mxu0 0.0
    %4121 = vmatprep.subr.mxu0 0.0
    %4122 = vmatpush2.msra.mxu0 0.0
    %4123 = vmatprep.subr.mxu0 0.0
    %4124 = vmatpush2.msra.mxu0 0.0
    %4125 = vmatprep.subr.mxu0 0.0
    %4126 = vmatpush2.msra.mxu0 0.0
    %4127 = vmatprep.subr.mxu0 0.0
    %4128 = vmatpush2.msra.mxu0 0.0
    %4129 = vmatprep.mubr.f32.mxu0 0.0
    %v4130 = vand.u32 %v3809, 4294901760
    %v4131 = vsub.f32 %v3809, %v4130
    %v4132 = vand.u32 %v4131, 4294901760
    %4133 = vmatmul.mubr.f32.gmra.mxu0 %v4132
    %v4134 = vpop.f32.mrf.mxu0
    %v4135 = vadd.f32 %v4058, %v4134
    %v4136 = vpop.f32.mrf.mxu0
    %4137 = vdwg.mxu0
    %4138 = vmatprep.subr.mxu0 0.0
    %4139 = vmatpush1.msra.mxu0 0.0
    %4140 = vmatprep.subr.mxu0 0.0
    %4141 = vmatpush1.msra.mxu0 0.0
    %4142 = vmatprep.subr.mxu0 0.0
    %4143 = vmatpush1.msra.mxu0 0.0
    %4144 = vmatprep.subr.mxu0 0.0
    %4145 = vmatpush1.msra.mxu0 0.0
    %4146 = vmatprep.subr.mxu0 0.0
    %4147 = vmatpush1.msra.mxu0 0.0
    %4148 = vmatprep.subr.mxu0 0.0
    %4149 = vmatpush1.msra.mxu0 0.0
    %4150 = vmatprep.subr.mxu0 0.0
    %4151 = vmatpush1.msra.mxu0 0.0
    %4152 = vmatprep.subr.mxu0 0.0
    %4153 = vmatpush1.msra.mxu0 0.0
    %4154 = vmatprep.subr.mxu0 0.0
    %4155 = vmatpush1.msra.mxu0 0.0
    %4156 = vmatprep.subr.mxu0 0.0
    %4157 = vmatpush1.msra.mxu0 0.0
    %4158 = vmatprep.subr.mxu0 0.0
    %4159 = vmatpush1.msra.mxu0 0.0
    %4160 = vmatprep.subr.mxu0 0.0
    %4161 = vmatpush1.msra.mxu0 0.0
    %4162 = vmatprep.subr.mxu0 0.0
    %v4163 = vand.u32 %v654, 4294901760
    %v4164 = vsub.f32 %v654, %v4163
    %v4165 = vand.u32 %v4164, 4294901760
    %4166 = vmatpush1.msra.mxu0 %v4165
    %4167 = vmatprep.subr.mxu0 0.0
    %v4168 = vand.u32 %v653, 4294901760
    %v4169 = vsub.f32 %v653, %v4168
    %v4170 = vand.u32 %v4169, 4294901760
    %4171 = vmatpush1.msra.mxu0 %v4170
    %4172 = vmatprep.subr.mxu0 0.0
    %v4173 = vand.u32 %v652, 4294901760
    %v4174 = vsub.f32 %v652, %v4173
    %v4175 = vand.u32 %v4174, 4294901760
    %4176 = vmatpush1.msra.mxu0 %v4175
    %4177 = vmatprep.subr.mxu0 0.0
    %v4178 = vand.u32 %v651, 4294901760
    %v4179 = vsub.f32 %v651, %v4178
    %v4180 = vand.u32 %v4179, 4294901760
    %4181 = vmatpush1.msra.mxu0 %v4180
    %4182 = vmatprep.subr.mxu0 0.0
    %4183 = vmatpush2.msra.mxu0 0.0
    %4184 = vmatprep.subr.mxu0 0.0
    %4185 = vmatpush2.msra.mxu0 0.0
    %4186 = vmatprep.subr.mxu0 0.0
    %4187 = vmatpush2.msra.mxu0 0.0
    %4188 = vmatprep.subr.mxu0 0.0
    %4189 = vmatpush2.msra.mxu0 0.0
    %4190 = vmatprep.subr.mxu0 0.0
    %4191 = vmatpush2.msra.mxu0 0.0
    %4192 = vmatprep.subr.mxu0 0.0
    %4193 = vmatpush2.msra.mxu0 0.0
    %4194 = vmatprep.subr.mxu0 0.0
    %4195 = vmatpush2.msra.mxu0 0.0
    %4196 = vmatprep.subr.mxu0 0.0
    %4197 = vmatpush2.msra.mxu0 0.0
    %4198 = vmatprep.subr.mxu0 0.0
    %4199 = vmatpush2.msra.mxu0 0.0
    %4200 = vmatprep.subr.mxu0 0.0
    %4201 = vmatpush2.msra.mxu0 0.0
    %4202 = vmatprep.subr.mxu0 0.0
    %4203 = vmatpush2.msra.mxu0 0.0
    %4204 = vmatprep.subr.mxu0 0.0
    %4205 = vmatpush2.msra.mxu0 0.0
    %4206 = vmatprep.subr.mxu0 0.0
    %4207 = vmatpush2.msra.mxu0 0.0
    %4208 = vmatprep.subr.mxu0 0.0
    %4209 = vmatpush2.msra.mxu0 0.0
    %4210 = vmatprep.subr.mxu0 0.0
    %4211 = vmatpush2.msra.mxu0 0.0
    %4212 = vmatprep.subr.mxu0 0.0
    %4213 = vmatpush2.msra.mxu0 0.0
    %4214 = vmatprep.mubr.f32.mxu0 0.0
    %v4215 = vand.u32 %v3809, 4294901760
    %4216 = vmatmul.mubr.f32.gmra.mxu0 %v4215
    %v4217 = vpop.f32.mrf.mxu0
    %v4218 = vadd.f32 %v4135, %v4217
    %v4219 = vpop.f32.mrf.mxu0
    %4220 = vdwg.mxu0
    %4221 = vmatprep.subr.mxu0 0.0
    %4222 = vmatpush1.msra.mxu0 0.0
    %4223 = vmatprep.subr.mxu0 0.0
    %4224 = vmatpush1.msra.mxu0 0.0
    %4225 = vmatprep.subr.mxu0 0.0
    %4226 = vmatpush1.msra.mxu0 0.0
    %4227 = vmatprep.subr.mxu0 0.0
    %4228 = vmatpush1.msra.mxu0 0.0
    %4229 = vmatprep.subr.mxu0 0.0
    %4230 = vmatpush1.msra.mxu0 0.0
    %4231 = vmatprep.subr.mxu0 0.0
    %4232 = vmatpush1.msra.mxu0 0.0
    %4233 = vmatprep.subr.mxu0 0.0
    %4234 = vmatpush1.msra.mxu0 0.0
    %4235 = vmatprep.subr.mxu0 0.0
    %4236 = vmatpush1.msra.mxu0 0.0
    %4237 = vmatprep.subr.mxu0 0.0
    %4238 = vmatpush1.msra.mxu0 0.0
    %4239 = vmatprep.subr.mxu0 0.0
    %4240 = vmatpush1.msra.mxu0 0.0
    %4241 = vmatprep.subr.mxu0 0.0
    %4242 = vmatpush1.msra.mxu0 0.0
    %4243 = vmatprep.subr.mxu0 0.0
    %4244 = vmatpush1.msra.mxu0 0.0
    %4245 = vmatprep.subr.mxu0 0.0
    %v4246 = vand.u32 %v654, 4294901760
    %4247 = vmatpush1.msra.mxu0 %v4246
    %4248 = vmatprep.subr.mxu0 0.0
    %v4249 = vand.u32 %v653, 4294901760
    %4250 = vmatpush1.msra.mxu0 %v4249
    %4251 = vmatprep.subr.mxu0 0.0
    %v4252 = vand.u32 %v652, 4294901760
    %4253 = vmatpush1.msra.mxu0 %v4252
    %4254 = vmatprep.subr.mxu0 0.0
    %v4255 = vand.u32 %v651, 4294901760
    %4256 = vmatpush1.msra.mxu0 %v4255
    %4257 = vmatprep.subr.mxu0 0.0
    %4258 = vmatpush2.msra.mxu0 0.0
    %4259 = vmatprep.subr.mxu0 0.0
    %4260 = vmatpush2.msra.mxu0 0.0
    %4261 = vmatprep.subr.mxu0 0.0
    %4262 = vmatpush2.msra.mxu0 0.0
    %4263 = vmatprep.subr.mxu0 0.0
    %4264 = vmatpush2.msra.mxu0 0.0
    %4265 = vmatprep.subr.mxu0 0.0
    %4266 = vmatpush2.msra.mxu0 0.0
    %4267 = vmatprep.subr.mxu0 0.0
    %4268 = vmatpush2.msra.mxu0 0.0
    %4269 = vmatprep.subr.mxu0 0.0
    %4270 = vmatpush2.msra.mxu0 0.0
    %4271 = vmatprep.subr.mxu0 0.0
    %4272 = vmatpush2.msra.mxu0 0.0
    %4273 = vmatprep.subr.mxu0 0.0
    %4274 = vmatpush2.msra.mxu0 0.0
    %4275 = vmatprep.subr.mxu0 0.0
    %4276 = vmatpush2.msra.mxu0 0.0
    %4277 = vmatprep.subr.mxu0 0.0
    %4278 = vmatpush2.msra.mxu0 0.0
    %4279 = vmatprep.subr.mxu0 0.0
    %4280 = vmatpush2.msra.mxu0 0.0
    %4281 = vmatprep.subr.mxu0 0.0
    %4282 = vmatpush2.msra.mxu0 0.0
    %4283 = vmatprep.subr.mxu0 0.0
    %4284 = vmatpush2.msra.mxu0 0.0
    %4285 = vmatprep.subr.mxu0 0.0
    %4286 = vmatpush2.msra.mxu0 0.0
    %4287 = vmatprep.subr.mxu0 0.0
    %4288 = vmatpush2.msra.mxu0 0.0
    %4289 = vmatprep.mubr.f32.mxu0 0.0
    %v4290 = vand.u32 %v3809, 4294901760
    %4291 = vmatmul.mubr.f32.gmra.mxu0 %v4290
    %v4292 = vpop.f32.mrf.mxu0
    %v4293 = vadd.f32 %v4218, %v4292
    %v4294 = vpop.f32.mrf.mxu0
    %4295 = vdwg.mxu0
    %v4297 = vrot.slane %v4293, 4
    %v4299 = vadd.f32 %v3805, %v4297
    %v4300 = vsub.f32 0.0, %v4299
    %v4301 = vmul.f32 %v4300, 1.442695
    %v4302 = vpow.pop %v4301
    %v4303 = vadd.f32 %v4302, 1.0
    %v4304 = vrcp.pop %v4303
    %v4305 = vmul.f32 1.0, %v4304
    %v4306 = vtanh.pop %v4299
    %v4308 = vrot.slane %v3793, 6
    %v4310 = vmul.f32 %v4305, %v4308
    %4312 = vrot.lane.b32.xlu0 %v4306, 64
    %v4313 = vpop.permute.xlu0 %4312
    %v4315 = vmul.f32 %v4305, %v4313
    %4317 = vrot.lane.b32.xlu0 %v4315, 32
    %v4318 = vpop.permute.xlu0 %4317
    %v4320 = vadd.f32 %v4310, %v4318
    %v4321 = vtanh.pop %v4320
    %4323 = vrot.lane.b32.xlu0 %v4321, 64
    %v4324 = vpop.permute.xlu0 %4323
    %v4326 = vmul.f32 %v4305, %v4324
    %4328 = vrot.lane.b32.xlu0 %v4326, 32
    %v4329 = vpop.permute.xlu0 %4328
    %4331 = vst.msk [vmem:[#allocation3 + $0x8] sm:$0x30] %vm2227, %v4329
    %v4332 = vld [vmem:[#allocation2 + $0x10] sm:$0xc0]
    %v4333 = vrot.slane %v4326, 4
    %4334 = vrot.lane.b32.xlu0 %v4333, 32
    %v4335 = vpop.permute.xlu0 %4334
    %v4336 = vsel %vm656, %v4335, 0
    %4338 = vmatprep.subr.mxu0 0.0
    %4339 = vmatpush1.msra.mxu0 0.0
    %4340 = vmatprep.subr.mxu0 0.0
    %4341 = vmatpush1.msra.mxu0 0.0
    %4342 = vmatprep.subr.mxu0 0.0
    %4343 = vmatpush1.msra.mxu0 0.0
    %4344 = vmatprep.subr.mxu0 0.0
    %4345 = vmatpush1.msra.mxu0 0.0
    %4346 = vmatprep.subr.mxu0 0.0
    %4347 = vmatpush1.msra.mxu0 0.0
    %4348 = vmatprep.subr.mxu0 0.0
    %4349 = vmatpush1.msra.mxu0 0.0
    %4350 = vmatprep.subr.mxu0 0.0
    %4351 = vmatpush1.msra.mxu0 0.0
    %4352 = vmatprep.subr.mxu0 0.0
    %4353 = vmatpush1.msra.mxu0 0.0
    %4354 = vmatprep.subr.mxu0 0.0
    %4355 = vmatpush1.msra.mxu0 0.0
    %4356 = vmatprep.subr.mxu0 0.0
    %4357 = vmatpush1.msra.mxu0 0.0
    %4358 = vmatprep.subr.mxu0 0.0
    %4359 = vmatpush1.msra.mxu0 0.0
    %4360 = vmatprep.subr.mxu0 0.0
    %4361 = vmatpush1.msra.mxu0 0.0
    %4362 = vmatprep.subr.mxu0 0.0
    %v4363 = vand.u32 %v654, 4294901760
    %4364 = vmatpush1.msra.mxu0 %v4363
    %4365 = vmatprep.subr.mxu0 0.0
    %v4366 = vand.u32 %v653, 4294901760
    %4367 = vmatpush1.msra.mxu0 %v4366
    %4368 = vmatprep.subr.mxu0 0.0
    %v4369 = vand.u32 %v652, 4294901760
    %4370 = vmatpush1.msra.mxu0 %v4369
    %4371 = vmatprep.subr.mxu0 0.0
    %v4372 = vand.u32 %v651, 4294901760
    %4373 = vmatpush1.msra.mxu0 %v4372
    %4374 = vmatprep.subr.mxu0 0.0
    %4375 = vmatpush2.msra.mxu0 0.0
    %4376 = vmatprep.subr.mxu0 0.0
    %4377 = vmatpush2.msra.mxu0 0.0
    %4378 = vmatprep.subr.mxu0 0.0
    %4379 = vmatpush2.msra.mxu0 0.0
    %4380 = vmatprep.subr.mxu0 0.0
    %4381 = vmatpush2.msra.mxu0 0.0
    %4382 = vmatprep.subr.mxu0 0.0
    %4383 = vmatpush2.msra.mxu0 0.0
    %4384 = vmatprep.subr.mxu0 0.0
    %4385 = vmatpush2.msra.mxu0 0.0
    %4386 = vmatprep.subr.mxu0 0.0
    %4387 = vmatpush2.msra.mxu0 0.0
    %4388 = vmatprep.subr.mxu0 0.0
    %4389 = vmatpush2.msra.mxu0 0.0
    %4390 = vmatprep.subr.mxu0 0.0
    %4391 = vmatpush2.msra.mxu0 0.0
    %4392 = vmatprep.subr.mxu0 0.0
    %4393 = vmatpush2.msra.mxu0 0.0
    %4394 = vmatprep.subr.mxu0 0.0
    %4395 = vmatpush2.msra.mxu0 0.0
    %4396 = vmatprep.subr.mxu0 0.0
    %4397 = vmatpush2.msra.mxu0 0.0
    %4398 = vmatprep.subr.mxu0 0.0
    %4399 = vmatpush2.msra.mxu0 0.0
    %4400 = vmatprep.subr.mxu0 0.0
    %4401 = vmatpush2.msra.mxu0 0.0
    %4402 = vmatprep.subr.mxu0 0.0
    %4403 = vmatpush2.msra.mxu0 0.0
    %4404 = vmatprep.subr.mxu0 0.0
    %4405 = vmatpush2.msra.mxu0 0.0
    %4406 = vmatprep.mubr.f32.mxu0 0.0
    %v4407 = vand.u32 %v4336, 4294901760
    %v4408 = vsub.f32 %v4336, %v4407
    %v4409 = vand.u32 %v4408, 4294901760
    %v4410 = vsub.f32 %v4408, %v4409
    %v4411 = vand.u32 %v4410, 4294901760
    %4412 = vmatmul.mubr.f32.gmra.mxu0 %v4411
    %v4413 = vpop.f32.mrf.mxu0
    %v4414 = vadd.f32 0.0, %v4413
    %v4415 = vpop.f32.mrf.mxu0
    %4416 = vdwg.mxu0
    %4417 = vmatprep.subr.mxu0 0.0
    %4418 = vmatpush1.msra.mxu0 0.0
    %4419 = vmatprep.subr.mxu0 0.0
    %4420 = vmatpush1.msra.mxu0 0.0
    %4421 = vmatprep.subr.mxu0 0.0
    %4422 = vmatpush1.msra.mxu0 0.0
    %4423 = vmatprep.subr.mxu0 0.0
    %4424 = vmatpush1.msra.mxu0 0.0
    %4425 = vmatprep.subr.mxu0 0.0
    %4426 = vmatpush1.msra.mxu0 0.0
    %4427 = vmatprep.subr.mxu0 0.0
    %4428 = vmatpush1.msra.mxu0 0.0
    %4429 = vmatprep.subr.mxu0 0.0
    %4430 = vmatpush1.msra.mxu0 0.0
    %4431 = vmatprep.subr.mxu0 0.0
    %4432 = vmatpush1.msra.mxu0 0.0
    %4433 = vmatprep.subr.mxu0 0.0
    %4434 = vmatpush1.msra.mxu0 0.0
    %4435 = vmatprep.subr.mxu0 0.0
    %4436 = vmatpush1.msra.mxu0 0.0
    %4437 = vmatprep.subr.mxu0 0.0
    %4438 = vmatpush1.msra.mxu0 0.0
    %4439 = vmatprep.subr.mxu0 0.0
    %4440 = vmatpush1.msra.mxu0 0.0
    %4441 = vmatprep.subr.mxu0 0.0
    %v4442 = vand.u32 %v654, 4294901760
    %v4443 = vsub.f32 %v654, %v4442
    %v4444 = vand.u32 %v4443, 4294901760
    %v4445 = vsub.f32 %v4443, %v4444
    %v4446 = vand.u32 %v4445, 4294901760
    %4447 = vmatpush1.msra.mxu0 %v4446
    %4448 = vmatprep.subr.mxu0 0.0
    %v4449 = vand.u32 %v653, 4294901760
    %v4450 = vsub.f32 %v653, %v4449
    %v4451 = vand.u32 %v4450, 4294901760
    %v4452 = vsub.f32 %v4450, %v4451
    %v4453 = vand.u32 %v4452, 4294901760
    %4454 = vmatpush1.msra.mxu0 %v4453
    %4455 = vmatprep.subr.mxu0 0.0
    %v4456 = vand.u32 %v652, 4294901760
    %v4457 = vsub.f32 %v652, %v4456
    %v4458 = vand.u32 %v4457, 4294901760
    %v4459 = vsub.f32 %v4457, %v4458
    %v4460 = vand.u32 %v4459, 4294901760
    %4461 = vmatpush1.msra.mxu0 %v4460
    %4462 = vmatprep.subr.mxu0 0.0
    %v4463 = vand.u32 %v651, 4294901760
    %v4464 = vsub.f32 %v651, %v4463
    %v4465 = vand.u32 %v4464, 4294901760
    %v4466 = vsub.f32 %v4464, %v4465
    %v4467 = vand.u32 %v4466, 4294901760
    %4468 = vmatpush1.msra.mxu0 %v4467
    %4469 = vmatprep.subr.mxu0 0.0
    %4470 = vmatpush2.msra.mxu0 0.0
    %4471 = vmatprep.subr.mxu0 0.0
    %4472 = vmatpush2.msra.mxu0 0.0
    %4473 = vmatprep.subr.mxu0 0.0
    %4474 = vmatpush2.msra.mxu0 0.0
    %4475 = vmatprep.subr.mxu0 0.0
    %4476 = vmatpush2.msra.mxu0 0.0
    %4477 = vmatprep.subr.mxu0 0.0
    %4478 = vmatpush2.msra.mxu0 0.0
    %4479 = vmatprep.subr.mxu0 0.0
    %4480 = vmatpush2.msra.mxu0 0.0
    %4481 = vmatprep.subr.mxu0 0.0
    %4482 = vmatpush2.msra.mxu0 0.0
    %4483 = vmatprep.subr.mxu0 0.0
    %4484 = vmatpush2.msra.mxu0 0.0
    %4485 = vmatprep.subr.mxu0 0.0
    %4486 = vmatpush2.msra.mxu0 0.0
    %4487 = vmatprep.subr.mxu0 0.0
    %4488 = vmatpush2.msra.mxu0 0.0
    %4489 = vmatprep.subr.mxu0 0.0
    %4490 = vmatpush2.msra.mxu0 0.0
    %4491 = vmatprep.subr.mxu0 0.0
    %4492 = vmatpush2.msra.mxu0 0.0
    %4493 = vmatprep.subr.mxu0 0.0
    %4494 = vmatpush2.msra.mxu0 0.0
    %4495 = vmatprep.subr.mxu0 0.0
    %4496 = vmatpush2.msra.mxu0 0.0
    %4497 = vmatprep.subr.mxu0 0.0
    %4498 = vmatpush2.msra.mxu0 0.0
    %4499 = vmatprep.subr.mxu0 0.0
    %4500 = vmatpush2.msra.mxu0 0.0
    %4501 = vmatprep.mubr.f32.mxu0 0.0
    %v4502 = vand.u32 %v4336, 4294901760
    %4503 = vmatmul.mubr.f32.gmra.mxu0 %v4502
    %v4504 = vpop.f32.mrf.mxu0
    %v4505 = vadd.f32 %v4414, %v4504
    %v4506 = vpop.f32.mrf.mxu0
    %4507 = vdwg.mxu0
    %4508 = vmatprep.subr.mxu0 0.0
    %4509 = vmatpush1.msra.mxu0 0.0
    %4510 = vmatprep.subr.mxu0 0.0
    %4511 = vmatpush1.msra.mxu0 0.0
    %4512 = vmatprep.subr.mxu0 0.0
    %4513 = vmatpush1.msra.mxu0 0.0
    %4514 = vmatprep.subr.mxu0 0.0
    %4515 = vmatpush1.msra.mxu0 0.0
    %4516 = vmatprep.subr.mxu0 0.0
    %4517 = vmatpush1.msra.mxu0 0.0
    %4518 = vmatprep.subr.mxu0 0.0
    %4519 = vmatpush1.msra.mxu0 0.0
    %4520 = vmatprep.subr.mxu0 0.0
    %4521 = vmatpush1.msra.mxu0 0.0
    %4522 = vmatprep.subr.mxu0 0.0
    %4523 = vmatpush1.msra.mxu0 0.0
    %4524 = vmatprep.subr.mxu0 0.0
    %4525 = vmatpush1.msra.mxu0 0.0
    %4526 = vmatprep.subr.mxu0 0.0
    %4527 = vmatpush1.msra.mxu0 0.0
    %4528 = vmatprep.subr.mxu0 0.0
    %4529 = vmatpush1.msra.mxu0 0.0
    %4530 = vmatprep.subr.mxu0 0.0
    %4531 = vmatpush1.msra.mxu0 0.0
    %4532 = vmatprep.subr.mxu0 0.0
    %v4533 = vand.u32 %v654, 4294901760
    %v4534 = vsub.f32 %v654, %v4533
    %4535 = vmatpush1.msra.mxu0 %v4534
    %4536 = vmatprep.subr.mxu0 0.0
    %v4537 = vand.u32 %v653, 4294901760
    %v4538 = vsub.f32 %v653, %v4537
    %4539 = vmatpush1.msra.mxu0 %v4538
    %4540 = vmatprep.subr.mxu0 0.0
    %v4541 = vand.u32 %v652, 4294901760
    %v4542 = vsub.f32 %v652, %v4541
    %4543 = vmatpush1.msra.mxu0 %v4542
    %4544 = vmatprep.subr.mxu0 0.0
    %v4545 = vand.u32 %v651, 4294901760
    %v4546 = vsub.f32 %v651, %v4545
    %4547 = vmatpush1.msra.mxu0 %v4546
    %4548 = vmatprep.subr.mxu0 0.0
    %4549 = vmatpush2.msra.mxu0 0.0
    %4550 = vmatprep.subr.mxu0 0.0
    %4551 = vmatpush2.msra.mxu0 0.0
    %4552 = vmatprep.subr.mxu0 0.0
    %4553 = vmatpush2.msra.mxu0 0.0
    %4554 = vmatprep.subr.mxu0 0.0
    %4555 = vmatpush2.msra.mxu0 0.0
    %4556 = vmatprep.subr.mxu0 0.0
    %4557 = vmatpush2.msra.mxu0 0.0
    %4558 = vmatprep.subr.mxu0 0.0
    %4559 = vmatpush2.msra.mxu0 0.0
    %4560 = vmatprep.subr.mxu0 0.0
    %4561 = vmatpush2.msra.mxu0 0.0
    %4562 = vmatprep.subr.mxu0 0.0
    %4563 = vmatpush2.msra.mxu0 0.0
    %4564 = vmatprep.subr.mxu0 0.0
    %4565 = vmatpush2.msra.mxu0 0.0
    %4566 = vmatprep.subr.mxu0 0.0
    %4567 = vmatpush2.msra.mxu0 0.0
    %4568 = vmatprep.subr.mxu0 0.0
    %4569 = vmatpush2.msra.mxu0 0.0
    %4570 = vmatprep.subr.mxu0 0.0
    %4571 = vmatpush2.msra.mxu0 0.0
    %4572 = vmatprep.subr.mxu0 0.0
    %4573 = vmatpush2.msra.mxu0 0.0
    %4574 = vmatprep.subr.mxu0 0.0
    %4575 = vmatpush2.msra.mxu0 0.0
    %4576 = vmatprep.subr.mxu0 0.0
    %4577 = vmatpush2.msra.mxu0 0.0
    %4578 = vmatprep.subr.mxu0 0.0
    %4579 = vmatpush2.msra.mxu0 0.0
    %4580 = vmatprep.mubr.f32.mxu0 0.0
    %v4581 = vand.u32 %v4336, 4294901760
    %v4582 = vsub.f32 %v4336, %v4581
    %4583 = vmatmul.mubr.f32.gmra.mxu0 %v4582
    %v4584 = vpop.f32.mrf.mxu0
    %v4585 = vadd.f32 %v4505, %v4584
    %v4586 = vpop.f32.mrf.mxu0
    %4587 = vdwg.mxu0
    %4588 = vmatprep.subr.mxu0 0.0
    %4589 = vmatpush1.msra.mxu0 0.0
    %4590 = vmatprep.subr.mxu0 0.0
    %4591 = vmatpush1.msra.mxu0 0.0
    %4592 = vmatprep.subr.mxu0 0.0
    %4593 = vmatpush1.msra.mxu0 0.0
    %4594 = vmatprep.subr.mxu0 0.0
    %4595 = vmatpush1.msra.mxu0 0.0
    %4596 = vmatprep.subr.mxu0 0.0
    %4597 = vmatpush1.msra.mxu0 0.0
    %4598 = vmatprep.subr.mxu0 0.0
    %4599 = vmatpush1.msra.mxu0 0.0
    %4600 = vmatprep.subr.mxu0 0.0
    %4601 = vmatpush1.msra.mxu0 0.0
    %4602 = vmatprep.subr.mxu0 0.0
    %4603 = vmatpush1.msra.mxu0 0.0
    %4604 = vmatprep.subr.mxu0 0.0
    %4605 = vmatpush1.msra.mxu0 0.0
    %4606 = vmatprep.subr.mxu0 0.0
    %4607 = vmatpush1.msra.mxu0 0.0
    %4608 = vmatprep.subr.mxu0 0.0
    %4609 = vmatpush1.msra.mxu0 0.0
    %4610 = vmatprep.subr.mxu0 0.0
    %4611 = vmatpush1.msra.mxu0 0.0
    %4612 = vmatprep.subr.mxu0 0.0
    %v4613 = vand.u32 %v654, 4294901760
    %4614 = vmatpush1.msra.mxu0 %v4613
    %4615 = vmatprep.subr.mxu0 0.0
    %v4616 = vand.u32 %v653, 4294901760
    %4617 = vmatpush1.msra.mxu0 %v4616
    %4618 = vmatprep.subr.mxu0 0.0
    %v4619 = vand.u32 %v652, 4294901760
    %4620 = vmatpush1.msra.mxu0 %v4619
    %4621 = vmatprep.subr.mxu0 0.0
    %v4622 = vand.u32 %v651, 4294901760
    %4623 = vmatpush1.msra.mxu0 %v4622
    %4624 = vmatprep.subr.mxu0 0.0
    %4625 = vmatpush2.msra.mxu0 0.0
    %4626 = vmatprep.subr.mxu0 0.0
    %4627 = vmatpush2.msra.mxu0 0.0
    %4628 = vmatprep.subr.mxu0 0.0
    %4629 = vmatpush2.msra.mxu0 0.0
    %4630 = vmatprep.subr.mxu0 0.0
    %4631 = vmatpush2.msra.mxu0 0.0
    %4632 = vmatprep.subr.mxu0 0.0
    %4633 = vmatpush2.msra.mxu0 0.0
    %4634 = vmatprep.subr.mxu0 0.0
    %4635 = vmatpush2.msra.mxu0 0.0
    %4636 = vmatprep.subr.mxu0 0.0
    %4637 = vmatpush2.msra.mxu0 0.0
    %4638 = vmatprep.subr.mxu0 0.0
    %4639 = vmatpush2.msra.mxu0 0.0
    %4640 = vmatprep.subr.mxu0 0.0
    %4641 = vmatpush2.msra.mxu0 0.0
    %4642 = vmatprep.subr.mxu0 0.0
    %4643 = vmatpush2.msra.mxu0 0.0
    %4644 = vmatprep.subr.mxu0 0.0
    %4645 = vmatpush2.msra.mxu0 0.0
    %4646 = vmatprep.subr.mxu0 0.0
    %4647 = vmatpush2.msra.mxu0 0.0
    %4648 = vmatprep.subr.mxu0 0.0
    %4649 = vmatpush2.msra.mxu0 0.0
    %4650 = vmatprep.subr.mxu0 0.0
    %4651 = vmatpush2.msra.mxu0 0.0
    %4652 = vmatprep.subr.mxu0 0.0
    %4653 = vmatpush2.msra.mxu0 0.0
    %4654 = vmatprep.subr.mxu0 0.0
    %4655 = vmatpush2.msra.mxu0 0.0
    %4656 = vmatprep.mubr.f32.mxu0 0.0
    %v4657 = vand.u32 %v4336, 4294901760
    %v4658 = vsub.f32 %v4336, %v4657
    %v4659 = vand.u32 %v4658, 4294901760
    %4660 = vmatmul.mubr.f32.gmra.mxu0 %v4659
    %v4661 = vpop.f32.mrf.mxu0
    %v4662 = vadd.f32 %v4585, %v4661
    %v4663 = vpop.f32.mrf.mxu0
    %4664 = vdwg.mxu0
    %4665 = vmatprep.subr.mxu0 0.0
    %4666 = vmatpush1.msra.mxu0 0.0
    %4667 = vmatprep.subr.mxu0 0.0
    %4668 = vmatpush1.msra.mxu0 0.0
    %4669 = vmatprep.subr.mxu0 0.0
    %4670 = vmatpush1.msra.mxu0 0.0
    %4671 = vmatprep.subr.mxu0 0.0
    %4672 = vmatpush1.msra.mxu0 0.0
    %4673 = vmatprep.subr.mxu0 0.0
    %4674 = vmatpush1.msra.mxu0 0.0
    %4675 = vmatprep.subr.mxu0 0.0
    %4676 = vmatpush1.msra.mxu0 0.0
    %4677 = vmatprep.subr.mxu0 0.0
    %4678 = vmatpush1.msra.mxu0 0.0
    %4679 = vmatprep.subr.mxu0 0.0
    %4680 = vmatpush1.msra.mxu0 0.0
    %4681 = vmatprep.subr.mxu0 0.0
    %4682 = vmatpush1.msra.mxu0 0.0
    %4683 = vmatprep.subr.mxu0 0.0
    %4684 = vmatpush1.msra.mxu0 0.0
    %4685 = vmatprep.subr.mxu0 0.0
    %4686 = vmatpush1.msra.mxu0 0.0
    %4687 = vmatprep.subr.mxu0 0.0
    %4688 = vmatpush1.msra.mxu0 0.0
    %4689 = vmatprep.subr.mxu0 0.0
    %v4690 = vand.u32 %v654, 4294901760
    %v4691 = vsub.f32 %v654, %v4690
    %v4692 = vand.u32 %v4691, 4294901760
    %4693 = vmatpush1.msra.mxu0 %v4692
    %4694 = vmatprep.subr.mxu0 0.0
    %v4695 = vand.u32 %v653, 4294901760
    %v4696 = vsub.f32 %v653, %v4695
    %v4697 = vand.u32 %v4696, 4294901760
    %4698 = vmatpush1.msra.mxu0 %v4697
    %4699 = vmatprep.subr.mxu0 0.0
    %v4700 = vand.u32 %v652, 4294901760
    %v4701 = vsub.f32 %v652, %v4700
    %v4702 = vand.u32 %v4701, 4294901760
    %4703 = vmatpush1.msra.mxu0 %v4702
    %4704 = vmatprep.subr.mxu0 0.0
    %v4705 = vand.u32 %v651, 4294901760
    %v4706 = vsub.f32 %v651, %v4705
    %v4707 = vand.u32 %v4706, 4294901760
    %4708 = vmatpush1.msra.mxu0 %v4707
    %4709 = vmatprep.subr.mxu0 0.0
    %4710 = vmatpush2.msra.mxu0 0.0
    %4711 = vmatprep.subr.mxu0 0.0
    %4712 = vmatpush2.msra.mxu0 0.0
    %4713 = vmatprep.subr.mxu0 0.0
    %4714 = vmatpush2.msra.mxu0 0.0
    %4715 = vmatprep.subr.mxu0 0.0
    %4716 = vmatpush2.msra.mxu0 0.0
    %4717 = vmatprep.subr.mxu0 0.0
    %4718 = vmatpush2.msra.mxu0 0.0
    %4719 = vmatprep.subr.mxu0 0.0
    %4720 = vmatpush2.msra.mxu0 0.0
    %4721 = vmatprep.subr.mxu0 0.0
    %4722 = vmatpush2.msra.mxu0 0.0
    %4723 = vmatprep.subr.mxu0 0.0
    %4724 = vmatpush2.msra.mxu0 0.0
    %4725 = vmatprep.subr.mxu0 0.0
    %4726 = vmatpush2.msra.mxu0 0.0
    %4727 = vmatprep.subr.mxu0 0.0
    %4728 = vmatpush2.msra.mxu0 0.0
    %4729 = vmatprep.subr.mxu0 0.0
    %4730 = vmatpush2.msra.mxu0 0.0
    %4731 = vmatprep.subr.mxu0 0.0
    %4732 = vmatpush2.msra.mxu0 0.0
    %4733 = vmatprep.subr.mxu0 0.0
    %4734 = vmatpush2.msra.mxu0 0.0
    %4735 = vmatprep.subr.mxu0 0.0
    %4736 = vmatpush2.msra.mxu0 0.0
    %4737 = vmatprep.subr.mxu0 0.0
    %4738 = vmatpush2.msra.mxu0 0.0
    %4739 = vmatprep.subr.mxu0 0.0
    %4740 = vmatpush2.msra.mxu0 0.0
    %4741 = vmatprep.mubr.f32.mxu0 0.0
    %v4742 = vand.u32 %v4336, 4294901760
    %4743 = vmatmul.mubr.f32.gmra.mxu0 %v4742
    %v4744 = vpop.f32.mrf.mxu0
    %v4745 = vadd.f32 %v4662, %v4744
    %v4746 = vpop.f32.mrf.mxu0
    %4747 = vdwg.mxu0
    %4748 = vmatprep.subr.mxu0 0.0
    %4749 = vmatpush1.msra.mxu0 0.0
    %4750 = vmatprep.subr.mxu0 0.0
    %4751 = vmatpush1.msra.mxu0 0.0
    %4752 = vmatprep.subr.mxu0 0.0
    %4753 = vmatpush1.msra.mxu0 0.0
    %4754 = vmatprep.subr.mxu0 0.0
    %4755 = vmatpush1.msra.mxu0 0.0
    %4756 = vmatprep.subr.mxu0 0.0
    %4757 = vmatpush1.msra.mxu0 0.0
    %4758 = vmatprep.subr.mxu0 0.0
    %4759 = vmatpush1.msra.mxu0 0.0
    %4760 = vmatprep.subr.mxu0 0.0
    %4761 = vmatpush1.msra.mxu0 0.0
    %4762 = vmatprep.subr.mxu0 0.0
    %4763 = vmatpush1.msra.mxu0 0.0
    %4764 = vmatprep.subr.mxu0 0.0
    %4765 = vmatpush1.msra.mxu0 0.0
    %4766 = vmatprep.subr.mxu0 0.0
    %4767 = vmatpush1.msra.mxu0 0.0
    %4768 = vmatprep.subr.mxu0 0.0
    %4769 = vmatpush1.msra.mxu0 0.0
    %4770 = vmatprep.subr.mxu0 0.0
    %4771 = vmatpush1.msra.mxu0 0.0
    %4772 = vmatprep.subr.mxu0 0.0
    %v4773 = vand.u32 %v654, 4294901760
    %4774 = vmatpush1.msra.mxu0 %v4773
    %4775 = vmatprep.subr.mxu0 0.0
    %v4776 = vand.u32 %v653, 4294901760
    %4777 = vmatpush1.msra.mxu0 %v4776
    %4778 = vmatprep.subr.mxu0 0.0
    %v4779 = vand.u32 %v652, 4294901760
    %4780 = vmatpush1.msra.mxu0 %v4779
    %4781 = vmatprep.subr.mxu0 0.0
    %v4782 = vand.u32 %v651, 4294901760
    %4783 = vmatpush1.msra.mxu0 %v4782
    %4784 = vmatprep.subr.mxu0 0.0
    %4785 = vmatpush2.msra.mxu0 0.0
    %4786 = vmatprep.subr.mxu0 0.0
    %4787 = vmatpush2.msra.mxu0 0.0
    %4788 = vmatprep.subr.mxu0 0.0
    %4789 = vmatpush2.msra.mxu0 0.0
    %4790 = vmatprep.subr.mxu0 0.0
    %4791 = vmatpush2.msra.mxu0 0.0
    %4792 = vmatprep.subr.mxu0 0.0
    %4793 = vmatpush2.msra.mxu0 0.0
    %4794 = vmatprep.subr.mxu0 0.0
    %4795 = vmatpush2.msra.mxu0 0.0
    %4796 = vmatprep.subr.mxu0 0.0
    %4797 = vmatpush2.msra.mxu0 0.0
    %4798 = vmatprep.subr.mxu0 0.0
    %4799 = vmatpush2.msra.mxu0 0.0
    %4800 = vmatprep.subr.mxu0 0.0
    %4801 = vmatpush2.msra.mxu0 0.0
    %4802 = vmatprep.subr.mxu0 0.0
    %4803 = vmatpush2.msra.mxu0 0.0
    %4804 = vmatprep.subr.mxu0 0.0
    %4805 = vmatpush2.msra.mxu0 0.0
    %4806 = vmatprep.subr.mxu0 0.0
    %4807 = vmatpush2.msra.mxu0 0.0
    %4808 = vmatprep.subr.mxu0 0.0
    %4809 = vmatpush2.msra.mxu0 0.0
    %4810 = vmatprep.subr.mxu0 0.0
    %4811 = vmatpush2.msra.mxu0 0.0
    %4812 = vmatprep.subr.mxu0 0.0
    %4813 = vmatpush2.msra.mxu0 0.0
    %4814 = vmatprep.subr.mxu0 0.0
    %4815 = vmatpush2.msra.mxu0 0.0
    %4816 = vmatprep.mubr.f32.mxu0 0.0
    %v4817 = vand.u32 %v4336, 4294901760
    %4818 = vmatmul.mubr.f32.gmra.mxu0 %v4817
    %v4819 = vpop.f32.mrf.mxu0
    %v4820 = vadd.f32 %v4745, %v4819
    %v4821 = vpop.f32.mrf.mxu0
    %4822 = vdwg.mxu0
    %v4824 = vrot.slane %v4820, 2
    %v4826 = vadd.f32 %v4332, %v4824
    %v4827 = vsub.f32 0.0, %v4826
    %v4828 = vmul.f32 %v4827, 1.442695
    %v4829 = vpow.pop %v4828
    %v4830 = vadd.f32 %v4829, 1.0
    %v4831 = vrcp.pop %v4830
    %v4832 = vmul.f32 1.0, %v4831
    %v4833 = vtanh.pop %v4826
    %v4835 = vrot.slane %v4320, 6
    %v4837 = vmul.f32 %v4832, %v4835
    %4839 = vrot.lane.b32.xlu0 %v4833, 64
    %v4840 = vpop.permute.xlu0 %4839
    %v4842 = vmul.f32 %v4832, %v4840
    %4844 = vrot.lane.b32.xlu0 %v4842, 32
    %v4845 = vpop.permute.xlu0 %4844
    %v4847 = vadd.f32 %v4837, %v4845
    %v4848 = vtanh.pop %v4847
    %4850 = vrot.lane.b32.xlu0 %v4848, 64
    %v4851 = vpop.permute.xlu0 %4850
    %v4853 = vmul.f32 %v4832, %v4851
    %4855 = vrot.lane.b32.xlu0 %v4853, 32
    %v4856 = vpop.permute.xlu0 %4855
    %4858 = vst.msk [vmem:[#allocation3 + $0x8] sm:$0xc0] %vm2755, %v4856
    %v4859 = vld [vmem:[#allocation11] sm:$0xff]
    %v4860 = vld [vmem:[#allocation11 + $0x8] sm:$0xff]
    %v4861 = vld [vmem:[#allocation11 + $0x10] sm:$0xff]
    %v4862 = vld [vmem:[#allocation11 + $0x18] sm:$0xff]
    %v4863 = vld [vmem:[#allocation2 + $0x18] sm:$0xc0]
    %4864 = vmatprep.subr.mxu0 0.0
    %4865 = vmatpush1.msra.mxu0 0.0
    %4866 = vmatprep.subr.mxu0 0.0
    %4867 = vmatpush1.msra.mxu0 0.0
    %4868 = vmatprep.subr.mxu0 0.0
    %4869 = vmatpush1.msra.mxu0 0.0
    %4870 = vmatprep.subr.mxu0 0.0
    %4871 = vmatpush1.msra.mxu0 0.0
    %4872 = vmatprep.subr.mxu0 0.0
    %4873 = vmatpush1.msra.mxu0 0.0
    %4874 = vmatprep.subr.mxu0 0.0
    %4875 = vmatpush1.msra.mxu0 0.0
    %4876 = vmatprep.subr.mxu0 0.0
    %4877 = vmatpush1.msra.mxu0 0.0
    %4878 = vmatprep.subr.mxu0 0.0
    %4879 = vmatpush1.msra.mxu0 0.0
    %4880 = vmatprep.subr.mxu0 0.0
    %4881 = vmatpush1.msra.mxu0 0.0
    %4882 = vmatprep.subr.mxu0 0.0
    %4883 = vmatpush1.msra.mxu0 0.0
    %4884 = vmatprep.subr.mxu0 0.0
    %4885 = vmatpush1.msra.mxu0 0.0
    %4886 = vmatprep.subr.mxu0 0.0
    %4887 = vmatpush1.msra.mxu0 0.0
    %4888 = vmatprep.subr.mxu0 0.0
    %v4889 = vand.u32 %v4862, 4294901760
    %4890 = vmatpush1.msra.mxu0 %v4889
    %4891 = vmatprep.subr.mxu0 0.0
    %v4892 = vand.u32 %v4861, 4294901760
    %4893 = vmatpush1.msra.mxu0 %v4892
    %4894 = vmatprep.subr.mxu0 0.0
    %v4895 = vand.u32 %v4860, 4294901760
    %4896 = vmatpush1.msra.mxu0 %v4895
    %4897 = vmatprep.subr.mxu0 0.0
    %v4898 = vand.u32 %v4859, 4294901760
    %4899 = vmatpush1.msra.mxu0 %v4898
    %4900 = vmatprep.subr.mxu0 0.0
    %4901 = vmatpush2.msra.mxu0 0.0
    %4902 = vmatprep.subr.mxu0 0.0
    %4903 = vmatpush2.msra.mxu0 0.0
    %4904 = vmatprep.subr.mxu0 0.0
    %4905 = vmatpush2.msra.mxu0 0.0
    %4906 = vmatprep.subr.mxu0 0.0
    %4907 = vmatpush2.msra.mxu0 0.0
    %4908 = vmatprep.subr.mxu0 0.0
    %4909 = vmatpush2.msra.mxu0 0.0
    %4910 = vmatprep.subr.mxu0 0.0
    %4911 = vmatpush2.msra.mxu0 0.0
    %4912 = vmatprep.subr.mxu0 0.0
    %4913 = vmatpush2.msra.mxu0 0.0
    %4914 = vmatprep.subr.mxu0 0.0
    %4915 = vmatpush2.msra.mxu0 0.0
    %4916 = vmatprep.subr.mxu0 0.0
    %4917 = vmatpush2.msra.mxu0 0.0
    %4918 = vmatprep.subr.mxu0 0.0
    %4919 = vmatpush2.msra.mxu0 0.0
    %4920 = vmatprep.subr.mxu0 0.0
    %4921 = vmatpush2.msra.mxu0 0.0
    %4922 = vmatprep.subr.mxu0 0.0
    %4923 = vmatpush2.msra.mxu0 0.0
    %4924 = vmatprep.subr.mxu0 0.0
    %4925 = vmatpush2.msra.mxu0 0.0
    %4926 = vmatprep.subr.mxu0 0.0
    %4927 = vmatpush2.msra.mxu0 0.0
    %4928 = vmatprep.subr.mxu0 0.0
    %4929 = vmatpush2.msra.mxu0 0.0
    %4930 = vmatprep.subr.mxu0 0.0
    %4931 = vmatpush2.msra.mxu0 0.0
    %4932 = vmatprep.mubr.f32.mxu0 0.0
    %v4933 = vand.u32 %v658, 4294901760
    %v4934 = vsub.f32 %v658, %v4933
    %v4935 = vand.u32 %v4934, 4294901760
    %v4936 = vsub.f32 %v4934, %v4935
    %v4937 = vand.u32 %v4936, 4294901760
    %4938 = vmatmul.mubr.f32.gmra.mxu0 %v4937
    %v4939 = vpop.f32.mrf.mxu0
    %v4940 = vadd.f32 0.0, %v4939
    %v4941 = vpop.f32.mrf.mxu0
    %4942 = vdwg.mxu0
    %4943 = vmatprep.subr.mxu0 0.0
    %4944 = vmatpush1.msra.mxu0 0.0
    %4945 = vmatprep.subr.mxu0 0.0
    %4946 = vmatpush1.msra.mxu0 0.0
    %4947 = vmatprep.subr.mxu0 0.0
    %4948 = vmatpush1.msra.mxu0 0.0
    %4949 = vmatprep.subr.mxu0 0.0
    %4950 = vmatpush1.msra.mxu0 0.0
    %4951 = vmatprep.subr.mxu0 0.0
    %4952 = vmatpush1.msra.mxu0 0.0
    %4953 = vmatprep.subr.mxu0 0.0
    %4954 = vmatpush1.msra.mxu0 0.0
    %4955 = vmatprep.subr.mxu0 0.0
    %4956 = vmatpush1.msra.mxu0 0.0
    %4957 = vmatprep.subr.mxu0 0.0
    %4958 = vmatpush1.msra.mxu0 0.0
    %4959 = vmatprep.subr.mxu0 0.0
    %4960 = vmatpush1.msra.mxu0 0.0
    %4961 = vmatprep.subr.mxu0 0.0
    %4962 = vmatpush1.msra.mxu0 0.0
    %4963 = vmatprep.subr.mxu0 0.0
    %4964 = vmatpush1.msra.mxu0 0.0
    %4965 = vmatprep.subr.mxu0 0.0
    %4966 = vmatpush1.msra.mxu0 0.0
    %4967 = vmatprep.subr.mxu0 0.0
    %v4968 = vand.u32 %v4862, 4294901760
    %v4969 = vsub.f32 %v4862, %v4968
    %v4970 = vand.u32 %v4969, 4294901760
    %v4971 = vsub.f32 %v4969, %v4970
    %v4972 = vand.u32 %v4971, 4294901760
    %4973 = vmatpush1.msra.mxu0 %v4972
    %4974 = vmatprep.subr.mxu0 0.0
    %v4975 = vand.u32 %v4861, 4294901760
    %v4976 = vsub.f32 %v4861, %v4975
    %v4977 = vand.u32 %v4976, 4294901760
    %v4978 = vsub.f32 %v4976, %v4977
    %v4979 = vand.u32 %v4978, 4294901760
    %4980 = vmatpush1.msra.mxu0 %v4979
    %4981 = vmatprep.subr.mxu0 0.0
    %v4982 = vand.u32 %v4860, 4294901760
    %v4983 = vsub.f32 %v4860, %v4982
    %v4984 = vand.u32 %v4983, 4294901760
    %v4985 = vsub.f32 %v4983, %v4984
    %v4986 = vand.u32 %v4985, 4294901760
    %4987 = vmatpush1.msra.mxu0 %v4986
    %4988 = vmatprep.subr.mxu0 0.0
    %v4989 = vand.u32 %v4859, 4294901760
    %v4990 = vsub.f32 %v4859, %v4989
    %v4991 = vand.u32 %v4990, 4294901760
    %v4992 = vsub.f32 %v4990, %v4991
    %v4993 = vand.u32 %v4992, 4294901760
    %4994 = vmatpush1.msra.mxu0 %v4993
    %4995 = vmatprep.subr.mxu0 0.0
    %4996 = vmatpush2.msra.mxu0 0.0
    %4997 = vmatprep.subr.mxu0 0.0
    %4998 = vmatpush2.msra.mxu0 0.0
    %4999 = vmatprep.subr.mxu0 0.0
    %5000 = vmatpush2.msra.mxu0 0.0
    %5001 = vmatprep.subr.mxu0 0.0
    %5002 = vmatpush2.msra.mxu0 0.0
    %5003 = vmatprep.subr.mxu0 0.0
    %5004 = vmatpush2.msra.mxu0 0.0
    %5005 = vmatprep.subr.mxu0 0.0
    %5006 = vmatpush2.msra.mxu0 0.0
    %5007 = vmatprep.subr.mxu0 0.0
    %5008 = vmatpush2.msra.mxu0 0.0
    %5009 = vmatprep.subr.mxu0 0.0
    %5010 = vmatpush2.msra.mxu0 0.0
    %5011 = vmatprep.subr.mxu0 0.0
    %5012 = vmatpush2.msra.mxu0 0.0
    %5013 = vmatprep.subr.mxu0 0.0
    %5014 = vmatpush2.msra.mxu0 0.0
    %5015 = vmatprep.subr.mxu0 0.0
    %5016 = vmatpush2.msra.mxu0 0.0
    %5017 = vmatprep.subr.mxu0 0.0
    %5018 = vmatpush2.msra.mxu0 0.0
    %5019 = vmatprep.subr.mxu0 0.0
    %5020 = vmatpush2.msra.mxu0 0.0
    %5021 = vmatprep.subr.mxu0 0.0
    %5022 = vmatpush2.msra.mxu0 0.0
    %5023 = vmatprep.subr.mxu0 0.0
    %5024 = vmatpush2.msra.mxu0 0.0
    %5025 = vmatprep.subr.mxu0 0.0
    %5026 = vmatpush2.msra.mxu0 0.0
    %5027 = vmatprep.mubr.f32.mxu0 0.0
    %v5028 = vand.u32 %v658, 4294901760
    %5029 = vmatmul.mubr.f32.gmra.mxu0 %v5028
    %v5030 = vpop.f32.mrf.mxu0
    %v5031 = vadd.f32 %v4940, %v5030
    %v5032 = vpop.f32.mrf.mxu0
    %5033 = vdwg.mxu0
    %5034 = vmatprep.subr.mxu0 0.0
    %5035 = vmatpush1.msra.mxu0 0.0
    %5036 = vmatprep.subr.mxu0 0.0
    %5037 = vmatpush1.msra.mxu0 0.0
    %5038 = vmatprep.subr.mxu0 0.0
    %5039 = vmatpush1.msra.mxu0 0.0
    %5040 = vmatprep.subr.mxu0 0.0
    %5041 = vmatpush1.msra.mxu0 0.0
    %5042 = vmatprep.subr.mxu0 0.0
    %5043 = vmatpush1.msra.mxu0 0.0
    %5044 = vmatprep.subr.mxu0 0.0
    %5045 = vmatpush1.msra.mxu0 0.0
    %5046 = vmatprep.subr.mxu0 0.0
    %5047 = vmatpush1.msra.mxu0 0.0
    %5048 = vmatprep.subr.mxu0 0.0
    %5049 = vmatpush1.msra.mxu0 0.0
    %5050 = vmatprep.subr.mxu0 0.0
    %5051 = vmatpush1.msra.mxu0 0.0
    %5052 = vmatprep.subr.mxu0 0.0
    %5053 = vmatpush1.msra.mxu0 0.0
    %5054 = vmatprep.subr.mxu0 0.0
    %5055 = vmatpush1.msra.mxu0 0.0
    %5056 = vmatprep.subr.mxu0 0.0
    %5057 = vmatpush1.msra.mxu0 0.0
    %5058 = vmatprep.subr.mxu0 0.0
    %v5059 = vand.u32 %v4862, 4294901760
    %v5060 = vsub.f32 %v4862, %v5059
    %5061 = vmatpush1.msra.mxu0 %v5060
    %5062 = vmatprep.subr.mxu0 0.0
    %v5063 = vand.u32 %v4861, 4294901760
    %v5064 = vsub.f32 %v4861, %v5063
    %5065 = vmatpush1.msra.mxu0 %v5064
    %5066 = vmatprep.subr.mxu0 0.0
    %v5067 = vand.u32 %v4860, 4294901760
    %v5068 = vsub.f32 %v4860, %v5067
    %5069 = vmatpush1.msra.mxu0 %v5068
    %5070 = vmatprep.subr.mxu0 0.0
    %v5071 = vand.u32 %v4859, 4294901760
    %v5072 = vsub.f32 %v4859, %v5071
    %5073 = vmatpush1.msra.mxu0 %v5072
    %5074 = vmatprep.subr.mxu0 0.0
    %5075 = vmatpush2.msra.mxu0 0.0
    %5076 = vmatprep.subr.mxu0 0.0
    %5077 = vmatpush2.msra.mxu0 0.0
    %5078 = vmatprep.subr.mxu0 0.0
    %5079 = vmatpush2.msra.mxu0 0.0
    %5080 = vmatprep.subr.mxu0 0.0
    %5081 = vmatpush2.msra.mxu0 0.0
    %5082 = vmatprep.subr.mxu0 0.0
    %5083 = vmatpush2.msra.mxu0 0.0
    %5084 = vmatprep.subr.mxu0 0.0
    %5085 = vmatpush2.msra.mxu0 0.0
    %5086 = vmatprep.subr.mxu0 0.0
    %5087 = vmatpush2.msra.mxu0 0.0
    %5088 = vmatprep.subr.mxu0 0.0
    %5089 = vmatpush2.msra.mxu0 0.0
    %5090 = vmatprep.subr.mxu0 0.0
    %5091 = vmatpush2.msra.mxu0 0.0
    %5092 = vmatprep.subr.mxu0 0.0
    %5093 = vmatpush2.msra.mxu0 0.0
    %5094 = vmatprep.subr.mxu0 0.0
    %5095 = vmatpush2.msra.mxu0 0.0
    %5096 = vmatprep.subr.mxu0 0.0
    %5097 = vmatpush2.msra.mxu0 0.0
    %5098 = vmatprep.subr.mxu0 0.0
    %5099 = vmatpush2.msra.mxu0 0.0
    %5100 = vmatprep.subr.mxu0 0.0
    %5101 = vmatpush2.msra.mxu0 0.0
    %5102 = vmatprep.subr.mxu0 0.0
    %5103 = vmatpush2.msra.mxu0 0.0
    %5104 = vmatprep.subr.mxu0 0.0
    %5105 = vmatpush2.msra.mxu0 0.0
    %5106 = vmatprep.mubr.f32.mxu0 0.0
    %v5107 = vand.u32 %v658, 4294901760
    %v5108 = vsub.f32 %v658, %v5107
    %5109 = vmatmul.mubr.f32.gmra.mxu0 %v5108
    %v5110 = vpop.f32.mrf.mxu0
    %v5111 = vadd.f32 %v5031, %v5110
    %v5112 = vpop.f32.mrf.mxu0
    %5113 = vdwg.mxu0
    %5114 = vmatprep.subr.mxu0 0.0
    %5115 = vmatpush1.msra.mxu0 0.0
    %5116 = vmatprep.subr.mxu0 0.0
    %5117 = vmatpush1.msra.mxu0 0.0
    %5118 = vmatprep.subr.mxu0 0.0
    %5119 = vmatpush1.msra.mxu0 0.0
    %5120 = vmatprep.subr.mxu0 0.0
    %5121 = vmatpush1.msra.mxu0 0.0
    %5122 = vmatprep.subr.mxu0 0.0
    %5123 = vmatpush1.msra.mxu0 0.0
    %5124 = vmatprep.subr.mxu0 0.0
    %5125 = vmatpush1.msra.mxu0 0.0
    %5126 = vmatprep.subr.mxu0 0.0
    %5127 = vmatpush1.msra.mxu0 0.0
    %5128 = vmatprep.subr.mxu0 0.0
    %5129 = vmatpush1.msra.mxu0 0.0
    %5130 = vmatprep.subr.mxu0 0.0
    %5131 = vmatpush1.msra.mxu0 0.0
    %5132 = vmatprep.subr.mxu0 0.0
    %5133 = vmatpush1.msra.mxu0 0.0
    %5134 = vmatprep.subr.mxu0 0.0
    %5135 = vmatpush1.msra.mxu0 0.0
    %5136 = vmatprep.subr.mxu0 0.0
    %5137 = vmatpush1.msra.mxu0 0.0
    %5138 = vmatprep.subr.mxu0 0.0
    %v5139 = vand.u32 %v4862, 4294901760
    %5140 = vmatpush1.msra.mxu0 %v5139
    %5141 = vmatprep.subr.mxu0 0.0
    %v5142 = vand.u32 %v4861, 4294901760
    %5143 = vmatpush1.msra.mxu0 %v5142
    %5144 = vmatprep.subr.mxu0 0.0
    %v5145 = vand.u32 %v4860, 4294901760
    %5146 = vmatpush1.msra.mxu0 %v5145
    %5147 = vmatprep.subr.mxu0 0.0
    %v5148 = vand.u32 %v4859, 4294901760
    %5149 = vmatpush1.msra.mxu0 %v5148
    %5150 = vmatprep.subr.mxu0 0.0
    %5151 = vmatpush2.msra.mxu0 0.0
    %5152 = vmatprep.subr.mxu0 0.0
    %5153 = vmatpush2.msra.mxu0 0.0
    %5154 = vmatprep.subr.mxu0 0.0
    %5155 = vmatpush2.msra.mxu0 0.0
    %5156 = vmatprep.subr.mxu0 0.0
    %5157 = vmatpush2.msra.mxu0 0.0
    %5158 = vmatprep.subr.mxu0 0.0
    %5159 = vmatpush2.msra.mxu0 0.0
    %5160 = vmatprep.subr.mxu0 0.0
    %5161 = vmatpush2.msra.mxu0 0.0
    %5162 = vmatprep.subr.mxu0 0.0
    %5163 = vmatpush2.msra.mxu0 0.0
    %5164 = vmatprep.subr.mxu0 0.0
    %5165 = vmatpush2.msra.mxu0 0.0
    %5166 = vmatprep.subr.mxu0 0.0
    %5167 = vmatpush2.msra.mxu0 0.0
    %5168 = vmatprep.subr.mxu0 0.0
    %5169 = vmatpush2.msra.mxu0 0.0
    %5170 = vmatprep.subr.mxu0 0.0
    %5171 = vmatpush2.msra.mxu0 0.0
    %5172 = vmatprep.subr.mxu0 0.0
    %5173 = vmatpush2.msra.mxu0 0.0
    %5174 = vmatprep.subr.mxu0 0.0
    %5175 = vmatpush2.msra.mxu0 0.0
    %5176 = vmatprep.subr.mxu0 0.0
    %5177 = vmatpush2.msra.mxu0 0.0
    %5178 = vmatprep.subr.mxu0 0.0
    %5179 = vmatpush2.msra.mxu0 0.0
    %5180 = vmatprep.subr.mxu0 0.0
    %5181 = vmatpush2.msra.mxu0 0.0
    %5182 = vmatprep.mubr.f32.mxu0 0.0
    %v5183 = vand.u32 %v658, 4294901760
    %v5184 = vsub.f32 %v658, %v5183
    %v5185 = vand.u32 %v5184, 4294901760
    %5186 = vmatmul.mubr.f32.gmra.mxu0 %v5185
    %v5187 = vpop.f32.mrf.mxu0
    %v5188 = vadd.f32 %v5111, %v5187
    %v5189 = vpop.f32.mrf.mxu0
    %5190 = vdwg.mxu0
    %5191 = vmatprep.subr.mxu0 0.0
    %5192 = vmatpush1.msra.mxu0 0.0
    %5193 = vmatprep.subr.mxu0 0.0
    %5194 = vmatpush1.msra.mxu0 0.0
    %5195 = vmatprep.subr.mxu0 0.0
    %5196 = vmatpush1.msra.mxu0 0.0
    %5197 = vmatprep.subr.mxu0 0.0
    %5198 = vmatpush1.msra.mxu0 0.0
    %5199 = vmatprep.subr.mxu0 0.0
    %5200 = vmatpush1.msra.mxu0 0.0
    %5201 = vmatprep.subr.mxu0 0.0
    %5202 = vmatpush1.msra.mxu0 0.0
    %5203 = vmatprep.subr.mxu0 0.0
    %5204 = vmatpush1.msra.mxu0 0.0
    %5205 = vmatprep.subr.mxu0 0.0
    %5206 = vmatpush1.msra.mxu0 0.0
    %5207 = vmatprep.subr.mxu0 0.0
    %5208 = vmatpush1.msra.mxu0 0.0
    %5209 = vmatprep.subr.mxu0 0.0
    %5210 = vmatpush1.msra.mxu0 0.0
    %5211 = vmatprep.subr.mxu0 0.0
    %5212 = vmatpush1.msra.mxu0 0.0
    %5213 = vmatprep.subr.mxu0 0.0
    %5214 = vmatpush1.msra.mxu0 0.0
    %5215 = vmatprep.subr.mxu0 0.0
    %v5216 = vand.u32 %v4862, 4294901760
    %v5217 = vsub.f32 %v4862, %v5216
    %v5218 = vand.u32 %v5217, 4294901760
    %5219 = vmatpush1.msra.mxu0 %v5218
    %5220 = vmatprep.subr.mxu0 0.0
    %v5221 = vand.u32 %v4861, 4294901760
    %v5222 = vsub.f32 %v4861, %v5221
    %v5223 = vand.u32 %v5222, 4294901760
    %5224 = vmatpush1.msra.mxu0 %v5223
    %5225 = vmatprep.subr.mxu0 0.0
    %v5226 = vand.u32 %v4860, 4294901760
    %v5227 = vsub.f32 %v4860, %v5226
    %v5228 = vand.u32 %v5227, 4294901760
    %5229 = vmatpush1.msra.mxu0 %v5228
    %5230 = vmatprep.subr.mxu0 0.0
    %v5231 = vand.u32 %v4859, 4294901760
    %v5232 = vsub.f32 %v4859, %v5231
    %v5233 = vand.u32 %v5232, 4294901760
    %5234 = vmatpush1.msra.mxu0 %v5233
    %5235 = vmatprep.subr.mxu0 0.0
    %5236 = vmatpush2.msra.mxu0 0.0
    %5237 = vmatprep.subr.mxu0 0.0
    %5238 = vmatpush2.msra.mxu0 0.0
    %5239 = vmatprep.subr.mxu0 0.0
    %5240 = vmatpush2.msra.mxu0 0.0
    %5241 = vmatprep.subr.mxu0 0.0
    %5242 = vmatpush2.msra.mxu0 0.0
    %5243 = vmatprep.subr.mxu0 0.0
    %5244 = vmatpush2.msra.mxu0 0.0
    %5245 = vmatprep.subr.mxu0 0.0
    %5246 = vmatpush2.msra.mxu0 0.0
    %5247 = vmatprep.subr.mxu0 0.0
    %5248 = vmatpush2.msra.mxu0 0.0
    %5249 = vmatprep.subr.mxu0 0.0
    %5250 = vmatpush2.msra.mxu0 0.0
    %5251 = vmatprep.subr.mxu0 0.0
    %5252 = vmatpush2.msra.mxu0 0.0
    %5253 = vmatprep.subr.mxu0 0.0
    %5254 = vmatpush2.msra.mxu0 0.0
    %5255 = vmatprep.subr.mxu0 0.0
    %5256 = vmatpush2.msra.mxu0 0.0
    %5257 = vmatprep.subr.mxu0 0.0
    %5258 = vmatpush2.msra.mxu0 0.0
    %5259 = vmatprep.subr.mxu0 0.0
    %5260 = vmatpush2.msra.mxu0 0.0
    %5261 = vmatprep.subr.mxu0 0.0
    %5262 = vmatpush2.msra.mxu0 0.0
    %5263 = vmatprep.subr.mxu0 0.0
    %5264 = vmatpush2.msra.mxu0 0.0
    %5265 = vmatprep.subr.mxu0 0.0
    %5266 = vmatpush2.msra.mxu0 0.0
    %5267 = vmatprep.mubr.f32.mxu0 0.0
    %v5268 = vand.u32 %v658, 4294901760
    %5269 = vmatmul.mubr.f32.gmra.mxu0 %v5268
    %v5270 = vpop.f32.mrf.mxu0
    %v5271 = vadd.f32 %v5188, %v5270
    %v5272 = vpop.f32.mrf.mxu0
    %5273 = vdwg.mxu0
    %5274 = vmatprep.subr.mxu0 0.0
    %5275 = vmatpush1.msra.mxu0 0.0
    %5276 = vmatprep.subr.mxu0 0.0
    %5277 = vmatpush1.msra.mxu0 0.0
    %5278 = vmatprep.subr.mxu0 0.0
    %5279 = vmatpush1.msra.mxu0 0.0
    %5280 = vmatprep.subr.mxu0 0.0
    %5281 = vmatpush1.msra.mxu0 0.0
    %5282 = vmatprep.subr.mxu0 0.0
    %5283 = vmatpush1.msra.mxu0 0.0
    %5284 = vmatprep.subr.mxu0 0.0
    %5285 = vmatpush1.msra.mxu0 0.0
    %5286 = vmatprep.subr.mxu0 0.0
    %5287 = vmatpush1.msra.mxu0 0.0
    %5288 = vmatprep.subr.mxu0 0.0
    %5289 = vmatpush1.msra.mxu0 0.0
    %5290 = vmatprep.subr.mxu0 0.0
    %5291 = vmatpush1.msra.mxu0 0.0
    %5292 = vmatprep.subr.mxu0 0.0
    %5293 = vmatpush1.msra.mxu0 0.0
    %5294 = vmatprep.subr.mxu0 0.0
    %5295 = vmatpush1.msra.mxu0 0.0
    %5296 = vmatprep.subr.mxu0 0.0
    %5297 = vmatpush1.msra.mxu0 0.0
    %5298 = vmatprep.subr.mxu0 0.0
    %v5299 = vand.u32 %v4862, 4294901760
    %5300 = vmatpush1.msra.mxu0 %v5299
    %5301 = vmatprep.subr.mxu0 0.0
    %v5302 = vand.u32 %v4861, 4294901760
    %5303 = vmatpush1.msra.mxu0 %v5302
    %5304 = vmatprep.subr.mxu0 0.0
    %v5305 = vand.u32 %v4860, 4294901760
    %5306 = vmatpush1.msra.mxu0 %v5305
    %5307 = vmatprep.subr.mxu0 0.0
    %v5308 = vand.u32 %v4859, 4294901760
    %5309 = vmatpush1.msra.mxu0 %v5308
    %5310 = vmatprep.subr.mxu0 0.0
    %5311 = vmatpush2.msra.mxu0 0.0
    %5312 = vmatprep.subr.mxu0 0.0
    %5313 = vmatpush2.msra.mxu0 0.0
    %5314 = vmatprep.subr.mxu0 0.0
    %5315 = vmatpush2.msra.mxu0 0.0
    %5316 = vmatprep.subr.mxu0 0.0
    %5317 = vmatpush2.msra.mxu0 0.0
    %5318 = vmatprep.subr.mxu0 0.0
    %5319 = vmatpush2.msra.mxu0 0.0
    %5320 = vmatprep.subr.mxu0 0.0
    %5321 = vmatpush2.msra.mxu0 0.0
    %5322 = vmatprep.subr.mxu0 0.0
    %5323 = vmatpush2.msra.mxu0 0.0
    %5324 = vmatprep.subr.mxu0 0.0
    %5325 = vmatpush2.msra.mxu0 0.0
    %5326 = vmatprep.subr.mxu0 0.0
    %5327 = vmatpush2.msra.mxu0 0.0
    %5328 = vmatprep.subr.mxu0 0.0
    %5329 = vmatpush2.msra.mxu0 0.0
    %5330 = vmatprep.subr.mxu0 0.0
    %5331 = vmatpush2.msra.mxu0 0.0
    %5332 = vmatprep.subr.mxu0 0.0
    %5333 = vmatpush2.msra.mxu0 0.0
    %5334 = vmatprep.subr.mxu0 0.0
    %5335 = vmatpush2.msra.mxu0 0.0
    %5336 = vmatprep.subr.mxu0 0.0
    %5337 = vmatpush2.msra.mxu0 0.0
    %5338 = vmatprep.subr.mxu0 0.0
    %5339 = vmatpush2.msra.mxu0 0.0
    %5340 = vmatprep.subr.mxu0 0.0
    %5341 = vmatpush2.msra.mxu0 0.0
    %5342 = vmatprep.mubr.f32.mxu0 0.0
    %v5343 = vand.u32 %v658, 4294901760
    %5344 = vmatmul.mubr.f32.gmra.mxu0 %v5343
    %v5345 = vpop.f32.mrf.mxu0
    %v5346 = vadd.f32 %v5271, %v5345
    %v5347 = vpop.f32.mrf.mxu0
    %5348 = vdwg.mxu0
    %v5350 = vrot.slane %v5346, 2
    %v5352 = vadd.f32 %v4863, %v5350
    %v5353 = vsub.f32 0.0, %v5352
    %v5354 = vmul.f32 %v5353, 1.442695
    %v5355 = vpow.pop %v5354
    %v5356 = vadd.f32 %v5355, 1.0
    %v5357 = vrcp.pop %v5356
    %v5358 = vmul.f32 1.0, %v5357
    %v5359 = vtanh.pop %v5352
    %v5360 = vmul.f32 %v5358, 0.0
    %5362 = vrot.lane.b32.xlu0 %v5359, 64
    %v5363 = vpop.permute.xlu0 %5362
    %v5365 = vmul.f32 %v5358, %v5363
    %5367 = vrot.lane.b32.xlu0 %v5365, 32
    %v5368 = vpop.permute.xlu0 %5367
    %v5370 = vadd.f32 %v5360, %v5368
    %v5371 = vtanh.pop %v5370
    %5373 = vrot.lane.b32.xlu0 %v5371, 64
    %v5374 = vpop.permute.xlu0 %5373
    %v5376 = vmul.f32 %v5358, %v5374
    %5378 = vrot.lane.b32.xlu0 %v5376, 32
    %v5379 = vpop.permute.xlu0 %5378
    %5381 = vst.msk [vmem:[#allocation4 + $0x8] sm:$0xc0] %vm2755, %v5379
    %v5382 = vld [vmem:[#allocation2 + $0x18] sm:$0x30]
    %v5383 = vrot.slane %v5376, 6
    %5384 = vrot.lane.b32.xlu0 %v5383, 32
    %v5385 = vpop.permute.xlu0 %5384
    %v5386 = vsel %vm656, %v5385, 0
    %5388 = vmatprep.subr.mxu0 0.0
    %5389 = vmatpush1.msra.mxu0 0.0
    %5390 = vmatprep.subr.mxu0 0.0
    %5391 = vmatpush1.msra.mxu0 0.0
    %5392 = vmatprep.subr.mxu0 0.0
    %5393 = vmatpush1.msra.mxu0 0.0
    %5394 = vmatprep.subr.mxu0 0.0
    %5395 = vmatpush1.msra.mxu0 0.0
    %5396 = vmatprep.subr.mxu0 0.0
    %5397 = vmatpush1.msra.mxu0 0.0
    %5398 = vmatprep.subr.mxu0 0.0
    %5399 = vmatpush1.msra.mxu0 0.0
    %5400 = vmatprep.subr.mxu0 0.0
    %5401 = vmatpush1.msra.mxu0 0.0
    %5402 = vmatprep.subr.mxu0 0.0
    %5403 = vmatpush1.msra.mxu0 0.0
    %5404 = vmatprep.subr.mxu0 0.0
    %5405 = vmatpush1.msra.mxu0 0.0
    %5406 = vmatprep.subr.mxu0 0.0
    %5407 = vmatpush1.msra.mxu0 0.0
    %5408 = vmatprep.subr.mxu0 0.0
    %5409 = vmatpush1.msra.mxu0 0.0
    %5410 = vmatprep.subr.mxu0 0.0
    %5411 = vmatpush1.msra.mxu0 0.0
    %5412 = vmatprep.subr.mxu0 0.0
    %v5413 = vand.u32 %v4862, 4294901760
    %5414 = vmatpush1.msra.mxu0 %v5413
    %5415 = vmatprep.subr.mxu0 0.0
    %v5416 = vand.u32 %v4861, 4294901760
    %5417 = vmatpush1.msra.mxu0 %v5416
    %5418 = vmatprep.subr.mxu0 0.0
    %v5419 = vand.u32 %v4860, 4294901760
    %5420 = vmatpush1.msra.mxu0 %v5419
    %5421 = vmatprep.subr.mxu0 0.0
    %v5422 = vand.u32 %v4859, 4294901760
    %5423 = vmatpush1.msra.mxu0 %v5422
    %5424 = vmatprep.subr.mxu0 0.0
    %5425 = vmatpush2.msra.mxu0 0.0
    %5426 = vmatprep.subr.mxu0 0.0
    %5427 = vmatpush2.msra.mxu0 0.0
    %5428 = vmatprep.subr.mxu0 0.0
    %5429 = vmatpush2.msra.mxu0 0.0
    %5430 = vmatprep.subr.mxu0 0.0
    %5431 = vmatpush2.msra.mxu0 0.0
    %5432 = vmatprep.subr.mxu0 0.0
    %5433 = vmatpush2.msra.mxu0 0.0
    %5434 = vmatprep.subr.mxu0 0.0
    %5435 = vmatpush2.msra.mxu0 0.0
    %5436 = vmatprep.subr.mxu0 0.0
    %5437 = vmatpush2.msra.mxu0 0.0
    %5438 = vmatprep.subr.mxu0 0.0
    %5439 = vmatpush2.msra.mxu0 0.0
    %5440 = vmatprep.subr.mxu0 0.0
    %5441 = vmatpush2.msra.mxu0 0.0
    %5442 = vmatprep.subr.mxu0 0.0
    %5443 = vmatpush2.msra.mxu0 0.0
    %5444 = vmatprep.subr.mxu0 0.0
    %5445 = vmatpush2.msra.mxu0 0.0
    %5446 = vmatprep.subr.mxu0 0.0
    %5447 = vmatpush2.msra.mxu0 0.0
    %5448 = vmatprep.subr.mxu0 0.0
    %5449 = vmatpush2.msra.mxu0 0.0
    %5450 = vmatprep.subr.mxu0 0.0
    %5451 = vmatpush2.msra.mxu0 0.0
    %5452 = vmatprep.subr.mxu0 0.0
    %5453 = vmatpush2.msra.mxu0 0.0
    %5454 = vmatprep.subr.mxu0 0.0
    %5455 = vmatpush2.msra.mxu0 0.0
    %5456 = vmatprep.mubr.f32.mxu0 0.0
    %v5457 = vand.u32 %v5386, 4294901760
    %v5458 = vsub.f32 %v5386, %v5457
    %v5459 = vand.u32 %v5458, 4294901760
    %v5460 = vsub.f32 %v5458, %v5459
    %v5461 = vand.u32 %v5460, 4294901760
    %5462 = vmatmul.mubr.f32.gmra.mxu0 %v5461
    %v5463 = vpop.f32.mrf.mxu0
    %v5464 = vadd.f32 0.0, %v5463
    %v5465 = vpop.f32.mrf.mxu0
    %5466 = vdwg.mxu0
    %5467 = vmatprep.subr.mxu0 0.0
    %5468 = vmatpush1.msra.mxu0 0.0
    %5469 = vmatprep.subr.mxu0 0.0
    %5470 = vmatpush1.msra.mxu0 0.0
    %5471 = vmatprep.subr.mxu0 0.0
    %5472 = vmatpush1.msra.mxu0 0.0
    %5473 = vmatprep.subr.mxu0 0.0
    %5474 = vmatpush1.msra.mxu0 0.0
    %5475 = vmatprep.subr.mxu0 0.0
    %5476 = vmatpush1.msra.mxu0 0.0
    %5477 = vmatprep.subr.mxu0 0.0
    %5478 = vmatpush1.msra.mxu0 0.0
    %5479 = vmatprep.subr.mxu0 0.0
    %5480 = vmatpush1.msra.mxu0 0.0
    %5481 = vmatprep.subr.mxu0 0.0
    %5482 = vmatpush1.msra.mxu0 0.0
    %5483 = vmatprep.subr.mxu0 0.0
    %5484 = vmatpush1.msra.mxu0 0.0
    %5485 = vmatprep.subr.mxu0 0.0
    %5486 = vmatpush1.msra.mxu0 0.0
    %5487 = vmatprep.subr.mxu0 0.0
    %5488 = vmatpush1.msra.mxu0 0.0
    %5489 = vmatprep.subr.mxu0 0.0
    %5490 = vmatpush1.msra.mxu0 0.0
    %5491 = vmatprep.subr.mxu0 0.0
    %v5492 = vand.u32 %v4862, 4294901760
    %v5493 = vsub.f32 %v4862, %v5492
    %v5494 = vand.u32 %v5493, 4294901760
    %v5495 = vsub.f32 %v5493, %v5494
    %v5496 = vand.u32 %v5495, 4294901760
    %5497 = vmatpush1.msra.mxu0 %v5496
    %5498 = vmatprep.subr.mxu0 0.0
    %v5499 = vand.u32 %v4861, 4294901760
    %v5500 = vsub.f32 %v4861, %v5499
    %v5501 = vand.u32 %v5500, 4294901760
    %v5502 = vsub.f32 %v5500, %v5501
    %v5503 = vand.u32 %v5502, 4294901760
    %5504 = vmatpush1.msra.mxu0 %v5503
    %5505 = vmatprep.subr.mxu0 0.0
    %v5506 = vand.u32 %v4860, 4294901760
    %v5507 = vsub.f32 %v4860, %v5506
    %v5508 = vand.u32 %v5507, 4294901760
    %v5509 = vsub.f32 %v5507, %v5508
    %v5510 = vand.u32 %v5509, 4294901760
    %5511 = vmatpush1.msra.mxu0 %v5510
    %5512 = vmatprep.subr.mxu0 0.0
    %v5513 = vand.u32 %v4859, 4294901760
    %v5514 = vsub.f32 %v4859, %v5513
    %v5515 = vand.u32 %v5514, 4294901760
    %v5516 = vsub.f32 %v5514, %v5515
    %v5517 = vand.u32 %v5516, 4294901760
    %5518 = vmatpush1.msra.mxu0 %v5517
    %5519 = vmatprep.subr.mxu0 0.0
    %5520 = vmatpush2.msra.mxu0 0.0
    %5521 = vmatprep.subr.mxu0 0.0
    %5522 = vmatpush2.msra.mxu0 0.0
    %5523 = vmatprep.subr.mxu0 0.0
    %5524 = vmatpush2.msra.mxu0 0.0
    %5525 = vmatprep.subr.mxu0 0.0
    %5526 = vmatpush2.msra.mxu0 0.0
    %5527 = vmatprep.subr.mxu0 0.0
    %5528 = vmatpush2.msra.mxu0 0.0
    %5529 = vmatprep.subr.mxu0 0.0
    %5530 = vmatpush2.msra.mxu0 0.0
    %5531 = vmatprep.subr.mxu0 0.0
    %5532 = vmatpush2.msra.mxu0 0.0
    %5533 = vmatprep.subr.mxu0 0.0
    %5534 = vmatpush2.msra.mxu0 0.0
    %5535 = vmatprep.subr.mxu0 0.0
    %5536 = vmatpush2.msra.mxu0 0.0
    %5537 = vmatprep.subr.mxu0 0.0
    %5538 = vmatpush2.msra.mxu0 0.0
    %5539 = vmatprep.subr.mxu0 0.0
    %5540 = vmatpush2.msra.mxu0 0.0
    %5541 = vmatprep.subr.mxu0 0.0
    %5542 = vmatpush2.msra.mxu0 0.0
    %5543 = vmatprep.subr.mxu0 0.0
    %5544 = vmatpush2.msra.mxu0 0.0
    %5545 = vmatprep.subr.mxu0 0.0
    %5546 = vmatpush2.msra.mxu0 0.0
    %5547 = vmatprep.subr.mxu0 0.0
    %5548 = vmatpush2.msra.mxu0 0.0
    %5549 = vmatprep.subr.mxu0 0.0
    %5550 = vmatpush2.msra.mxu0 0.0
    %5551 = vmatprep.mubr.f32.mxu0 0.0
    %v5552 = vand.u32 %v5386, 4294901760
    %5553 = vmatmul.mubr.f32.gmra.mxu0 %v5552
    %v5554 = vpop.f32.mrf.mxu0
    %v5555 = vadd.f32 %v5464, %v5554
    %v5556 = vpop.f32.mrf.mxu0
    %5557 = vdwg.mxu0
    %5558 = vmatprep.subr.mxu0 0.0
    %5559 = vmatpush1.msra.mxu0 0.0
    %5560 = vmatprep.subr.mxu0 0.0
    %5561 = vmatpush1.msra.mxu0 0.0
    %5562 = vmatprep.subr.mxu0 0.0
    %5563 = vmatpush1.msra.mxu0 0.0
    %5564 = vmatprep.subr.mxu0 0.0
    %5565 = vmatpush1.msra.mxu0 0.0
    %5566 = vmatprep.subr.mxu0 0.0
    %5567 = vmatpush1.msra.mxu0 0.0
    %5568 = vmatprep.subr.mxu0 0.0
    %5569 = vmatpush1.msra.mxu0 0.0
    %5570 = vmatprep.subr.mxu0 0.0
    %5571 = vmatpush1.msra.mxu0 0.0
    %5572 = vmatprep.subr.mxu0 0.0
    %5573 = vmatpush1.msra.mxu0 0.0
    %5574 = vmatprep.subr.mxu0 0.0
    %5575 = vmatpush1.msra.mxu0 0.0
    %5576 = vmatprep.subr.mxu0 0.0
    %5577 = vmatpush1.msra.mxu0 0.0
    %5578 = vmatprep.subr.mxu0 0.0
    %5579 = vmatpush1.msra.mxu0 0.0
    %5580 = vmatprep.subr.mxu0 0.0
    %5581 = vmatpush1.msra.mxu0 0.0
    %5582 = vmatprep.subr.mxu0 0.0
    %v5583 = vand.u32 %v4862, 4294901760
    %v5584 = vsub.f32 %v4862, %v5583
    %5585 = vmatpush1.msra.mxu0 %v5584
    %5586 = vmatprep.subr.mxu0 0.0
    %v5587 = vand.u32 %v4861, 4294901760
    %v5588 = vsub.f32 %v4861, %v5587
    %5589 = vmatpush1.msra.mxu0 %v5588
    %5590 = vmatprep.subr.mxu0 0.0
    %v5591 = vand.u32 %v4860, 4294901760
    %v5592 = vsub.f32 %v4860, %v5591
    %5593 = vmatpush1.msra.mxu0 %v5592
    %5594 = vmatprep.subr.mxu0 0.0
    %v5595 = vand.u32 %v4859, 4294901760
    %v5596 = vsub.f32 %v4859, %v5595
    %5597 = vmatpush1.msra.mxu0 %v5596
    %5598 = vmatprep.subr.mxu0 0.0
    %5599 = vmatpush2.msra.mxu0 0.0
    %5600 = vmatprep.subr.mxu0 0.0
    %5601 = vmatpush2.msra.mxu0 0.0
    %5602 = vmatprep.subr.mxu0 0.0
    %5603 = vmatpush2.msra.mxu0 0.0
    %5604 = vmatprep.subr.mxu0 0.0
    %5605 = vmatpush2.msra.mxu0 0.0
    %5606 = vmatprep.subr.mxu0 0.0
    %5607 = vmatpush2.msra.mxu0 0.0
    %5608 = vmatprep.subr.mxu0 0.0
    %5609 = vmatpush2.msra.mxu0 0.0
    %5610 = vmatprep.subr.mxu0 0.0
    %5611 = vmatpush2.msra.mxu0 0.0
    %5612 = vmatprep.subr.mxu0 0.0
    %5613 = vmatpush2.msra.mxu0 0.0
    %5614 = vmatprep.subr.mxu0 0.0
    %5615 = vmatpush2.msra.mxu0 0.0
    %5616 = vmatprep.subr.mxu0 0.0
    %5617 = vmatpush2.msra.mxu0 0.0
    %5618 = vmatprep.subr.mxu0 0.0
    %5619 = vmatpush2.msra.mxu0 0.0
    %5620 = vmatprep.subr.mxu0 0.0
    %5621 = vmatpush2.msra.mxu0 0.0
    %5622 = vmatprep.subr.mxu0 0.0
    %5623 = vmatpush2.msra.mxu0 0.0
    %5624 = vmatprep.subr.mxu0 0.0
    %5625 = vmatpush2.msra.mxu0 0.0
    %5626 = vmatprep.subr.mxu0 0.0
    %5627 = vmatpush2.msra.mxu0 0.0
    %5628 = vmatprep.subr.mxu0 0.0
    %5629 = vmatpush2.msra.mxu0 0.0
    %5630 = vmatprep.mubr.f32.mxu0 0.0
    %v5631 = vand.u32 %v5386, 4294901760
    %v5632 = vsub.f32 %v5386, %v5631
    %5633 = vmatmul.mubr.f32.gmra.mxu0 %v5632
    %v5634 = vpop.f32.mrf.mxu0
    %v5635 = vadd.f32 %v5555, %v5634
    %v5636 = vpop.f32.mrf.mxu0
    %5637 = vdwg.mxu0
    %5638 = vmatprep.subr.mxu0 0.0
    %5639 = vmatpush1.msra.mxu0 0.0
    %5640 = vmatprep.subr.mxu0 0.0
    %5641 = vmatpush1.msra.mxu0 0.0
    %5642 = vmatprep.subr.mxu0 0.0
    %5643 = vmatpush1.msra.mxu0 0.0
    %5644 = vmatprep.subr.mxu0 0.0
    %5645 = vmatpush1.msra.mxu0 0.0
    %5646 = vmatprep.subr.mxu0 0.0
    %5647 = vmatpush1.msra.mxu0 0.0
    %5648 = vmatprep.subr.mxu0 0.0
    %5649 = vmatpush1.msra.mxu0 0.0
    %5650 = vmatprep.subr.mxu0 0.0
    %5651 = vmatpush1.msra.mxu0 0.0
    %5652 = vmatprep.subr.mxu0 0.0
    %5653 = vmatpush1.msra.mxu0 0.0
    %5654 = vmatprep.subr.mxu0 0.0
    %5655 = vmatpush1.msra.mxu0 0.0
    %5656 = vmatprep.subr.mxu0 0.0
    %5657 = vmatpush1.msra.mxu0 0.0
    %5658 = vmatprep.subr.mxu0 0.0
    %5659 = vmatpush1.msra.mxu0 0.0
    %5660 = vmatprep.subr.mxu0 0.0
    %5661 = vmatpush1.msra.mxu0 0.0
    %5662 = vmatprep.subr.mxu0 0.0
    %v5663 = vand.u32 %v4862, 4294901760
    %5664 = vmatpush1.msra.mxu0 %v5663
    %5665 = vmatprep.subr.mxu0 0.0
    %v5666 = vand.u32 %v4861, 4294901760
    %5667 = vmatpush1.msra.mxu0 %v5666
    %5668 = vmatprep.subr.mxu0 0.0
    %v5669 = vand.u32 %v4860, 4294901760
    %5670 = vmatpush1.msra.mxu0 %v5669
    %5671 = vmatprep.subr.mxu0 0.0
    %v5672 = vand.u32 %v4859, 4294901760
    %5673 = vmatpush1.msra.mxu0 %v5672
    %5674 = vmatprep.subr.mxu0 0.0
    %5675 = vmatpush2.msra.mxu0 0.0
    %5676 = vmatprep.subr.mxu0 0.0
    %5677 = vmatpush2.msra.mxu0 0.0
    %5678 = vmatprep.subr.mxu0 0.0
    %5679 = vmatpush2.msra.mxu0 0.0
    %5680 = vmatprep.subr.mxu0 0.0
    %5681 = vmatpush2.msra.mxu0 0.0
    %5682 = vmatprep.subr.mxu0 0.0
    %5683 = vmatpush2.msra.mxu0 0.0
    %5684 = vmatprep.subr.mxu0 0.0
    %5685 = vmatpush2.msra.mxu0 0.0
    %5686 = vmatprep.subr.mxu0 0.0
    %5687 = vmatpush2.msra.mxu0 0.0
    %5688 = vmatprep.subr.mxu0 0.0
    %5689 = vmatpush2.msra.mxu0 0.0
    %5690 = vmatprep.subr.mxu0 0.0
    %5691 = vmatpush2.msra.mxu0 0.0
    %5692 = vmatprep.subr.mxu0 0.0
    %5693 = vmatpush2.msra.mxu0 0.0
    %5694 = vmatprep.subr.mxu0 0.0
    %5695 = vmatpush2.msra.mxu0 0.0
    %5696 = vmatprep.subr.mxu0 0.0
    %5697 = vmatpush2.msra.mxu0 0.0
    %5698 = vmatprep.subr.mxu0 0.0
    %5699 = vmatpush2.msra.mxu0 0.0
    %5700 = vmatprep.subr.mxu0 0.0
    %5701 = vmatpush2.msra.mxu0 0.0
    %5702 = vmatprep.subr.mxu0 0.0
    %5703 = vmatpush2.msra.mxu0 0.0
    %5704 = vmatprep.subr.mxu0 0.0
    %5705 = vmatpush2.msra.mxu0 0.0
    %5706 = vmatprep.mubr.f32.mxu0 0.0
    %v5707 = vand.u32 %v5386, 4294901760
    %v5708 = vsub.f32 %v5386, %v5707
    %v5709 = vand.u32 %v5708, 4294901760
    %5710 = vmatmul.mubr.f32.gmra.mxu0 %v5709
    %v5711 = vpop.f32.mrf.mxu0
    %v5712 = vadd.f32 %v5635, %v5711
    %v5713 = vpop.f32.mrf.mxu0
    %5714 = vdwg.mxu0
    %5715 = vmatprep.subr.mxu0 0.0
    %5716 = vmatpush1.msra.mxu0 0.0
    %5717 = vmatprep.subr.mxu0 0.0
    %5718 = vmatpush1.msra.mxu0 0.0
    %5719 = vmatprep.subr.mxu0 0.0
    %5720 = vmatpush1.msra.mxu0 0.0
    %5721 = vmatprep.subr.mxu0 0.0
    %5722 = vmatpush1.msra.mxu0 0.0
    %5723 = vmatprep.subr.mxu0 0.0
    %5724 = vmatpush1.msra.mxu0 0.0
    %5725 = vmatprep.subr.mxu0 0.0
    %5726 = vmatpush1.msra.mxu0 0.0
    %5727 = vmatprep.subr.mxu0 0.0
    %5728 = vmatpush1.msra.mxu0 0.0
    %5729 = vmatprep.subr.mxu0 0.0
    %5730 = vmatpush1.msra.mxu0 0.0
    %5731 = vmatprep.subr.mxu0 0.0
    %5732 = vmatpush1.msra.mxu0 0.0
    %5733 = vmatprep.subr.mxu0 0.0
    %5734 = vmatpush1.msra.mxu0 0.0
    %5735 = vmatprep.subr.mxu0 0.0
    %5736 = vmatpush1.msra.mxu0 0.0
    %5737 = vmatprep.subr.mxu0 0.0
    %5738 = vmatpush1.msra.mxu0 0.0
    %5739 = vmatprep.subr.mxu0 0.0
    %v5740 = vand.u32 %v4862, 4294901760
    %v5741 = vsub.f32 %v4862, %v5740
    %v5742 = vand.u32 %v5741, 4294901760
    %5743 = vmatpush1.msra.mxu0 %v5742
    %5744 = vmatprep.subr.mxu0 0.0
    %v5745 = vand.u32 %v4861, 4294901760
    %v5746 = vsub.f32 %v4861, %v5745
    %v5747 = vand.u32 %v5746, 4294901760
    %5748 = vmatpush1.msra.mxu0 %v5747
    %5749 = vmatprep.subr.mxu0 0.0
    %v5750 = vand.u32 %v4860, 4294901760
    %v5751 = vsub.f32 %v4860, %v5750
    %v5752 = vand.u32 %v5751, 4294901760
    %5753 = vmatpush1.msra.mxu0 %v5752
    %5754 = vmatprep.subr.mxu0 0.0
    %v5755 = vand.u32 %v4859, 4294901760
    %v5756 = vsub.f32 %v4859, %v5755
    %v5757 = vand.u32 %v5756, 4294901760
    %5758 = vmatpush1.msra.mxu0 %v5757
    %5759 = vmatprep.subr.mxu0 0.0
    %5760 = vmatpush2.msra.mxu0 0.0
    %5761 = vmatprep.subr.mxu0 0.0
    %5762 = vmatpush2.msra.mxu0 0.0
    %5763 = vmatprep.subr.mxu0 0.0
    %5764 = vmatpush2.msra.mxu0 0.0
    %5765 = vmatprep.subr.mxu0 0.0
    %5766 = vmatpush2.msra.mxu0 0.0
    %5767 = vmatprep.subr.mxu0 0.0
    %5768 = vmatpush2.msra.mxu0 0.0
    %5769 = vmatprep.subr.mxu0 0.0
    %5770 = vmatpush2.msra.mxu0 0.0
    %5771 = vmatprep.subr.mxu0 0.0
    %5772 = vmatpush2.msra.mxu0 0.0
    %5773 = vmatprep.subr.mxu0 0.0
    %5774 = vmatpush2.msra.mxu0 0.0
    %5775 = vmatprep.subr.mxu0 0.0
    %5776 = vmatpush2.msra.mxu0 0.0
    %5777 = vmatprep.subr.mxu0 0.0
    %5778 = vmatpush2.msra.mxu0 0.0
    %5779 = vmatprep.subr.mxu0 0.0
    %5780 = vmatpush2.msra.mxu0 0.0
    %5781 = vmatprep.subr.mxu0 0.0
    %5782 = vmatpush2.msra.mxu0 0.0
    %5783 = vmatprep.subr.mxu0 0.0
    %5784 = vmatpush2.msra.mxu0 0.0
    %5785 = vmatprep.subr.mxu0 0.0
    %5786 = vmatpush2.msra.mxu0 0.0
    %5787 = vmatprep.subr.mxu0 0.0
    %5788 = vmatpush2.msra.mxu0 0.0
    %5789 = vmatprep.subr.mxu0 0.0
    %5790 = vmatpush2.msra.mxu0 0.0
    %5791 = vmatprep.mubr.f32.mxu0 0.0
    %v5792 = vand.u32 %v5386, 4294901760
    %5793 = vmatmul.mubr.f32.gmra.mxu0 %v5792
    %v5794 = vpop.f32.mrf.mxu0
    %v5795 = vadd.f32 %v5712, %v5794
    %v5796 = vpop.f32.mrf.mxu0
    %5797 = vdwg.mxu0
    %5798 = vmatprep.subr.mxu0 0.0
    %5799 = vmatpush1.msra.mxu0 0.0
    %5800 = vmatprep.subr.mxu0 0.0
    %5801 = vmatpush1.msra.mxu0 0.0
    %5802 = vmatprep.subr.mxu0 0.0
    %5803 = vmatpush1.msra.mxu0 0.0
    %5804 = vmatprep.subr.mxu0 0.0
    %5805 = vmatpush1.msra.mxu0 0.0
    %5806 = vmatprep.subr.mxu0 0.0
    %5807 = vmatpush1.msra.mxu0 0.0
    %5808 = vmatprep.subr.mxu0 0.0
    %5809 = vmatpush1.msra.mxu0 0.0
    %5810 = vmatprep.subr.mxu0 0.0
    %5811 = vmatpush1.msra.mxu0 0.0
    %5812 = vmatprep.subr.mxu0 0.0
    %5813 = vmatpush1.msra.mxu0 0.0
    %5814 = vmatprep.subr.mxu0 0.0
    %5815 = vmatpush1.msra.mxu0 0.0
    %5816 = vmatprep.subr.mxu0 0.0
    %5817 = vmatpush1.msra.mxu0 0.0
    %5818 = vmatprep.subr.mxu0 0.0
    %5819 = vmatpush1.msra.mxu0 0.0
    %5820 = vmatprep.subr.mxu0 0.0
    %5821 = vmatpush1.msra.mxu0 0.0
    %5822 = vmatprep.subr.mxu0 0.0
    %v5823 = vand.u32 %v4862, 4294901760
    %5824 = vmatpush1.msra.mxu0 %v5823
    %5825 = vmatprep.subr.mxu0 0.0
    %v5826 = vand.u32 %v4861, 4294901760
    %5827 = vmatpush1.msra.mxu0 %v5826
    %5828 = vmatprep.subr.mxu0 0.0
    %v5829 = vand.u32 %v4860, 4294901760
    %5830 = vmatpush1.msra.mxu0 %v5829
    %5831 = vmatprep.subr.mxu0 0.0
    %v5832 = vand.u32 %v4859, 4294901760
    %5833 = vmatpush1.msra.mxu0 %v5832
    %5834 = vmatprep.subr.mxu0 0.0
    %5835 = vmatpush2.msra.mxu0 0.0
    %5836 = vmatprep.subr.mxu0 0.0
    %5837 = vmatpush2.msra.mxu0 0.0
    %5838 = vmatprep.subr.mxu0 0.0
    %5839 = vmatpush2.msra.mxu0 0.0
    %5840 = vmatprep.subr.mxu0 0.0
    %5841 = vmatpush2.msra.mxu0 0.0
    %5842 = vmatprep.subr.mxu0 0.0
    %5843 = vmatpush2.msra.mxu0 0.0
    %5844 = vmatprep.subr.mxu0 0.0
    %5845 = vmatpush2.msra.mxu0 0.0
    %5846 = vmatprep.subr.mxu0 0.0
    %5847 = vmatpush2.msra.mxu0 0.0
    %5848 = vmatprep.subr.mxu0 0.0
    %5849 = vmatpush2.msra.mxu0 0.0
    %5850 = vmatprep.subr.mxu0 0.0
    %5851 = vmatpush2.msra.mxu0 0.0
    %5852 = vmatprep.subr.mxu0 0.0
    %5853 = vmatpush2.msra.mxu0 0.0
    %5854 = vmatprep.subr.mxu0 0.0
    %5855 = vmatpush2.msra.mxu0 0.0
    %5856 = vmatprep.subr.mxu0 0.0
    %5857 = vmatpush2.msra.mxu0 0.0
    %5858 = vmatprep.subr.mxu0 0.0
    %5859 = vmatpush2.msra.mxu0 0.0
    %5860 = vmatprep.subr.mxu0 0.0
    %5861 = vmatpush2.msra.mxu0 0.0
    %5862 = vmatprep.subr.mxu0 0.0
    %5863 = vmatpush2.msra.mxu0 0.0
    %5864 = vmatprep.subr.mxu0 0.0
    %5865 = vmatpush2.msra.mxu0 0.0
    %5866 = vmatprep.mubr.f32.mxu0 0.0
    %v5867 = vand.u32 %v5386, 4294901760
    %5868 = vmatmul.mubr.f32.gmra.mxu0 %v5867
    %v5869 = vpop.f32.mrf.mxu0
    %v5870 = vadd.f32 %v5795, %v5869
    %v5871 = vpop.f32.mrf.mxu0
    %5872 = vdwg.mxu0
    %v5874 = vrot.slane %v5870, 4
    %v5876 = vadd.f32 %v5382, %v5874
    %v5877 = vsub.f32 0.0, %v5876
    %v5878 = vmul.f32 %v5877, 1.442695
    %v5879 = vpow.pop %v5878
    %v5880 = vadd.f32 %v5879, 1.0
    %v5881 = vrcp.pop %v5880
    %v5882 = vmul.f32 1.0, %v5881
    %v5883 = vtanh.pop %v5876
    %v5885 = vrot.slane %v5370, 2
    %v5887 = vmul.f32 %v5882, %v5885
    %5889 = vrot.lane.b32.xlu0 %v5883, 64
    %v5890 = vpop.permute.xlu0 %5889
    %v5892 = vmul.f32 %v5882, %v5890
    %5894 = vrot.lane.b32.xlu0 %v5892, 32
    %v5895 = vpop.permute.xlu0 %5894
    %v5897 = vadd.f32 %v5887, %v5895
    %v5898 = vtanh.pop %v5897
    %5900 = vrot.lane.b32.xlu0 %v5898, 64
    %v5901 = vpop.permute.xlu0 %5900
    %v5903 = vmul.f32 %v5882, %v5901
    %5905 = vrot.lane.b32.xlu0 %v5903, 32
    %v5906 = vpop.permute.xlu0 %5905
    %5908 = vst.msk [vmem:[#allocation4 + $0x8] sm:$0x30] %vm2227, %v5906
    %v5909 = vld [vmem:[#allocation2 + $0x18] sm:$0xc]
    %v5910 = vrot.slane %v5903, 4
    %5911 = vrot.lane.b32.xlu0 %v5910, 32
    %v5912 = vpop.permute.xlu0 %5911
    %v5913 = vsel %vm656, %v5912, 0
    %5915 = vmatprep.subr.mxu0 0.0
    %5916 = vmatpush1.msra.mxu0 0.0
    %5917 = vmatprep.subr.mxu0 0.0
    %5918 = vmatpush1.msra.mxu0 0.0
    %5919 = vmatprep.subr.mxu0 0.0
    %5920 = vmatpush1.msra.mxu0 0.0
    %5921 = vmatprep.subr.mxu0 0.0
    %5922 = vmatpush1.msra.mxu0 0.0
    %5923 = vmatprep.subr.mxu0 0.0
    %5924 = vmatpush1.msra.mxu0 0.0
    %5925 = vmatprep.subr.mxu0 0.0
    %5926 = vmatpush1.msra.mxu0 0.0
    %5927 = vmatprep.subr.mxu0 0.0
    %5928 = vmatpush1.msra.mxu0 0.0
    %5929 = vmatprep.subr.mxu0 0.0
    %5930 = vmatpush1.msra.mxu0 0.0
    %5931 = vmatprep.subr.mxu0 0.0
    %5932 = vmatpush1.msra.mxu0 0.0
    %5933 = vmatprep.subr.mxu0 0.0
    %5934 = vmatpush1.msra.mxu0 0.0
    %5935 = vmatprep.subr.mxu0 0.0
    %5936 = vmatpush1.msra.mxu0 0.0
    %5937 = vmatprep.subr.mxu0 0.0
    %5938 = vmatpush1.msra.mxu0 0.0
    %5939 = vmatprep.subr.mxu0 0.0
    %v5940 = vand.u32 %v4862, 4294901760
    %5941 = vmatpush1.msra.mxu0 %v5940
    %5942 = vmatprep.subr.mxu0 0.0
    %v5943 = vand.u32 %v4861, 4294901760
    %5944 = vmatpush1.msra.mxu0 %v5943
    %5945 = vmatprep.subr.mxu0 0.0
    %v5946 = vand.u32 %v4860, 4294901760
    %5947 = vmatpush1.msra.mxu0 %v5946
    %5948 = vmatprep.subr.mxu0 0.0
    %v5949 = vand.u32 %v4859, 4294901760
    %5950 = vmatpush1.msra.mxu0 %v5949
    %5951 = vmatprep.subr.mxu0 0.0
    %5952 = vmatpush2.msra.mxu0 0.0
    %5953 = vmatprep.subr.mxu0 0.0
    %5954 = vmatpush2.msra.mxu0 0.0
    %5955 = vmatprep.subr.mxu0 0.0
    %5956 = vmatpush2.msra.mxu0 0.0
    %5957 = vmatprep.subr.mxu0 0.0
    %5958 = vmatpush2.msra.mxu0 0.0
    %5959 = vmatprep.subr.mxu0 0.0
    %5960 = vmatpush2.msra.mxu0 0.0
    %5961 = vmatprep.subr.mxu0 0.0
    %5962 = vmatpush2.msra.mxu0 0.0
    %5963 = vmatprep.subr.mxu0 0.0
    %5964 = vmatpush2.msra.mxu0 0.0
    %5965 = vmatprep.subr.mxu0 0.0
    %5966 = vmatpush2.msra.mxu0 0.0
    %5967 = vmatprep.subr.mxu0 0.0
    %5968 = vmatpush2.msra.mxu0 0.0
    %5969 = vmatprep.subr.mxu0 0.0
    %5970 = vmatpush2.msra.mxu0 0.0
    %5971 = vmatprep.subr.mxu0 0.0
    %5972 = vmatpush2.msra.mxu0 0.0
    %5973 = vmatprep.subr.mxu0 0.0
    %5974 = vmatpush2.msra.mxu0 0.0
    %5975 = vmatprep.subr.mxu0 0.0
    %5976 = vmatpush2.msra.mxu0 0.0
    %5977 = vmatprep.subr.mxu0 0.0
    %5978 = vmatpush2.msra.mxu0 0.0
    %5979 = vmatprep.subr.mxu0 0.0
    %5980 = vmatpush2.msra.mxu0 0.0
    %5981 = vmatprep.subr.mxu0 0.0
    %5982 = vmatpush2.msra.mxu0 0.0
    %5983 = vmatprep.mubr.f32.mxu0 0.0
    %v5984 = vand.u32 %v5913, 4294901760
    %v5985 = vsub.f32 %v5913, %v5984
    %v5986 = vand.u32 %v5985, 4294901760
    %v5987 = vsub.f32 %v5985, %v5986
    %v5988 = vand.u32 %v5987, 4294901760
    %5989 = vmatmul.mubr.f32.gmra.mxu0 %v5988
    %v5990 = vpop.f32.mrf.mxu0
    %v5991 = vadd.f32 0.0, %v5990
    %v5992 = vpop.f32.mrf.mxu0
    %5993 = vdwg.mxu0
    %5994 = vmatprep.subr.mxu0 0.0
    %5995 = vmatpush1.msra.mxu0 0.0
    %5996 = vmatprep.subr.mxu0 0.0
    %5997 = vmatpush1.msra.mxu0 0.0
    %5998 = vmatprep.subr.mxu0 0.0
    %5999 = vmatpush1.msra.mxu0 0.0
    %6000 = vmatprep.subr.mxu0 0.0
    %6001 = vmatpush1.msra.mxu0 0.0
    %6002 = vmatprep.subr.mxu0 0.0
    %6003 = vmatpush1.msra.mxu0 0.0
    %6004 = vmatprep.subr.mxu0 0.0
    %6005 = vmatpush1.msra.mxu0 0.0
    %6006 = vmatprep.subr.mxu0 0.0
    %6007 = vmatpush1.msra.mxu0 0.0
    %6008 = vmatprep.subr.mxu0 0.0
    %6009 = vmatpush1.msra.mxu0 0.0
    %6010 = vmatprep.subr.mxu0 0.0
    %6011 = vmatpush1.msra.mxu0 0.0
    %6012 = vmatprep.subr.mxu0 0.0
    %6013 = vmatpush1.msra.mxu0 0.0
    %6014 = vmatprep.subr.mxu0 0.0
    %6015 = vmatpush1.msra.mxu0 0.0
    %6016 = vmatprep.subr.mxu0 0.0
    %6017 = vmatpush1.msra.mxu0 0.0
    %6018 = vmatprep.subr.mxu0 0.0
    %v6019 = vand.u32 %v4862, 4294901760
    %v6020 = vsub.f32 %v4862, %v6019
    %v6021 = vand.u32 %v6020, 4294901760
    %v6022 = vsub.f32 %v6020, %v6021
    %v6023 = vand.u32 %v6022, 4294901760
    %6024 = vmatpush1.msra.mxu0 %v6023
    %6025 = vmatprep.subr.mxu0 0.0
    %v6026 = vand.u32 %v4861, 4294901760
    %v6027 = vsub.f32 %v4861, %v6026
    %v6028 = vand.u32 %v6027, 4294901760
    %v6029 = vsub.f32 %v6027, %v6028
    %v6030 = vand.u32 %v6029, 4294901760
    %6031 = vmatpush1.msra.mxu0 %v6030
    %6032 = vmatprep.subr.mxu0 0.0
    %v6033 = vand.u32 %v4860, 4294901760
    %v6034 = vsub.f32 %v4860, %v6033
    %v6035 = vand.u32 %v6034, 4294901760
    %v6036 = vsub.f32 %v6034, %v6035
    %v6037 = vand.u32 %v6036, 4294901760
    %6038 = vmatpush1.msra.mxu0 %v6037
    %6039 = vmatprep.subr.mxu0 0.0
    %v6040 = vand.u32 %v4859, 4294901760
    %v6041 = vsub.f32 %v4859, %v6040
    %v6042 = vand.u32 %v6041, 4294901760
    %v6043 = vsub.f32 %v6041, %v6042
    %v6044 = vand.u32 %v6043, 4294901760
    %6045 = vmatpush1.msra.mxu0 %v6044
    %6046 = vmatprep.subr.mxu0 0.0
    %6047 = vmatpush2.msra.mxu0 0.0
    %6048 = vmatprep.subr.mxu0 0.0
    %6049 = vmatpush2.msra.mxu0 0.0
    %6050 = vmatprep.subr.mxu0 0.0
    %6051 = vmatpush2.msra.mxu0 0.0
    %6052 = vmatprep.subr.mxu0 0.0
    %6053 = vmatpush2.msra.mxu0 0.0
    %6054 = vmatprep.subr.mxu0 0.0
    %6055 = vmatpush2.msra.mxu0 0.0
    %6056 = vmatprep.subr.mxu0 0.0
    %6057 = vmatpush2.msra.mxu0 0.0
    %6058 = vmatprep.subr.mxu0 0.0
    %6059 = vmatpush2.msra.mxu0 0.0
    %6060 = vmatprep.subr.mxu0 0.0
    %6061 = vmatpush2.msra.mxu0 0.0
    %6062 = vmatprep.subr.mxu0 0.0
    %6063 = vmatpush2.msra.mxu0 0.0
    %6064 = vmatprep.subr.mxu0 0.0
    %6065 = vmatpush2.msra.mxu0 0.0
    %6066 = vmatprep.subr.mxu0 0.0
    %6067 = vmatpush2.msra.mxu0 0.0
    %6068 = vmatprep.subr.mxu0 0.0
    %6069 = vmatpush2.msra.mxu0 0.0
    %6070 = vmatprep.subr.mxu0 0.0
    %6071 = vmatpush2.msra.mxu0 0.0
    %6072 = vmatprep.subr.mxu0 0.0
    %6073 = vmatpush2.msra.mxu0 0.0
    %6074 = vmatprep.subr.mxu0 0.0
    %6075 = vmatpush2.msra.mxu0 0.0
    %6076 = vmatprep.subr.mxu0 0.0
    %6077 = vmatpush2.msra.mxu0 0.0
    %6078 = vmatprep.mubr.f32.mxu0 0.0
    %v6079 = vand.u32 %v5913, 4294901760
    %6080 = vmatmul.mubr.f32.gmra.mxu0 %v6079
    %v6081 = vpop.f32.mrf.mxu0
    %v6082 = vadd.f32 %v5991, %v6081
    %v6083 = vpop.f32.mrf.mxu0
    %6084 = vdwg.mxu0
    %6085 = vmatprep.subr.mxu0 0.0
    %6086 = vmatpush1.msra.mxu0 0.0
    %6087 = vmatprep.subr.mxu0 0.0
    %6088 = vmatpush1.msra.mxu0 0.0
    %6089 = vmatprep.subr.mxu0 0.0
    %6090 = vmatpush1.msra.mxu0 0.0
    %6091 = vmatprep.subr.mxu0 0.0
    %6092 = vmatpush1.msra.mxu0 0.0
    %6093 = vmatprep.subr.mxu0 0.0
    %6094 = vmatpush1.msra.mxu0 0.0
    %6095 = vmatprep.subr.mxu0 0.0
    %6096 = vmatpush1.msra.mxu0 0.0
    %6097 = vmatprep.subr.mxu0 0.0
    %6098 = vmatpush1.msra.mxu0 0.0
    %6099 = vmatprep.subr.mxu0 0.0
    %6100 = vmatpush1.msra.mxu0 0.0
    %6101 = vmatprep.subr.mxu0 0.0
    %6102 = vmatpush1.msra.mxu0 0.0
    %6103 = vmatprep.subr.mxu0 0.0
    %6104 = vmatpush1.msra.mxu0 0.0
    %6105 = vmatprep.subr.mxu0 0.0
    %6106 = vmatpush1.msra.mxu0 0.0
    %6107 = vmatprep.subr.mxu0 0.0
    %6108 = vmatpush1.msra.mxu0 0.0
    %6109 = vmatprep.subr.mxu0 0.0
    %v6110 = vand.u32 %v4862, 4294901760
    %v6111 = vsub.f32 %v4862, %v6110
    %6112 = vmatpush1.msra.mxu0 %v6111
    %6113 = vmatprep.subr.mxu0 0.0
    %v6114 = vand.u32 %v4861, 4294901760
    %v6115 = vsub.f32 %v4861, %v6114
    %6116 = vmatpush1.msra.mxu0 %v6115
    %6117 = vmatprep.subr.mxu0 0.0
    %v6118 = vand.u32 %v4860, 4294901760
    %v6119 = vsub.f32 %v4860, %v6118
    %6120 = vmatpush1.msra.mxu0 %v6119
    %6121 = vmatprep.subr.mxu0 0.0
    %v6122 = vand.u32 %v4859, 4294901760
    %v6123 = vsub.f32 %v4859, %v6122
    %6124 = vmatpush1.msra.mxu0 %v6123
    %6125 = vmatprep.subr.mxu0 0.0
    %6126 = vmatpush2.msra.mxu0 0.0
    %6127 = vmatprep.subr.mxu0 0.0
    %6128 = vmatpush2.msra.mxu0 0.0
    %6129 = vmatprep.subr.mxu0 0.0
    %6130 = vmatpush2.msra.mxu0 0.0
    %6131 = vmatprep.subr.mxu0 0.0
    %6132 = vmatpush2.msra.mxu0 0.0
    %6133 = vmatprep.subr.mxu0 0.0
    %6134 = vmatpush2.msra.mxu0 0.0
    %6135 = vmatprep.subr.mxu0 0.0
    %6136 = vmatpush2.msra.mxu0 0.0
    %6137 = vmatprep.subr.mxu0 0.0
    %6138 = vmatpush2.msra.mxu0 0.0
    %6139 = vmatprep.subr.mxu0 0.0
    %6140 = vmatpush2.msra.mxu0 0.0
    %6141 = vmatprep.subr.mxu0 0.0
    %6142 = vmatpush2.msra.mxu0 0.0
    %6143 = vmatprep.subr.mxu0 0.0
    %6144 = vmatpush2.msra.mxu0 0.0
    %6145 = vmatprep.subr.mxu0 0.0
    %6146 = vmatpush2.msra.mxu0 0.0
    %6147 = vmatprep.subr.mxu0 0.0
    %6148 = vmatpush2.msra.mxu0 0.0
    %6149 = vmatprep.subr.mxu0 0.0
    %6150 = vmatpush2.msra.mxu0 0.0
    %6151 = vmatprep.subr.mxu0 0.0
    %6152 = vmatpush2.msra.mxu0 0.0
    %6153 = vmatprep.subr.mxu0 0.0
    %6154 = vmatpush2.msra.mxu0 0.0
    %6155 = vmatprep.subr.mxu0 0.0
    %6156 = vmatpush2.msra.mxu0 0.0
    %6157 = vmatprep.mubr.f32.mxu0 0.0
    %v6158 = vand.u32 %v5913, 4294901760
    %v6159 = vsub.f32 %v5913, %v6158
    %6160 = vmatmul.mubr.f32.gmra.mxu0 %v6159
    %v6161 = vpop.f32.mrf.mxu0
    %v6162 = vadd.f32 %v6082, %v6161
    %v6163 = vpop.f32.mrf.mxu0
    %6164 = vdwg.mxu0
    %6165 = vmatprep.subr.mxu0 0.0
    %6166 = vmatpush1.msra.mxu0 0.0
    %6167 = vmatprep.subr.mxu0 0.0
    %6168 = vmatpush1.msra.mxu0 0.0
    %6169 = vmatprep.subr.mxu0 0.0
    %6170 = vmatpush1.msra.mxu0 0.0
    %6171 = vmatprep.subr.mxu0 0.0
    %6172 = vmatpush1.msra.mxu0 0.0
    %6173 = vmatprep.subr.mxu0 0.0
    %6174 = vmatpush1.msra.mxu0 0.0
    %6175 = vmatprep.subr.mxu0 0.0
    %6176 = vmatpush1.msra.mxu0 0.0
    %6177 = vmatprep.subr.mxu0 0.0
    %6178 = vmatpush1.msra.mxu0 0.0
    %6179 = vmatprep.subr.mxu0 0.0
    %6180 = vmatpush1.msra.mxu0 0.0
    %6181 = vmatprep.subr.mxu0 0.0
    %6182 = vmatpush1.msra.mxu0 0.0
    %6183 = vmatprep.subr.mxu0 0.0
    %6184 = vmatpush1.msra.mxu0 0.0
    %6185 = vmatprep.subr.mxu0 0.0
    %6186 = vmatpush1.msra.mxu0 0.0
    %6187 = vmatprep.subr.mxu0 0.0
    %6188 = vmatpush1.msra.mxu0 0.0
    %6189 = vmatprep.subr.mxu0 0.0
    %v6190 = vand.u32 %v4862, 4294901760
    %6191 = vmatpush1.msra.mxu0 %v6190
    %6192 = vmatprep.subr.mxu0 0.0
    %v6193 = vand.u32 %v4861, 4294901760
    %6194 = vmatpush1.msra.mxu0 %v6193
    %6195 = vmatprep.subr.mxu0 0.0
    %v6196 = vand.u32 %v4860, 4294901760
    %6197 = vmatpush1.msra.mxu0 %v6196
    %6198 = vmatprep.subr.mxu0 0.0
    %v6199 = vand.u32 %v4859, 4294901760
    %6200 = vmatpush1.msra.mxu0 %v6199
    %6201 = vmatprep.subr.mxu0 0.0
    %6202 = vmatpush2.msra.mxu0 0.0
    %6203 = vmatprep.subr.mxu0 0.0
    %6204 = vmatpush2.msra.mxu0 0.0
    %6205 = vmatprep.subr.mxu0 0.0
    %6206 = vmatpush2.msra.mxu0 0.0
    %6207 = vmatprep.subr.mxu0 0.0
    %6208 = vmatpush2.msra.mxu0 0.0
    %6209 = vmatprep.subr.mxu0 0.0
    %6210 = vmatpush2.msra.mxu0 0.0
    %6211 = vmatprep.subr.mxu0 0.0
    %6212 = vmatpush2.msra.mxu0 0.0
    %6213 = vmatprep.subr.mxu0 0.0
    %6214 = vmatpush2.msra.mxu0 0.0
    %6215 = vmatprep.subr.mxu0 0.0
    %6216 = vmatpush2.msra.mxu0 0.0
    %6217 = vmatprep.subr.mxu0 0.0
    %6218 = vmatpush2.msra.mxu0 0.0
    %6219 = vmatprep.subr.mxu0 0.0
    %6220 = vmatpush2.msra.mxu0 0.0
    %6221 = vmatprep.subr.mxu0 0.0
    %6222 = vmatpush2.msra.mxu0 0.0
    %6223 = vmatprep.subr.mxu0 0.0
    %6224 = vmatpush2.msra.mxu0 0.0
    %6225 = vmatprep.subr.mxu0 0.0
    %6226 = vmatpush2.msra.mxu0 0.0
    %6227 = vmatprep.subr.mxu0 0.0
    %6228 = vmatpush2.msra.mxu0 0.0
    %6229 = vmatprep.subr.mxu0 0.0
    %6230 = vmatpush2.msra.mxu0 0.0
    %6231 = vmatprep.subr.mxu0 0.0
    %6232 = vmatpush2.msra.mxu0 0.0
    %6233 = vmatprep.mubr.f32.mxu0 0.0
    %v6234 = vand.u32 %v5913, 4294901760
    %v6235 = vsub.f32 %v5913, %v6234
    %v6236 = vand.u32 %v6235, 4294901760
    %6237 = vmatmul.mubr.f32.gmra.mxu0 %v6236
    %v6238 = vpop.f32.mrf.mxu0
    %v6239 = vadd.f32 %v6162, %v6238
    %v6240 = vpop.f32.mrf.mxu0
    %6241 = vdwg.mxu0
    %6242 = vmatprep.subr.mxu0 0.0
    %6243 = vmatpush1.msra.mxu0 0.0
    %6244 = vmatprep.subr.mxu0 0.0
    %6245 = vmatpush1.msra.mxu0 0.0
    %6246 = vmatprep.subr.mxu0 0.0
    %6247 = vmatpush1.msra.mxu0 0.0
    %6248 = vmatprep.subr.mxu0 0.0
    %6249 = vmatpush1.msra.mxu0 0.0
    %6250 = vmatprep.subr.mxu0 0.0
    %6251 = vmatpush1.msra.mxu0 0.0
    %6252 = vmatprep.subr.mxu0 0.0
    %6253 = vmatpush1.msra.mxu0 0.0
    %6254 = vmatprep.subr.mxu0 0.0
    %6255 = vmatpush1.msra.mxu0 0.0
    %6256 = vmatprep.subr.mxu0 0.0
    %6257 = vmatpush1.msra.mxu0 0.0
    %6258 = vmatprep.subr.mxu0 0.0
    %6259 = vmatpush1.msra.mxu0 0.0
    %6260 = vmatprep.subr.mxu0 0.0
    %6261 = vmatpush1.msra.mxu0 0.0
    %6262 = vmatprep.subr.mxu0 0.0
    %6263 = vmatpush1.msra.mxu0 0.0
    %6264 = vmatprep.subr.mxu0 0.0
    %6265 = vmatpush1.msra.mxu0 0.0
    %6266 = vmatprep.subr.mxu0 0.0
    %v6267 = vand.u32 %v4862, 4294901760
    %v6268 = vsub.f32 %v4862, %v6267
    %v6269 = vand.u32 %v6268, 4294901760
    %6270 = vmatpush1.msra.mxu0 %v6269
    %6271 = vmatprep.subr.mxu0 0.0
    %v6272 = vand.u32 %v4861, 4294901760
    %v6273 = vsub.f32 %v4861, %v6272
    %v6274 = vand.u32 %v6273, 4294901760
    %6275 = vmatpush1.msra.mxu0 %v6274
    %6276 = vmatprep.subr.mxu0 0.0
    %v6277 = vand.u32 %v4860, 4294901760
    %v6278 = vsub.f32 %v4860, %v6277
    %v6279 = vand.u32 %v6278, 4294901760
    %6280 = vmatpush1.msra.mxu0 %v6279
    %6281 = vmatprep.subr.mxu0 0.0
    %v6282 = vand.u32 %v4859, 4294901760
    %v6283 = vsub.f32 %v4859, %v6282
    %v6284 = vand.u32 %v6283, 4294901760
    %6285 = vmatpush1.msra.mxu0 %v6284
    %6286 = vmatprep.subr.mxu0 0.0
    %6287 = vmatpush2.msra.mxu0 0.0
    %6288 = vmatprep.subr.mxu0 0.0
    %6289 = vmatpush2.msra.mxu0 0.0
    %6290 = vmatprep.subr.mxu0 0.0
    %6291 = vmatpush2.msra.mxu0 0.0
    %6292 = vmatprep.subr.mxu0 0.0
    %6293 = vmatpush2.msra.mxu0 0.0
    %6294 = vmatprep.subr.mxu0 0.0
    %6295 = vmatpush2.msra.mxu0 0.0
    %6296 = vmatprep.subr.mxu0 0.0
    %6297 = vmatpush2.msra.mxu0 0.0
    %6298 = vmatprep.subr.mxu0 0.0
    %6299 = vmatpush2.msra.mxu0 0.0
    %6300 = vmatprep.subr.mxu0 0.0
    %6301 = vmatpush2.msra.mxu0 0.0
    %6302 = vmatprep.subr.mxu0 0.0
    %6303 = vmatpush2.msra.mxu0 0.0
    %6304 = vmatprep.subr.mxu0 0.0
    %6305 = vmatpush2.msra.mxu0 0.0
    %6306 = vmatprep.subr.mxu0 0.0
    %6307 = vmatpush2.msra.mxu0 0.0
    %6308 = vmatprep.subr.mxu0 0.0
    %6309 = vmatpush2.msra.mxu0 0.0
    %6310 = vmatprep.subr.mxu0 0.0
    %6311 = vmatpush2.msra.mxu0 0.0
    %6312 = vmatprep.subr.mxu0 0.0
    %6313 = vmatpush2.msra.mxu0 0.0
    %6314 = vmatprep.subr.mxu0 0.0
    %6315 = vmatpush2.msra.mxu0 0.0
    %6316 = vmatprep.subr.mxu0 0.0
    %6317 = vmatpush2.msra.mxu0 0.0
    %6318 = vmatprep.mubr.f32.mxu0 0.0
    %v6319 = vand.u32 %v5913, 4294901760
    %6320 = vmatmul.mubr.f32.gmra.mxu0 %v6319
    %v6321 = vpop.f32.mrf.mxu0
    %v6322 = vadd.f32 %v6239, %v6321
    %v6323 = vpop.f32.mrf.mxu0
    %6324 = vdwg.mxu0
    %6325 = vmatprep.subr.mxu0 0.0
    %6326 = vmatpush1.msra.mxu0 0.0
    %6327 = vmatprep.subr.mxu0 0.0
    %6328 = vmatpush1.msra.mxu0 0.0
    %6329 = vmatprep.subr.mxu0 0.0
    %6330 = vmatpush1.msra.mxu0 0.0
    %6331 = vmatprep.subr.mxu0 0.0
    %6332 = vmatpush1.msra.mxu0 0.0
    %6333 = vmatprep.subr.mxu0 0.0
    %6334 = vmatpush1.msra.mxu0 0.0
    %6335 = vmatprep.subr.mxu0 0.0
    %6336 = vmatpush1.msra.mxu0 0.0
    %6337 = vmatprep.subr.mxu0 0.0
    %6338 = vmatpush1.msra.mxu0 0.0
    %6339 = vmatprep.subr.mxu0 0.0
    %6340 = vmatpush1.msra.mxu0 0.0
    %6341 = vmatprep.subr.mxu0 0.0
    %6342 = vmatpush1.msra.mxu0 0.0
    %6343 = vmatprep.subr.mxu0 0.0
    %6344 = vmatpush1.msra.mxu0 0.0
    %6345 = vmatprep.subr.mxu0 0.0
    %6346 = vmatpush1.msra.mxu0 0.0
    %6347 = vmatprep.subr.mxu0 0.0
    %6348 = vmatpush1.msra.mxu0 0.0
    %6349 = vmatprep.subr.mxu0 0.0
    %v6350 = vand.u32 %v4862, 4294901760
    %6351 = vmatpush1.msra.mxu0 %v6350
    %6352 = vmatprep.subr.mxu0 0.0
    %v6353 = vand.u32 %v4861, 4294901760
    %6354 = vmatpush1.msra.mxu0 %v6353
    %6355 = vmatprep.subr.mxu0 0.0
    %v6356 = vand.u32 %v4860, 4294901760
    %6357 = vmatpush1.msra.mxu0 %v6356
    %6358 = vmatprep.subr.mxu0 0.0
    %v6359 = vand.u32 %v4859, 4294901760
    %6360 = vmatpush1.msra.mxu0 %v6359
    %6361 = vmatprep.subr.mxu0 0.0
    %6362 = vmatpush2.msra.mxu0 0.0
    %6363 = vmatprep.subr.mxu0 0.0
    %6364 = vmatpush2.msra.mxu0 0.0
    %6365 = vmatprep.subr.mxu0 0.0
    %6366 = vmatpush2.msra.mxu0 0.0
    %6367 = vmatprep.subr.mxu0 0.0
    %6368 = vmatpush2.msra.mxu0 0.0
    %6369 = vmatprep.subr.mxu0 0.0
    %6370 = vmatpush2.msra.mxu0 0.0
    %6371 = vmatprep.subr.mxu0 0.0
    %6372 = vmatpush2.msra.mxu0 0.0
    %6373 = vmatprep.subr.mxu0 0.0
    %6374 = vmatpush2.msra.mxu0 0.0
    %6375 = vmatprep.subr.mxu0 0.0
    %6376 = vmatpush2.msra.mxu0 0.0
    %6377 = vmatprep.subr.mxu0 0.0
    %6378 = vmatpush2.msra.mxu0 0.0
    %6379 = vmatprep.subr.mxu0 0.0
    %6380 = vmatpush2.msra.mxu0 0.0
    %6381 = vmatprep.subr.mxu0 0.0
    %6382 = vmatpush2.msra.mxu0 0.0
    %6383 = vmatprep.subr.mxu0 0.0
    %6384 = vmatpush2.msra.mxu0 0.0
    %6385 = vmatprep.subr.mxu0 0.0
    %6386 = vmatpush2.msra.mxu0 0.0
    %6387 = vmatprep.subr.mxu0 0.0
    %6388 = vmatpush2.msra.mxu0 0.0
    %6389 = vmatprep.subr.mxu0 0.0
    %6390 = vmatpush2.msra.mxu0 0.0
    %6391 = vmatprep.subr.mxu0 0.0
    %6392 = vmatpush2.msra.mxu0 0.0
    %6393 = vmatprep.mubr.f32.mxu0 0.0
    %v6394 = vand.u32 %v5913, 4294901760
    %6395 = vmatmul.mubr.f32.gmra.mxu0 %v6394
    %v6396 = vpop.f32.mrf.mxu0
    %v6397 = vadd.f32 %v6322, %v6396
    %v6398 = vpop.f32.mrf.mxu0
    %6399 = vdwg.mxu0
    %v6401 = vrot.slane %v6397, 6
    %v6403 = vadd.f32 %v5909, %v6401
    %v6404 = vsub.f32 0.0, %v6403
    %v6405 = vmul.f32 %v6404, 1.442695
    %v6406 = vpow.pop %v6405
    %v6407 = vadd.f32 %v6406, 1.0
    %v6408 = vrcp.pop %v6407
    %v6409 = vmul.f32 1.0, %v6408
    %v6410 = vtanh.pop %v6403
    %v6412 = vrot.slane %v5897, 2
    %v6414 = vmul.f32 %v6409, %v6412
    %6416 = vrot.lane.b32.xlu0 %v6410, 64
    %v6417 = vpop.permute.xlu0 %6416
    %v6419 = vmul.f32 %v6409, %v6417
    %6421 = vrot.lane.b32.xlu0 %v6419, 32
    %v6422 = vpop.permute.xlu0 %6421
    %v6424 = vadd.f32 %v6414, %v6422
    %v6425 = vtanh.pop %v6424
    %6427 = vrot.lane.b32.xlu0 %v6425, 64
    %v6428 = vpop.permute.xlu0 %6427
    %v6430 = vmul.f32 %v6409, %v6428
    %6432 = vrot.lane.b32.xlu0 %v6430, 32
    %v6433 = vpop.permute.xlu0 %6432
    %6435 = vst.msk [vmem:[#allocation4 + $0x8] sm:$0xc] %vm1699, %v6433
    %v6436 = vld [vmem:[#allocation2 + $0x18] sm:$0x3]
    %v6437 = vrot.slane %v6430, 2
    %6438 = vrot.lane.b32.xlu0 %v6437, 32
    %v6439 = vpop.permute.xlu0 %6438
    %v6440 = vsel %vm656, %v6439, 0
    %6442 = vmatprep.subr.mxu0 0.0
    %6443 = vmatpush1.msra.mxu0 0.0
    %6444 = vmatprep.subr.mxu0 0.0
    %6445 = vmatpush1.msra.mxu0 0.0
    %6446 = vmatprep.subr.mxu0 0.0
    %6447 = vmatpush1.msra.mxu0 0.0
    %6448 = vmatprep.subr.mxu0 0.0
    %6449 = vmatpush1.msra.mxu0 0.0
    %6450 = vmatprep.subr.mxu0 0.0
    %6451 = vmatpush1.msra.mxu0 0.0
    %6452 = vmatprep.subr.mxu0 0.0
    %6453 = vmatpush1.msra.mxu0 0.0
    %6454 = vmatprep.subr.mxu0 0.0
    %6455 = vmatpush1.msra.mxu0 0.0
    %6456 = vmatprep.subr.mxu0 0.0
    %6457 = vmatpush1.msra.mxu0 0.0
    %6458 = vmatprep.subr.mxu0 0.0
    %6459 = vmatpush1.msra.mxu0 0.0
    %6460 = vmatprep.subr.mxu0 0.0
    %6461 = vmatpush1.msra.mxu0 0.0
    %6462 = vmatprep.subr.mxu0 0.0
    %6463 = vmatpush1.msra.mxu0 0.0
    %6464 = vmatprep.subr.mxu0 0.0
    %6465 = vmatpush1.msra.mxu0 0.0
    %6466 = vmatprep.subr.mxu0 0.0
    %v6467 = vand.u32 %v4862, 4294901760
    %6468 = vmatpush1.msra.mxu0 %v6467
    %6469 = vmatprep.subr.mxu0 0.0
    %v6470 = vand.u32 %v4861, 4294901760
    %6471 = vmatpush1.msra.mxu0 %v6470
    %6472 = vmatprep.subr.mxu0 0.0
    %v6473 = vand.u32 %v4860, 4294901760
    %6474 = vmatpush1.msra.mxu0 %v6473
    %6475 = vmatprep.subr.mxu0 0.0
    %v6476 = vand.u32 %v4859, 4294901760
    %6477 = vmatpush1.msra.mxu0 %v6476
    %6478 = vmatprep.subr.mxu0 0.0
    %6479 = vmatpush2.msra.mxu0 0.0
    %6480 = vmatprep.subr.mxu0 0.0
    %6481 = vmatpush2.msra.mxu0 0.0
    %6482 = vmatprep.subr.mxu0 0.0
    %6483 = vmatpush2.msra.mxu0 0.0
    %6484 = vmatprep.subr.mxu0 0.0
    %6485 = vmatpush2.msra.mxu0 0.0
    %6486 = vmatprep.subr.mxu0 0.0
    %6487 = vmatpush2.msra.mxu0 0.0
    %6488 = vmatprep.subr.mxu0 0.0
    %6489 = vmatpush2.msra.mxu0 0.0
    %6490 = vmatprep.subr.mxu0 0.0
    %6491 = vmatpush2.msra.mxu0 0.0
    %6492 = vmatprep.subr.mxu0 0.0
    %6493 = vmatpush2.msra.mxu0 0.0
    %6494 = vmatprep.subr.mxu0 0.0
    %6495 = vmatpush2.msra.mxu0 0.0
    %6496 = vmatprep.subr.mxu0 0.0
    %6497 = vmatpush2.msra.mxu0 0.0
    %6498 = vmatprep.subr.mxu0 0.0
    %6499 = vmatpush2.msra.mxu0 0.0
    %6500 = vmatprep.subr.mxu0 0.0
    %6501 = vmatpush2.msra.mxu0 0.0
    %6502 = vmatprep.subr.mxu0 0.0
    %6503 = vmatpush2.msra.mxu0 0.0
    %6504 = vmatprep.subr.mxu0 0.0
    %6505 = vmatpush2.msra.mxu0 0.0
    %6506 = vmatprep.subr.mxu0 0.0
    %6507 = vmatpush2.msra.mxu0 0.0
    %6508 = vmatprep.subr.mxu0 0.0
    %6509 = vmatpush2.msra.mxu0 0.0
    %6510 = vmatprep.mubr.f32.mxu0 0.0
    %v6511 = vand.u32 %v6440, 4294901760
    %v6512 = vsub.f32 %v6440, %v6511
    %v6513 = vand.u32 %v6512, 4294901760
    %v6514 = vsub.f32 %v6512, %v6513
    %v6515 = vand.u32 %v6514, 4294901760
    %6516 = vmatmul.mubr.f32.gmra.mxu0 %v6515
    %v6517 = vpop.f32.mrf.mxu0
    %v6518 = vadd.f32 0.0, %v6517
    %v6519 = vpop.f32.mrf.mxu0
    %6520 = vdwg.mxu0
    %6521 = vmatprep.subr.mxu0 0.0
    %6522 = vmatpush1.msra.mxu0 0.0
    %6523 = vmatprep.subr.mxu0 0.0
    %6524 = vmatpush1.msra.mxu0 0.0
    %6525 = vmatprep.subr.mxu0 0.0
    %6526 = vmatpush1.msra.mxu0 0.0
    %6527 = vmatprep.subr.mxu0 0.0
    %6528 = vmatpush1.msra.mxu0 0.0
    %6529 = vmatprep.subr.mxu0 0.0
    %6530 = vmatpush1.msra.mxu0 0.0
    %6531 = vmatprep.subr.mxu0 0.0
    %6532 = vmatpush1.msra.mxu0 0.0
    %6533 = vmatprep.subr.mxu0 0.0
    %6534 = vmatpush1.msra.mxu0 0.0
    %6535 = vmatprep.subr.mxu0 0.0
    %6536 = vmatpush1.msra.mxu0 0.0
    %6537 = vmatprep.subr.mxu0 0.0
    %6538 = vmatpush1.msra.mxu0 0.0
    %6539 = vmatprep.subr.mxu0 0.0
    %6540 = vmatpush1.msra.mxu0 0.0
    %6541 = vmatprep.subr.mxu0 0.0
    %6542 = vmatpush1.msra.mxu0 0.0
    %6543 = vmatprep.subr.mxu0 0.0
    %6544 = vmatpush1.msra.mxu0 0.0
    %6545 = vmatprep.subr.mxu0 0.0
    %v6546 = vand.u32 %v4862, 4294901760
    %v6547 = vsub.f32 %v4862, %v6546
    %v6548 = vand.u32 %v6547, 4294901760
    %v6549 = vsub.f32 %v6547, %v6548
    %v6550 = vand.u32 %v6549, 4294901760
    %6551 = vmatpush1.msra.mxu0 %v6550
    %6552 = vmatprep.subr.mxu0 0.0
    %v6553 = vand.u32 %v4861, 4294901760
    %v6554 = vsub.f32 %v4861, %v6553
    %v6555 = vand.u32 %v6554, 4294901760
    %v6556 = vsub.f32 %v6554, %v6555
    %v6557 = vand.u32 %v6556, 4294901760
    %6558 = vmatpush1.msra.mxu0 %v6557
    %6559 = vmatprep.subr.mxu0 0.0
    %v6560 = vand.u32 %v4860, 4294901760
    %v6561 = vsub.f32 %v4860, %v6560
    %v6562 = vand.u32 %v6561, 4294901760
    %v6563 = vsub.f32 %v6561, %v6562
    %v6564 = vand.u32 %v6563, 4294901760
    %6565 = vmatpush1.msra.mxu0 %v6564
    %6566 = vmatprep.subr.mxu0 0.0
    %v6567 = vand.u32 %v4859, 4294901760
    %v6568 = vsub.f32 %v4859, %v6567
    %v6569 = vand.u32 %v6568, 4294901760
    %v6570 = vsub.f32 %v6568, %v6569
    %v6571 = vand.u32 %v6570, 4294901760
    %6572 = vmatpush1.msra.mxu0 %v6571
    %6573 = vmatprep.subr.mxu0 0.0
    %6574 = vmatpush2.msra.mxu0 0.0
    %6575 = vmatprep.subr.mxu0 0.0
    %6576 = vmatpush2.msra.mxu0 0.0
    %6577 = vmatprep.subr.mxu0 0.0
    %6578 = vmatpush2.msra.mxu0 0.0
    %6579 = vmatprep.subr.mxu0 0.0
    %6580 = vmatpush2.msra.mxu0 0.0
    %6581 = vmatprep.subr.mxu0 0.0
    %6582 = vmatpush2.msra.mxu0 0.0
    %6583 = vmatprep.subr.mxu0 0.0
    %6584 = vmatpush2.msra.mxu0 0.0
    %6585 = vmatprep.subr.mxu0 0.0
    %6586 = vmatpush2.msra.mxu0 0.0
    %6587 = vmatprep.subr.mxu0 0.0
    %6588 = vmatpush2.msra.mxu0 0.0
    %6589 = vmatprep.subr.mxu0 0.0
    %6590 = vmatpush2.msra.mxu0 0.0
    %6591 = vmatprep.subr.mxu0 0.0
    %6592 = vmatpush2.msra.mxu0 0.0
    %6593 = vmatprep.subr.mxu0 0.0
    %6594 = vmatpush2.msra.mxu0 0.0
    %6595 = vmatprep.subr.mxu0 0.0
    %6596 = vmatpush2.msra.mxu0 0.0
    %6597 = vmatprep.subr.mxu0 0.0
    %6598 = vmatpush2.msra.mxu0 0.0
    %6599 = vmatprep.subr.mxu0 0.0
    %6600 = vmatpush2.msra.mxu0 0.0
    %6601 = vmatprep.subr.mxu0 0.0
    %6602 = vmatpush2.msra.mxu0 0.0
    %6603 = vmatprep.subr.mxu0 0.0
    %6604 = vmatpush2.msra.mxu0 0.0
    %6605 = vmatprep.mubr.f32.mxu0 0.0
    %v6606 = vand.u32 %v6440, 4294901760
    %6607 = vmatmul.mubr.f32.gmra.mxu0 %v6606
    %v6608 = vpop.f32.mrf.mxu0
    %v6609 = vadd.f32 %v6518, %v6608
    %v6610 = vpop.f32.mrf.mxu0
    %6611 = vdwg.mxu0
    %6612 = vmatprep.subr.mxu0 0.0
    %6613 = vmatpush1.msra.mxu0 0.0
    %6614 = vmatprep.subr.mxu0 0.0
    %6615 = vmatpush1.msra.mxu0 0.0
    %6616 = vmatprep.subr.mxu0 0.0
    %6617 = vmatpush1.msra.mxu0 0.0
    %6618 = vmatprep.subr.mxu0 0.0
    %6619 = vmatpush1.msra.mxu0 0.0
    %6620 = vmatprep.subr.mxu0 0.0
    %6621 = vmatpush1.msra.mxu0 0.0
    %6622 = vmatprep.subr.mxu0 0.0
    %6623 = vmatpush1.msra.mxu0 0.0
    %6624 = vmatprep.subr.mxu0 0.0
    %6625 = vmatpush1.msra.mxu0 0.0
    %6626 = vmatprep.subr.mxu0 0.0
    %6627 = vmatpush1.msra.mxu0 0.0
    %6628 = vmatprep.subr.mxu0 0.0
    %6629 = vmatpush1.msra.mxu0 0.0
    %6630 = vmatprep.subr.mxu0 0.0
    %6631 = vmatpush1.msra.mxu0 0.0
    %6632 = vmatprep.subr.mxu0 0.0
    %6633 = vmatpush1.msra.mxu0 0.0
    %6634 = vmatprep.subr.mxu0 0.0
    %6635 = vmatpush1.msra.mxu0 0.0
    %6636 = vmatprep.subr.mxu0 0.0
    %v6637 = vand.u32 %v4862, 4294901760
    %v6638 = vsub.f32 %v4862, %v6637
    %6639 = vmatpush1.msra.mxu0 %v6638
    %6640 = vmatprep.subr.mxu0 0.0
    %v6641 = vand.u32 %v4861, 4294901760
    %v6642 = vsub.f32 %v4861, %v6641
    %6643 = vmatpush1.msra.mxu0 %v6642
    %6644 = vmatprep.subr.mxu0 0.0
    %v6645 = vand.u32 %v4860, 4294901760
    %v6646 = vsub.f32 %v4860, %v6645
    %6647 = vmatpush1.msra.mxu0 %v6646
    %6648 = vmatprep.subr.mxu0 0.0
    %v6649 = vand.u32 %v4859, 4294901760
    %v6650 = vsub.f32 %v4859, %v6649
    %6651 = vmatpush1.msra.mxu0 %v6650
    %6652 = vmatprep.subr.mxu0 0.0
    %6653 = vmatpush2.msra.mxu0 0.0
    %6654 = vmatprep.subr.mxu0 0.0
    %6655 = vmatpush2.msra.mxu0 0.0
    %6656 = vmatprep.subr.mxu0 0.0
    %6657 = vmatpush2.msra.mxu0 0.0
    %6658 = vmatprep.subr.mxu0 0.0
    %6659 = vmatpush2.msra.mxu0 0.0
    %6660 = vmatprep.subr.mxu0 0.0
    %6661 = vmatpush2.msra.mxu0 0.0
    %6662 = vmatprep.subr.mxu0 0.0
    %6663 = vmatpush2.msra.mxu0 0.0
    %6664 = vmatprep.subr.mxu0 0.0
    %6665 = vmatpush2.msra.mxu0 0.0
    %6666 = vmatprep.subr.mxu0 0.0
    %6667 = vmatpush2.msra.mxu0 0.0
    %6668 = vmatprep.subr.mxu0 0.0
    %6669 = vmatpush2.msra.mxu0 0.0
    %6670 = vmatprep.subr.mxu0 0.0
    %6671 = vmatpush2.msra.mxu0 0.0
    %6672 = vmatprep.subr.mxu0 0.0
    %6673 = vmatpush2.msra.mxu0 0.0
    %6674 = vmatprep.subr.mxu0 0.0
    %6675 = vmatpush2.msra.mxu0 0.0
    %6676 = vmatprep.subr.mxu0 0.0
    %6677 = vmatpush2.msra.mxu0 0.0
    %6678 = vmatprep.subr.mxu0 0.0
    %6679 = vmatpush2.msra.mxu0 0.0
    %6680 = vmatprep.subr.mxu0 0.0
    %6681 = vmatpush2.msra.mxu0 0.0
    %6682 = vmatprep.subr.mxu0 0.0
    %6683 = vmatpush2.msra.mxu0 0.0
    %6684 = vmatprep.mubr.f32.mxu0 0.0
    %v6685 = vand.u32 %v6440, 4294901760
    %v6686 = vsub.f32 %v6440, %v6685
    %6687 = vmatmul.mubr.f32.gmra.mxu0 %v6686
    %v6688 = vpop.f32.mrf.mxu0
    %v6689 = vadd.f32 %v6609, %v6688
    %v6690 = vpop.f32.mrf.mxu0
    %6691 = vdwg.mxu0
    %6692 = vmatprep.subr.mxu0 0.0
    %6693 = vmatpush1.msra.mxu0 0.0
    %6694 = vmatprep.subr.mxu0 0.0
    %6695 = vmatpush1.msra.mxu0 0.0
    %6696 = vmatprep.subr.mxu0 0.0
    %6697 = vmatpush1.msra.mxu0 0.0
    %6698 = vmatprep.subr.mxu0 0.0
    %6699 = vmatpush1.msra.mxu0 0.0
    %6700 = vmatprep.subr.mxu0 0.0
    %6701 = vmatpush1.msra.mxu0 0.0
    %6702 = vmatprep.subr.mxu0 0.0
    %6703 = vmatpush1.msra.mxu0 0.0
    %6704 = vmatprep.subr.mxu0 0.0
    %6705 = vmatpush1.msra.mxu0 0.0
    %6706 = vmatprep.subr.mxu0 0.0
    %6707 = vmatpush1.msra.mxu0 0.0
    %6708 = vmatprep.subr.mxu0 0.0
    %6709 = vmatpush1.msra.mxu0 0.0
    %6710 = vmatprep.subr.mxu0 0.0
    %6711 = vmatpush1.msra.mxu0 0.0
    %6712 = vmatprep.subr.mxu0 0.0
    %6713 = vmatpush1.msra.mxu0 0.0
    %6714 = vmatprep.subr.mxu0 0.0
    %6715 = vmatpush1.msra.mxu0 0.0
    %6716 = vmatprep.subr.mxu0 0.0
    %v6717 = vand.u32 %v4862, 4294901760
    %6718 = vmatpush1.msra.mxu0 %v6717
    %6719 = vmatprep.subr.mxu0 0.0
    %v6720 = vand.u32 %v4861, 4294901760
    %6721 = vmatpush1.msra.mxu0 %v6720
    %6722 = vmatprep.subr.mxu0 0.0
    %v6723 = vand.u32 %v4860, 4294901760
    %6724 = vmatpush1.msra.mxu0 %v6723
    %6725 = vmatprep.subr.mxu0 0.0
    %v6726 = vand.u32 %v4859, 4294901760
    %6727 = vmatpush1.msra.mxu0 %v6726
    %6728 = vmatprep.subr.mxu0 0.0
    %6729 = vmatpush2.msra.mxu0 0.0
    %6730 = vmatprep.subr.mxu0 0.0
    %6731 = vmatpush2.msra.mxu0 0.0
    %6732 = vmatprep.subr.mxu0 0.0
    %6733 = vmatpush2.msra.mxu0 0.0
    %6734 = vmatprep.subr.mxu0 0.0
    %6735 = vmatpush2.msra.mxu0 0.0
    %6736 = vmatprep.subr.mxu0 0.0
    %6737 = vmatpush2.msra.mxu0 0.0
    %6738 = vmatprep.subr.mxu0 0.0
    %6739 = vmatpush2.msra.mxu0 0.0
    %6740 = vmatprep.subr.mxu0 0.0
    %6741 = vmatpush2.msra.mxu0 0.0
    %6742 = vmatprep.subr.mxu0 0.0
    %6743 = vmatpush2.msra.mxu0 0.0
    %6744 = vmatprep.subr.mxu0 0.0
    %6745 = vmatpush2.msra.mxu0 0.0
    %6746 = vmatprep.subr.mxu0 0.0
    %6747 = vmatpush2.msra.mxu0 0.0
    %6748 = vmatprep.subr.mxu0 0.0
    %6749 = vmatpush2.msra.mxu0 0.0
    %6750 = vmatprep.subr.mxu0 0.0
    %6751 = vmatpush2.msra.mxu0 0.0
    %6752 = vmatprep.subr.mxu0 0.0
    %6753 = vmatpush2.msra.mxu0 0.0
    %6754 = vmatprep.subr.mxu0 0.0
    %6755 = vmatpush2.msra.mxu0 0.0
    %6756 = vmatprep.subr.mxu0 0.0
    %6757 = vmatpush2.msra.mxu0 0.0
    %6758 = vmatprep.subr.mxu0 0.0
    %6759 = vmatpush2.msra.mxu0 0.0
    %6760 = vmatprep.mubr.f32.mxu0 0.0
    %v6761 = vand.u32 %v6440, 4294901760
    %v6762 = vsub.f32 %v6440, %v6761
    %v6763 = vand.u32 %v6762, 4294901760
    %6764 = vmatmul.mubr.f32.gmra.mxu0 %v6763
    %v6765 = vpop.f32.mrf.mxu0
    %v6766 = vadd.f32 %v6689, %v6765
    %v6767 = vpop.f32.mrf.mxu0
    %6768 = vdwg.mxu0
    %6769 = vmatprep.subr.mxu0 0.0
    %6770 = vmatpush1.msra.mxu0 0.0
    %6771 = vmatprep.subr.mxu0 0.0
    %6772 = vmatpush1.msra.mxu0 0.0
    %6773 = vmatprep.subr.mxu0 0.0
    %6774 = vmatpush1.msra.mxu0 0.0
    %6775 = vmatprep.subr.mxu0 0.0
    %6776 = vmatpush1.msra.mxu0 0.0
    %6777 = vmatprep.subr.mxu0 0.0
    %6778 = vmatpush1.msra.mxu0 0.0
    %6779 = vmatprep.subr.mxu0 0.0
    %6780 = vmatpush1.msra.mxu0 0.0
    %6781 = vmatprep.subr.mxu0 0.0
    %6782 = vmatpush1.msra.mxu0 0.0
    %6783 = vmatprep.subr.mxu0 0.0
    %6784 = vmatpush1.msra.mxu0 0.0
    %6785 = vmatprep.subr.mxu0 0.0
    %6786 = vmatpush1.msra.mxu0 0.0
    %6787 = vmatprep.subr.mxu0 0.0
    %6788 = vmatpush1.msra.mxu0 0.0
    %6789 = vmatprep.subr.mxu0 0.0
    %6790 = vmatpush1.msra.mxu0 0.0
    %6791 = vmatprep.subr.mxu0 0.0
    %6792 = vmatpush1.msra.mxu0 0.0
    %6793 = vmatprep.subr.mxu0 0.0
    %v6794 = vand.u32 %v4862, 4294901760
    %v6795 = vsub.f32 %v4862, %v6794
    %v6796 = vand.u32 %v6795, 4294901760
    %6797 = vmatpush1.msra.mxu0 %v6796
    %6798 = vmatprep.subr.mxu0 0.0
    %v6799 = vand.u32 %v4861, 4294901760
    %v6800 = vsub.f32 %v4861, %v6799
    %v6801 = vand.u32 %v6800, 4294901760
    %6802 = vmatpush1.msra.mxu0 %v6801
    %6803 = vmatprep.subr.mxu0 0.0
    %v6804 = vand.u32 %v4860, 4294901760
    %v6805 = vsub.f32 %v4860, %v6804
    %v6806 = vand.u32 %v6805, 4294901760
    %6807 = vmatpush1.msra.mxu0 %v6806
    %6808 = vmatprep.subr.mxu0 0.0
    %v6809 = vand.u32 %v4859, 4294901760
    %v6810 = vsub.f32 %v4859, %v6809
    %v6811 = vand.u32 %v6810, 4294901760
    %6812 = vmatpush1.msra.mxu0 %v6811
    %6813 = vmatprep.subr.mxu0 0.0
    %6814 = vmatpush2.msra.mxu0 0.0
    %6815 = vmatprep.subr.mxu0 0.0
    %6816 = vmatpush2.msra.mxu0 0.0
    %6817 = vmatprep.subr.mxu0 0.0
    %6818 = vmatpush2.msra.mxu0 0.0
    %6819 = vmatprep.subr.mxu0 0.0
    %6820 = vmatpush2.msra.mxu0 0.0
    %6821 = vmatprep.subr.mxu0 0.0
    %6822 = vmatpush2.msra.mxu0 0.0
    %6823 = vmatprep.subr.mxu0 0.0
    %6824 = vmatpush2.msra.mxu0 0.0
    %6825 = vmatprep.subr.mxu0 0.0
    %6826 = vmatpush2.msra.mxu0 0.0
    %6827 = vmatprep.subr.mxu0 0.0
    %6828 = vmatpush2.msra.mxu0 0.0
    %6829 = vmatprep.subr.mxu0 0.0
    %6830 = vmatpush2.msra.mxu0 0.0
    %6831 = vmatprep.subr.mxu0 0.0
    %6832 = vmatpush2.msra.mxu0 0.0
    %6833 = vmatprep.subr.mxu0 0.0
    %6834 = vmatpush2.msra.mxu0 0.0
    %6835 = vmatprep.subr.mxu0 0.0
    %6836 = vmatpush2.msra.mxu0 0.0
    %6837 = vmatprep.subr.mxu0 0.0
    %6838 = vmatpush2.msra.mxu0 0.0
    %6839 = vmatprep.subr.mxu0 0.0
    %6840 = vmatpush2.msra.mxu0 0.0
    %6841 = vmatprep.subr.mxu0 0.0
    %6842 = vmatpush2.msra.mxu0 0.0
    %6843 = vmatprep.subr.mxu0 0.0
    %6844 = vmatpush2.msra.mxu0 0.0
    %6845 = vmatprep.mubr.f32.mxu0 0.0
    %v6846 = vand.u32 %v6440, 4294901760
    %6847 = vmatmul.mubr.f32.gmra.mxu0 %v6846
    %v6848 = vpop.f32.mrf.mxu0
    %v6849 = vadd.f32 %v6766, %v6848
    %v6850 = vpop.f32.mrf.mxu0
    %6851 = vdwg.mxu0
    %6852 = vmatprep.subr.mxu0 0.0
    %6853 = vmatpush1.msra.mxu0 0.0
    %6854 = vmatprep.subr.mxu0 0.0
    %6855 = vmatpush1.msra.mxu0 0.0
    %6856 = vmatprep.subr.mxu0 0.0
    %6857 = vmatpush1.msra.mxu0 0.0
    %6858 = vmatprep.subr.mxu0 0.0
    %6859 = vmatpush1.msra.mxu0 0.0
    %6860 = vmatprep.subr.mxu0 0.0
    %6861 = vmatpush1.msra.mxu0 0.0
    %6862 = vmatprep.subr.mxu0 0.0
    %6863 = vmatpush1.msra.mxu0 0.0
    %6864 = vmatprep.subr.mxu0 0.0
    %6865 = vmatpush1.msra.mxu0 0.0
    %6866 = vmatprep.subr.mxu0 0.0
    %6867 = vmatpush1.msra.mxu0 0.0
    %6868 = vmatprep.subr.mxu0 0.0
    %6869 = vmatpush1.msra.mxu0 0.0
    %6870 = vmatprep.subr.mxu0 0.0
    %6871 = vmatpush1.msra.mxu0 0.0
    %6872 = vmatprep.subr.mxu0 0.0
    %6873 = vmatpush1.msra.mxu0 0.0
    %6874 = vmatprep.subr.mxu0 0.0
    %6875 = vmatpush1.msra.mxu0 0.0
    %6876 = vmatprep.subr.mxu0 0.0
    %v6877 = vand.u32 %v4862, 4294901760
    %6878 = vmatpush1.msra.mxu0 %v6877
    %6879 = vmatprep.subr.mxu0 0.0
    %v6880 = vand.u32 %v4861, 4294901760
    %6881 = vmatpush1.msra.mxu0 %v6880
    %6882 = vmatprep.subr.mxu0 0.0
    %v6883 = vand.u32 %v4860, 4294901760
    %6884 = vmatpush1.msra.mxu0 %v6883
    %6885 = vmatprep.subr.mxu0 0.0
    %v6886 = vand.u32 %v4859, 4294901760
    %6887 = vmatpush1.msra.mxu0 %v6886
    %6888 = vmatprep.subr.mxu0 0.0
    %6889 = vmatpush2.msra.mxu0 0.0
    %6890 = vmatprep.subr.mxu0 0.0
    %6891 = vmatpush2.msra.mxu0 0.0
    %6892 = vmatprep.subr.mxu0 0.0
    %6893 = vmatpush2.msra.mxu0 0.0
    %6894 = vmatprep.subr.mxu0 0.0
    %6895 = vmatpush2.msra.mxu0 0.0
    %6896 = vmatprep.subr.mxu0 0.0
    %6897 = vmatpush2.msra.mxu0 0.0
    %6898 = vmatprep.subr.mxu0 0.0
    %6899 = vmatpush2.msra.mxu0 0.0
    %6900 = vmatprep.subr.mxu0 0.0
    %6901 = vmatpush2.msra.mxu0 0.0
    %6902 = vmatprep.subr.mxu0 0.0
    %6903 = vmatpush2.msra.mxu0 0.0
    %6904 = vmatprep.subr.mxu0 0.0
    %6905 = vmatpush2.msra.mxu0 0.0
    %6906 = vmatprep.subr.mxu0 0.0
    %6907 = vmatpush2.msra.mxu0 0.0
    %6908 = vmatprep.subr.mxu0 0.0
    %6909 = vmatpush2.msra.mxu0 0.0
    %6910 = vmatprep.subr.mxu0 0.0
    %6911 = vmatpush2.msra.mxu0 0.0
    %6912 = vmatprep.subr.mxu0 0.0
    %6913 = vmatpush2.msra.mxu0 0.0
    %6914 = vmatprep.subr.mxu0 0.0
    %6915 = vmatpush2.msra.mxu0 0.0
    %6916 = vmatprep.subr.mxu0 0.0
    %6917 = vmatpush2.msra.mxu0 0.0
    %6918 = vmatprep.subr.mxu0 0.0
    %6919 = vmatpush2.msra.mxu0 0.0
    %6920 = vmatprep.mubr.f32.mxu0 0.0
    %v6921 = vand.u32 %v6440, 4294901760
    %6922 = vmatmul.mubr.f32.gmra.mxu0 %v6921
    %v6923 = vpop.f32.mrf.mxu0
    %v6924 = vadd.f32 %v6849, %v6923
    %v6925 = vpop.f32.mrf.mxu0
    %6926 = vdwg.mxu0
    %v6927 = vadd.f32 %v6436, %v6924
    %v6928 = vsub.f32 0.0, %v6927
    %v6929 = vmul.f32 %v6928, 1.442695
    %v6930 = vpow.pop %v6929
    %v6931 = vadd.f32 %v6930, 1.0
    %v6932 = vrcp.pop %v6931
    %v6933 = vmul.f32 1.0, %v6932
    %v6934 = vtanh.pop %v6927
    %v6936 = vrot.slane %v6424, 2
    %v6938 = vmul.f32 %v6933, %v6936
    %6940 = vrot.lane.b32.xlu0 %v6934, 64
    %v6941 = vpop.permute.xlu0 %6940
    %v6943 = vmul.f32 %v6933, %v6941
    %6945 = vrot.lane.b32.xlu0 %v6943, 32
    %v6946 = vpop.permute.xlu0 %6945
    %v6948 = vadd.f32 %v6938, %v6946
    %v6949 = vtanh.pop %v6948
    %6951 = vrot.lane.b32.xlu0 %v6949, 64
    %v6952 = vpop.permute.xlu0 %6951
    %v6954 = vmul.f32 %v6933, %v6952
    %6956 = vrot.lane.b32.xlu0 %v6954, 32
    %v6957 = vpop.permute.xlu0 %6956
    %6959 = vst.msk [vmem:[#allocation4 + $0x8] sm:$0x3] %vm1174, %v6957
    %v6960 = vld [vmem:[#allocation2 + $0x8] sm:$0xc0]
    %v6961 = vsel %vm656, %v6957, 0
    %6963 = vmatprep.subr.mxu0 0.0
    %6964 = vmatpush1.msra.mxu0 0.0
    %6965 = vmatprep.subr.mxu0 0.0
    %6966 = vmatpush1.msra.mxu0 0.0
    %6967 = vmatprep.subr.mxu0 0.0
    %6968 = vmatpush1.msra.mxu0 0.0
    %6969 = vmatprep.subr.mxu0 0.0
    %6970 = vmatpush1.msra.mxu0 0.0
    %6971 = vmatprep.subr.mxu0 0.0
    %6972 = vmatpush1.msra.mxu0 0.0
    %6973 = vmatprep.subr.mxu0 0.0
    %6974 = vmatpush1.msra.mxu0 0.0
    %6975 = vmatprep.subr.mxu0 0.0
    %6976 = vmatpush1.msra.mxu0 0.0
    %6977 = vmatprep.subr.mxu0 0.0
    %6978 = vmatpush1.msra.mxu0 0.0
    %6979 = vmatprep.subr.mxu0 0.0
    %6980 = vmatpush1.msra.mxu0 0.0
    %6981 = vmatprep.subr.mxu0 0.0
    %6982 = vmatpush1.msra.mxu0 0.0
    %6983 = vmatprep.subr.mxu0 0.0
    %6984 = vmatpush1.msra.mxu0 0.0
    %6985 = vmatprep.subr.mxu0 0.0
    %6986 = vmatpush1.msra.mxu0 0.0
    %6987 = vmatprep.subr.mxu0 0.0
    %v6988 = vand.u32 %v4862, 4294901760
    %6989 = vmatpush1.msra.mxu0 %v6988
    %6990 = vmatprep.subr.mxu0 0.0
    %v6991 = vand.u32 %v4861, 4294901760
    %6992 = vmatpush1.msra.mxu0 %v6991
    %6993 = vmatprep.subr.mxu0 0.0
    %v6994 = vand.u32 %v4860, 4294901760
    %6995 = vmatpush1.msra.mxu0 %v6994
    %6996 = vmatprep.subr.mxu0 0.0
    %v6997 = vand.u32 %v4859, 4294901760
    %6998 = vmatpush1.msra.mxu0 %v6997
    %6999 = vmatprep.subr.mxu0 0.0
    %7000 = vmatpush2.msra.mxu0 0.0
    %7001 = vmatprep.subr.mxu0 0.0
    %7002 = vmatpush2.msra.mxu0 0.0
    %7003 = vmatprep.subr.mxu0 0.0
    %7004 = vmatpush2.msra.mxu0 0.0
    %7005 = vmatprep.subr.mxu0 0.0
    %7006 = vmatpush2.msra.mxu0 0.0
    %7007 = vmatprep.subr.mxu0 0.0
    %7008 = vmatpush2.msra.mxu0 0.0
    %7009 = vmatprep.subr.mxu0 0.0
    %7010 = vmatpush2.msra.mxu0 0.0
    %7011 = vmatprep.subr.mxu0 0.0
    %7012 = vmatpush2.msra.mxu0 0.0
    %7013 = vmatprep.subr.mxu0 0.0
    %7014 = vmatpush2.msra.mxu0 0.0
    %7015 = vmatprep.subr.mxu0 0.0
    %7016 = vmatpush2.msra.mxu0 0.0
    %7017 = vmatprep.subr.mxu0 0.0
    %7018 = vmatpush2.msra.mxu0 0.0
    %7019 = vmatprep.subr.mxu0 0.0
    %7020 = vmatpush2.msra.mxu0 0.0
    %7021 = vmatprep.subr.mxu0 0.0
    %7022 = vmatpush2.msra.mxu0 0.0
    %7023 = vmatprep.subr.mxu0 0.0
    %7024 = vmatpush2.msra.mxu0 0.0
    %7025 = vmatprep.subr.mxu0 0.0
    %7026 = vmatpush2.msra.mxu0 0.0
    %7027 = vmatprep.subr.mxu0 0.0
    %7028 = vmatpush2.msra.mxu0 0.0
    %7029 = vmatprep.subr.mxu0 0.0
    %7030 = vmatpush2.msra.mxu0 0.0
    %7031 = vmatprep.mubr.f32.mxu0 0.0
    %v7032 = vand.u32 %v6961, 4294901760
    %v7033 = vsub.f32 %v6961, %v7032
    %v7034 = vand.u32 %v7033, 4294901760
    %v7035 = vsub.f32 %v7033, %v7034
    %v7036 = vand.u32 %v7035, 4294901760
    %7037 = vmatmul.mubr.f32.gmra.mxu0 %v7036
    %v7038 = vpop.f32.mrf.mxu0
    %v7039 = vadd.f32 0.0, %v7038
    %v7040 = vpop.f32.mrf.mxu0
    %7041 = vdwg.mxu0
    %7042 = vmatprep.subr.mxu0 0.0
    %7043 = vmatpush1.msra.mxu0 0.0
    %7044 = vmatprep.subr.mxu0 0.0
    %7045 = vmatpush1.msra.mxu0 0.0
    %7046 = vmatprep.subr.mxu0 0.0
    %7047 = vmatpush1.msra.mxu0 0.0
    %7048 = vmatprep.subr.mxu0 0.0
    %7049 = vmatpush1.msra.mxu0 0.0
    %7050 = vmatprep.subr.mxu0 0.0
    %7051 = vmatpush1.msra.mxu0 0.0
    %7052 = vmatprep.subr.mxu0 0.0
    %7053 = vmatpush1.msra.mxu0 0.0
    %7054 = vmatprep.subr.mxu0 0.0
    %7055 = vmatpush1.msra.mxu0 0.0
    %7056 = vmatprep.subr.mxu0 0.0
    %7057 = vmatpush1.msra.mxu0 0.0
    %7058 = vmatprep.subr.mxu0 0.0
    %7059 = vmatpush1.msra.mxu0 0.0
    %7060 = vmatprep.subr.mxu0 0.0
    %7061 = vmatpush1.msra.mxu0 0.0
    %7062 = vmatprep.subr.mxu0 0.0
    %7063 = vmatpush1.msra.mxu0 0.0
    %7064 = vmatprep.subr.mxu0 0.0
    %7065 = vmatpush1.msra.mxu0 0.0
    %7066 = vmatprep.subr.mxu0 0.0
    %v7067 = vand.u32 %v4862, 4294901760
    %v7068 = vsub.f32 %v4862, %v7067
    %v7069 = vand.u32 %v7068, 4294901760
    %v7070 = vsub.f32 %v7068, %v7069
    %v7071 = vand.u32 %v7070, 4294901760
    %7072 = vmatpush1.msra.mxu0 %v7071
    %7073 = vmatprep.subr.mxu0 0.0
    %v7074 = vand.u32 %v4861, 4294901760
    %v7075 = vsub.f32 %v4861, %v7074
    %v7076 = vand.u32 %v7075, 4294901760
    %v7077 = vsub.f32 %v7075, %v7076
    %v7078 = vand.u32 %v7077, 4294901760
    %7079 = vmatpush1.msra.mxu0 %v7078
    %7080 = vmatprep.subr.mxu0 0.0
    %v7081 = vand.u32 %v4860, 4294901760
    %v7082 = vsub.f32 %v4860, %v7081
    %v7083 = vand.u32 %v7082, 4294901760
    %v7084 = vsub.f32 %v7082, %v7083
    %v7085 = vand.u32 %v7084, 4294901760
    %7086 = vmatpush1.msra.mxu0 %v7085
    %7087 = vmatprep.subr.mxu0 0.0
    %v7088 = vand.u32 %v4859, 4294901760
    %v7089 = vsub.f32 %v4859, %v7088
    %v7090 = vand.u32 %v7089, 4294901760
    %v7091 = vsub.f32 %v7089, %v7090
    %v7092 = vand.u32 %v7091, 4294901760
    %7093 = vmatpush1.msra.mxu0 %v7092
    %7094 = vmatprep.subr.mxu0 0.0
    %7095 = vmatpush2.msra.mxu0 0.0
    %7096 = vmatprep.subr.mxu0 0.0
    %7097 = vmatpush2.msra.mxu0 0.0
    %7098 = vmatprep.subr.mxu0 0.0
    %7099 = vmatpush2.msra.mxu0 0.0
    %7100 = vmatprep.subr.mxu0 0.0
    %7101 = vmatpush2.msra.mxu0 0.0
    %7102 = vmatprep.subr.mxu0 0.0
    %7103 = vmatpush2.msra.mxu0 0.0
    %7104 = vmatprep.subr.mxu0 0.0
    %7105 = vmatpush2.msra.mxu0 0.0
    %7106 = vmatprep.subr.mxu0 0.0
    %7107 = vmatpush2.msra.mxu0 0.0
    %7108 = vmatprep.subr.mxu0 0.0
    %7109 = vmatpush2.msra.mxu0 0.0
    %7110 = vmatprep.subr.mxu0 0.0
    %7111 = vmatpush2.msra.mxu0 0.0
    %7112 = vmatprep.subr.mxu0 0.0
    %7113 = vmatpush2.msra.mxu0 0.0
    %7114 = vmatprep.subr.mxu0 0.0
    %7115 = vmatpush2.msra.mxu0 0.0
    %7116 = vmatprep.subr.mxu0 0.0
    %7117 = vmatpush2.msra.mxu0 0.0
    %7118 = vmatprep.subr.mxu0 0.0
    %7119 = vmatpush2.msra.mxu0 0.0
    %7120 = vmatprep.subr.mxu0 0.0
    %7121 = vmatpush2.msra.mxu0 0.0
    %7122 = vmatprep.subr.mxu0 0.0
    %7123 = vmatpush2.msra.mxu0 0.0
    %7124 = vmatprep.subr.mxu0 0.0
    %7125 = vmatpush2.msra.mxu0 0.0
    %7126 = vmatprep.mubr.f32.mxu0 0.0
    %v7127 = vand.u32 %v6961, 4294901760
    %7128 = vmatmul.mubr.f32.gmra.mxu0 %v7127
    %v7129 = vpop.f32.mrf.mxu0
    %v7130 = vadd.f32 %v7039, %v7129
    %v7131 = vpop.f32.mrf.mxu0
    %7132 = vdwg.mxu0
    %7133 = vmatprep.subr.mxu0 0.0
    %7134 = vmatpush1.msra.mxu0 0.0
    %7135 = vmatprep.subr.mxu0 0.0
    %7136 = vmatpush1.msra.mxu0 0.0
    %7137 = vmatprep.subr.mxu0 0.0
    %7138 = vmatpush1.msra.mxu0 0.0
    %7139 = vmatprep.subr.mxu0 0.0
    %7140 = vmatpush1.msra.mxu0 0.0
    %7141 = vmatprep.subr.mxu0 0.0
    %7142 = vmatpush1.msra.mxu0 0.0
    %7143 = vmatprep.subr.mxu0 0.0
    %7144 = vmatpush1.msra.mxu0 0.0
    %7145 = vmatprep.subr.mxu0 0.0
    %7146 = vmatpush1.msra.mxu0 0.0
    %7147 = vmatprep.subr.mxu0 0.0
    %7148 = vmatpush1.msra.mxu0 0.0
    %7149 = vmatprep.subr.mxu0 0.0
    %7150 = vmatpush1.msra.mxu0 0.0
    %7151 = vmatprep.subr.mxu0 0.0
    %7152 = vmatpush1.msra.mxu0 0.0
    %7153 = vmatprep.subr.mxu0 0.0
    %7154 = vmatpush1.msra.mxu0 0.0
    %7155 = vmatprep.subr.mxu0 0.0
    %7156 = vmatpush1.msra.mxu0 0.0
    %7157 = vmatprep.subr.mxu0 0.0
    %v7158 = vand.u32 %v4862, 4294901760
    %v7159 = vsub.f32 %v4862, %v7158
    %7160 = vmatpush1.msra.mxu0 %v7159
    %7161 = vmatprep.subr.mxu0 0.0
    %v7162 = vand.u32 %v4861, 4294901760
    %v7163 = vsub.f32 %v4861, %v7162
    %7164 = vmatpush1.msra.mxu0 %v7163
    %7165 = vmatprep.subr.mxu0 0.0
    %v7166 = vand.u32 %v4860, 4294901760
    %v7167 = vsub.f32 %v4860, %v7166
    %7168 = vmatpush1.msra.mxu0 %v7167
    %7169 = vmatprep.subr.mxu0 0.0
    %v7170 = vand.u32 %v4859, 4294901760
    %v7171 = vsub.f32 %v4859, %v7170
    %7172 = vmatpush1.msra.mxu0 %v7171
    %7173 = vmatprep.subr.mxu0 0.0
    %7174 = vmatpush2.msra.mxu0 0.0
    %7175 = vmatprep.subr.mxu0 0.0
    %7176 = vmatpush2.msra.mxu0 0.0
    %7177 = vmatprep.subr.mxu0 0.0
    %7178 = vmatpush2.msra.mxu0 0.0
    %7179 = vmatprep.subr.mxu0 0.0
    %7180 = vmatpush2.msra.mxu0 0.0
    %7181 = vmatprep.subr.mxu0 0.0
    %7182 = vmatpush2.msra.mxu0 0.0
    %7183 = vmatprep.subr.mxu0 0.0
    %7184 = vmatpush2.msra.mxu0 0.0
    %7185 = vmatprep.subr.mxu0 0.0
    %7186 = vmatpush2.msra.mxu0 0.0
    %7187 = vmatprep.subr.mxu0 0.0
    %7188 = vmatpush2.msra.mxu0 0.0
    %7189 = vmatprep.subr.mxu0 0.0
    %7190 = vmatpush2.msra.mxu0 0.0
    %7191 = vmatprep.subr.mxu0 0.0
    %7192 = vmatpush2.msra.mxu0 0.0
    %7193 = vmatprep.subr.mxu0 0.0
    %7194 = vmatpush2.msra.mxu0 0.0
    %7195 = vmatprep.subr.mxu0 0.0
    %7196 = vmatpush2.msra.mxu0 0.0
    %7197 = vmatprep.subr.mxu0 0.0
    %7198 = vmatpush2.msra.mxu0 0.0
    %7199 = vmatprep.subr.mxu0 0.0
    %7200 = vmatpush2.msra.mxu0 0.0
    %7201 = vmatprep.subr.mxu0 0.0
    %7202 = vmatpush2.msra.mxu0 0.0
    %7203 = vmatprep.subr.mxu0 0.0
    %7204 = vmatpush2.msra.mxu0 0.0
    %7205 = vmatprep.mubr.f32.mxu0 0.0
    %v7206 = vand.u32 %v6961, 4294901760
    %v7207 = vsub.f32 %v6961, %v7206
    %7208 = vmatmul.mubr.f32.gmra.mxu0 %v7207
    %v7209 = vpop.f32.mrf.mxu0
    %v7210 = vadd.f32 %v7130, %v7209
    %v7211 = vpop.f32.mrf.mxu0
    %7212 = vdwg.mxu0
    %7213 = vmatprep.subr.mxu0 0.0
    %7214 = vmatpush1.msra.mxu0 0.0
    %7215 = vmatprep.subr.mxu0 0.0
    %7216 = vmatpush1.msra.mxu0 0.0
    %7217 = vmatprep.subr.mxu0 0.0
    %7218 = vmatpush1.msra.mxu0 0.0
    %7219 = vmatprep.subr.mxu0 0.0
    %7220 = vmatpush1.msra.mxu0 0.0
    %7221 = vmatprep.subr.mxu0 0.0
    %7222 = vmatpush1.msra.mxu0 0.0
    %7223 = vmatprep.subr.mxu0 0.0
    %7224 = vmatpush1.msra.mxu0 0.0
    %7225 = vmatprep.subr.mxu0 0.0
    %7226 = vmatpush1.msra.mxu0 0.0
    %7227 = vmatprep.subr.mxu0 0.0
    %7228 = vmatpush1.msra.mxu0 0.0
    %7229 = vmatprep.subr.mxu0 0.0
    %7230 = vmatpush1.msra.mxu0 0.0
    %7231 = vmatprep.subr.mxu0 0.0
    %7232 = vmatpush1.msra.mxu0 0.0
    %7233 = vmatprep.subr.mxu0 0.0
    %7234 = vmatpush1.msra.mxu0 0.0
    %7235 = vmatprep.subr.mxu0 0.0
    %7236 = vmatpush1.msra.mxu0 0.0
    %7237 = vmatprep.subr.mxu0 0.0
    %v7238 = vand.u32 %v4862, 4294901760
    %7239 = vmatpush1.msra.mxu0 %v7238
    %7240 = vmatprep.subr.mxu0 0.0
    %v7241 = vand.u32 %v4861, 4294901760
    %7242 = vmatpush1.msra.mxu0 %v7241
    %7243 = vmatprep.subr.mxu0 0.0
    %v7244 = vand.u32 %v4860, 4294901760
    %7245 = vmatpush1.msra.mxu0 %v7244
    %7246 = vmatprep.subr.mxu0 0.0
    %v7247 = vand.u32 %v4859, 4294901760
    %7248 = vmatpush1.msra.mxu0 %v7247
    %7249 = vmatprep.subr.mxu0 0.0
    %7250 = vmatpush2.msra.mxu0 0.0
    %7251 = vmatprep.subr.mxu0 0.0
    %7252 = vmatpush2.msra.mxu0 0.0
    %7253 = vmatprep.subr.mxu0 0.0
    %7254 = vmatpush2.msra.mxu0 0.0
    %7255 = vmatprep.subr.mxu0 0.0
    %7256 = vmatpush2.msra.mxu0 0.0
    %7257 = vmatprep.subr.mxu0 0.0
    %7258 = vmatpush2.msra.mxu0 0.0
    %7259 = vmatprep.subr.mxu0 0.0
    %7260 = vmatpush2.msra.mxu0 0.0
    %7261 = vmatprep.subr.mxu0 0.0
    %7262 = vmatpush2.msra.mxu0 0.0
    %7263 = vmatprep.subr.mxu0 0.0
    %7264 = vmatpush2.msra.mxu0 0.0
    %7265 = vmatprep.subr.mxu0 0.0
    %7266 = vmatpush2.msra.mxu0 0.0
    %7267 = vmatprep.subr.mxu0 0.0
    %7268 = vmatpush2.msra.mxu0 0.0
    %7269 = vmatprep.subr.mxu0 0.0
    %7270 = vmatpush2.msra.mxu0 0.0
    %7271 = vmatprep.subr.mxu0 0.0
    %7272 = vmatpush2.msra.mxu0 0.0
    %7273 = vmatprep.subr.mxu0 0.0
    %7274 = vmatpush2.msra.mxu0 0.0
    %7275 = vmatprep.subr.mxu0 0.0
    %7276 = vmatpush2.msra.mxu0 0.0
    %7277 = vmatprep.subr.mxu0 0.0
    %7278 = vmatpush2.msra.mxu0 0.0
    %7279 = vmatprep.subr.mxu0 0.0
    %7280 = vmatpush2.msra.mxu0 0.0
    %7281 = vmatprep.mubr.f32.mxu0 0.0
    %v7282 = vand.u32 %v6961, 4294901760
    %v7283 = vsub.f32 %v6961, %v7282
    %v7284 = vand.u32 %v7283, 4294901760
    %7285 = vmatmul.mubr.f32.gmra.mxu0 %v7284
    %v7286 = vpop.f32.mrf.mxu0
    %v7287 = vadd.f32 %v7210, %v7286
    %v7288 = vpop.f32.mrf.mxu0
    %7289 = vdwg.mxu0
    %7290 = vmatprep.subr.mxu0 0.0
    %7291 = vmatpush1.msra.mxu0 0.0
    %7292 = vmatprep.subr.mxu0 0.0
    %7293 = vmatpush1.msra.mxu0 0.0
    %7294 = vmatprep.subr.mxu0 0.0
    %7295 = vmatpush1.msra.mxu0 0.0
    %7296 = vmatprep.subr.mxu0 0.0
    %7297 = vmatpush1.msra.mxu0 0.0
    %7298 = vmatprep.subr.mxu0 0.0
    %7299 = vmatpush1.msra.mxu0 0.0
    %7300 = vmatprep.subr.mxu0 0.0
    %7301 = vmatpush1.msra.mxu0 0.0
    %7302 = vmatprep.subr.mxu0 0.0
    %7303 = vmatpush1.msra.mxu0 0.0
    %7304 = vmatprep.subr.mxu0 0.0
    %7305 = vmatpush1.msra.mxu0 0.0
    %7306 = vmatprep.subr.mxu0 0.0
    %7307 = vmatpush1.msra.mxu0 0.0
    %7308 = vmatprep.subr.mxu0 0.0
    %7309 = vmatpush1.msra.mxu0 0.0
    %7310 = vmatprep.subr.mxu0 0.0
    %7311 = vmatpush1.msra.mxu0 0.0
    %7312 = vmatprep.subr.mxu0 0.0
    %7313 = vmatpush1.msra.mxu0 0.0
    %7314 = vmatprep.subr.mxu0 0.0
    %v7315 = vand.u32 %v4862, 4294901760
    %v7316 = vsub.f32 %v4862, %v7315
    %v7317 = vand.u32 %v7316, 4294901760
    %7318 = vmatpush1.msra.mxu0 %v7317
    %7319 = vmatprep.subr.mxu0 0.0
    %v7320 = vand.u32 %v4861, 4294901760
    %v7321 = vsub.f32 %v4861, %v7320
    %v7322 = vand.u32 %v7321, 4294901760
    %7323 = vmatpush1.msra.mxu0 %v7322
    %7324 = vmatprep.subr.mxu0 0.0
    %v7325 = vand.u32 %v4860, 4294901760
    %v7326 = vsub.f32 %v4860, %v7325
    %v7327 = vand.u32 %v7326, 4294901760
    %7328 = vmatpush1.msra.mxu0 %v7327
    %7329 = vmatprep.subr.mxu0 0.0
    %v7330 = vand.u32 %v4859, 4294901760
    %v7331 = vsub.f32 %v4859, %v7330
    %v7332 = vand.u32 %v7331, 4294901760
    %7333 = vmatpush1.msra.mxu0 %v7332
    %7334 = vmatprep.subr.mxu0 0.0
    %7335 = vmatpush2.msra.mxu0 0.0
    %7336 = vmatprep.subr.mxu0 0.0
    %7337 = vmatpush2.msra.mxu0 0.0
    %7338 = vmatprep.subr.mxu0 0.0
    %7339 = vmatpush2.msra.mxu0 0.0
    %7340 = vmatprep.subr.mxu0 0.0
    %7341 = vmatpush2.msra.mxu0 0.0
    %7342 = vmatprep.subr.mxu0 0.0
    %7343 = vmatpush2.msra.mxu0 0.0
    %7344 = vmatprep.subr.mxu0 0.0
    %7345 = vmatpush2.msra.mxu0 0.0
    %7346 = vmatprep.subr.mxu0 0.0
    %7347 = vmatpush2.msra.mxu0 0.0
    %7348 = vmatprep.subr.mxu0 0.0
    %7349 = vmatpush2.msra.mxu0 0.0
    %7350 = vmatprep.subr.mxu0 0.0
    %7351 = vmatpush2.msra.mxu0 0.0
    %7352 = vmatprep.subr.mxu0 0.0
    %7353 = vmatpush2.msra.mxu0 0.0
    %7354 = vmatprep.subr.mxu0 0.0
    %7355 = vmatpush2.msra.mxu0 0.0
    %7356 = vmatprep.subr.mxu0 0.0
    %7357 = vmatpush2.msra.mxu0 0.0
    %7358 = vmatprep.subr.mxu0 0.0
    %7359 = vmatpush2.msra.mxu0 0.0
    %7360 = vmatprep.subr.mxu0 0.0
    %7361 = vmatpush2.msra.mxu0 0.0
    %7362 = vmatprep.subr.mxu0 0.0
    %7363 = vmatpush2.msra.mxu0 0.0
    %7364 = vmatprep.subr.mxu0 0.0
    %7365 = vmatpush2.msra.mxu0 0.0
    %7366 = vmatprep.mubr.f32.mxu0 0.0
    %v7367 = vand.u32 %v6961, 4294901760
    %7368 = vmatmul.mubr.f32.gmra.mxu0 %v7367
    %v7369 = vpop.f32.mrf.mxu0
    %v7370 = vadd.f32 %v7287, %v7369
    %v7371 = vpop.f32.mrf.mxu0
    %7372 = vdwg.mxu0
    %7373 = vmatprep.subr.mxu0 0.0
    %7374 = vmatpush1.msra.mxu0 0.0
    %7375 = vmatprep.subr.mxu0 0.0
    %7376 = vmatpush1.msra.mxu0 0.0
    %7377 = vmatprep.subr.mxu0 0.0
    %7378 = vmatpush1.msra.mxu0 0.0
    %7379 = vmatprep.subr.mxu0 0.0
    %7380 = vmatpush1.msra.mxu0 0.0
    %7381 = vmatprep.subr.mxu0 0.0
    %7382 = vmatpush1.msra.mxu0 0.0
    %7383 = vmatprep.subr.mxu0 0.0
    %7384 = vmatpush1.msra.mxu0 0.0
    %7385 = vmatprep.subr.mxu0 0.0
    %7386 = vmatpush1.msra.mxu0 0.0
    %7387 = vmatprep.subr.mxu0 0.0
    %7388 = vmatpush1.msra.mxu0 0.0
    %7389 = vmatprep.subr.mxu0 0.0
    %7390 = vmatpush1.msra.mxu0 0.0
    %7391 = vmatprep.subr.mxu0 0.0
    %7392 = vmatpush1.msra.mxu0 0.0
    %7393 = vmatprep.subr.mxu0 0.0
    %7394 = vmatpush1.msra.mxu0 0.0
    %7395 = vmatprep.subr.mxu0 0.0
    %7396 = vmatpush1.msra.mxu0 0.0
    %7397 = vmatprep.subr.mxu0 0.0
    %v7398 = vand.u32 %v4862, 4294901760
    %7399 = vmatpush1.msra.mxu0 %v7398
    %7400 = vmatprep.subr.mxu0 0.0
    %v7401 = vand.u32 %v4861, 4294901760
    %7402 = vmatpush1.msra.mxu0 %v7401
    %7403 = vmatprep.subr.mxu0 0.0
    %v7404 = vand.u32 %v4860, 4294901760
    %7405 = vmatpush1.msra.mxu0 %v7404
    %7406 = vmatprep.subr.mxu0 0.0
    %v7407 = vand.u32 %v4859, 4294901760
    %7408 = vmatpush1.msra.mxu0 %v7407
    %7409 = vmatprep.subr.mxu0 0.0
    %7410 = vmatpush2.msra.mxu0 0.0
    %7411 = vmatprep.subr.mxu0 0.0
    %7412 = vmatpush2.msra.mxu0 0.0
    %7413 = vmatprep.subr.mxu0 0.0
    %7414 = vmatpush2.msra.mxu0 0.0
    %7415 = vmatprep.subr.mxu0 0.0
    %7416 = vmatpush2.msra.mxu0 0.0
    %7417 = vmatprep.subr.mxu0 0.0
    %7418 = vmatpush2.msra.mxu0 0.0
    %7419 = vmatprep.subr.mxu0 0.0
    %7420 = vmatpush2.msra.mxu0 0.0
    %7421 = vmatprep.subr.mxu0 0.0
    %7422 = vmatpush2.msra.mxu0 0.0
    %7423 = vmatprep.subr.mxu0 0.0
    %7424 = vmatpush2.msra.mxu0 0.0
    %7425 = vmatprep.subr.mxu0 0.0
    %7426 = vmatpush2.msra.mxu0 0.0
    %7427 = vmatprep.subr.mxu0 0.0
    %7428 = vmatpush2.msra.mxu0 0.0
    %7429 = vmatprep.subr.mxu0 0.0
    %7430 = vmatpush2.msra.mxu0 0.0
    %7431 = vmatprep.subr.mxu0 0.0
    %7432 = vmatpush2.msra.mxu0 0.0
    %7433 = vmatprep.subr.mxu0 0.0
    %7434 = vmatpush2.msra.mxu0 0.0
    %7435 = vmatprep.subr.mxu0 0.0
    %7436 = vmatpush2.msra.mxu0 0.0
    %7437 = vmatprep.subr.mxu0 0.0
    %7438 = vmatpush2.msra.mxu0 0.0
    %7439 = vmatprep.subr.mxu0 0.0
    %7440 = vmatpush2.msra.mxu0 0.0
    %7441 = vmatprep.mubr.f32.mxu0 0.0
    %v7442 = vand.u32 %v6961, 4294901760
    %7443 = vmatmul.mubr.f32.gmra.mxu0 %v7442
    %v7444 = vpop.f32.mrf.mxu0
    %v7445 = vadd.f32 %v7370, %v7444
    %v7446 = vpop.f32.mrf.mxu0
    %7447 = vdwg.mxu0
    %v7449 = vrot.slane %v7445, 2
    %v7451 = vadd.f32 %v6960, %v7449
    %v7452 = vsub.f32 0.0, %v7451
    %v7453 = vmul.f32 %v7452, 1.442695
    %v7454 = vpow.pop %v7453
    %v7455 = vadd.f32 %v7454, 1.0
    %v7456 = vrcp.pop %v7455
    %v7457 = vmul.f32 1.0, %v7456
    %v7458 = vtanh.pop %v7451
    %v7460 = vrot.slane %v6948, 2
    %v7462 = vmul.f32 %v7457, %v7460
    %7464 = vrot.lane.b32.xlu0 %v7458, 64
    %v7465 = vpop.permute.xlu0 %7464
    %v7467 = vmul.f32 %v7457, %v7465
    %7469 = vrot.lane.b32.xlu0 %v7467, 32
    %v7470 = vpop.permute.xlu0 %7469
    %v7472 = vadd.f32 %v7462, %v7470
    %v7473 = vtanh.pop %v7472
    %7475 = vrot.lane.b32.xlu0 %v7473, 64
    %v7476 = vpop.permute.xlu0 %7475
    %v7478 = vmul.f32 %v7457, %v7476
    %7480 = vrot.lane.b32.xlu0 %v7478, 32
    %v7481 = vpop.permute.xlu0 %7480
    %7483 = vst.msk [vmem:[#allocation4] sm:$0xc0] %vm2755, %v7481
    %v7484 = vld [vmem:[#allocation2 + $0x8] sm:$0x30]
    %v7485 = vrot.slane %v7478, 6
    %7486 = vrot.lane.b32.xlu0 %v7485, 32
    %v7487 = vpop.permute.xlu0 %7486
    %v7488 = vsel %vm656, %v7487, 0
    %7490 = vmatprep.subr.mxu0 0.0
    %7491 = vmatpush1.msra.mxu0 0.0
    %7492 = vmatprep.subr.mxu0 0.0
    %7493 = vmatpush1.msra.mxu0 0.0
    %7494 = vmatprep.subr.mxu0 0.0
    %7495 = vmatpush1.msra.mxu0 0.0
    %7496 = vmatprep.subr.mxu0 0.0
    %7497 = vmatpush1.msra.mxu0 0.0
    %7498 = vmatprep.subr.mxu0 0.0
    %7499 = vmatpush1.msra.mxu0 0.0
    %7500 = vmatprep.subr.mxu0 0.0
    %7501 = vmatpush1.msra.mxu0 0.0
    %7502 = vmatprep.subr.mxu0 0.0
    %7503 = vmatpush1.msra.mxu0 0.0
    %7504 = vmatprep.subr.mxu0 0.0
    %7505 = vmatpush1.msra.mxu0 0.0
    %7506 = vmatprep.subr.mxu0 0.0
    %7507 = vmatpush1.msra.mxu0 0.0
    %7508 = vmatprep.subr.mxu0 0.0
    %7509 = vmatpush1.msra.mxu0 0.0
    %7510 = vmatprep.subr.mxu0 0.0
    %7511 = vmatpush1.msra.mxu0 0.0
    %7512 = vmatprep.subr.mxu0 0.0
    %7513 = vmatpush1.msra.mxu0 0.0
    %7514 = vmatprep.subr.mxu0 0.0
    %v7515 = vand.u32 %v4862, 4294901760
    %7516 = vmatpush1.msra.mxu0 %v7515
    %7517 = vmatprep.subr.mxu0 0.0
    %v7518 = vand.u32 %v4861, 4294901760
    %7519 = vmatpush1.msra.mxu0 %v7518
    %7520 = vmatprep.subr.mxu0 0.0
    %v7521 = vand.u32 %v4860, 4294901760
    %7522 = vmatpush1.msra.mxu0 %v7521
    %7523 = vmatprep.subr.mxu0 0.0
    %v7524 = vand.u32 %v4859, 4294901760
    %7525 = vmatpush1.msra.mxu0 %v7524
    %7526 = vmatprep.subr.mxu0 0.0
    %7527 = vmatpush2.msra.mxu0 0.0
    %7528 = vmatprep.subr.mxu0 0.0
    %7529 = vmatpush2.msra.mxu0 0.0
    %7530 = vmatprep.subr.mxu0 0.0
    %7531 = vmatpush2.msra.mxu0 0.0
    %7532 = vmatprep.subr.mxu0 0.0
    %7533 = vmatpush2.msra.mxu0 0.0
    %7534 = vmatprep.subr.mxu0 0.0
    %7535 = vmatpush2.msra.mxu0 0.0
    %7536 = vmatprep.subr.mxu0 0.0
    %7537 = vmatpush2.msra.mxu0 0.0
    %7538 = vmatprep.subr.mxu0 0.0
    %7539 = vmatpush2.msra.mxu0 0.0
    %7540 = vmatprep.subr.mxu0 0.0
    %7541 = vmatpush2.msra.mxu0 0.0
    %7542 = vmatprep.subr.mxu0 0.0
    %7543 = vmatpush2.msra.mxu0 0.0
    %7544 = vmatprep.subr.mxu0 0.0
    %7545 = vmatpush2.msra.mxu0 0.0
    %7546 = vmatprep.subr.mxu0 0.0
    %7547 = vmatpush2.msra.mxu0 0.0
    %7548 = vmatprep.subr.mxu0 0.0
    %7549 = vmatpush2.msra.mxu0 0.0
    %7550 = vmatprep.subr.mxu0 0.0
    %7551 = vmatpush2.msra.mxu0 0.0
    %7552 = vmatprep.subr.mxu0 0.0
    %7553 = vmatpush2.msra.mxu0 0.0
    %7554 = vmatprep.subr.mxu0 0.0
    %7555 = vmatpush2.msra.mxu0 0.0
    %7556 = vmatprep.subr.mxu0 0.0
    %7557 = vmatpush2.msra.mxu0 0.0
    %7558 = vmatprep.mubr.f32.mxu0 0.0
    %v7559 = vand.u32 %v7488, 4294901760
    %v7560 = vsub.f32 %v7488, %v7559
    %v7561 = vand.u32 %v7560, 4294901760
    %v7562 = vsub.f32 %v7560, %v7561
    %v7563 = vand.u32 %v7562, 4294901760
    %7564 = vmatmul.mubr.f32.gmra.mxu0 %v7563
    %v7565 = vpop.f32.mrf.mxu0
    %v7566 = vadd.f32 0.0, %v7565
    %v7567 = vpop.f32.mrf.mxu0
    %7568 = vdwg.mxu0
    %7569 = vmatprep.subr.mxu0 0.0
    %7570 = vmatpush1.msra.mxu0 0.0
    %7571 = vmatprep.subr.mxu0 0.0
    %7572 = vmatpush1.msra.mxu0 0.0
    %7573 = vmatprep.subr.mxu0 0.0
    %7574 = vmatpush1.msra.mxu0 0.0
    %7575 = vmatprep.subr.mxu0 0.0
    %7576 = vmatpush1.msra.mxu0 0.0
    %7577 = vmatprep.subr.mxu0 0.0
    %7578 = vmatpush1.msra.mxu0 0.0
    %7579 = vmatprep.subr.mxu0 0.0
    %7580 = vmatpush1.msra.mxu0 0.0
    %7581 = vmatprep.subr.mxu0 0.0
    %7582 = vmatpush1.msra.mxu0 0.0
    %7583 = vmatprep.subr.mxu0 0.0
    %7584 = vmatpush1.msra.mxu0 0.0
    %7585 = vmatprep.subr.mxu0 0.0
    %7586 = vmatpush1.msra.mxu0 0.0
    %7587 = vmatprep.subr.mxu0 0.0
    %7588 = vmatpush1.msra.mxu0 0.0
    %7589 = vmatprep.subr.mxu0 0.0
    %7590 = vmatpush1.msra.mxu0 0.0
    %7591 = vmatprep.subr.mxu0 0.0
    %7592 = vmatpush1.msra.mxu0 0.0
    %7593 = vmatprep.subr.mxu0 0.0
    %v7594 = vand.u32 %v4862, 4294901760
    %v7595 = vsub.f32 %v4862, %v7594
    %v7596 = vand.u32 %v7595, 4294901760
    %v7597 = vsub.f32 %v7595, %v7596
    %v7598 = vand.u32 %v7597, 4294901760
    %7599 = vmatpush1.msra.mxu0 %v7598
    %7600 = vmatprep.subr.mxu0 0.0
    %v7601 = vand.u32 %v4861, 4294901760
    %v7602 = vsub.f32 %v4861, %v7601
    %v7603 = vand.u32 %v7602, 4294901760
    %v7604 = vsub.f32 %v7602, %v7603
    %v7605 = vand.u32 %v7604, 4294901760
    %7606 = vmatpush1.msra.mxu0 %v7605
    %7607 = vmatprep.subr.mxu0 0.0
    %v7608 = vand.u32 %v4860, 4294901760
    %v7609 = vsub.f32 %v4860, %v7608
    %v7610 = vand.u32 %v7609, 4294901760
    %v7611 = vsub.f32 %v7609, %v7610
    %v7612 = vand.u32 %v7611, 4294901760
    %7613 = vmatpush1.msra.mxu0 %v7612
    %7614 = vmatprep.subr.mxu0 0.0
    %v7615 = vand.u32 %v4859, 4294901760
    %v7616 = vsub.f32 %v4859, %v7615
    %v7617 = vand.u32 %v7616, 4294901760
    %v7618 = vsub.f32 %v7616, %v7617
    %v7619 = vand.u32 %v7618, 4294901760
    %7620 = vmatpush1.msra.mxu0 %v7619
    %7621 = vmatprep.subr.mxu0 0.0
    %7622 = vmatpush2.msra.mxu0 0.0
    %7623 = vmatprep.subr.mxu0 0.0
    %7624 = vmatpush2.msra.mxu0 0.0
    %7625 = vmatprep.subr.mxu0 0.0
    %7626 = vmatpush2.msra.mxu0 0.0
    %7627 = vmatprep.subr.mxu0 0.0
    %7628 = vmatpush2.msra.mxu0 0.0
    %7629 = vmatprep.subr.mxu0 0.0
    %7630 = vmatpush2.msra.mxu0 0.0
    %7631 = vmatprep.subr.mxu0 0.0
    %7632 = vmatpush2.msra.mxu0 0.0
    %7633 = vmatprep.subr.mxu0 0.0
    %7634 = vmatpush2.msra.mxu0 0.0
    %7635 = vmatprep.subr.mxu0 0.0
    %7636 = vmatpush2.msra.mxu0 0.0
    %7637 = vmatprep.subr.mxu0 0.0
    %7638 = vmatpush2.msra.mxu0 0.0
    %7639 = vmatprep.subr.mxu0 0.0
    %7640 = vmatpush2.msra.mxu0 0.0
    %7641 = vmatprep.subr.mxu0 0.0
    %7642 = vmatpush2.msra.mxu0 0.0
    %7643 = vmatprep.subr.mxu0 0.0
    %7644 = vmatpush2.msra.mxu0 0.0
    %7645 = vmatprep.subr.mxu0 0.0
    %7646 = vmatpush2.msra.mxu0 0.0
    %7647 = vmatprep.subr.mxu0 0.0
    %7648 = vmatpush2.msra.mxu0 0.0
    %7649 = vmatprep.subr.mxu0 0.0
    %7650 = vmatpush2.msra.mxu0 0.0
    %7651 = vmatprep.subr.mxu0 0.0
    %7652 = vmatpush2.msra.mxu0 0.0
    %7653 = vmatprep.mubr.f32.mxu0 0.0
    %v7654 = vand.u32 %v7488, 4294901760
    %7655 = vmatmul.mubr.f32.gmra.mxu0 %v7654
    %v7656 = vpop.f32.mrf.mxu0
    %v7657 = vadd.f32 %v7566, %v7656
    %v7658 = vpop.f32.mrf.mxu0
    %7659 = vdwg.mxu0
    %7660 = vmatprep.subr.mxu0 0.0
    %7661 = vmatpush1.msra.mxu0 0.0
    %7662 = vmatprep.subr.mxu0 0.0
    %7663 = vmatpush1.msra.mxu0 0.0
    %7664 = vmatprep.subr.mxu0 0.0
    %7665 = vmatpush1.msra.mxu0 0.0
    %7666 = vmatprep.subr.mxu0 0.0
    %7667 = vmatpush1.msra.mxu0 0.0
    %7668 = vmatprep.subr.mxu0 0.0
    %7669 = vmatpush1.msra.mxu0 0.0
    %7670 = vmatprep.subr.mxu0 0.0
    %7671 = vmatpush1.msra.mxu0 0.0
    %7672 = vmatprep.subr.mxu0 0.0
    %7673 = vmatpush1.msra.mxu0 0.0
    %7674 = vmatprep.subr.mxu0 0.0
    %7675 = vmatpush1.msra.mxu0 0.0
    %7676 = vmatprep.subr.mxu0 0.0
    %7677 = vmatpush1.msra.mxu0 0.0
    %7678 = vmatprep.subr.mxu0 0.0
    %7679 = vmatpush1.msra.mxu0 0.0
    %7680 = vmatprep.subr.mxu0 0.0
    %7681 = vmatpush1.msra.mxu0 0.0
    %7682 = vmatprep.subr.mxu0 0.0
    %7683 = vmatpush1.msra.mxu0 0.0
    %7684 = vmatprep.subr.mxu0 0.0
    %v7685 = vand.u32 %v4862, 4294901760
    %v7686 = vsub.f32 %v4862, %v7685
    %7687 = vmatpush1.msra.mxu0 %v7686
    %7688 = vmatprep.subr.mxu0 0.0
    %v7689 = vand.u32 %v4861, 4294901760
    %v7690 = vsub.f32 %v4861, %v7689
    %7691 = vmatpush1.msra.mxu0 %v7690
    %7692 = vmatprep.subr.mxu0 0.0
    %v7693 = vand.u32 %v4860, 4294901760
    %v7694 = vsub.f32 %v4860, %v7693
    %7695 = vmatpush1.msra.mxu0 %v7694
    %7696 = vmatprep.subr.mxu0 0.0
    %v7697 = vand.u32 %v4859, 4294901760
    %v7698 = vsub.f32 %v4859, %v7697
    %7699 = vmatpush1.msra.mxu0 %v7698
    %7700 = vmatprep.subr.mxu0 0.0
    %7701 = vmatpush2.msra.mxu0 0.0
    %7702 = vmatprep.subr.mxu0 0.0
    %7703 = vmatpush2.msra.mxu0 0.0
    %7704 = vmatprep.subr.mxu0 0.0
    %7705 = vmatpush2.msra.mxu0 0.0
    %7706 = vmatprep.subr.mxu0 0.0
    %7707 = vmatpush2.msra.mxu0 0.0
    %7708 = vmatprep.subr.mxu0 0.0
    %7709 = vmatpush2.msra.mxu0 0.0
    %7710 = vmatprep.subr.mxu0 0.0
    %7711 = vmatpush2.msra.mxu0 0.0
    %7712 = vmatprep.subr.mxu0 0.0
    %7713 = vmatpush2.msra.mxu0 0.0
    %7714 = vmatprep.subr.mxu0 0.0
    %7715 = vmatpush2.msra.mxu0 0.0
    %7716 = vmatprep.subr.mxu0 0.0
    %7717 = vmatpush2.msra.mxu0 0.0
    %7718 = vmatprep.subr.mxu0 0.0
    %7719 = vmatpush2.msra.mxu0 0.0
    %7720 = vmatprep.subr.mxu0 0.0
    %7721 = vmatpush2.msra.mxu0 0.0
    %7722 = vmatprep.subr.mxu0 0.0
    %7723 = vmatpush2.msra.mxu0 0.0
    %7724 = vmatprep.subr.mxu0 0.0
    %7725 = vmatpush2.msra.mxu0 0.0
    %7726 = vmatprep.subr.mxu0 0.0
    %7727 = vmatpush2.msra.mxu0 0.0
    %7728 = vmatprep.subr.mxu0 0.0
    %7729 = vmatpush2.msra.mxu0 0.0
    %7730 = vmatprep.subr.mxu0 0.0
    %7731 = vmatpush2.msra.mxu0 0.0
    %7732 = vmatprep.mubr.f32.mxu0 0.0
    %v7733 = vand.u32 %v7488, 4294901760
    %v7734 = vsub.f32 %v7488, %v7733
    %7735 = vmatmul.mubr.f32.gmra.mxu0 %v7734
    %v7736 = vpop.f32.mrf.mxu0
    %v7737 = vadd.f32 %v7657, %v7736
    %v7738 = vpop.f32.mrf.mxu0
    %7739 = vdwg.mxu0
    %7740 = vmatprep.subr.mxu0 0.0
    %7741 = vmatpush1.msra.mxu0 0.0
    %7742 = vmatprep.subr.mxu0 0.0
    %7743 = vmatpush1.msra.mxu0 0.0
    %7744 = vmatprep.subr.mxu0 0.0
    %7745 = vmatpush1.msra.mxu0 0.0
    %7746 = vmatprep.subr.mxu0 0.0
    %7747 = vmatpush1.msra.mxu0 0.0
    %7748 = vmatprep.subr.mxu0 0.0
    %7749 = vmatpush1.msra.mxu0 0.0
    %7750 = vmatprep.subr.mxu0 0.0
    %7751 = vmatpush1.msra.mxu0 0.0
    %7752 = vmatprep.subr.mxu0 0.0
    %7753 = vmatpush1.msra.mxu0 0.0
    %7754 = vmatprep.subr.mxu0 0.0
    %7755 = vmatpush1.msra.mxu0 0.0
    %7756 = vmatprep.subr.mxu0 0.0
    %7757 = vmatpush1.msra.mxu0 0.0
    %7758 = vmatprep.subr.mxu0 0.0
    %7759 = vmatpush1.msra.mxu0 0.0
    %7760 = vmatprep.subr.mxu0 0.0
    %7761 = vmatpush1.msra.mxu0 0.0
    %7762 = vmatprep.subr.mxu0 0.0
    %7763 = vmatpush1.msra.mxu0 0.0
    %7764 = vmatprep.subr.mxu0 0.0
    %v7765 = vand.u32 %v4862, 4294901760
    %7766 = vmatpush1.msra.mxu0 %v7765
    %7767 = vmatprep.subr.mxu0 0.0
    %v7768 = vand.u32 %v4861, 4294901760
    %7769 = vmatpush1.msra.mxu0 %v7768
    %7770 = vmatprep.subr.mxu0 0.0
    %v7771 = vand.u32 %v4860, 4294901760
    %7772 = vmatpush1.msra.mxu0 %v7771
    %7773 = vmatprep.subr.mxu0 0.0
    %v7774 = vand.u32 %v4859, 4294901760
    %7775 = vmatpush1.msra.mxu0 %v7774
    %7776 = vmatprep.subr.mxu0 0.0
    %7777 = vmatpush2.msra.mxu0 0.0
    %7778 = vmatprep.subr.mxu0 0.0
    %7779 = vmatpush2.msra.mxu0 0.0
    %7780 = vmatprep.subr.mxu0 0.0
    %7781 = vmatpush2.msra.mxu0 0.0
    %7782 = vmatprep.subr.mxu0 0.0
    %7783 = vmatpush2.msra.mxu0 0.0
    %7784 = vmatprep.subr.mxu0 0.0
    %7785 = vmatpush2.msra.mxu0 0.0
    %7786 = vmatprep.subr.mxu0 0.0
    %7787 = vmatpush2.msra.mxu0 0.0
    %7788 = vmatprep.subr.mxu0 0.0
    %7789 = vmatpush2.msra.mxu0 0.0
    %7790 = vmatprep.subr.mxu0 0.0
    %7791 = vmatpush2.msra.mxu0 0.0
    %7792 = vmatprep.subr.mxu0 0.0
    %7793 = vmatpush2.msra.mxu0 0.0
    %7794 = vmatprep.subr.mxu0 0.0
    %7795 = vmatpush2.msra.mxu0 0.0
    %7796 = vmatprep.subr.mxu0 0.0
    %7797 = vmatpush2.msra.mxu0 0.0
    %7798 = vmatprep.subr.mxu0 0.0
    %7799 = vmatpush2.msra.mxu0 0.0
    %7800 = vmatprep.subr.mxu0 0.0
    %7801 = vmatpush2.msra.mxu0 0.0
    %7802 = vmatprep.subr.mxu0 0.0
    %7803 = vmatpush2.msra.mxu0 0.0
    %7804 = vmatprep.subr.mxu0 0.0
    %7805 = vmatpush2.msra.mxu0 0.0
    %7806 = vmatprep.subr.mxu0 0.0
    %7807 = vmatpush2.msra.mxu0 0.0
    %7808 = vmatprep.mubr.f32.mxu0 0.0
    %v7809 = vand.u32 %v7488, 4294901760
    %v7810 = vsub.f32 %v7488, %v7809
    %v7811 = vand.u32 %v7810, 4294901760
    %7812 = vmatmul.mubr.f32.gmra.mxu0 %v7811
    %v7813 = vpop.f32.mrf.mxu0
    %v7814 = vadd.f32 %v7737, %v7813
    %v7815 = vpop.f32.mrf.mxu0
    %7816 = vdwg.mxu0
    %7817 = vmatprep.subr.mxu0 0.0
    %7818 = vmatpush1.msra.mxu0 0.0
    %7819 = vmatprep.subr.mxu0 0.0
    %7820 = vmatpush1.msra.mxu0 0.0
    %7821 = vmatprep.subr.mxu0 0.0
    %7822 = vmatpush1.msra.mxu0 0.0
    %7823 = vmatprep.subr.mxu0 0.0
    %7824 = vmatpush1.msra.mxu0 0.0
    %7825 = vmatprep.subr.mxu0 0.0
    %7826 = vmatpush1.msra.mxu0 0.0
    %7827 = vmatprep.subr.mxu0 0.0
    %7828 = vmatpush1.msra.mxu0 0.0
    %7829 = vmatprep.subr.mxu0 0.0
    %7830 = vmatpush1.msra.mxu0 0.0
    %7831 = vmatprep.subr.mxu0 0.0
    %7832 = vmatpush1.msra.mxu0 0.0
    %7833 = vmatprep.subr.mxu0 0.0
    %7834 = vmatpush1.msra.mxu0 0.0
    %7835 = vmatprep.subr.mxu0 0.0
    %7836 = vmatpush1.msra.mxu0 0.0
    %7837 = vmatprep.subr.mxu0 0.0
    %7838 = vmatpush1.msra.mxu0 0.0
    %7839 = vmatprep.subr.mxu0 0.0
    %7840 = vmatpush1.msra.mxu0 0.0
    %7841 = vmatprep.subr.mxu0 0.0
    %v7842 = vand.u32 %v4862, 4294901760
    %v7843 = vsub.f32 %v4862, %v7842
    %v7844 = vand.u32 %v7843, 4294901760
    %7845 = vmatpush1.msra.mxu0 %v7844
    %7846 = vmatprep.subr.mxu0 0.0
    %v7847 = vand.u32 %v4861, 4294901760
    %v7848 = vsub.f32 %v4861, %v7847
    %v7849 = vand.u32 %v7848, 4294901760
    %7850 = vmatpush1.msra.mxu0 %v7849
    %7851 = vmatprep.subr.mxu0 0.0
    %v7852 = vand.u32 %v4860, 4294901760
    %v7853 = vsub.f32 %v4860, %v7852
    %v7854 = vand.u32 %v7853, 4294901760
    %7855 = vmatpush1.msra.mxu0 %v7854
    %7856 = vmatprep.subr.mxu0 0.0
    %v7857 = vand.u32 %v4859, 4294901760
    %v7858 = vsub.f32 %v4859, %v7857
    %v7859 = vand.u32 %v7858, 4294901760
    %7860 = vmatpush1.msra.mxu0 %v7859
    %7861 = vmatprep.subr.mxu0 0.0
    %7862 = vmatpush2.msra.mxu0 0.0
    %7863 = vmatprep.subr.mxu0 0.0
    %7864 = vmatpush2.msra.mxu0 0.0
    %7865 = vmatprep.subr.mxu0 0.0
    %7866 = vmatpush2.msra.mxu0 0.0
    %7867 = vmatprep.subr.mxu0 0.0
    %7868 = vmatpush2.msra.mxu0 0.0
    %7869 = vmatprep.subr.mxu0 0.0
    %7870 = vmatpush2.msra.mxu0 0.0
    %7871 = vmatprep.subr.mxu0 0.0
    %7872 = vmatpush2.msra.mxu0 0.0
    %7873 = vmatprep.subr.mxu0 0.0
    %7874 = vmatpush2.msra.mxu0 0.0
    %7875 = vmatprep.subr.mxu0 0.0
    %7876 = vmatpush2.msra.mxu0 0.0
    %7877 = vmatprep.subr.mxu0 0.0
    %7878 = vmatpush2.msra.mxu0 0.0
    %7879 = vmatprep.subr.mxu0 0.0
    %7880 = vmatpush2.msra.mxu0 0.0
    %7881 = vmatprep.subr.mxu0 0.0
    %7882 = vmatpush2.msra.mxu0 0.0
    %7883 = vmatprep.subr.mxu0 0.0
    %7884 = vmatpush2.msra.mxu0 0.0
    %7885 = vmatprep.subr.mxu0 0.0
    %7886 = vmatpush2.msra.mxu0 0.0
    %7887 = vmatprep.subr.mxu0 0.0
    %7888 = vmatpush2.msra.mxu0 0.0
    %7889 = vmatprep.subr.mxu0 0.0
    %7890 = vmatpush2.msra.mxu0 0.0
    %7891 = vmatprep.subr.mxu0 0.0
    %7892 = vmatpush2.msra.mxu0 0.0
    %7893 = vmatprep.mubr.f32.mxu0 0.0
    %v7894 = vand.u32 %v7488, 4294901760
    %7895 = vmatmul.mubr.f32.gmra.mxu0 %v7894
    %v7896 = vpop.f32.mrf.mxu0
    %v7897 = vadd.f32 %v7814, %v7896
    %v7898 = vpop.f32.mrf.mxu0
    %7899 = vdwg.mxu0
    %7900 = vmatprep.subr.mxu0 0.0
    %7901 = vmatpush1.msra.mxu0 0.0
    %7902 = vmatprep.subr.mxu0 0.0
    %7903 = vmatpush1.msra.mxu0 0.0
    %7904 = vmatprep.subr.mxu0 0.0
    %7905 = vmatpush1.msra.mxu0 0.0
    %7906 = vmatprep.subr.mxu0 0.0
    %7907 = vmatpush1.msra.mxu0 0.0
    %7908 = vmatprep.subr.mxu0 0.0
    %7909 = vmatpush1.msra.mxu0 0.0
    %7910 = vmatprep.subr.mxu0 0.0
    %7911 = vmatpush1.msra.mxu0 0.0
    %7912 = vmatprep.subr.mxu0 0.0
    %7913 = vmatpush1.msra.mxu0 0.0
    %7914 = vmatprep.subr.mxu0 0.0
    %7915 = vmatpush1.msra.mxu0 0.0
    %7916 = vmatprep.subr.mxu0 0.0
    %7917 = vmatpush1.msra.mxu0 0.0
    %7918 = vmatprep.subr.mxu0 0.0
    %7919 = vmatpush1.msra.mxu0 0.0
    %7920 = vmatprep.subr.mxu0 0.0
    %7921 = vmatpush1.msra.mxu0 0.0
    %7922 = vmatprep.subr.mxu0 0.0
    %7923 = vmatpush1.msra.mxu0 0.0
    %7924 = vmatprep.subr.mxu0 0.0
    %v7925 = vand.u32 %v4862, 4294901760
    %7926 = vmatpush1.msra.mxu0 %v7925
    %7927 = vmatprep.subr.mxu0 0.0
    %v7928 = vand.u32 %v4861, 4294901760
    %7929 = vmatpush1.msra.mxu0 %v7928
    %7930 = vmatprep.subr.mxu0 0.0
    %v7931 = vand.u32 %v4860, 4294901760
    %7932 = vmatpush1.msra.mxu0 %v7931
    %7933 = vmatprep.subr.mxu0 0.0
    %v7934 = vand.u32 %v4859, 4294901760
    %7935 = vmatpush1.msra.mxu0 %v7934
    %7936 = vmatprep.subr.mxu0 0.0
    %7937 = vmatpush2.msra.mxu0 0.0
    %7938 = vmatprep.subr.mxu0 0.0
    %7939 = vmatpush2.msra.mxu0 0.0
    %7940 = vmatprep.subr.mxu0 0.0
    %7941 = vmatpush2.msra.mxu0 0.0
    %7942 = vmatprep.subr.mxu0 0.0
    %7943 = vmatpush2.msra.mxu0 0.0
    %7944 = vmatprep.subr.mxu0 0.0
    %7945 = vmatpush2.msra.mxu0 0.0
    %7946 = vmatprep.subr.mxu0 0.0
    %7947 = vmatpush2.msra.mxu0 0.0
    %7948 = vmatprep.subr.mxu0 0.0
    %7949 = vmatpush2.msra.mxu0 0.0
    %7950 = vmatprep.subr.mxu0 0.0
    %7951 = vmatpush2.msra.mxu0 0.0
    %7952 = vmatprep.subr.mxu0 0.0
    %7953 = vmatpush2.msra.mxu0 0.0
    %7954 = vmatprep.subr.mxu0 0.0
    %7955 = vmatpush2.msra.mxu0 0.0
    %7956 = vmatprep.subr.mxu0 0.0
    %7957 = vmatpush2.msra.mxu0 0.0
    %7958 = vmatprep.subr.mxu0 0.0
    %7959 = vmatpush2.msra.mxu0 0.0
    %7960 = vmatprep.subr.mxu0 0.0
    %7961 = vmatpush2.msra.mxu0 0.0
    %7962 = vmatprep.subr.mxu0 0.0
    %7963 = vmatpush2.msra.mxu0 0.0
    %7964 = vmatprep.subr.mxu0 0.0
    %7965 = vmatpush2.msra.mxu0 0.0
    %7966 = vmatprep.subr.mxu0 0.0
    %7967 = vmatpush2.msra.mxu0 0.0
    %7968 = vmatprep.mubr.f32.mxu0 0.0
    %v7969 = vand.u32 %v7488, 4294901760
    %7970 = vmatmul.mubr.f32.gmra.mxu0 %v7969
    %v7971 = vpop.f32.mrf.mxu0
    %v7972 = vadd.f32 %v7897, %v7971
    %v7973 = vpop.f32.mrf.mxu0
    %7974 = vdwg.mxu0
    %v7976 = vrot.slane %v7972, 4
    %v7978 = vadd.f32 %v7484, %v7976
    %v7979 = vsub.f32 0.0, %v7978
    %v7980 = vmul.f32 %v7979, 1.442695
    %v7981 = vpow.pop %v7980
    %v7982 = vadd.f32 %v7981, 1.0
    %v7983 = vrcp.pop %v7982
    %v7984 = vmul.f32 1.0, %v7983
    %v7985 = vtanh.pop %v7978
    %v7987 = vrot.slane %v7472, 2
    %v7989 = vmul.f32 %v7984, %v7987
    %7991 = vrot.lane.b32.xlu0 %v7985, 64
    %v7992 = vpop.permute.xlu0 %7991
    %v7994 = vmul.f32 %v7984, %v7992
    %7996 = vrot.lane.b32.xlu0 %v7994, 32
    %v7997 = vpop.permute.xlu0 %7996
    %v7999 = vadd.f32 %v7989, %v7997
    %v8000 = vtanh.pop %v7999
    %8002 = vrot.lane.b32.xlu0 %v8000, 64
    %v8003 = vpop.permute.xlu0 %8002
    %v8005 = vmul.f32 %v7984, %v8003
    %8007 = vrot.lane.b32.xlu0 %v8005, 32
    %v8008 = vpop.permute.xlu0 %8007
    %8010 = vst.msk [vmem:[#allocation4] sm:$0x30] %vm2227, %v8008
    %v8011 = vld [vmem:[#allocation2 + $0x8] sm:$0xc]
    %v8012 = vrot.slane %v8005, 4
    %8013 = vrot.lane.b32.xlu0 %v8012, 32
    %v8014 = vpop.permute.xlu0 %8013
    %v8015 = vsel %vm656, %v8014, 0
    %8017 = vmatprep.subr.mxu0 0.0
    %8018 = vmatpush1.msra.mxu0 0.0
    %8019 = vmatprep.subr.mxu0 0.0
    %8020 = vmatpush1.msra.mxu0 0.0
    %8021 = vmatprep.subr.mxu0 0.0
    %8022 = vmatpush1.msra.mxu0 0.0
    %8023 = vmatprep.subr.mxu0 0.0
    %8024 = vmatpush1.msra.mxu0 0.0
    %8025 = vmatprep.subr.mxu0 0.0
    %8026 = vmatpush1.msra.mxu0 0.0
    %8027 = vmatprep.subr.mxu0 0.0
    %8028 = vmatpush1.msra.mxu0 0.0
    %8029 = vmatprep.subr.mxu0 0.0
    %8030 = vmatpush1.msra.mxu0 0.0
    %8031 = vmatprep.subr.mxu0 0.0
    %8032 = vmatpush1.msra.mxu0 0.0
    %8033 = vmatprep.subr.mxu0 0.0
    %8034 = vmatpush1.msra.mxu0 0.0
    %8035 = vmatprep.subr.mxu0 0.0
    %8036 = vmatpush1.msra.mxu0 0.0
    %8037 = vmatprep.subr.mxu0 0.0
    %8038 = vmatpush1.msra.mxu0 0.0
    %8039 = vmatprep.subr.mxu0 0.0
    %8040 = vmatpush1.msra.mxu0 0.0
    %8041 = vmatprep.subr.mxu0 0.0
    %v8042 = vand.u32 %v4862, 4294901760
    %8043 = vmatpush1.msra.mxu0 %v8042
    %8044 = vmatprep.subr.mxu0 0.0
    %v8045 = vand.u32 %v4861, 4294901760
    %8046 = vmatpush1.msra.mxu0 %v8045
    %8047 = vmatprep.subr.mxu0 0.0
    %v8048 = vand.u32 %v4860, 4294901760
    %8049 = vmatpush1.msra.mxu0 %v8048
    %8050 = vmatprep.subr.mxu0 0.0
    %v8051 = vand.u32 %v4859, 4294901760
    %8052 = vmatpush1.msra.mxu0 %v8051
    %8053 = vmatprep.subr.mxu0 0.0
    %8054 = vmatpush2.msra.mxu0 0.0
    %8055 = vmatprep.subr.mxu0 0.0
    %8056 = vmatpush2.msra.mxu0 0.0
    %8057 = vmatprep.subr.mxu0 0.0
    %8058 = vmatpush2.msra.mxu0 0.0
    %8059 = vmatprep.subr.mxu0 0.0
    %8060 = vmatpush2.msra.mxu0 0.0
    %8061 = vmatprep.subr.mxu0 0.0
    %8062 = vmatpush2.msra.mxu0 0.0
    %8063 = vmatprep.subr.mxu0 0.0
    %8064 = vmatpush2.msra.mxu0 0.0
    %8065 = vmatprep.subr.mxu0 0.0
    %8066 = vmatpush2.msra.mxu0 0.0
    %8067 = vmatprep.subr.mxu0 0.0
    %8068 = vmatpush2.msra.mxu0 0.0
    %8069 = vmatprep.subr.mxu0 0.0
    %8070 = vmatpush2.msra.mxu0 0.0
    %8071 = vmatprep.subr.mxu0 0.0
    %8072 = vmatpush2.msra.mxu0 0.0
    %8073 = vmatprep.subr.mxu0 0.0
    %8074 = vmatpush2.msra.mxu0 0.0
    %8075 = vmatprep.subr.mxu0 0.0
    %8076 = vmatpush2.msra.mxu0 0.0
    %8077 = vmatprep.subr.mxu0 0.0
    %8078 = vmatpush2.msra.mxu0 0.0
    %8079 = vmatprep.subr.mxu0 0.0
    %8080 = vmatpush2.msra.mxu0 0.0
    %8081 = vmatprep.subr.mxu0 0.0
    %8082 = vmatpush2.msra.mxu0 0.0
    %8083 = vmatprep.subr.mxu0 0.0
    %8084 = vmatpush2.msra.mxu0 0.0
    %8085 = vmatprep.mubr.f32.mxu0 0.0
    %v8086 = vand.u32 %v8015, 4294901760
    %v8087 = vsub.f32 %v8015, %v8086
    %v8088 = vand.u32 %v8087, 4294901760
    %v8089 = vsub.f32 %v8087, %v8088
    %v8090 = vand.u32 %v8089, 4294901760
    %8091 = vmatmul.mubr.f32.gmra.mxu0 %v8090
    %v8092 = vpop.f32.mrf.mxu0
    %v8093 = vadd.f32 0.0, %v8092
    %v8094 = vpop.f32.mrf.mxu0
    %8095 = vdwg.mxu0
    %8096 = vmatprep.subr.mxu0 0.0
    %8097 = vmatpush1.msra.mxu0 0.0
    %8098 = vmatprep.subr.mxu0 0.0
    %8099 = vmatpush1.msra.mxu0 0.0
    %8100 = vmatprep.subr.mxu0 0.0
    %8101 = vmatpush1.msra.mxu0 0.0
    %8102 = vmatprep.subr.mxu0 0.0
    %8103 = vmatpush1.msra.mxu0 0.0
    %8104 = vmatprep.subr.mxu0 0.0
    %8105 = vmatpush1.msra.mxu0 0.0
    %8106 = vmatprep.subr.mxu0 0.0
    %8107 = vmatpush1.msra.mxu0 0.0
    %8108 = vmatprep.subr.mxu0 0.0
    %8109 = vmatpush1.msra.mxu0 0.0
    %8110 = vmatprep.subr.mxu0 0.0
    %8111 = vmatpush1.msra.mxu0 0.0
    %8112 = vmatprep.subr.mxu0 0.0
    %8113 = vmatpush1.msra.mxu0 0.0
    %8114 = vmatprep.subr.mxu0 0.0
    %8115 = vmatpush1.msra.mxu0 0.0
    %8116 = vmatprep.subr.mxu0 0.0
    %8117 = vmatpush1.msra.mxu0 0.0
    %8118 = vmatprep.subr.mxu0 0.0
    %8119 = vmatpush1.msra.mxu0 0.0
    %8120 = vmatprep.subr.mxu0 0.0
    %v8121 = vand.u32 %v4862, 4294901760
    %v8122 = vsub.f32 %v4862, %v8121
    %v8123 = vand.u32 %v8122, 4294901760
    %v8124 = vsub.f32 %v8122, %v8123
    %v8125 = vand.u32 %v8124, 4294901760
    %8126 = vmatpush1.msra.mxu0 %v8125
    %8127 = vmatprep.subr.mxu0 0.0
    %v8128 = vand.u32 %v4861, 4294901760
    %v8129 = vsub.f32 %v4861, %v8128
    %v8130 = vand.u32 %v8129, 4294901760
    %v8131 = vsub.f32 %v8129, %v8130
    %v8132 = vand.u32 %v8131, 4294901760
    %8133 = vmatpush1.msra.mxu0 %v8132
    %8134 = vmatprep.subr.mxu0 0.0
    %v8135 = vand.u32 %v4860, 4294901760
    %v8136 = vsub.f32 %v4860, %v8135
    %v8137 = vand.u32 %v8136, 4294901760
    %v8138 = vsub.f32 %v8136, %v8137
    %v8139 = vand.u32 %v8138, 4294901760
    %8140 = vmatpush1.msra.mxu0 %v8139
    %8141 = vmatprep.subr.mxu0 0.0
    %v8142 = vand.u32 %v4859, 4294901760
    %v8143 = vsub.f32 %v4859, %v8142
    %v8144 = vand.u32 %v8143, 4294901760
    %v8145 = vsub.f32 %v8143, %v8144
    %v8146 = vand.u32 %v8145, 4294901760
    %8147 = vmatpush1.msra.mxu0 %v8146
    %8148 = vmatprep.subr.mxu0 0.0
    %8149 = vmatpush2.msra.mxu0 0.0
    %8150 = vmatprep.subr.mxu0 0.0
    %8151 = vmatpush2.msra.mxu0 0.0
    %8152 = vmatprep.subr.mxu0 0.0
    %8153 = vmatpush2.msra.mxu0 0.0
    %8154 = vmatprep.subr.mxu0 0.0
    %8155 = vmatpush2.msra.mxu0 0.0
    %8156 = vmatprep.subr.mxu0 0.0
    %8157 = vmatpush2.msra.mxu0 0.0
    %8158 = vmatprep.subr.mxu0 0.0
    %8159 = vmatpush2.msra.mxu0 0.0
    %8160 = vmatprep.subr.mxu0 0.0
    %8161 = vmatpush2.msra.mxu0 0.0
    %8162 = vmatprep.subr.mxu0 0.0
    %8163 = vmatpush2.msra.mxu0 0.0
    %8164 = vmatprep.subr.mxu0 0.0
    %8165 = vmatpush2.msra.mxu0 0.0
    %8166 = vmatprep.subr.mxu0 0.0
    %8167 = vmatpush2.msra.mxu0 0.0
    %8168 = vmatprep.subr.mxu0 0.0
    %8169 = vmatpush2.msra.mxu0 0.0
    %8170 = vmatprep.subr.mxu0 0.0
    %8171 = vmatpush2.msra.mxu0 0.0
    %8172 = vmatprep.subr.mxu0 0.0
    %8173 = vmatpush2.msra.mxu0 0.0
    %8174 = vmatprep.subr.mxu0 0.0
    %8175 = vmatpush2.msra.mxu0 0.0
    %8176 = vmatprep.subr.mxu0 0.0
    %8177 = vmatpush2.msra.mxu0 0.0
    %8178 = vmatprep.subr.mxu0 0.0
    %8179 = vmatpush2.msra.mxu0 0.0
    %8180 = vmatprep.mubr.f32.mxu0 0.0
    %v8181 = vand.u32 %v8015, 4294901760
    %8182 = vmatmul.mubr.f32.gmra.mxu0 %v8181
    %v8183 = vpop.f32.mrf.mxu0
    %v8184 = vadd.f32 %v8093, %v8183
    %v8185 = vpop.f32.mrf.mxu0
    %8186 = vdwg.mxu0
    %8187 = vmatprep.subr.mxu0 0.0
    %8188 = vmatpush1.msra.mxu0 0.0
    %8189 = vmatprep.subr.mxu0 0.0
    %8190 = vmatpush1.msra.mxu0 0.0
    %8191 = vmatprep.subr.mxu0 0.0
    %8192 = vmatpush1.msra.mxu0 0.0
    %8193 = vmatprep.subr.mxu0 0.0
    %8194 = vmatpush1.msra.mxu0 0.0
    %8195 = vmatprep.subr.mxu0 0.0
    %8196 = vmatpush1.msra.mxu0 0.0
    %8197 = vmatprep.subr.mxu0 0.0
    %8198 = vmatpush1.msra.mxu0 0.0
    %8199 = vmatprep.subr.mxu0 0.0
    %8200 = vmatpush1.msra.mxu0 0.0
    %8201 = vmatprep.subr.mxu0 0.0
    %8202 = vmatpush1.msra.mxu0 0.0
    %8203 = vmatprep.subr.mxu0 0.0
    %8204 = vmatpush1.msra.mxu0 0.0
    %8205 = vmatprep.subr.mxu0 0.0
    %8206 = vmatpush1.msra.mxu0 0.0
    %8207 = vmatprep.subr.mxu0 0.0
    %8208 = vmatpush1.msra.mxu0 0.0
    %8209 = vmatprep.subr.mxu0 0.0
    %8210 = vmatpush1.msra.mxu0 0.0
    %8211 = vmatprep.subr.mxu0 0.0
    %v8212 = vand.u32 %v4862, 4294901760
    %v8213 = vsub.f32 %v4862, %v8212
    %8214 = vmatpush1.msra.mxu0 %v8213
    %8215 = vmatprep.subr.mxu0 0.0
    %v8216 = vand.u32 %v4861, 4294901760
    %v8217 = vsub.f32 %v4861, %v8216
    %8218 = vmatpush1.msra.mxu0 %v8217
    %8219 = vmatprep.subr.mxu0 0.0
    %v8220 = vand.u32 %v4860, 4294901760
    %v8221 = vsub.f32 %v4860, %v8220
    %8222 = vmatpush1.msra.mxu0 %v8221
    %8223 = vmatprep.subr.mxu0 0.0
    %v8224 = vand.u32 %v4859, 4294901760
    %v8225 = vsub.f32 %v4859, %v8224
    %8226 = vmatpush1.msra.mxu0 %v8225
    %8227 = vmatprep.subr.mxu0 0.0
    %8228 = vmatpush2.msra.mxu0 0.0
    %8229 = vmatprep.subr.mxu0 0.0
    %8230 = vmatpush2.msra.mxu0 0.0
    %8231 = vmatprep.subr.mxu0 0.0
    %8232 = vmatpush2.msra.mxu0 0.0
    %8233 = vmatprep.subr.mxu0 0.0
    %8234 = vmatpush2.msra.mxu0 0.0
    %8235 = vmatprep.subr.mxu0 0.0
    %8236 = vmatpush2.msra.mxu0 0.0
    %8237 = vmatprep.subr.mxu0 0.0
    %8238 = vmatpush2.msra.mxu0 0.0
    %8239 = vmatprep.subr.mxu0 0.0
    %8240 = vmatpush2.msra.mxu0 0.0
    %8241 = vmatprep.subr.mxu0 0.0
    %8242 = vmatpush2.msra.mxu0 0.0
    %8243 = vmatprep.subr.mxu0 0.0
    %8244 = vmatpush2.msra.mxu0 0.0
    %8245 = vmatprep.subr.mxu0 0.0
    %8246 = vmatpush2.msra.mxu0 0.0
    %8247 = vmatprep.subr.mxu0 0.0
    %8248 = vmatpush2.msra.mxu0 0.0
    %8249 = vmatprep.subr.mxu0 0.0
    %8250 = vmatpush2.msra.mxu0 0.0
    %8251 = vmatprep.subr.mxu0 0.0
    %8252 = vmatpush2.msra.mxu0 0.0
    %8253 = vmatprep.subr.mxu0 0.0
    %8254 = vmatpush2.msra.mxu0 0.0
    %8255 = vmatprep.subr.mxu0 0.0
    %8256 = vmatpush2.msra.mxu0 0.0
    %8257 = vmatprep.subr.mxu0 0.0
    %8258 = vmatpush2.msra.mxu0 0.0
    %8259 = vmatprep.mubr.f32.mxu0 0.0
    %v8260 = vand.u32 %v8015, 4294901760
    %v8261 = vsub.f32 %v8015, %v8260
    %8262 = vmatmul.mubr.f32.gmra.mxu0 %v8261
    %v8263 = vpop.f32.mrf.mxu0
    %v8264 = vadd.f32 %v8184, %v8263
    %v8265 = vpop.f32.mrf.mxu0
    %8266 = vdwg.mxu0
    %8267 = vmatprep.subr.mxu0 0.0
    %8268 = vmatpush1.msra.mxu0 0.0
    %8269 = vmatprep.subr.mxu0 0.0
    %8270 = vmatpush1.msra.mxu0 0.0
    %8271 = vmatprep.subr.mxu0 0.0
    %8272 = vmatpush1.msra.mxu0 0.0
    %8273 = vmatprep.subr.mxu0 0.0
    %8274 = vmatpush1.msra.mxu0 0.0
    %8275 = vmatprep.subr.mxu0 0.0
    %8276 = vmatpush1.msra.mxu0 0.0
    %8277 = vmatprep.subr.mxu0 0.0
    %8278 = vmatpush1.msra.mxu0 0.0
    %8279 = vmatprep.subr.mxu0 0.0
    %8280 = vmatpush1.msra.mxu0 0.0
    %8281 = vmatprep.subr.mxu0 0.0
    %8282 = vmatpush1.msra.mxu0 0.0
    %8283 = vmatprep.subr.mxu0 0.0
    %8284 = vmatpush1.msra.mxu0 0.0
    %8285 = vmatprep.subr.mxu0 0.0
    %8286 = vmatpush1.msra.mxu0 0.0
    %8287 = vmatprep.subr.mxu0 0.0
    %8288 = vmatpush1.msra.mxu0 0.0
    %8289 = vmatprep.subr.mxu0 0.0
    %8290 = vmatpush1.msra.mxu0 0.0
    %8291 = vmatprep.subr.mxu0 0.0
    %v8292 = vand.u32 %v4862, 4294901760
    %8293 = vmatpush1.msra.mxu0 %v8292
    %8294 = vmatprep.subr.mxu0 0.0
    %v8295 = vand.u32 %v4861, 4294901760
    %8296 = vmatpush1.msra.mxu0 %v8295
    %8297 = vmatprep.subr.mxu0 0.0
    %v8298 = vand.u32 %v4860, 4294901760
    %8299 = vmatpush1.msra.mxu0 %v8298
    %8300 = vmatprep.subr.mxu0 0.0
    %v8301 = vand.u32 %v4859, 4294901760
    %8302 = vmatpush1.msra.mxu0 %v8301
    %8303 = vmatprep.subr.mxu0 0.0
    %8304 = vmatpush2.msra.mxu0 0.0
    %8305 = vmatprep.subr.mxu0 0.0
    %8306 = vmatpush2.msra.mxu0 0.0
    %8307 = vmatprep.subr.mxu0 0.0
    %8308 = vmatpush2.msra.mxu0 0.0
    %8309 = vmatprep.subr.mxu0 0.0
    %8310 = vmatpush2.msra.mxu0 0.0
    %8311 = vmatprep.subr.mxu0 0.0
    %8312 = vmatpush2.msra.mxu0 0.0
    %8313 = vmatprep.subr.mxu0 0.0
    %8314 = vmatpush2.msra.mxu0 0.0
    %8315 = vmatprep.subr.mxu0 0.0
    %8316 = vmatpush2.msra.mxu0 0.0
    %8317 = vmatprep.subr.mxu0 0.0
    %8318 = vmatpush2.msra.mxu0 0.0
    %8319 = vmatprep.subr.mxu0 0.0
    %8320 = vmatpush2.msra.mxu0 0.0
    %8321 = vmatprep.subr.mxu0 0.0
    %8322 = vmatpush2.msra.mxu0 0.0
    %8323 = vmatprep.subr.mxu0 0.0
    %8324 = vmatpush2.msra.mxu0 0.0
    %8325 = vmatprep.subr.mxu0 0.0
    %8326 = vmatpush2.msra.mxu0 0.0
    %8327 = vmatprep.subr.mxu0 0.0
    %8328 = vmatpush2.msra.mxu0 0.0
    %8329 = vmatprep.subr.mxu0 0.0
    %8330 = vmatpush2.msra.mxu0 0.0
    %8331 = vmatprep.subr.mxu0 0.0
    %8332 = vmatpush2.msra.mxu0 0.0
    %8333 = vmatprep.subr.mxu0 0.0
    %8334 = vmatpush2.msra.mxu0 0.0
    %8335 = vmatprep.mubr.f32.mxu0 0.0
    %v8336 = vand.u32 %v8015, 4294901760
    %v8337 = vsub.f32 %v8015, %v8336
    %v8338 = vand.u32 %v8337, 4294901760
    %8339 = vmatmul.mubr.f32.gmra.mxu0 %v8338
    %v8340 = vpop.f32.mrf.mxu0
    %v8341 = vadd.f32 %v8264, %v8340
    %v8342 = vpop.f32.mrf.mxu0
    %8343 = vdwg.mxu0
    %8344 = vmatprep.subr.mxu0 0.0
    %8345 = vmatpush1.msra.mxu0 0.0
    %8346 = vmatprep.subr.mxu0 0.0
    %8347 = vmatpush1.msra.mxu0 0.0
    %8348 = vmatprep.subr.mxu0 0.0
    %8349 = vmatpush1.msra.mxu0 0.0
    %8350 = vmatprep.subr.mxu0 0.0
    %8351 = vmatpush1.msra.mxu0 0.0
    %8352 = vmatprep.subr.mxu0 0.0
    %8353 = vmatpush1.msra.mxu0 0.0
    %8354 = vmatprep.subr.mxu0 0.0
    %8355 = vmatpush1.msra.mxu0 0.0
    %8356 = vmatprep.subr.mxu0 0.0
    %8357 = vmatpush1.msra.mxu0 0.0
    %8358 = vmatprep.subr.mxu0 0.0
    %8359 = vmatpush1.msra.mxu0 0.0
    %8360 = vmatprep.subr.mxu0 0.0
    %8361 = vmatpush1.msra.mxu0 0.0
    %8362 = vmatprep.subr.mxu0 0.0
    %8363 = vmatpush1.msra.mxu0 0.0
    %8364 = vmatprep.subr.mxu0 0.0
    %8365 = vmatpush1.msra.mxu0 0.0
    %8366 = vmatprep.subr.mxu0 0.0
    %8367 = vmatpush1.msra.mxu0 0.0
    %8368 = vmatprep.subr.mxu0 0.0
    %v8369 = vand.u32 %v4862, 4294901760
    %v8370 = vsub.f32 %v4862, %v8369
    %v8371 = vand.u32 %v8370, 4294901760
    %8372 = vmatpush1.msra.mxu0 %v8371
    %8373 = vmatprep.subr.mxu0 0.0
    %v8374 = vand.u32 %v4861, 4294901760
    %v8375 = vsub.f32 %v4861, %v8374
    %v8376 = vand.u32 %v8375, 4294901760
    %8377 = vmatpush1.msra.mxu0 %v8376
    %8378 = vmatprep.subr.mxu0 0.0
    %v8379 = vand.u32 %v4860, 4294901760
    %v8380 = vsub.f32 %v4860, %v8379
    %v8381 = vand.u32 %v8380, 4294901760
    %8382 = vmatpush1.msra.mxu0 %v8381
    %8383 = vmatprep.subr.mxu0 0.0
    %v8384 = vand.u32 %v4859, 4294901760
    %v8385 = vsub.f32 %v4859, %v8384
    %v8386 = vand.u32 %v8385, 4294901760
    %8387 = vmatpush1.msra.mxu0 %v8386
    %8388 = vmatprep.subr.mxu0 0.0
    %8389 = vmatpush2.msra.mxu0 0.0
    %8390 = vmatprep.subr.mxu0 0.0
    %8391 = vmatpush2.msra.mxu0 0.0
    %8392 = vmatprep.subr.mxu0 0.0
    %8393 = vmatpush2.msra.mxu0 0.0
    %8394 = vmatprep.subr.mxu0 0.0
    %8395 = vmatpush2.msra.mxu0 0.0
    %8396 = vmatprep.subr.mxu0 0.0
    %8397 = vmatpush2.msra.mxu0 0.0
    %8398 = vmatprep.subr.mxu0 0.0
    %8399 = vmatpush2.msra.mxu0 0.0
    %8400 = vmatprep.subr.mxu0 0.0
    %8401 = vmatpush2.msra.mxu0 0.0
    %8402 = vmatprep.subr.mxu0 0.0
    %8403 = vmatpush2.msra.mxu0 0.0
    %8404 = vmatprep.subr.mxu0 0.0
    %8405 = vmatpush2.msra.mxu0 0.0
    %8406 = vmatprep.subr.mxu0 0.0
    %8407 = vmatpush2.msra.mxu0 0.0
    %8408 = vmatprep.subr.mxu0 0.0
    %8409 = vmatpush2.msra.mxu0 0.0
    %8410 = vmatprep.subr.mxu0 0.0
    %8411 = vmatpush2.msra.mxu0 0.0
    %8412 = vmatprep.subr.mxu0 0.0
    %8413 = vmatpush2.msra.mxu0 0.0
    %8414 = vmatprep.subr.mxu0 0.0
    %8415 = vmatpush2.msra.mxu0 0.0
    %8416 = vmatprep.subr.mxu0 0.0
    %8417 = vmatpush2.msra.mxu0 0.0
    %8418 = vmatprep.subr.mxu0 0.0
    %8419 = vmatpush2.msra.mxu0 0.0
    %8420 = vmatprep.mubr.f32.mxu0 0.0
    %v8421 = vand.u32 %v8015, 4294901760
    %8422 = vmatmul.mubr.f32.gmra.mxu0 %v8421
    %v8423 = vpop.f32.mrf.mxu0
    %v8424 = vadd.f32 %v8341, %v8423
    %v8425 = vpop.f32.mrf.mxu0
    %8426 = vdwg.mxu0
    %8427 = vmatprep.subr.mxu0 0.0
    %8428 = vmatpush1.msra.mxu0 0.0
    %8429 = vmatprep.subr.mxu0 0.0
    %8430 = vmatpush1.msra.mxu0 0.0
    %8431 = vmatprep.subr.mxu0 0.0
    %8432 = vmatpush1.msra.mxu0 0.0
    %8433 = vmatprep.subr.mxu0 0.0
    %8434 = vmatpush1.msra.mxu0 0.0
    %8435 = vmatprep.subr.mxu0 0.0
    %8436 = vmatpush1.msra.mxu0 0.0
    %8437 = vmatprep.subr.mxu0 0.0
    %8438 = vmatpush1.msra.mxu0 0.0
    %8439 = vmatprep.subr.mxu0 0.0
    %8440 = vmatpush1.msra.mxu0 0.0
    %8441 = vmatprep.subr.mxu0 0.0
    %8442 = vmatpush1.msra.mxu0 0.0
    %8443 = vmatprep.subr.mxu0 0.0
    %8444 = vmatpush1.msra.mxu0 0.0
    %8445 = vmatprep.subr.mxu0 0.0
    %8446 = vmatpush1.msra.mxu0 0.0
    %8447 = vmatprep.subr.mxu0 0.0
    %8448 = vmatpush1.msra.mxu0 0.0
    %8449 = vmatprep.subr.mxu0 0.0
    %8450 = vmatpush1.msra.mxu0 0.0
    %8451 = vmatprep.subr.mxu0 0.0
    %v8452 = vand.u32 %v4862, 4294901760
    %8453 = vmatpush1.msra.mxu0 %v8452
    %8454 = vmatprep.subr.mxu0 0.0
    %v8455 = vand.u32 %v4861, 4294901760
    %8456 = vmatpush1.msra.mxu0 %v8455
    %8457 = vmatprep.subr.mxu0 0.0
    %v8458 = vand.u32 %v4860, 4294901760
    %8459 = vmatpush1.msra.mxu0 %v8458
    %8460 = vmatprep.subr.mxu0 0.0
    %v8461 = vand.u32 %v4859, 4294901760
    %8462 = vmatpush1.msra.mxu0 %v8461
    %8463 = vmatprep.subr.mxu0 0.0
    %8464 = vmatpush2.msra.mxu0 0.0
    %8465 = vmatprep.subr.mxu0 0.0
    %8466 = vmatpush2.msra.mxu0 0.0
    %8467 = vmatprep.subr.mxu0 0.0
    %8468 = vmatpush2.msra.mxu0 0.0
    %8469 = vmatprep.subr.mxu0 0.0
    %8470 = vmatpush2.msra.mxu0 0.0
    %8471 = vmatprep.subr.mxu0 0.0
    %8472 = vmatpush2.msra.mxu0 0.0
    %8473 = vmatprep.subr.mxu0 0.0
    %8474 = vmatpush2.msra.mxu0 0.0
    %8475 = vmatprep.subr.mxu0 0.0
    %8476 = vmatpush2.msra.mxu0 0.0
    %8477 = vmatprep.subr.mxu0 0.0
    %8478 = vmatpush2.msra.mxu0 0.0
    %8479 = vmatprep.subr.mxu0 0.0
    %8480 = vmatpush2.msra.mxu0 0.0
    %8481 = vmatprep.subr.mxu0 0.0
    %8482 = vmatpush2.msra.mxu0 0.0
    %8483 = vmatprep.subr.mxu0 0.0
    %8484 = vmatpush2.msra.mxu0 0.0
    %8485 = vmatprep.subr.mxu0 0.0
    %8486 = vmatpush2.msra.mxu0 0.0
    %8487 = vmatprep.subr.mxu0 0.0
    %8488 = vmatpush2.msra.mxu0 0.0
    %8489 = vmatprep.subr.mxu0 0.0
    %8490 = vmatpush2.msra.mxu0 0.0
    %8491 = vmatprep.subr.mxu0 0.0
    %8492 = vmatpush2.msra.mxu0 0.0
    %8493 = vmatprep.subr.mxu0 0.0
    %8494 = vmatpush2.msra.mxu0 0.0
    %8495 = vmatprep.mubr.f32.mxu0 0.0
    %v8496 = vand.u32 %v8015, 4294901760
    %8497 = vmatmul.mubr.f32.gmra.mxu0 %v8496
    %v8498 = vpop.f32.mrf.mxu0
    %v8499 = vadd.f32 %v8424, %v8498
    %v8500 = vpop.f32.mrf.mxu0
    %8501 = vdwg.mxu0
    %v8503 = vrot.slane %v8499, 6
    %v8505 = vadd.f32 %v8011, %v8503
    %v8506 = vsub.f32 0.0, %v8505
    %v8507 = vmul.f32 %v8506, 1.442695
    %v8508 = vpow.pop %v8507
    %v8509 = vadd.f32 %v8508, 1.0
    %v8510 = vrcp.pop %v8509
    %v8511 = vmul.f32 1.0, %v8510
    %v8512 = vtanh.pop %v8505
    %v8514 = vrot.slane %v7999, 2
    %v8516 = vmul.f32 %v8511, %v8514
    %8518 = vrot.lane.b32.xlu0 %v8512, 64
    %v8519 = vpop.permute.xlu0 %8518
    %v8521 = vmul.f32 %v8511, %v8519
    %8523 = vrot.lane.b32.xlu0 %v8521, 32
    %v8524 = vpop.permute.xlu0 %8523
    %v8526 = vadd.f32 %v8516, %v8524
    %v8527 = vtanh.pop %v8526
    %8529 = vrot.lane.b32.xlu0 %v8527, 64
    %v8530 = vpop.permute.xlu0 %8529
    %v8532 = vmul.f32 %v8511, %v8530
    %8534 = vrot.lane.b32.xlu0 %v8532, 32
    %v8535 = vpop.permute.xlu0 %8534
    %8537 = vst.msk [vmem:[#allocation4] sm:$0xc] %vm1699, %v8535
    %v8538 = vld [vmem:[#allocation2 + $0x8] sm:$0x3]
    %v8539 = vrot.slane %v8532, 2
    %8540 = vrot.lane.b32.xlu0 %v8539, 32
    %v8541 = vpop.permute.xlu0 %8540
    %v8542 = vsel %vm656, %v8541, 0
    %8544 = vmatprep.subr.mxu0 0.0
    %8545 = vmatpush1.msra.mxu0 0.0
    %8546 = vmatprep.subr.mxu0 0.0
    %8547 = vmatpush1.msra.mxu0 0.0
    %8548 = vmatprep.subr.mxu0 0.0
    %8549 = vmatpush1.msra.mxu0 0.0
    %8550 = vmatprep.subr.mxu0 0.0
    %8551 = vmatpush1.msra.mxu0 0.0
    %8552 = vmatprep.subr.mxu0 0.0
    %8553 = vmatpush1.msra.mxu0 0.0
    %8554 = vmatprep.subr.mxu0 0.0
    %8555 = vmatpush1.msra.mxu0 0.0
    %8556 = vmatprep.subr.mxu0 0.0
    %8557 = vmatpush1.msra.mxu0 0.0
    %8558 = vmatprep.subr.mxu0 0.0
    %8559 = vmatpush1.msra.mxu0 0.0
    %8560 = vmatprep.subr.mxu0 0.0
    %8561 = vmatpush1.msra.mxu0 0.0
    %8562 = vmatprep.subr.mxu0 0.0
    %8563 = vmatpush1.msra.mxu0 0.0
    %8564 = vmatprep.subr.mxu0 0.0
    %8565 = vmatpush1.msra.mxu0 0.0
    %8566 = vmatprep.subr.mxu0 0.0
    %8567 = vmatpush1.msra.mxu0 0.0
    %8568 = vmatprep.subr.mxu0 0.0
    %v8569 = vand.u32 %v4862, 4294901760
    %8570 = vmatpush1.msra.mxu0 %v8569
    %8571 = vmatprep.subr.mxu0 0.0
    %v8572 = vand.u32 %v4861, 4294901760
    %8573 = vmatpush1.msra.mxu0 %v8572
    %8574 = vmatprep.subr.mxu0 0.0
    %v8575 = vand.u32 %v4860, 4294901760
    %8576 = vmatpush1.msra.mxu0 %v8575
    %8577 = vmatprep.subr.mxu0 0.0
    %v8578 = vand.u32 %v4859, 4294901760
    %8579 = vmatpush1.msra.mxu0 %v8578
    %8580 = vmatprep.subr.mxu0 0.0
    %8581 = vmatpush2.msra.mxu0 0.0
    %8582 = vmatprep.subr.mxu0 0.0
    %8583 = vmatpush2.msra.mxu0 0.0
    %8584 = vmatprep.subr.mxu0 0.0
    %8585 = vmatpush2.msra.mxu0 0.0
    %8586 = vmatprep.subr.mxu0 0.0
    %8587 = vmatpush2.msra.mxu0 0.0
    %8588 = vmatprep.subr.mxu0 0.0
    %8589 = vmatpush2.msra.mxu0 0.0
    %8590 = vmatprep.subr.mxu0 0.0
    %8591 = vmatpush2.msra.mxu0 0.0
    %8592 = vmatprep.subr.mxu0 0.0
    %8593 = vmatpush2.msra.mxu0 0.0
    %8594 = vmatprep.subr.mxu0 0.0
    %8595 = vmatpush2.msra.mxu0 0.0
    %8596 = vmatprep.subr.mxu0 0.0
    %8597 = vmatpush2.msra.mxu0 0.0
    %8598 = vmatprep.subr.mxu0 0.0
    %8599 = vmatpush2.msra.mxu0 0.0
    %8600 = vmatprep.subr.mxu0 0.0
    %8601 = vmatpush2.msra.mxu0 0.0
    %8602 = vmatprep.subr.mxu0 0.0
    %8603 = vmatpush2.msra.mxu0 0.0
    %8604 = vmatprep.subr.mxu0 0.0
    %8605 = vmatpush2.msra.mxu0 0.0
    %8606 = vmatprep.subr.mxu0 0.0
    %8607 = vmatpush2.msra.mxu0 0.0
    %8608 = vmatprep.subr.mxu0 0.0
    %8609 = vmatpush2.msra.mxu0 0.0
    %8610 = vmatprep.subr.mxu0 0.0
    %8611 = vmatpush2.msra.mxu0 0.0
    %8612 = vmatprep.mubr.f32.mxu0 0.0
    %v8613 = vand.u32 %v8542, 4294901760
    %v8614 = vsub.f32 %v8542, %v8613
    %v8615 = vand.u32 %v8614, 4294901760
    %v8616 = vsub.f32 %v8614, %v8615
    %v8617 = vand.u32 %v8616, 4294901760
    %8618 = vmatmul.mubr.f32.gmra.mxu0 %v8617
    %v8619 = vpop.f32.mrf.mxu0
    %v8620 = vadd.f32 0.0, %v8619
    %v8621 = vpop.f32.mrf.mxu0
    %8622 = vdwg.mxu0
    %8623 = vmatprep.subr.mxu0 0.0
    %8624 = vmatpush1.msra.mxu0 0.0
    %8625 = vmatprep.subr.mxu0 0.0
    %8626 = vmatpush1.msra.mxu0 0.0
    %8627 = vmatprep.subr.mxu0 0.0
    %8628 = vmatpush1.msra.mxu0 0.0
    %8629 = vmatprep.subr.mxu0 0.0
    %8630 = vmatpush1.msra.mxu0 0.0
    %8631 = vmatprep.subr.mxu0 0.0
    %8632 = vmatpush1.msra.mxu0 0.0
    %8633 = vmatprep.subr.mxu0 0.0
    %8634 = vmatpush1.msra.mxu0 0.0
    %8635 = vmatprep.subr.mxu0 0.0
    %8636 = vmatpush1.msra.mxu0 0.0
    %8637 = vmatprep.subr.mxu0 0.0
    %8638 = vmatpush1.msra.mxu0 0.0
    %8639 = vmatprep.subr.mxu0 0.0
    %8640 = vmatpush1.msra.mxu0 0.0
    %8641 = vmatprep.subr.mxu0 0.0
    %8642 = vmatpush1.msra.mxu0 0.0
    %8643 = vmatprep.subr.mxu0 0.0
    %8644 = vmatpush1.msra.mxu0 0.0
    %8645 = vmatprep.subr.mxu0 0.0
    %8646 = vmatpush1.msra.mxu0 0.0
    %8647 = vmatprep.subr.mxu0 0.0
    %v8648 = vand.u32 %v4862, 4294901760
    %v8649 = vsub.f32 %v4862, %v8648
    %v8650 = vand.u32 %v8649, 4294901760
    %v8651 = vsub.f32 %v8649, %v8650
    %v8652 = vand.u32 %v8651, 4294901760
    %8653 = vmatpush1.msra.mxu0 %v8652
    %8654 = vmatprep.subr.mxu0 0.0
    %v8655 = vand.u32 %v4861, 4294901760
    %v8656 = vsub.f32 %v4861, %v8655
    %v8657 = vand.u32 %v8656, 4294901760
    %v8658 = vsub.f32 %v8656, %v8657
    %v8659 = vand.u32 %v8658, 4294901760
    %8660 = vmatpush1.msra.mxu0 %v8659
    %8661 = vmatprep.subr.mxu0 0.0
    %v8662 = vand.u32 %v4860, 4294901760
    %v8663 = vsub.f32 %v4860, %v8662
    %v8664 = vand.u32 %v8663, 4294901760
    %v8665 = vsub.f32 %v8663, %v8664
    %v8666 = vand.u32 %v8665, 4294901760
    %8667 = vmatpush1.msra.mxu0 %v8666
    %8668 = vmatprep.subr.mxu0 0.0
    %v8669 = vand.u32 %v4859, 4294901760
    %v8670 = vsub.f32 %v4859, %v8669
    %v8671 = vand.u32 %v8670, 4294901760
    %v8672 = vsub.f32 %v8670, %v8671
    %v8673 = vand.u32 %v8672, 4294901760
    %8674 = vmatpush1.msra.mxu0 %v8673
    %8675 = vmatprep.subr.mxu0 0.0
    %8676 = vmatpush2.msra.mxu0 0.0
    %8677 = vmatprep.subr.mxu0 0.0
    %8678 = vmatpush2.msra.mxu0 0.0
    %8679 = vmatprep.subr.mxu0 0.0
    %8680 = vmatpush2.msra.mxu0 0.0
    %8681 = vmatprep.subr.mxu0 0.0
    %8682 = vmatpush2.msra.mxu0 0.0
    %8683 = vmatprep.subr.mxu0 0.0
    %8684 = vmatpush2.msra.mxu0 0.0
    %8685 = vmatprep.subr.mxu0 0.0
    %8686 = vmatpush2.msra.mxu0 0.0
    %8687 = vmatprep.subr.mxu0 0.0
    %8688 = vmatpush2.msra.mxu0 0.0
    %8689 = vmatprep.subr.mxu0 0.0
    %8690 = vmatpush2.msra.mxu0 0.0
    %8691 = vmatprep.subr.mxu0 0.0
    %8692 = vmatpush2.msra.mxu0 0.0
    %8693 = vmatprep.subr.mxu0 0.0
    %8694 = vmatpush2.msra.mxu0 0.0
    %8695 = vmatprep.subr.mxu0 0.0
    %8696 = vmatpush2.msra.mxu0 0.0
    %8697 = vmatprep.subr.mxu0 0.0
    %8698 = vmatpush2.msra.mxu0 0.0
    %8699 = vmatprep.subr.mxu0 0.0
    %8700 = vmatpush2.msra.mxu0 0.0
    %8701 = vmatprep.subr.mxu0 0.0
    %8702 = vmatpush2.msra.mxu0 0.0
    %8703 = vmatprep.subr.mxu0 0.0
    %8704 = vmatpush2.msra.mxu0 0.0
    %8705 = vmatprep.subr.mxu0 0.0
    %8706 = vmatpush2.msra.mxu0 0.0
    %8707 = vmatprep.mubr.f32.mxu0 0.0
    %v8708 = vand.u32 %v8542, 4294901760
    %8709 = vmatmul.mubr.f32.gmra.mxu0 %v8708
    %v8710 = vpop.f32.mrf.mxu0
    %v8711 = vadd.f32 %v8620, %v8710
    %v8712 = vpop.f32.mrf.mxu0
    %8713 = vdwg.mxu0
    %8714 = vmatprep.subr.mxu0 0.0
    %8715 = vmatpush1.msra.mxu0 0.0
    %8716 = vmatprep.subr.mxu0 0.0
    %8717 = vmatpush1.msra.mxu0 0.0
    %8718 = vmatprep.subr.mxu0 0.0
    %8719 = vmatpush1.msra.mxu0 0.0
    %8720 = vmatprep.subr.mxu0 0.0
    %8721 = vmatpush1.msra.mxu0 0.0
    %8722 = vmatprep.subr.mxu0 0.0
    %8723 = vmatpush1.msra.mxu0 0.0
    %8724 = vmatprep.subr.mxu0 0.0
    %8725 = vmatpush1.msra.mxu0 0.0
    %8726 = vmatprep.subr.mxu0 0.0
    %8727 = vmatpush1.msra.mxu0 0.0
    %8728 = vmatprep.subr.mxu0 0.0
    %8729 = vmatpush1.msra.mxu0 0.0
    %8730 = vmatprep.subr.mxu0 0.0
    %8731 = vmatpush1.msra.mxu0 0.0
    %8732 = vmatprep.subr.mxu0 0.0
    %8733 = vmatpush1.msra.mxu0 0.0
    %8734 = vmatprep.subr.mxu0 0.0
    %8735 = vmatpush1.msra.mxu0 0.0
    %8736 = vmatprep.subr.mxu0 0.0
    %8737 = vmatpush1.msra.mxu0 0.0
    %8738 = vmatprep.subr.mxu0 0.0
    %v8739 = vand.u32 %v4862, 4294901760
    %v8740 = vsub.f32 %v4862, %v8739
    %8741 = vmatpush1.msra.mxu0 %v8740
    %8742 = vmatprep.subr.mxu0 0.0
    %v8743 = vand.u32 %v4861, 4294901760
    %v8744 = vsub.f32 %v4861, %v8743
    %8745 = vmatpush1.msra.mxu0 %v8744
    %8746 = vmatprep.subr.mxu0 0.0
    %v8747 = vand.u32 %v4860, 4294901760
    %v8748 = vsub.f32 %v4860, %v8747
    %8749 = vmatpush1.msra.mxu0 %v8748
    %8750 = vmatprep.subr.mxu0 0.0
    %v8751 = vand.u32 %v4859, 4294901760
    %v8752 = vsub.f32 %v4859, %v8751
    %8753 = vmatpush1.msra.mxu0 %v8752
    %8754 = vmatprep.subr.mxu0 0.0
    %8755 = vmatpush2.msra.mxu0 0.0
    %8756 = vmatprep.subr.mxu0 0.0
    %8757 = vmatpush2.msra.mxu0 0.0
    %8758 = vmatprep.subr.mxu0 0.0
    %8759 = vmatpush2.msra.mxu0 0.0
    %8760 = vmatprep.subr.mxu0 0.0
    %8761 = vmatpush2.msra.mxu0 0.0
    %8762 = vmatprep.subr.mxu0 0.0
    %8763 = vmatpush2.msra.mxu0 0.0
    %8764 = vmatprep.subr.mxu0 0.0
    %8765 = vmatpush2.msra.mxu0 0.0
    %8766 = vmatprep.subr.mxu0 0.0
    %8767 = vmatpush2.msra.mxu0 0.0
    %8768 = vmatprep.subr.mxu0 0.0
    %8769 = vmatpush2.msra.mxu0 0.0
    %8770 = vmatprep.subr.mxu0 0.0
    %8771 = vmatpush2.msra.mxu0 0.0
    %8772 = vmatprep.subr.mxu0 0.0
    %8773 = vmatpush2.msra.mxu0 0.0
    %8774 = vmatprep.subr.mxu0 0.0
    %8775 = vmatpush2.msra.mxu0 0.0
    %8776 = vmatprep.subr.mxu0 0.0
    %8777 = vmatpush2.msra.mxu0 0.0
    %8778 = vmatprep.subr.mxu0 0.0
    %8779 = vmatpush2.msra.mxu0 0.0
    %8780 = vmatprep.subr.mxu0 0.0
    %8781 = vmatpush2.msra.mxu0 0.0
    %8782 = vmatprep.subr.mxu0 0.0
    %8783 = vmatpush2.msra.mxu0 0.0
    %8784 = vmatprep.subr.mxu0 0.0
    %8785 = vmatpush2.msra.mxu0 0.0
    %8786 = vmatprep.mubr.f32.mxu0 0.0
    %v8787 = vand.u32 %v8542, 4294901760
    %v8788 = vsub.f32 %v8542, %v8787
    %8789 = vmatmul.mubr.f32.gmra.mxu0 %v8788
    %v8790 = vpop.f32.mrf.mxu0
    %v8791 = vadd.f32 %v8711, %v8790
    %v8792 = vpop.f32.mrf.mxu0
    %8793 = vdwg.mxu0
    %8794 = vmatprep.subr.mxu0 0.0
    %8795 = vmatpush1.msra.mxu0 0.0
    %8796 = vmatprep.subr.mxu0 0.0
    %8797 = vmatpush1.msra.mxu0 0.0
    %8798 = vmatprep.subr.mxu0 0.0
    %8799 = vmatpush1.msra.mxu0 0.0
    %8800 = vmatprep.subr.mxu0 0.0
    %8801 = vmatpush1.msra.mxu0 0.0
    %8802 = vmatprep.subr.mxu0 0.0
    %8803 = vmatpush1.msra.mxu0 0.0
    %8804 = vmatprep.subr.mxu0 0.0
    %8805 = vmatpush1.msra.mxu0 0.0
    %8806 = vmatprep.subr.mxu0 0.0
    %8807 = vmatpush1.msra.mxu0 0.0
    %8808 = vmatprep.subr.mxu0 0.0
    %8809 = vmatpush1.msra.mxu0 0.0
    %8810 = vmatprep.subr.mxu0 0.0
    %8811 = vmatpush1.msra.mxu0 0.0
    %8812 = vmatprep.subr.mxu0 0.0
    %8813 = vmatpush1.msra.mxu0 0.0
    %8814 = vmatprep.subr.mxu0 0.0
    %8815 = vmatpush1.msra.mxu0 0.0
    %8816 = vmatprep.subr.mxu0 0.0
    %8817 = vmatpush1.msra.mxu0 0.0
    %8818 = vmatprep.subr.mxu0 0.0
    %v8819 = vand.u32 %v4862, 4294901760
    %8820 = vmatpush1.msra.mxu0 %v8819
    %8821 = vmatprep.subr.mxu0 0.0
    %v8822 = vand.u32 %v4861, 4294901760
    %8823 = vmatpush1.msra.mxu0 %v8822
    %8824 = vmatprep.subr.mxu0 0.0
    %v8825 = vand.u32 %v4860, 4294901760
    %8826 = vmatpush1.msra.mxu0 %v8825
    %8827 = vmatprep.subr.mxu0 0.0
    %v8828 = vand.u32 %v4859, 4294901760
    %8829 = vmatpush1.msra.mxu0 %v8828
    %8830 = vmatprep.subr.mxu0 0.0
    %8831 = vmatpush2.msra.mxu0 0.0
    %8832 = vmatprep.subr.mxu0 0.0
    %8833 = vmatpush2.msra.mxu0 0.0
    %8834 = vmatprep.subr.mxu0 0.0
    %8835 = vmatpush2.msra.mxu0 0.0
    %8836 = vmatprep.subr.mxu0 0.0
    %8837 = vmatpush2.msra.mxu0 0.0
    %8838 = vmatprep.subr.mxu0 0.0
    %8839 = vmatpush2.msra.mxu0 0.0
    %8840 = vmatprep.subr.mxu0 0.0
    %8841 = vmatpush2.msra.mxu0 0.0
    %8842 = vmatprep.subr.mxu0 0.0
    %8843 = vmatpush2.msra.mxu0 0.0
    %8844 = vmatprep.subr.mxu0 0.0
    %8845 = vmatpush2.msra.mxu0 0.0
    %8846 = vmatprep.subr.mxu0 0.0
    %8847 = vmatpush2.msra.mxu0 0.0
    %8848 = vmatprep.subr.mxu0 0.0
    %8849 = vmatpush2.msra.mxu0 0.0
    %8850 = vmatprep.subr.mxu0 0.0
    %8851 = vmatpush2.msra.mxu0 0.0
    %8852 = vmatprep.subr.mxu0 0.0
    %8853 = vmatpush2.msra.mxu0 0.0
    %8854 = vmatprep.subr.mxu0 0.0
    %8855 = vmatpush2.msra.mxu0 0.0
    %8856 = vmatprep.subr.mxu0 0.0
    %8857 = vmatpush2.msra.mxu0 0.0
    %8858 = vmatprep.subr.mxu0 0.0
    %8859 = vmatpush2.msra.mxu0 0.0
    %8860 = vmatprep.subr.mxu0 0.0
    %8861 = vmatpush2.msra.mxu0 0.0
    %8862 = vmatprep.mubr.f32.mxu0 0.0
    %v8863 = vand.u32 %v8542, 4294901760
    %v8864 = vsub.f32 %v8542, %v8863
    %v8865 = vand.u32 %v8864, 4294901760
    %8866 = vmatmul.mubr.f32.gmra.mxu0 %v8865
    %v8867 = vpop.f32.mrf.mxu0
    %v8868 = vadd.f32 %v8791, %v8867
    %v8869 = vpop.f32.mrf.mxu0
    %8870 = vdwg.mxu0
    %8871 = vmatprep.subr.mxu0 0.0
    %8872 = vmatpush1.msra.mxu0 0.0
    %8873 = vmatprep.subr.mxu0 0.0
    %8874 = vmatpush1.msra.mxu0 0.0
    %8875 = vmatprep.subr.mxu0 0.0
    %8876 = vmatpush1.msra.mxu0 0.0
    %8877 = vmatprep.subr.mxu0 0.0
    %8878 = vmatpush1.msra.mxu0 0.0
    %8879 = vmatprep.subr.mxu0 0.0
    %8880 = vmatpush1.msra.mxu0 0.0
    %8881 = vmatprep.subr.mxu0 0.0
    %8882 = vmatpush1.msra.mxu0 0.0
    %8883 = vmatprep.subr.mxu0 0.0
    %8884 = vmatpush1.msra.mxu0 0.0
    %8885 = vmatprep.subr.mxu0 0.0
    %8886 = vmatpush1.msra.mxu0 0.0
    %8887 = vmatprep.subr.mxu0 0.0
    %8888 = vmatpush1.msra.mxu0 0.0
    %8889 = vmatprep.subr.mxu0 0.0
    %8890 = vmatpush1.msra.mxu0 0.0
    %8891 = vmatprep.subr.mxu0 0.0
    %8892 = vmatpush1.msra.mxu0 0.0
    %8893 = vmatprep.subr.mxu0 0.0
    %8894 = vmatpush1.msra.mxu0 0.0
    %8895 = vmatprep.subr.mxu0 0.0
    %v8896 = vand.u32 %v4862, 4294901760
    %v8897 = vsub.f32 %v4862, %v8896
    %v8898 = vand.u32 %v8897, 4294901760
    %8899 = vmatpush1.msra.mxu0 %v8898
    %8900 = vmatprep.subr.mxu0 0.0
    %v8901 = vand.u32 %v4861, 4294901760
    %v8902 = vsub.f32 %v4861, %v8901
    %v8903 = vand.u32 %v8902, 4294901760
    %8904 = vmatpush1.msra.mxu0 %v8903
    %8905 = vmatprep.subr.mxu0 0.0
    %v8906 = vand.u32 %v4860, 4294901760
    %v8907 = vsub.f32 %v4860, %v8906
    %v8908 = vand.u32 %v8907, 4294901760
    %8909 = vmatpush1.msra.mxu0 %v8908
    %8910 = vmatprep.subr.mxu0 0.0
    %v8911 = vand.u32 %v4859, 4294901760
    %v8912 = vsub.f32 %v4859, %v8911
    %v8913 = vand.u32 %v8912, 4294901760
    %8914 = vmatpush1.msra.mxu0 %v8913
    %8915 = vmatprep.subr.mxu0 0.0
    %8916 = vmatpush2.msra.mxu0 0.0
    %8917 = vmatprep.subr.mxu0 0.0
    %8918 = vmatpush2.msra.mxu0 0.0
    %8919 = vmatprep.subr.mxu0 0.0
    %8920 = vmatpush2.msra.mxu0 0.0
    %8921 = vmatprep.subr.mxu0 0.0
    %8922 = vmatpush2.msra.mxu0 0.0
    %8923 = vmatprep.subr.mxu0 0.0
    %8924 = vmatpush2.msra.mxu0 0.0
    %8925 = vmatprep.subr.mxu0 0.0
    %8926 = vmatpush2.msra.mxu0 0.0
    %8927 = vmatprep.subr.mxu0 0.0
    %8928 = vmatpush2.msra.mxu0 0.0
    %8929 = vmatprep.subr.mxu0 0.0
    %8930 = vmatpush2.msra.mxu0 0.0
    %8931 = vmatprep.subr.mxu0 0.0
    %8932 = vmatpush2.msra.mxu0 0.0
    %8933 = vmatprep.subr.mxu0 0.0
    %8934 = vmatpush2.msra.mxu0 0.0
    %8935 = vmatprep.subr.mxu0 0.0
    %8936 = vmatpush2.msra.mxu0 0.0
    %8937 = vmatprep.subr.mxu0 0.0
    %8938 = vmatpush2.msra.mxu0 0.0
    %8939 = vmatprep.subr.mxu0 0.0
    %8940 = vmatpush2.msra.mxu0 0.0
    %8941 = vmatprep.subr.mxu0 0.0
    %8942 = vmatpush2.msra.mxu0 0.0
    %8943 = vmatprep.subr.mxu0 0.0
    %8944 = vmatpush2.msra.mxu0 0.0
    %8945 = vmatprep.subr.mxu0 0.0
    %8946 = vmatpush2.msra.mxu0 0.0
    %8947 = vmatprep.mubr.f32.mxu0 0.0
    %v8948 = vand.u32 %v8542, 4294901760
    %8949 = vmatmul.mubr.f32.gmra.mxu0 %v8948
    %v8950 = vpop.f32.mrf.mxu0
    %v8951 = vadd.f32 %v8868, %v8950
    %v8952 = vpop.f32.mrf.mxu0
    %8953 = vdwg.mxu0
    %8954 = vmatprep.subr.mxu0 0.0
    %8955 = vmatpush1.msra.mxu0 0.0
    %8956 = vmatprep.subr.mxu0 0.0
    %8957 = vmatpush1.msra.mxu0 0.0
    %8958 = vmatprep.subr.mxu0 0.0
    %8959 = vmatpush1.msra.mxu0 0.0
    %8960 = vmatprep.subr.mxu0 0.0
    %8961 = vmatpush1.msra.mxu0 0.0
    %8962 = vmatprep.subr.mxu0 0.0
    %8963 = vmatpush1.msra.mxu0 0.0
    %8964 = vmatprep.subr.mxu0 0.0
    %8965 = vmatpush1.msra.mxu0 0.0
    %8966 = vmatprep.subr.mxu0 0.0
    %8967 = vmatpush1.msra.mxu0 0.0
    %8968 = vmatprep.subr.mxu0 0.0
    %8969 = vmatpush1.msra.mxu0 0.0
    %8970 = vmatprep.subr.mxu0 0.0
    %8971 = vmatpush1.msra.mxu0 0.0
    %8972 = vmatprep.subr.mxu0 0.0
    %8973 = vmatpush1.msra.mxu0 0.0
    %8974 = vmatprep.subr.mxu0 0.0
    %8975 = vmatpush1.msra.mxu0 0.0
    %8976 = vmatprep.subr.mxu0 0.0
    %8977 = vmatpush1.msra.mxu0 0.0
    %8978 = vmatprep.subr.mxu0 0.0
    %v8979 = vand.u32 %v4862, 4294901760
    %8980 = vmatpush1.msra.mxu0 %v8979
    %8981 = vmatprep.subr.mxu0 0.0
    %v8982 = vand.u32 %v4861, 4294901760
    %8983 = vmatpush1.msra.mxu0 %v8982
    %8984 = vmatprep.subr.mxu0 0.0
    %v8985 = vand.u32 %v4860, 4294901760
    %8986 = vmatpush1.msra.mxu0 %v8985
    %8987 = vmatprep.subr.mxu0 0.0
    %v8988 = vand.u32 %v4859, 4294901760
    %8989 = vmatpush1.msra.mxu0 %v8988
    %8990 = vmatprep.subr.mxu0 0.0
    %8991 = vmatpush2.msra.mxu0 0.0
    %8992 = vmatprep.subr.mxu0 0.0
    %8993 = vmatpush2.msra.mxu0 0.0
    %8994 = vmatprep.subr.mxu0 0.0
    %8995 = vmatpush2.msra.mxu0 0.0
    %8996 = vmatprep.subr.mxu0 0.0
    %8997 = vmatpush2.msra.mxu0 0.0
    %8998 = vmatprep.subr.mxu0 0.0
    %8999 = vmatpush2.msra.mxu0 0.0
    %9000 = vmatprep.subr.mxu0 0.0
    %9001 = vmatpush2.msra.mxu0 0.0
    %9002 = vmatprep.subr.mxu0 0.0
    %9003 = vmatpush2.msra.mxu0 0.0
    %9004 = vmatprep.subr.mxu0 0.0
    %9005 = vmatpush2.msra.mxu0 0.0
    %9006 = vmatprep.subr.mxu0 0.0
    %9007 = vmatpush2.msra.mxu0 0.0
    %9008 = vmatprep.subr.mxu0 0.0
    %9009 = vmatpush2.msra.mxu0 0.0
    %9010 = vmatprep.subr.mxu0 0.0
    %9011 = vmatpush2.msra.mxu0 0.0
    %9012 = vmatprep.subr.mxu0 0.0
    %9013 = vmatpush2.msra.mxu0 0.0
    %9014 = vmatprep.subr.mxu0 0.0
    %9015 = vmatpush2.msra.mxu0 0.0
    %9016 = vmatprep.subr.mxu0 0.0
    %9017 = vmatpush2.msra.mxu0 0.0
    %9018 = vmatprep.subr.mxu0 0.0
    %9019 = vmatpush2.msra.mxu0 0.0
    %9020 = vmatprep.subr.mxu0 0.0
    %9021 = vmatpush2.msra.mxu0 0.0
    %9022 = vmatprep.mubr.f32.mxu0 0.0
    %v9023 = vand.u32 %v8542, 4294901760
    %9024 = vmatmul.mubr.f32.gmra.mxu0 %v9023
    %v9025 = vpop.f32.mrf.mxu0
    %v9026 = vadd.f32 %v8951, %v9025
    %v9027 = vpop.f32.mrf.mxu0
    %9028 = vdwg.mxu0
    %v9029 = vadd.f32 %v8538, %v9026
    %v9030 = vsub.f32 0.0, %v9029
    %v9031 = vmul.f32 %v9030, 1.442695
    %v9032 = vpow.pop %v9031
    %v9033 = vadd.f32 %v9032, 1.0
    %v9034 = vrcp.pop %v9033
    %v9035 = vmul.f32 1.0, %v9034
    %v9036 = vtanh.pop %v9029
    %v9038 = vrot.slane %v8526, 2
    %v9040 = vmul.f32 %v9035, %v9038
    %9042 = vrot.lane.b32.xlu0 %v9036, 64
    %v9043 = vpop.permute.xlu0 %9042
    %v9045 = vmul.f32 %v9035, %v9043
    %9047 = vrot.lane.b32.xlu0 %v9045, 32
    %v9048 = vpop.permute.xlu0 %9047
    %v9050 = vadd.f32 %v9040, %v9048
    %v9051 = vtanh.pop %v9050
    %9053 = vrot.lane.b32.xlu0 %v9051, 64
    %v9054 = vpop.permute.xlu0 %9053
    %v9056 = vmul.f32 %v9035, %v9054
    %9058 = vrot.lane.b32.xlu0 %v9056, 32
    %v9059 = vpop.permute.xlu0 %9058
    %9061 = vst.msk [vmem:[#allocation4] sm:$0x3] %vm1174, %v9059
    %v9062 = vld [vmem:[#allocation3] sm:$0xff]
    %v9063 = vld [vmem:[#allocation3 + $0x8] sm:$0xff]
    %v9064 = vld [vmem:[#allocation4] sm:$0xff]
    %v9065 = vld [vmem:[#allocation4 + $0x8] sm:$0xff]
    %9068 = vrot.lane.b32.xlu0 %v9064, 32
    %v9069 = vpop.permute.xlu0 %9068
    %9070 = vrot.lane.b32.xlu0 %v9065, 32
    %v9071 = vpop.permute.xlu0 %9070
    %v9074 = vsel %vm656, %v9062, %v9069
    %v9075 = vsel %vm656, %v9063, %v9071
    %vm9076 = vcmask 523264
    %v9077 = vsel %vm9076, %v9074, 0.0
    %9078 = vadd.xlane.f32.xlu0 %v9077
    %v9079 = vpop.xlane.xlu0 %9078
    %v9080 = vsel %vm9076, %v9075, 0.0
    %9081 = vadd.xlane.f32.xlu0 %v9080
    %v9082 = vpop.xlane.xlu0 %9081
    %v9083 = vrcp.pop 64.0
    %v9084 = vmul.f32 %v9079, %v9083
    %v9085 = vmul.f32 %v9082, %v9083
    %v9086 = vsub.f32 %v9074, %v9084
    %v9087 = vsub.f32 %v9075, %v9085
    %v9088 = vmul.f32 %v9086, %v9086
    %v9089 = vmul.f32 %v9087, %v9087
    %v9090 = vsel %vm9076, %v9088, 0.0
    %9091 = vadd.xlane.f32.xlu0 %v9090
    %v9092 = vpop.xlane.xlu0 %9091
    %v9093 = vsel %vm9076, %v9089, 0.0
    %9094 = vadd.xlane.f32.xlu0 %v9093
    %v9095 = vpop.xlane.xlu0 %9094
    %v9096 = vmul.f32 %v9092, %v9083
    %v9097 = vmul.f32 %v9095, %v9083
    %v9098 = vadd.f32 %v9096, 1e-05
    %v9099 = vadd.f32 %v9097, 1e-05
    %v9100 = vrsqrt.pop %v9098
    %v9101 = vrsqrt.pop %v9099
    %v9102 = vmul.f32 %v9086, %v9100
    %v9103 = vmul.f32 %v9087, %v9101
    %v9104 = vld [vmem:[%s5] sm:$0x1]
    %v9106 = vlaneseq
    %v9107 = vshrl.u32 %v9106, 7
    %v9108 = vsub.s32 0, %v9107
    %v9109 = vrot.slane %v9104, %v9108
    %v9111 = vmul.f32 %v9102, %v9109
    %v9112 = vmul.f32 %v9103, %v9109
    %v9113 = vld [vmem:[%s6] sm:$0x1]
    %v9115 = vlaneseq
    %v9116 = vshrl.u32 %v9115, 7
    %v9117 = vsub.s32 0, %v9116
    %v9118 = vrot.slane %v9113, %v9117
    %v9120 = vadd.f32 %v9111, %v9118
    %v9121 = vadd.f32 %v9112, %v9118
    %9122 = vst.msk [vmem:[#allocation13] sm:$0xff] %vm9076, %v9120
    %9123 = vst.msk [vmem:[#allocation13 + $0x8] sm:$0xff] %vm9076, %v9121
    // Predicated region
    $region46: #{tpu_custom_call.1} parent=1 // pred_check
      _
    $region47: #{tpu_custom_call.1} parent=1 // pred_check_branch
      %9125 = sbr.rel (0) target = $region49
    $region48: #{tpu_custom_call.1} parent=1 // pred_region
      %s9127 = ssub.s32 256, 256
      %9128 = vsyncadd [#allocation7], %s9127
      %s9129 = sshll.u32 [#allocation13], 4
      %s9130 = int_to_ptr.vmem [resolvable:$true] %s9129
      %9135 = dma.vmem_to_hbm [thread:$0]  %s9130, 256, %s7, [#allocation7], 128, 128, 8
    $region49: #{tpu_custom_call.1} parent=1 // pred_fallthru
      _
    // Predicated region
    $region50: #{tpu_custom_call.1} parent=1 // pred_check
      _
    $region51: #{tpu_custom_call.1} parent=1 // pred_check_branch
      %9137 = sbr.rel (0) target = $region53
    $region52: #{tpu_custom_call.1} parent=1 // pred_region
      %9138 = dma.done [#allocation7], 256
    $region53: #{tpu_custom_call.1} parent=1 // pred_fallthru
      _
    %9139 = vsyncpa [#allocation6], 1
    %9140 = vsyncpa [#allocation9], 1
    %9141 = vsyncpa [#allocation12], 1
    %9142 = vsyncpa [#allocation7], 1

</llo_original>
